<compile_context>
chip_gen: v7x
topology: tpu7x:2x2x1
jax: 0.10.0
libtpu: 0.0.40
codegen_flags: <defaults>
</compile_context>

<pallas_src>
import functools
import math

import jax
import jax.numpy as jnp
from jax.experimental import pallas as pl
from jax.experimental.pallas import tpu as pltpu


_COMPILER_PARAMS = pltpu.CompilerParams(
    dimension_semantics=("parallel", "parallel"),
    vmem_limit_bytes=48 * 1024 * 1024,
)


# ----------------------------------------------------------------------------
# Pallas kernels
# ----------------------------------------------------------------------------
def _trunk_kernel(x_ref, wh_ref, bh_ref, w1_ref, b1_ref, w2_ref, b2_ref,
                  wm_ref, bm_ref, o_ref, h64_ref, *, TH, W, NBLK):
    """Fused trunk: 5x5 head conv -> NBLK residual blocks -> 3x3 mid conv.

    x_ref : (1, 1, TH+6, W+6, 4) zero-padded input band (3 real channels + pad)
    wh_ref: (100, 64) bf16   head conv with 5*5*4 taps folded into K
    w1/w2 : (NBLK, 64, 32) / (NBLK, 32, 64) bf16   1x1 residual-block convs
    wm_ref: (576, 32) bf16   mid conv with 3*3*64 taps folded into K
    o_ref : (1, 1, TH, W, 32)  band of the 32-channel trunk output
    h64_ref: VMEM scratch ((TH+2)*(W+2), 64) f32 - resident 64-ch activation
    """
    Ho, Wo = TH + 2, W + 2                      # head output incl. mid-conv halo
    x = x_ref[0, 0]                             # (TH+6, W+6, 4) f32

    # --- head conv: one bf16 MXU matmul with K = 5*5*4 = 100
    taps = [x[kh:kh + Ho, kw:kw + Wo, :] for kh in range(5) for kw in range(5)]
    lhs = jnp.concatenate(taps, axis=-1).reshape(Ho * Wo, 100).astype(jnp.bfloat16)
    h = jnp.dot(lhs, wh_ref[...], preferred_element_type=jnp.float32)
    h64_ref[...] = h + bh_ref[...]

    # --- residual blocks: activation stays in VMEM in a 2-D (rows, 64) layout
    for r in range(NBLK):
        hb = h64_ref[...].astype(jnp.bfloat16)
        t = jnp.dot(hb, w1_ref[r], preferred_element_type=jnp.float32)
        t = jnp.maximum(t + b1_ref[r], 0.0).astype(jnp.bfloat16)
        y = jnp.dot(t, w2_ref[r], preferred_element_type=jnp.float32) + b2_ref[r]
        h64_ref[...] = h64_ref[...] + y

    # --- zero the halo positions that correspond to the mid conv's zero padding
    #     in the reference network (image border only; interior band halos are
    #     real recomputed rows and must NOT be zeroed).
    r64 = h64_ref[...].reshape(Ho, Wo, 64)
    band = pl.program_id(1)
    nbands = pl.num_programs(1)
    row = jax.lax.broadcasted_iota(jnp.int32, (Ho, Wo, 1), 0)
    col = jax.lax.broadcasted_iota(jnp.int32, (Ho, Wo, 1), 1)
    is_pad = (col == 0) | (col == Wo - 1)
    is_pad = is_pad | ((band == 0) & (row == 0))
    is_pad = is_pad | ((band == nbands - 1) & (row == Ho - 1))
    r64 = jnp.where(is_pad, 0.0, r64)

    # --- mid conv: one bf16 MXU matmul with K = 3*3*64 = 576
    taps = [r64[kh:kh + TH, kw:kw + W, :] for kh in range(3) for kw in range(3)]
    lhs = jnp.concatenate(taps, axis=-1).reshape(TH * W, 576).astype(jnp.bfloat16)
    m = jnp.dot(lhs, wm_ref[...], preferred_element_type=jnp.float32) + bm_ref[...]
    o_ref[0, 0] = m.reshape(TH, W, 32).astype(o_ref.dtype)


def _subpixel_kernel(x_ref, w_ref, b_ref, o_ref, *, TH, W):
    """3x3 conv 32->128 + ReLU with PixelShuffle(2) fused into the store.

    Weight columns are pre-permuted to (i, j, c) = i*64 + j*32 + c so the band,
    stored with dims (h, [i, w], [j, c]), reshapes for free to the shuffled
    (2H, 2W, 32) layout in the wrapper.
    """
    x = x_ref[0, 0]                                        # (TH+2, W+2, 32) f32
    taps = [x[kh:kh + TH, kw:kw + W, :] for kh in range(3) for kw in range(3)]
    lhs = jnp.concatenate(taps, axis=-1).reshape(TH * W, 288).astype(jnp.bfloat16)
    y = jnp.dot(lhs, w_ref[...], preferred_element_type=jnp.float32) + b_ref[...]
    y = jnp.maximum(y, 0.0).reshape(TH, W, 128)
    o_ref[0, 0, :, 0:W, :] = y[:, :, 0:64].astype(o_ref.dtype)      # i = 0 rows
    o_ref[0, 0, :, W:2 * W, :] = y[:, :, 64:128].astype(o_ref.dtype)  # i = 1 rows


def _tail_kernel(x_ref, w_ref, b_ref, o_ref, *, TH, W, CP):
    """3x3 conv 32->3 (padded to CP output lanes) + sigmoid."""
    x = x_ref[0, 0]                                        # (TH+2, W+2, 32) f32
    taps = [x[kh:kh + TH, kw:kw + W, :] for kh in range(3) for kw in range(3)]
    lhs = jnp.concatenate(taps, axis=-1).reshape(TH * W, 288).astype(jnp.bfloat16)
    y = jnp.dot(lhs, w_ref[...], preferred_element_type=jnp.float32) + b_ref[...]
    y = jax.nn.sigmoid(y)
    # TODO(synk): a fully lane-dense (TH, W*CP) output slab would further cut
    # masked-store work; kept (TH, W, CP) for lowering safety.
    o_ref[0, 0] = y.reshape(TH, W, CP).astype(o_ref.dtype)


# ----------------------------------------------------------------------------
# Band / tiling helpers
# ----------------------------------------------------------------------------
def _divisor_rows(H, target):
    rows = max(1, min(H, int(target)))
    while H % rows:
        rows -= 1
    return rows


def _auto_band_rows(H, W):
    # ~4 MiB budget for the dominant per-band f32 buffers (double-buffered input
    # band + im2col LHS).  Use roughly half this budget on v7x (64 MiB VMEM).
    budget = 4 << 20
    per_row = (W + 8) * 64 * 4 * 4
    return max(1, min(H, 256, budget // max(per_row, 1)))


def _band(x, rows, halo):
    """(N, H + 2*halo, Wp, C) -> (N, H//rows, rows + 2*halo, Wp, C) row bands."""
    H = x.shape[1] - 2 * halo
    nb = H // rows
    return jnp.stack(
        [x[:, b * rows: b * rows + rows + 2 * halo] for b in range(nb)], axis=1)


# ----------------------------------------------------------------------------
# pallas_call wrappers
# ----------------------------------------------------------------------------
def _trunk_call(x_nhwc, kp, rows):
    N, H, W, _ = x_nhwc.shape
    nb = H // rows
    nblk = kp["res_w1"].shape[0]
    xp = jnp.pad(x_nhwc, ((0, 0), (3, 3), (3, 3), (0, 1)))   # halo 3, cin 3 -> 4
    xb = _band(xp, rows, 3)                                  # (N, nb, rows+6, W+6, 4)
    kernel = functools.partial(_trunk_kernel, TH=rows, W=W, NBLK=nblk)
    out = pl.pallas_call(
        kernel,
        out_shape=jax.ShapeDtypeStruct((N, nb, rows, W, 32), jnp.float32),
        grid=(N, nb),
        in_specs=[
            pl.BlockSpec((1, 1, rows + 6, W + 6, 4), lambda n, b: (n, b, 0, 0, 0)),
            pl.BlockSpec((100, 64), lambda n, b: (0, 0)),
            pl.BlockSpec((1, 64), lambda n, b: (0, 0)),
            pl.BlockSpec((nblk, 64, 32), lambda n, b: (0, 0, 0)),
            pl.BlockSpec((nblk, 1, 32), lambda n, b: (0, 0, 0)),
            pl.BlockSpec((nblk, 32, 64), lambda n, b: (0, 0, 0)),
            pl.BlockSpec((nblk, 1, 64), lambda n, b: (0, 0, 0)),
            pl.BlockSpec((576, 32), lambda n, b: (0, 0)),
            pl.BlockSpec((1, 32), lambda n, b: (0, 0)),
        ],
        out_specs=pl.BlockSpec((1, 1, rows, W, 32), lambda n, b: (n, b, 0, 0, 0)),
        scratch_shapes=[pltpu.VMEM(((rows + 2) * (W + 2), 64), jnp.float32)],
        compiler_params=_COMPILER_PARAMS,
    )(xb, kp["head_w"], kp["head_b"], kp["res_w1"], kp["res_b1"],
      kp["res_w2"], kp["res_b2"], kp["mid_w"], kp["mid_b"])
    return out.reshape(N, H, W, 32)


def _subpixel_call(h, w_sp, b_sp, rows):
    N, H, W, _ = h.shape
    nb = H // rows
    xp = jnp.pad(h, ((0, 0), (1, 1), (1, 1), (0, 0)))
    xb = _band(xp, rows, 1)                                  # (N, nb, rows+2, W+2, 32)
    kernel = functools.partial(_subpixel_kernel, TH=rows, W=W)
    out = pl.pallas_call(
        kernel,
        out_shape=jax.ShapeDtypeStruct((N, nb, rows, 2 * W, 64), jnp.float32),
        grid=(N, nb),
        in_specs=[
            pl.BlockSpec((1, 1, rows + 2, W + 2, 32), lambda n, b: (n, b, 0, 0, 0)),
            pl.BlockSpec((288, 128), lambda n, b: (0, 0)),
            pl.BlockSpec((1, 128), lambda n, b: (0, 0)),
        ],
        out_specs=pl.BlockSpec((1, 1, rows, 2 * W, 64), lambda n, b: (n, b, 0, 0, 0)),
        compiler_params=_COMPILER_PARAMS,
    )(xb, w_sp, b_sp)
    # dims are (n, band, h, [i, w], [j, c]) -> the shuffled layout is a free
    # row-major reshape (no HBM transpose of the upsampled activation).
    return out.reshape(N, 2 * H, 2 * W, 32)


def _tail_call(h, w_t, b_t, rows, cp=8):
    N, H, W, _ = h.shape
    nb = H // rows
    xp = jnp.pad(h, ((0, 0), (1, 1), (1, 1), (0, 0)))
    xb = _band(xp, rows, 1)
    kernel = functools.partial(_tail_kernel, TH=rows, W=W, CP=cp)
    out = pl.pallas_call(
        kernel,
        out_shape=jax.ShapeDtypeStruct((N, nb, rows, W, cp), jnp.float32),
        grid=(N, nb),
        in_specs=[
            pl.BlockSpec((1, 1, rows + 2, W + 2, 32), lambda n, b: (n, b, 0, 0, 0)),
            pl.BlockSpec((288, cp), lambda n, b: (0, 0)),
            pl.BlockSpec((1, cp), lambda n, b: (0, 0)),
        ],
        out_specs=pl.BlockSpec((1, 1, rows, W, cp), lambda n, b: (n, b, 0, 0, 0)),
        compiler_params=_COMPILER_PARAMS,
    )(xb, w_t, b_t)
    return out.reshape(N, H, W, cp)


# ----------------------------------------------------------------------------
# Parameter prep (kernel-layout weights, bf16 for the MXU; biases stay f32)
# ----------------------------------------------------------------------------
def _prep_kernel_params(params):
    bf16 = jnp.bfloat16
    kp = {}
    wh, bh = params["head"]                                   # (5,5,3,64), (1,64)
    wh = jnp.pad(wh, ((0, 0), (0, 0), (0, 1), (0, 0)))        # cin 3 -> 4
    kp["head_w"] = wh.reshape(100, 64).astype(bf16)
    kp["head_b"] = bh
    kp["res_w1"] = jnp.stack([p["w1"] for p in params["resblocks"]]).astype(bf16)
    kp["res_b1"] = jnp.stack([p["b1"] for p in params["resblocks"]])
    kp["res_w2"] = jnp.stack([p["w2"] for p in params["resblocks"]]).astype(bf16)
    kp["res_b2"] = jnp.stack([p["b2"] for p in params["resblocks"]])
    wm, bm = params["mid"]                                    # (3,3,64,32), (1,32)
    kp["mid_w"] = wm.reshape(576, 32).astype(bf16)
    kp["mid_b"] = bm
    kp["subpixel"] = []
    for p in params["subpixel"]:
        w, b = p["w"], p["b"]                                 # (3,3,32,128), (1,128)
        # permute output channels from torch PixelShuffle order c*4 + i*2 + j
        # to i*64 + j*32 + c so the fused-shuffle store is a free reshape.
        w = w.reshape(3, 3, 32, 32, 2, 2)                     # (kh,kw,cin, c,i,j)
        w = jnp.transpose(w, (0, 1, 2, 4, 5, 3))              # (kh,kw,cin, i,j,c)
        b = jnp.transpose(b.reshape(32, 2, 2), (1, 2, 0)).reshape(1, 128)
        kp["subpixel"].append({"w": w.reshape(288, 128).astype(bf16), "b": b})
    wt, bt = params["tail"]                                   # (3,3,32,3), (1,3)
    kp["tail_w"] = jnp.pad(wt.reshape(288, 3), ((0, 0), (0, 5))).astype(bf16)
    kp["tail_b"] = jnp.pad(bt, ((0, 0), (0, 5)))
    return kp


# ----------------------------------------------------------------------------
# Parameters (deterministic, PyTorch-default-like uniform init)
# ----------------------------------------------------------------------------
def _init_conv(key, kh, kw, cin, cout):
    kwgt, kb = jax.random.split(key)
    bound = 1.0 / math.sqrt(cin * kh * kw)
    w = jax.random.uniform(kwgt, (kh, kw, cin, cout), jnp.float32, -bound, bound)
    b = jax.random.uniform(kb, (1, cout), jnp.float32, -bound, bound)
    return w, b


def init_params(key, num_residual_blocks=4, upscale_factor=2):
    num_sub_pixel = int(math.log2(upscale_factor))
    keys = iter(jax.random.split(key, 3 + 2 * num_residual_blocks + num_sub_pixel))
    params = {}
    params["head"] = _init_conv(next(keys), 5, 5, 3, 64)
    resblocks = []
    for _ in range(num_residual_blocks):
        w1, b1 = _init_conv(next(keys), 1, 1, 64, 32)
        w2, b2 = _init_conv(next(keys), 1, 1, 32, 64)
        resblocks.append({"w1": w1.reshape(64, 32), "b1": b1,
                          "w2": w2.reshape(32, 64), "b2": b2})
    params["resblocks"] = resblocks
    params["mid"] = _init_conv(next(keys), 3, 3, 64, 32)
    subpixel = []
    for _ in range(num_sub_pixel):
        w, b = _init_conv(next(keys), 3, 3, 32, 32 * 4)       # SubPixelConv(32), r=2
        subpixel.append({"w": w, "b": b})
    params["subpixel"] = subpixel
    params["tail"] = _init_conv(next(keys), 3, 3, 32, 3)
    return params


# ----------------------------------------------------------------------------
# Forward passes
# ----------------------------------------------------------------------------
def srresnet_forward(params, x_nchw, band_rows=None):
    """Pallas forward.  x_nchw: (N, 3, H, W) -> (N, 3, H*r, W*r)."""
    kp = _prep_kernel_params(params)
    x = jnp.transpose(x_nchw, (0, 2, 3, 1))                   # NCHW -> NHWC
    _, H, W, _ = x.shape

    rows = _divisor_rows(H, band_rows or _auto_band_rows(H, W))
    h = _trunk_call(x, kp, rows)                              # (N, H, W, 32)

    for p in kp["subpixel"]:                                  # each upsamples 2x
        Hc, Wc = h.shape[1], h.shape[2]
        rows = _divisor_rows(Hc, band_rows or _auto_band_rows(Hc, Wc))
        h = _subpixel_call(h, p["w"], p["b"], rows)           # (N, 2Hc, 2Wc, 32)

    Hc, Wc = h.shape[1], h.shape[2]
    rows = _divisor_rows(Hc, band_rows or _auto_band_rows(Hc, Wc))
    y = _tail_call(h, kp["tail_w"], kp["tail_b"], rows)       # (N, Hc, Wc, 8)
    y = y[..., :3]
    return jnp.transpose(y, (0, 3, 1, 2))                     # NHWC -> NCHW


def pixel_shuffle_nhwc(x, r):
    """NHWC pixel shuffle matching torch.nn.PixelShuffle channel ordering."""
    N, H, W, K = x.shape
    C = K // (r * r)
    x = x.reshape(N, H, W, C, r, r)
    x = jnp.transpose(x, (0, 1, 4, 2, 5, 3))
    return x.reshape(N, H * r, W * r, C)


def _conv_ref(x, w, b, act="none"):
    y = jax.lax.conv_general_dilated(
        x, w, window_strides=(1, 1), padding="SAME",
        dimension_numbers=("NHWC", "HWIO", "NHWC"))
    y = y + b[0]
    if act == "relu":
        y = jnp.maximum(y, 0.0)
    elif act == "sigmoid":
        y = jax.nn.sigmoid(y)
    return y


def srresnet_ref(params, x_nchw):
    """Pure-JAX f32 reference used only for correctness checking."""
    h = jnp.transpose(x_nchw, (0, 2, 3, 1))
    h = _conv_ref(h, *params["head"])
    for p in params["resblocks"]:
        t = jnp.maximum(jnp.einsum("nhwc,cd->nhwd", h, p["w1"]) + p["b1"][0], 0.0)
        h = h + jnp.einsum("nhwc,cd->nhwd", t, p["w2"]) + p["b2"][0]
    h = _conv_ref(h, *params["mid"])
    for p in params["subpixel"]:
        h = _conv_ref(h, p["w"], p["b"], act="relu")
        h = pixel_shuffle_nhwc(h, 2)
    h = _conv_ref(h, *params["tail"], act="sigmoid")
    return jnp.transpose(h, (0, 3, 1, 2))


# ----------------------------------------------------------------------------
if __name__ == "__main__":
    root = jax.random.PRNGKey(0)
    k_x, k_p = jax.random.split(root)

    params = init_params(k_p, num_residual_blocks=4, upscale_factor=2)
    x = jax.random.uniform(k_x, (2, 3, 16, 16), jnp.float32)  # small image batch

    # band_rows=8 exercises the multi-band halo path (2 bands at 16x16, 4 at 32x32).
    fwd = jax.jit(functools.partial(srresnet_forward, band_rows=8))
    y = jax.block_until_ready(fwd(params, x))
    assert y.shape == (2, 3, 32, 32), y.shape
    assert bool(jnp.all(jnp.isfinite(y)))

    y_ref = jax.block_until_ready(jax.jit(srresnet_ref)(params, x))
    max_diff = float(jnp.max(jnp.abs(y - y_ref)))
    # bf16 MXU operands with f32 accumulation/epilogues: allow a slightly wider
    # tolerance than the pure-f32 path.
    assert max_diff < 2e-2, f"mismatch vs reference: {max_diff}"

    print("KERNEL_OK")
</pallas_src>

<mosaic_0001>
module attributes {stable_mosaic.version = 11 : i64} {
  func.func @_trunk_kernel(%arg0: i32, %arg1: i32, %arg2: memref<1x1x14x22x4xf32, #tpu.memory_space<vmem>>, %arg3: memref<100x64xbf16, #tpu.memory_space<vmem>>, %arg4: memref<1x64xf32, #tpu.memory_space<vmem>>, %arg5: memref<4x64x32xbf16, #tpu.memory_space<vmem>>, %arg6: memref<4x1x32xf32, #tpu.memory_space<vmem>>, %arg7: memref<4x32x64xbf16, #tpu.memory_space<vmem>>, %arg8: memref<4x1x64xf32, #tpu.memory_space<vmem>>, %arg9: memref<576x32xbf16, #tpu.memory_space<vmem>>, %arg10: memref<1x32xf32, #tpu.memory_space<vmem>>, %arg11: memref<1x1x8x16x32xf32, #tpu.memory_space<vmem>>, %arg12: memref<180x64xf32, #tpu.memory_space<vmem>>) attributes {dimension_semantics = [#tpu.dimension_semantics<parallel>, #tpu.dimension_semantics<parallel>], iteration_bounds = array<i64: 2, 2>, scalar_prefetch = 0 : i64, scratch_operands = 1 : i64, tpu.core_type = #tpu.core_type<tc>, window_params = [{transform_indices = @transform_0, window_bounds = array<i64: 1, 1, 14, 22, 4>}, {pipeline_mode = #tpu.pipeline_mode<synchronous>, transform_indices = @transform_1, window_bounds = array<i64: 100, 64>}, {pipeline_mode = #tpu.pipeline_mode<synchronous>, transform_indices = @transform_2, window_bounds = array<i64: 1, 64>}, {pipeline_mode = #tpu.pipeline_mode<synchronous>, transform_indices = @transform_3, window_bounds = array<i64: 4, 64, 32>}, {pipeline_mode = #tpu.pipeline_mode<synchronous>, transform_indices = @transform_4, window_bounds = array<i64: 4, 1, 32>}, {pipeline_mode = #tpu.pipeline_mode<synchronous>, transform_indices = @transform_5, window_bounds = array<i64: 4, 32, 64>}, {pipeline_mode = #tpu.pipeline_mode<synchronous>, transform_indices = @transform_6, window_bounds = array<i64: 4, 1, 64>}, {pipeline_mode = #tpu.pipeline_mode<synchronous>, transform_indices = @transform_7, window_bounds = array<i64: 576, 32>}, {pipeline_mode = #tpu.pipeline_mode<synchronous>, transform_indices = @transform_8, window_bounds = array<i64: 1, 32>}, {transform_indices = @transform_9, window_bounds = array<i64: 1, 1, 8, 16, 32>}]} {
    %c0 = arith.constant 0 : index
    %c0_0 = arith.constant 0 : index
    %c0_1 = arith.constant 0 : index
    %c0_2 = arith.constant 0 : index
    %c0_3 = arith.constant 0 : index
    %0 = vector.load %arg2[%c0, %c0_0, %c0_1, %c0_2, %c0_3] : memref<1x1x14x22x4xf32, #tpu.memory_space<vmem>>, vector<1x1x14x22x4xf32>
    %1 = vector.shape_cast %0 : vector<1x1x14x22x4xf32> to vector<14x22x4xf32>
    %2 = vector.extract_strided_slice %1 {offsets = [0, 0, 0], sizes = [10, 18, 4], strides = [1, 1, 1]} : vector<14x22x4xf32> to vector<10x18x4xf32>
    %3 = vector.extract_strided_slice %1 {offsets = [0, 1, 0], sizes = [10, 18, 4], strides = [1, 1, 1]} : vector<14x22x4xf32> to vector<10x18x4xf32>
    %4 = vector.extract_strided_slice %1 {offsets = [0, 2, 0], sizes = [10, 18, 4], strides = [1, 1, 1]} : vector<14x22x4xf32> to vector<10x18x4xf32>
    %5 = vector.extract_strided_slice %1 {offsets = [0, 3, 0], sizes = [10, 18, 4], strides = [1, 1, 1]} : vector<14x22x4xf32> to vector<10x18x4xf32>
    %6 = vector.extract_strided_slice %1 {offsets = [0, 4, 0], sizes = [10, 18, 4], strides = [1, 1, 1]} : vector<14x22x4xf32> to vector<10x18x4xf32>
    %7 = vector.extract_strided_slice %1 {offsets = [1, 0, 0], sizes = [10, 18, 4], strides = [1, 1, 1]} : vector<14x22x4xf32> to vector<10x18x4xf32>
    %8 = vector.extract_strided_slice %1 {offsets = [1, 1, 0], sizes = [10, 18, 4], strides = [1, 1, 1]} : vector<14x22x4xf32> to vector<10x18x4xf32>
    %9 = vector.extract_strided_slice %1 {offsets = [1, 2, 0], sizes = [10, 18, 4], strides = [1, 1, 1]} : vector<14x22x4xf32> to vector<10x18x4xf32>
    %10 = vector.extract_strided_slice %1 {offsets = [1, 3, 0], sizes = [10, 18, 4], strides = [1, 1, 1]} : vector<14x22x4xf32> to vector<10x18x4xf32>
    %11 = vector.extract_strided_slice %1 {offsets = [1, 4, 0], sizes = [10, 18, 4], strides = [1, 1, 1]} : vector<14x22x4xf32> to vector<10x18x4xf32>
    %12 = vector.extract_strided_slice %1 {offsets = [2, 0, 0], sizes = [10, 18, 4], strides = [1, 1, 1]} : vector<14x22x4xf32> to vector<10x18x4xf32>
    %13 = vector.extract_strided_slice %1 {offsets = [2, 1, 0], sizes = [10, 18, 4], strides = [1, 1, 1]} : vector<14x22x4xf32> to vector<10x18x4xf32>
    %14 = vector.extract_strided_slice %1 {offsets = [2, 2, 0], sizes = [10, 18, 4], strides = [1, 1, 1]} : vector<14x22x4xf32> to vector<10x18x4xf32>
    %15 = vector.extract_strided_slice %1 {offsets = [2, 3, 0], sizes = [10, 18, 4], strides = [1, 1, 1]} : vector<14x22x4xf32> to vector<10x18x4xf32>
    %16 = vector.extract_strided_slice %1 {offsets = [2, 4, 0], sizes = [10, 18, 4], strides = [1, 1, 1]} : vector<14x22x4xf32> to vector<10x18x4xf32>
    %17 = vector.extract_strided_slice %1 {offsets = [3, 0, 0], sizes = [10, 18, 4], strides = [1, 1, 1]} : vector<14x22x4xf32> to vector<10x18x4xf32>
    %18 = vector.extract_strided_slice %1 {offsets = [3, 1, 0], sizes = [10, 18, 4], strides = [1, 1, 1]} : vector<14x22x4xf32> to vector<10x18x4xf32>
    %19 = vector.extract_strided_slice %1 {offsets = [3, 2, 0], sizes = [10, 18, 4], strides = [1, 1, 1]} : vector<14x22x4xf32> to vector<10x18x4xf32>
    %20 = vector.extract_strided_slice %1 {offsets = [3, 3, 0], sizes = [10, 18, 4], strides = [1, 1, 1]} : vector<14x22x4xf32> to vector<10x18x4xf32>
    %21 = vector.extract_strided_slice %1 {offsets = [3, 4, 0], sizes = [10, 18, 4], strides = [1, 1, 1]} : vector<14x22x4xf32> to vector<10x18x4xf32>
    %22 = vector.extract_strided_slice %1 {offsets = [4, 0, 0], sizes = [10, 18, 4], strides = [1, 1, 1]} : vector<14x22x4xf32> to vector<10x18x4xf32>
    %23 = vector.extract_strided_slice %1 {offsets = [4, 1, 0], sizes = [10, 18, 4], strides = [1, 1, 1]} : vector<14x22x4xf32> to vector<10x18x4xf32>
    %24 = vector.extract_strided_slice %1 {offsets = [4, 2, 0], sizes = [10, 18, 4], strides = [1, 1, 1]} : vector<14x22x4xf32> to vector<10x18x4xf32>
    %25 = vector.extract_strided_slice %1 {offsets = [4, 3, 0], sizes = [10, 18, 4], strides = [1, 1, 1]} : vector<14x22x4xf32> to vector<10x18x4xf32>
    %26 = vector.extract_strided_slice %1 {offsets = [4, 4, 0], sizes = [10, 18, 4], strides = [1, 1, 1]} : vector<14x22x4xf32> to vector<10x18x4xf32>
    %27 = tpu.concatenate %2, %3, %4, %5, %6, %7, %8, %9, %10, %11, %12, %13, %14, %15, %16, %17 in 2 : vector<10x18x4xf32>, vector<10x18x4xf32>, vector<10x18x4xf32>, vector<10x18x4xf32>, vector<10x18x4xf32>, vector<10x18x4xf32>, vector<10x18x4xf32>, vector<10x18x4xf32>, vector<10x18x4xf32>, vector<10x18x4xf32>, vector<10x18x4xf32>, vector<10x18x4xf32>, vector<10x18x4xf32>, vector<10x18x4xf32>, vector<10x18x4xf32>, vector<10x18x4xf32> -> vector<10x18x64xf32>
    %28 = tpu.concatenate %18, %19, %20, %21, %22, %23, %24, %25, %26 in 2 : vector<10x18x4xf32>, vector<10x18x4xf32>, vector<10x18x4xf32>, vector<10x18x4xf32>, vector<10x18x4xf32>, vector<10x18x4xf32>, vector<10x18x4xf32>, vector<10x18x4xf32>, vector<10x18x4xf32> -> vector<10x18x36xf32>
    %29 = tpu.concatenate %27, %28 in 2 : vector<10x18x64xf32>, vector<10x18x36xf32> -> vector<10x18x100xf32>
    %30 = vector.shape_cast %29 : vector<10x18x100xf32> to vector<180x100xf32>
    %31 = arith.truncf %30 : vector<180x100xf32> to vector<180x100xbf16>
    %c0_4 = arith.constant 0 : index
    %c0_5 = arith.constant 0 : index
    %32 = vector.load %arg3[%c0_4, %c0_5] : memref<100x64xbf16, #tpu.memory_space<vmem>>, vector<100x64xbf16>
    %cst = arith.constant dense<0.000000e+00> : vector<180x64xf32>
    %33 = tpu.matmul %31, %32, %cst {dimension_numbers = #tpu.dot_dimension_numbers<[1], [0], [0], [1], [0, 0, 1, 1], [], []>} : vector<180x100xbf16>, vector<100x64xbf16>, vector<180x64xf32> -> vector<180x64xf32>
    %c0_6 = arith.constant 0 : index
    %c0_7 = arith.constant 0 : index
    %34 = vector.load %arg4[%c0_6, %c0_7] : memref<1x64xf32, #tpu.memory_space<vmem>>, vector<1x64xf32>
    %35 = vector.broadcast %34 : vector<1x64xf32> to vector<180x64xf32>
    %36 = arith.addf %33, %35 : vector<180x64xf32>
    %c0_8 = arith.constant 0 : index
    %c0_9 = arith.constant 0 : index
    %37 = vector.load %arg12[%c0_8, %c0_9] : memref<180x64xf32, #tpu.memory_space<vmem>>, vector<180x64xf32>
    tpu.vector_store %arg12[%c0_8, %c0_9], %36 {strides = array<i32>} : memref<180x64xf32, #tpu.memory_space<vmem>>, vector<180x64xf32>,
    %c0_10 = arith.constant 0 : index
    %c0_11 = arith.constant 0 : index
    %38 = vector.load %arg12[%c0_10, %c0_11] : memref<180x64xf32, #tpu.memory_space<vmem>>, vector<180x64xf32>
    %39 = arith.truncf %38 : vector<180x64xf32> to vector<180x64xbf16>
    %c0_12 = arith.constant 0 : index
    %c0_13 = arith.constant 0 : index
    %c0_14 = arith.constant 0 : index
    %40 = vector.load %arg5[%c0_12, %c0_13, %c0_14] : memref<4x64x32xbf16, #tpu.memory_space<vmem>>, vector<1x64x32xbf16>
    %41 = vector.shape_cast %40 : vector<1x64x32xbf16> to vector<64x32xbf16>
    %cst_15 = arith.constant dense<0.000000e+00> : vector<180x32xf32>
    %42 = tpu.matmul %39, %41, %cst_15 {dimension_numbers = #tpu.dot_dimension_numbers<[1], [0], [0], [1], [0, 0, 1, 1], [], []>} : vector<180x64xbf16>, vector<64x32xbf16>, vector<180x32xf32> -> vector<180x32xf32>
    %c0_16 = arith.constant 0 : index
    %c0_17 = arith.constant 0 : index
    %c0_18 = arith.constant 0 : index
    %43 = vector.load %arg6[%c0_16, %c0_17, %c0_18] : memref<4x1x32xf32, #tpu.memory_space<vmem>>, vector<1x1x32xf32>
    %44 = vector.shape_cast %43 : vector<1x1x32xf32> to vector<1x32xf32>
    %45 = vector.broadcast %44 : vector<1x32xf32> to vector<180x32xf32>
    %46 = arith.addf %42, %45 : vector<180x32xf32>
    %cst_19 = arith.constant 0.000000e+00 : f32
    %47 = vector.broadcast %cst_19 : f32 to vector<180x32xf32>
    %48 = arith.maximumf %46, %47 : vector<180x32xf32>
    %49 = arith.truncf %48 : vector<180x32xf32> to vector<180x32xbf16>
    %c0_20 = arith.constant 0 : index
    %c0_21 = arith.constant 0 : index
    %c0_22 = arith.constant 0 : index
    %50 = vector.load %arg7[%c0_20, %c0_21, %c0_22] : memref<4x32x64xbf16, #tpu.memory_space<vmem>>, vector<1x32x64xbf16>
    %51 = vector.shape_cast %50 : vector<1x32x64xbf16> to vector<32x64xbf16>
    %cst_23 = arith.constant dense<0.000000e+00> : vector<180x64xf32>
    %52 = tpu.matmul %49, %51, %cst_23 {dimension_numbers = #tpu.dot_dimension_numbers<[1], [0], [0], [1], [0, 0, 1, 1], [], []>} : vector<180x32xbf16>, vector<32x64xbf16>, vector<180x64xf32> -> vector<180x64xf32>
    %c0_24 = arith.constant 0 : index
    %c0_25 = arith.constant 0 : index
    %c0_26 = arith.constant 0 : index
    %53 = vector.load %arg8[%c0_24, %c0_25, %c0_26] : memref<4x1x64xf32, #tpu.memory_space<vmem>>, vector<1x1x64xf32>
    %54 = vector.shape_cast %53 : vector<1x1x64xf32> to vector<1x64xf32>
    %55 = vector.broadcast %54 : vector<1x64xf32> to vector<180x64xf32>
    %56 = arith.addf %52, %55 : vector<180x64xf32>
    %c0_27 = arith.constant 0 : index
    %c0_28 = arith.constant 0 : index
    %57 = vector.load %arg12[%c0_27, %c0_28] : memref<180x64xf32, #tpu.memory_space<vmem>>, vector<180x64xf32>
    %58 = arith.addf %57, %56 : vector<180x64xf32>
    %c0_29 = arith.constant 0 : index
    %c0_30 = arith.constant 0 : index
    %59 = vector.load %arg12[%c0_29, %c0_30] : memref<180x64xf32, #tpu.memory_space<vmem>>, vector<180x64xf32>
    tpu.vector_store %arg12[%c0_29, %c0_30], %58 {strides = array<i32>} : memref<180x64xf32, #tpu.memory_space<vmem>>, vector<180x64xf32>,
    %c0_31 = arith.constant 0 : index
    %c0_32 = arith.constant 0 : index
    %60 = vector.load %arg12[%c0_31, %c0_32] : memref<180x64xf32, #tpu.memory_space<vmem>>, vector<180x64xf32>
    %61 = arith.truncf %60 : vector<180x64xf32> to vector<180x64xbf16>
    %c1 = arith.constant 1 : index
    %c0_33 = arith.constant 0 : index
    %c0_34 = arith.constant 0 : index
    %62 = vector.load %arg5[%c1, %c0_33, %c0_34] : memref<4x64x32xbf16, #tpu.memory_space<vmem>>, vector<1x64x32xbf16>
    %63 = vector.shape_cast %62 : vector<1x64x32xbf16> to vector<64x32xbf16>
    %cst_35 = arith.constant dense<0.000000e+00> : vector<180x32xf32>
    %64 = tpu.matmul %61, %63, %cst_35 {dimension_numbers = #tpu.dot_dimension_numbers<[1], [0], [0], [1], [0, 0, 1, 1], [], []>} : vector<180x64xbf16>, vector<64x32xbf16>, vector<180x32xf32> -> vector<180x32xf32>
    %c1_36 = arith.constant 1 : index
    %c0_37 = arith.constant 0 : index
    %c0_38 = arith.constant 0 : index
    %65 = vector.load %arg6[%c1_36, %c0_37, %c0_38] : memref<4x1x32xf32, #tpu.memory_space<vmem>>, vector<1x1x32xf32>
    %66 = vector.shape_cast %65 : vector<1x1x32xf32> to vector<1x32xf32>
    %67 = vector.broadcast %66 : vector<1x32xf32> to vector<180x32xf32>
    %68 = arith.addf %64, %67 : vector<180x32xf32>
    %cst_39 = arith.constant 0.000000e+00 : f32
    %69 = vector.broadcast %cst_39 : f32 to vector<180x32xf32>
    %70 = arith.maximumf %68, %69 : vector<180x32xf32>
    %71 = arith.truncf %70 : vector<180x32xf32> to vector<180x32xbf16>
    %c1_40 = arith.constant 1 : index
    %c0_41 = arith.constant 0 : index
    %c0_42 = arith.constant 0 : index
    %72 = vector.load %arg7[%c1_40, %c0_41, %c0_42] : memref<4x32x64xbf16, #tpu.memory_space<vmem>>, vector<1x32x64xbf16>
    %73 = vector.shape_cast %72 : vector<1x32x64xbf16> to vector<32x64xbf16>
    %cst_43 = arith.constant dense<0.000000e+00> : vector<180x64xf32>
    %74 = tpu.matmul %71, %73, %cst_43 {dimension_numbers = #tpu.dot_dimension_numbers<[1], [0], [0], [1], [0, 0, 1, 1], [], []>} : vector<180x32xbf16>, vector<32x64xbf16>, vector<180x64xf32> -> vector<180x64xf32>
    %c1_44 = arith.constant 1 : index
    %c0_45 = arith.constant 0 : index
    %c0_46 = arith.constant 0 : index
    %75 = vector.load %arg8[%c1_44, %c0_45, %c0_46] : memref<4x1x64xf32, #tpu.memory_space<vmem>>, vector<1x1x64xf32>
    %76 = vector.shape_cast %75 : vector<1x1x64xf32> to vector<1x64xf32>
    %77 = vector.broadcast %76 : vector<1x64xf32> to vector<180x64xf32>
    %78 = arith.addf %74, %77 : vector<180x64xf32>
    %c0_47 = arith.constant 0 : index
    %c0_48 = arith.constant 0 : index
    %79 = vector.load %arg12[%c0_47, %c0_48] : memref<180x64xf32, #tpu.memory_space<vmem>>, vector<180x64xf32>
    %80 = arith.addf %79, %78 : vector<180x64xf32>
    %c0_49 = arith.constant 0 : index
    %c0_50 = arith.constant 0 : index
    %81 = vector.load %arg12[%c0_49, %c0_50] : memref<180x64xf32, #tpu.memory_space<vmem>>, vector<180x64xf32>
    tpu.vector_store %arg12[%c0_49, %c0_50], %80 {strides = array<i32>} : memref<180x64xf32, #tpu.memory_space<vmem>>, vector<180x64xf32>,
    %c0_51 = arith.constant 0 : index
    %c0_52 = arith.constant 0 : index
    %82 = vector.load %arg12[%c0_51, %c0_52] : memref<180x64xf32, #tpu.memory_space<vmem>>, vector<180x64xf32>
    %83 = arith.truncf %82 : vector<180x64xf32> to vector<180x64xbf16>
    %c2 = arith.constant 2 : index
    %c0_53 = arith.constant 0 : index
    %c0_54 = arith.constant 0 : index
    %84 = vector.load %arg5[%c2, %c0_53, %c0_54] : memref<4x64x32xbf16, #tpu.memory_space<vmem>>, vector<1x64x32xbf16>
    %85 = vector.shape_cast %84 : vector<1x64x32xbf16> to vector<64x32xbf16>
    %cst_55 = arith.constant dense<0.000000e+00> : vector<180x32xf32>
    %86 = tpu.matmul %83, %85, %cst_55 {dimension_numbers = #tpu.dot_dimension_numbers<[1], [0], [0], [1], [0, 0, 1, 1], [], []>} : vector<180x64xbf16>, vector<64x32xbf16>, vector<180x32xf32> -> vector<180x32xf32>
    %c2_56 = arith.constant 2 : index
    %c0_57 = arith.constant 0 : index
    %c0_58 = arith.constant 0 : index
    %87 = vector.load %arg6[%c2_56, %c0_57, %c0_58] : memref<4x1x32xf32, #tpu.memory_space<vmem>>, vector<1x1x32xf32>
    %88 = vector.shape_cast %87 : vector<1x1x32xf32> to vector<1x32xf32>
    %89 = vector.broadcast %88 : vector<1x32xf32> to vector<180x32xf32>
    %90 = arith.addf %86, %89 : vector<180x32xf32>
    %cst_59 = arith.constant 0.000000e+00 : f32
    %91 = vector.broadcast %cst_59 : f32 to vector<180x32xf32>
    %92 = arith.maximumf %90, %91 : vector<180x32xf32>
    %93 = arith.truncf %92 : vector<180x32xf32> to vector<180x32xbf16>
    %c2_60 = arith.constant 2 : index
    %c0_61 = arith.constant 0 : index
    %c0_62 = arith.constant 0 : index
    %94 = vector.load %arg7[%c2_60, %c0_61, %c0_62] : memref<4x32x64xbf16, #tpu.memory_space<vmem>>, vector<1x32x64xbf16>
    %95 = vector.shape_cast %94 : vector<1x32x64xbf16> to vector<32x64xbf16>
    %cst_63 = arith.constant dense<0.000000e+00> : vector<180x64xf32>
    %96 = tpu.matmul %93, %95, %cst_63 {dimension_numbers = #tpu.dot_dimension_numbers<[1], [0], [0], [1], [0, 0, 1, 1], [], []>} : vector<180x32xbf16>, vector<32x64xbf16>, vector<180x64xf32> -> vector<180x64xf32>
    %c2_64 = arith.constant 2 : index
    %c0_65 = arith.constant 0 : index
    %c0_66 = arith.constant 0 : index
    %97 = vector.load %arg8[%c2_64, %c0_65, %c0_66] : memref<4x1x64xf32, #tpu.memory_space<vmem>>, vector<1x1x64xf32>
    %98 = vector.shape_cast %97 : vector<1x1x64xf32> to vector<1x64xf32>
    %99 = vector.broadcast %98 : vector<1x64xf32> to vector<180x64xf32>
    %100 = arith.addf %96, %99 : vector<180x64xf32>
    %c0_67 = arith.constant 0 : index
    %c0_68 = arith.constant 0 : index
    %101 = vector.load %arg12[%c0_67, %c0_68] : memref<180x64xf32, #tpu.memory_space<vmem>>, vector<180x64xf32>
    %102 = arith.addf %101, %100 : vector<180x64xf32>
    %c0_69 = arith.constant 0 : index
    %c0_70 = arith.constant 0 : index
    %103 = vector.load %arg12[%c0_69, %c0_70] : memref<180x64xf32, #tpu.memory_space<vmem>>, vector<180x64xf32>
    tpu.vector_store %arg12[%c0_69, %c0_70], %102 {strides = array<i32>} : memref<180x64xf32, #tpu.memory_space<vmem>>, vector<180x64xf32>,
    %c0_71 = arith.constant 0 : index
    %c0_72 = arith.constant 0 : index
    %104 = vector.load %arg12[%c0_71, %c0_72] : memref<180x64xf32, #tpu.memory_space<vmem>>, vector<180x64xf32>
    %105 = arith.truncf %104 : vector<180x64xf32> to vector<180x64xbf16>
    %c3 = arith.constant 3 : index
    %c0_73 = arith.constant 0 : index
    %c0_74 = arith.constant 0 : index
    %106 = vector.load %arg5[%c3, %c0_73, %c0_74] : memref<4x64x32xbf16, #tpu.memory_space<vmem>>, vector<1x64x32xbf16>
    %107 = vector.shape_cast %106 : vector<1x64x32xbf16> to vector<64x32xbf16>
    %cst_75 = arith.constant dense<0.000000e+00> : vector<180x32xf32>
    %108 = tpu.matmul %105, %107, %cst_75 {dimension_numbers = #tpu.dot_dimension_numbers<[1], [0], [0], [1], [0, 0, 1, 1], [], []>} : vector<180x64xbf16>, vector<64x32xbf16>, vector<180x32xf32> -> vector<180x32xf32>
    %c3_76 = arith.constant 3 : index
    %c0_77 = arith.constant 0 : index
    %c0_78 = arith.constant 0 : index
    %109 = vector.load %arg6[%c3_76, %c0_77, %c0_78] : memref<4x1x32xf32, #tpu.memory_space<vmem>>, vector<1x1x32xf32>
    %110 = vector.shape_cast %109 : vector<1x1x32xf32> to vector<1x32xf32>
    %111 = vector.broadcast %110 : vector<1x32xf32> to vector<180x32xf32>
    %112 = arith.addf %108, %111 : vector<180x32xf32>
    %cst_79 = arith.constant 0.000000e+00 : f32
    %113 = vector.broadcast %cst_79 : f32 to vector<180x32xf32>
    %114 = arith.maximumf %112, %113 : vector<180x32xf32>
    %115 = arith.truncf %114 : vector<180x32xf32> to vector<180x32xbf16>
    %c3_80 = arith.constant 3 : index
    %c0_81 = arith.constant 0 : index
    %c0_82 = arith.constant 0 : index
    %116 = vector.load %arg7[%c3_80, %c0_81, %c0_82] : memref<4x32x64xbf16, #tpu.memory_space<vmem>>, vector<1x32x64xbf16>
    %117 = vector.shape_cast %116 : vector<1x32x64xbf16> to vector<32x64xbf16>
    %cst_83 = arith.constant dense<0.000000e+00> : vector<180x64xf32>
    %118 = tpu.matmul %115, %117, %cst_83 {dimension_numbers = #tpu.dot_dimension_numbers<[1], [0], [0], [1], [0, 0, 1, 1], [], []>} : vector<180x32xbf16>, vector<32x64xbf16>, vector<180x64xf32> -> vector<180x64xf32>
    %c3_84 = arith.constant 3 : index
    %c0_85 = arith.constant 0 : index
    %c0_86 = arith.constant 0 : index
    %119 = vector.load %arg8[%c3_84, %c0_85, %c0_86] : memref<4x1x64xf32, #tpu.memory_space<vmem>>, vector<1x1x64xf32>
    %120 = vector.shape_cast %119 : vector<1x1x64xf32> to vector<1x64xf32>
    %121 = vector.broadcast %120 : vector<1x64xf32> to vector<180x64xf32>
    %122 = arith.addf %118, %121 : vector<180x64xf32>
    %c0_87 = arith.constant 0 : index
    %c0_88 = arith.constant 0 : index
    %123 = vector.load %arg12[%c0_87, %c0_88] : memref<180x64xf32, #tpu.memory_space<vmem>>, vector<180x64xf32>
    %124 = arith.addf %123, %122 : vector<180x64xf32>
    %c0_89 = arith.constant 0 : index
    %c0_90 = arith.constant 0 : index
    %125 = vector.load %arg12[%c0_89, %c0_90] : memref<180x64xf32, #tpu.memory_space<vmem>>, vector<180x64xf32>
    tpu.vector_store %arg12[%c0_89, %c0_90], %124 {strides = array<i32>} : memref<180x64xf32, #tpu.memory_space<vmem>>, vector<180x64xf32>,
    %c0_91 = arith.constant 0 : index
    %c0_92 = arith.constant 0 : index
    %126 = vector.load %arg12[%c0_91, %c0_92] : memref<180x64xf32, #tpu.memory_space<vmem>>, vector<180x64xf32>
    %127 = vector.shape_cast %126 : vector<180x64xf32> to vector<10x18x64xf32>
    %128 = tpu.iota {dimensions = array<i32: 0>} : vector<10x18x1xi32>
    %129 = tpu.iota {dimensions = array<i32: 1>} : vector<10x18x1xi32>
    %c0_i32 = arith.constant 0 : i32
    %130 = vector.broadcast %c0_i32 : i32 to vector<10x18x1xi32>
    %131 = arith.cmpi eq, %129, %130 : vector<10x18x1xi32>
    %c17_i32 = arith.constant 17 : i32
    %132 = vector.broadcast %c17_i32 : i32 to vector<10x18x1xi32>
    %133 = arith.cmpi eq, %129, %132 : vector<10x18x1xi32>
    %134 = arith.ori %131, %133 : vector<10x18x1xi1>
    %c0_i32_93 = arith.constant 0 : i32
    %135 = arith.cmpi eq, %arg1, %c0_i32_93 : i32
    %c0_i32_94 = arith.constant 0 : i32
    %136 = vector.broadcast %c0_i32_94 : i32 to vector<10x18x1xi32>
    %137 = arith.cmpi eq, %128, %136 : vector<10x18x1xi32>
    %138 = vector.broadcast %135 : i1 to vector<10x18x1xi1>
    %139 = arith.andi %138, %137 : vector<10x18x1xi1>
    %140 = arith.ori %134, %139 : vector<10x18x1xi1>
    %c1_i32 = arith.constant 1 : i32
    %141 = arith.cmpi eq, %arg1, %c1_i32 : i32
    %c9_i32 = arith.constant 9 : i32
    %142 = vector.broadcast %c9_i32 : i32 to vector<10x18x1xi32>
    %143 = arith.cmpi eq, %128, %142 : vector<10x18x1xi32>
    %144 = vector.broadcast %141 : i1 to vector<10x18x1xi1>
    %145 = arith.andi %144, %143 : vector<10x18x1xi1>
    %146 = arith.ori %140, %145 : vector<10x18x1xi1>
    %cst_95 = arith.constant 0.000000e+00 : f32
    %147 = vector.shape_cast %146 : vector<10x18x1xi1> to vector<10x18x1xi1>
    %148 = vector.broadcast %147 : vector<10x18x1xi1> to vector<10x18x64xi1>
    %149 = vector.broadcast %cst_95 : f32 to vector<10x18x64xf32>
    %150 = arith.select %148, %149, %127 : vector<10x18x64xi1>, vector<10x18x64xf32>
    %151 = vector.extract_strided_slice %150 {offsets = [0, 0, 0], sizes = [8, 16, 64], strides = [1, 1, 1]} : vector<10x18x64xf32> to vector<8x16x64xf32>
    %152 = vector.extract_strided_slice %150 {offsets = [0, 1, 0], sizes = [8, 16, 64], strides = [1, 1, 1]} : vector<10x18x64xf32> to vector<8x16x64xf32>
    %153 = vector.extract_strided_slice %150 {offsets = [0, 2, 0], sizes = [8, 16, 64], strides = [1, 1, 1]} : vector<10x18x64xf32> to vector<8x16x64xf32>
    %154 = vector.extract_strided_slice %150 {offsets = [1, 0, 0], sizes = [8, 16, 64], strides = [1, 1, 1]} : vector<10x18x64xf32> to vector<8x16x64xf32>
    %155 = vector.extract_strided_slice %150 {offsets = [1, 1, 0], sizes = [8, 16, 64], strides = [1, 1, 1]} : vector<10x18x64xf32> to vector<8x16x64xf32>
    %156 = vector.extract_strided_slice %150 {offsets = [1, 2, 0], sizes = [8, 16, 64], strides = [1, 1, 1]} : vector<10x18x64xf32> to vector<8x16x64xf32>
    %157 = vector.extract_strided_slice %150 {offsets = [2, 0, 0], sizes = [8, 16, 64], strides = [1, 1, 1]} : vector<10x18x64xf32> to vector<8x16x64xf32>
    %158 = vector.extract_strided_slice %150 {offsets = [2, 1, 0], sizes = [8, 16, 64], strides = [1, 1, 1]} : vector<10x18x64xf32> to vector<8x16x64xf32>
    %159 = vector.extract_strided_slice %150 {offsets = [2, 2, 0], sizes = [8, 16, 64], strides = [1, 1, 1]} : vector<10x18x64xf32> to vector<8x16x64xf32>
    %160 = tpu.concatenate %151, %152, %153, %154, %155, %156, %157, %158, %159 in 2 : vector<8x16x64xf32>, vector<8x16x64xf32>, vector<8x16x64xf32>, vector<8x16x64xf32>, vector<8x16x64xf32>, vector<8x16x64xf32>, vector<8x16x64xf32>, vector<8x16x64xf32>, vector<8x16x64xf32> -> vector<8x16x576xf32>
    %161 = vector.shape_cast %160 : vector<8x16x576xf32> to vector<128x576xf32>
    %162 = arith.truncf %161 : vector<128x576xf32> to vector<128x576xbf16>
    %c0_96 = arith.constant 0 : index
    %c0_97 = arith.constant 0 : index
    %163 = vector.load %arg9[%c0_96, %c0_97] : memref<576x32xbf16, #tpu.memory_space<vmem>>, vector<576x32xbf16>
    %cst_98 = arith.constant dense<0.000000e+00> : vector<128x32xf32>
    %164 = tpu.matmul %162, %163, %cst_98 {dimension_numbers = #tpu.dot_dimension_numbers<[1], [0], [0], [1], [0, 0, 1, 1], [], []>} : vector<128x576xbf16>, vector<576x32xbf16>, vector<128x32xf32> -> vector<128x32xf32>
    %c0_99 = arith.constant 0 : index
    %c0_100 = arith.constant 0 : index
    %165 = vector.load %arg10[%c0_99, %c0_100] : memref<1x32xf32, #tpu.memory_space<vmem>>, vector<1x32xf32>
    %166 = vector.broadcast %165 : vector<1x32xf32> to vector<128x32xf32>
    %167 = arith.addf %164, %166 : vector<128x32xf32>
    %168 = vector.shape_cast %167 : vector<128x32xf32> to vector<8x16x32xf32>
    %c0_101 = arith.constant 0 : index
    %c0_102 = arith.constant 0 : index
    %c0_103 = arith.constant 0 : index
    %c0_104 = arith.constant 0 : index
    %c0_105 = arith.constant 0 : index
    %169 = vector.load %arg11[%c0_101, %c0_102, %c0_103, %c0_104, %c0_105] : memref<1x1x8x16x32xf32, #tpu.memory_space<vmem>>, vector<1x1x8x16x32xf32>
    %170 = vector.shape_cast %169 : vector<1x1x8x16x32xf32> to vector<8x16x32xf32>
    %171 = vector.shape_cast %168 : vector<8x16x32xf32> to vector<1x1x8x16x32xf32>
    tpu.vector_store %arg11[%c0_101, %c0_102, %c0_103, %c0_104, %c0_105], %171 {strides = array<i32>} : memref<1x1x8x16x32xf32, #tpu.memory_space<vmem>>, vector<1x1x8x16x32xf32>,
    return
  }
  func.func @transform_0(%arg0: i32, %arg1: i32) -> (i32, i32, i32, i32, i32) {
    %c0_i32 = arith.constant 0 : i32
    %c0_i32_0 = arith.constant 0 : i32
    %c0_i32_1 = arith.constant 0 : i32
    %c0_i32_2 = arith.constant 0 : i32
    return %arg0, %arg1, %c0_i32, %c0_i32_0, %c0_i32_1 : i32, i32, i32, i32, i32
  }
  func.func @transform_1(%arg0: i32, %arg1: i32) -> (i32, i32) {
    %c0_i32 = arith.constant 0 : i32
    %c0_i32_0 = arith.constant 0 : i32
    %c0_i32_1 = arith.constant 0 : i32
    return %c0_i32, %c0_i32_0 : i32, i32
  }
  func.func @transform_2(%arg0: i32, %arg1: i32) -> (i32, i32) {
    %c0_i32 = arith.constant 0 : i32
    %c0_i32_0 = arith.constant 0 : i32
    %c0_i32_1 = arith.constant 0 : i32
    return %c0_i32, %c0_i32_0 : i32, i32
  }
  func.func @transform_3(%arg0: i32, %arg1: i32) -> (i32, i32, i32) {
    %c0_i32 = arith.constant 0 : i32
    %c0_i32_0 = arith.constant 0 : i32
    %c0_i32_1 = arith.constant 0 : i32
    %c0_i32_2 = arith.constant 0 : i32
    return %c0_i32, %c0_i32_0, %c0_i32_1 : i32, i32, i32
  }
  func.func @transform_4(%arg0: i32, %arg1: i32) -> (i32, i32, i32) {
    %c0_i32 = arith.constant 0 : i32
    %c0_i32_0 = arith.constant 0 : i32
    %c0_i32_1 = arith.constant 0 : i32
    %c0_i32_2 = arith.constant 0 : i32
    return %c0_i32, %c0_i32_0, %c0_i32_1 : i32, i32, i32
  }
  func.func @transform_5(%arg0: i32, %arg1: i32) -> (i32, i32, i32) {
    %c0_i32 = arith.constant 0 : i32
    %c0_i32_0 = arith.constant 0 : i32
    %c0_i32_1 = arith.constant 0 : i32
    %c0_i32_2 = arith.constant 0 : i32
    return %c0_i32, %c0_i32_0, %c0_i32_1 : i32, i32, i32
  }
  func.func @transform_6(%arg0: i32, %arg1: i32) -> (i32, i32, i32) {
    %c0_i32 = arith.constant 0 : i32
    %c0_i32_0 = arith.constant 0 : i32
    %c0_i32_1 = arith.constant 0 : i32
    %c0_i32_2 = arith.constant 0 : i32
    return %c0_i32, %c0_i32_0, %c0_i32_1 : i32, i32, i32
  }
  func.func @transform_7(%arg0: i32, %arg1: i32) -> (i32, i32) {
    %c0_i32 = arith.constant 0 : i32
    %c0_i32_0 = arith.constant 0 : i32
    %c0_i32_1 = arith.constant 0 : i32
    return %c0_i32, %c0_i32_0 : i32, i32
  }
  func.func @transform_8(%arg0: i32, %arg1: i32) -> (i32, i32) {
    %c0_i32 = arith.constant 0 : i32
    %c0_i32_0 = arith.constant 0 : i32
    %c0_i32_1 = arith.constant 0 : i32
    return %c0_i32, %c0_i32_0 : i32, i32
  }
  func.func @transform_9(%arg0: i32, %arg1: i32) -> (i32, i32, i32, i32, i32) {
    %c0_i32 = arith.constant 0 : i32
    %c0_i32_0 = arith.constant 0 : i32
    %c0_i32_1 = arith.constant 0 : i32
    %c0_i32_2 = arith.constant 0 : i32
    return %arg0, %arg1, %c0_i32, %c0_i32_0, %c0_i32_1 : i32, i32, i32, i32, i32
  }
}

module attributes {stable_mosaic.version = 11 : i64} {
  func.func @_subpixel_kernel(%arg0: i32, %arg1: i32, %arg2: memref<1x1x10x18x32xf32, #tpu.memory_space<vmem>>, %arg3: memref<288x128xbf16, #tpu.memory_space<vmem>>, %arg4: memref<1x128xf32, #tpu.memory_space<vmem>>, %arg5: memref<1x1x8x32x64xf32, #tpu.memory_space<vmem>>) attributes {dimension_semantics = [#tpu.dimension_semantics<parallel>, #tpu.dimension_semantics<parallel>], iteration_bounds = array<i64: 2, 2>, scalar_prefetch = 0 : i64, scratch_operands = 0 : i64, tpu.core_type = #tpu.core_type<tc>, window_params = [{transform_indices = @transform_0, window_bounds = array<i64: 1, 1, 10, 18, 32>}, {pipeline_mode = #tpu.pipeline_mode<synchronous>, transform_indices = @transform_1, window_bounds = array<i64: 288, 128>}, {pipeline_mode = #tpu.pipeline_mode<synchronous>, transform_indices = @transform_2, window_bounds = array<i64: 1, 128>}, {transform_indices = @transform_3, window_bounds = array<i64: 1, 1, 8, 32, 64>}]} {
    %c0 = arith.constant 0 : index
    %c0_0 = arith.constant 0 : index
    %c0_1 = arith.constant 0 : index
    %c0_2 = arith.constant 0 : index
    %c0_3 = arith.constant 0 : index
    %0 = vector.load %arg2[%c0, %c0_0, %c0_1, %c0_2, %c0_3] : memref<1x1x10x18x32xf32, #tpu.memory_space<vmem>>, vector<1x1x10x18x32xf32>
    %1 = vector.shape_cast %0 : vector<1x1x10x18x32xf32> to vector<10x18x32xf32>
    %2 = vector.extract_strided_slice %1 {offsets = [0, 0, 0], sizes = [8, 16, 32], strides = [1, 1, 1]} : vector<10x18x32xf32> to vector<8x16x32xf32>
    %3 = vector.extract_strided_slice %1 {offsets = [0, 1, 0], sizes = [8, 16, 32], strides = [1, 1, 1]} : vector<10x18x32xf32> to vector<8x16x32xf32>
    %4 = vector.extract_strided_slice %1 {offsets = [0, 2, 0], sizes = [8, 16, 32], strides = [1, 1, 1]} : vector<10x18x32xf32> to vector<8x16x32xf32>
    %5 = vector.extract_strided_slice %1 {offsets = [1, 0, 0], sizes = [8, 16, 32], strides = [1, 1, 1]} : vector<10x18x32xf32> to vector<8x16x32xf32>
    %6 = vector.extract_strided_slice %1 {offsets = [1, 1, 0], sizes = [8, 16, 32], strides = [1, 1, 1]} : vector<10x18x32xf32> to vector<8x16x32xf32>
    %7 = vector.extract_strided_slice %1 {offsets = [1, 2, 0], sizes = [8, 16, 32], strides = [1, 1, 1]} : vector<10x18x32xf32> to vector<8x16x32xf32>
    %8 = vector.extract_strided_slice %1 {offsets = [2, 0, 0], sizes = [8, 16, 32], strides = [1, 1, 1]} : vector<10x18x32xf32> to vector<8x16x32xf32>
    %9 = vector.extract_strided_slice %1 {offsets = [2, 1, 0], sizes = [8, 16, 32], strides = [1, 1, 1]} : vector<10x18x32xf32> to vector<8x16x32xf32>
    %10 = vector.extract_strided_slice %1 {offsets = [2, 2, 0], sizes = [8, 16, 32], strides = [1, 1, 1]} : vector<10x18x32xf32> to vector<8x16x32xf32>
    %11 = tpu.concatenate %2, %3, %4, %5, %6, %7, %8, %9, %10 in 2 : vector<8x16x32xf32>, vector<8x16x32xf32>, vector<8x16x32xf32>, vector<8x16x32xf32>, vector<8x16x32xf32>, vector<8x16x32xf32>, vector<8x16x32xf32>, vector<8x16x32xf32>, vector<8x16x32xf32> -> vector<8x16x288xf32>
    %12 = vector.shape_cast %11 : vector<8x16x288xf32> to vector<128x288xf32>
    %13 = arith.truncf %12 : vector<128x288xf32> to vector<128x288xbf16>
    %c0_4 = arith.constant 0 : index
    %c0_5 = arith.constant 0 : index
    %14 = vector.load %arg3[%c0_4, %c0_5] : memref<288x128xbf16, #tpu.memory_space<vmem>>, vector<288x128xbf16>
    %cst = arith.constant dense<0.000000e+00> : vector<128x128xf32>
    %15 = tpu.matmul %13, %14, %cst {dimension_numbers = #tpu.dot_dimension_numbers<[1], [0], [0], [1], [0, 0, 1, 1], [], []>} : vector<128x288xbf16>, vector<288x128xbf16>, vector<128x128xf32> -> vector<128x128xf32>
    %c0_6 = arith.constant 0 : index
    %c0_7 = arith.constant 0 : index
    %16 = vector.load %arg4[%c0_6, %c0_7] : memref<1x128xf32, #tpu.memory_space<vmem>>, vector<1x128xf32>
    %17 = vector.broadcast %16 : vector<1x128xf32> to vector<128x128xf32>
    %18 = arith.addf %15, %17 : vector<128x128xf32>
    %cst_8 = arith.constant 0.000000e+00 : f32
    %19 = vector.broadcast %cst_8 : f32 to vector<128x128xf32>
    %20 = arith.maximumf %18, %19 : vector<128x128xf32>
    %21 = vector.shape_cast %20 : vector<128x128xf32> to vector<8x16x128xf32>
    %22 = vector.extract_strided_slice %21 {offsets = [0, 0, 0], sizes = [8, 16, 64], strides = [1, 1, 1]} : vector<8x16x128xf32> to vector<8x16x64xf32>
    %c0_9 = arith.constant 0 : index
    %c0_10 = arith.constant 0 : index
    %c0_11 = arith.constant 0 : index
    %c0_12 = arith.constant 0 : index
    %c0_13 = arith.constant 0 : index
    %23 = vector.load %arg5[%c0_9, %c0_10, %c0_11, %c0_12, %c0_13] : memref<1x1x8x32x64xf32, #tpu.memory_space<vmem>>, vector<1x1x8x16x64xf32>
    %24 = vector.shape_cast %23 : vector<1x1x8x16x64xf32> to vector<8x16x64xf32>
    %25 = vector.shape_cast %22 : vector<8x16x64xf32> to vector<1x1x8x16x64xf32>
    tpu.vector_store %arg5[%c0_9, %c0_10, %c0_11, %c0_12, %c0_13], %25 {strides = array<i32>} : memref<1x1x8x32x64xf32, #tpu.memory_space<vmem>>, vector<1x1x8x16x64xf32>,
    %26 = vector.extract_strided_slice %21 {offsets = [0, 0, 64], sizes = [8, 16, 64], strides = [1, 1, 1]} : vector<8x16x128xf32> to vector<8x16x64xf32>
    %c0_14 = arith.constant 0 : index
    %c0_15 = arith.constant 0 : index
    %c0_16 = arith.constant 0 : index
    %c16 = arith.constant 16 : index
    %c0_17 = arith.constant 0 : index
    %27 = vector.load %arg5[%c0_14, %c0_15, %c0_16, %c16, %c0_17] : memref<1x1x8x32x64xf32, #tpu.memory_space<vmem>>, vector<1x1x8x16x64xf32>
    %28 = vector.shape_cast %27 : vector<1x1x8x16x64xf32> to vector<8x16x64xf32>
    %29 = vector.shape_cast %26 : vector<8x16x64xf32> to vector<1x1x8x16x64xf32>
    tpu.vector_store %arg5[%c0_14, %c0_15, %c0_16, %c16, %c0_17], %29 {strides = array<i32>} : memref<1x1x8x32x64xf32, #tpu.memory_space<vmem>>, vector<1x1x8x16x64xf32>,
    return
  }
  func.func @transform_0(%arg0: i32, %arg1: i32) -> (i32, i32, i32, i32, i32) {
    %c0_i32 = arith.constant 0 : i32
    %c0_i32_0 = arith.constant 0 : i32
    %c0_i32_1 = arith.constant 0 : i32
    %c0_i32_2 = arith.constant 0 : i32
    return %arg0, %arg1, %c0_i32, %c0_i32_0, %c0_i32_1 : i32, i32, i32, i32, i32
  }
  func.func @transform_1(%arg0: i32, %arg1: i32) -> (i32, i32) {
    %c0_i32 = arith.constant 0 : i32
    %c0_i32_0 = arith.constant 0 : i32
    %c0_i32_1 = arith.constant 0 : i32
    return %c0_i32, %c0_i32_0 : i32, i32
  }
  func.func @transform_2(%arg0: i32, %arg1: i32) -> (i32, i32) {
    %c0_i32 = arith.constant 0 : i32
    %c0_i32_0 = arith.constant 0 : i32
    %c0_i32_1 = arith.constant 0 : i32
    return %c0_i32, %c0_i32_0 : i32, i32
  }
  func.func @transform_3(%arg0: i32, %arg1: i32) -> (i32, i32, i32, i32, i32) {
    %c0_i32 = arith.constant 0 : i32
    %c0_i32_0 = arith.constant 0 : i32
    %c0_i32_1 = arith.constant 0 : i32
    %c0_i32_2 = arith.constant 0 : i32
    return %arg0, %arg1, %c0_i32, %c0_i32_0, %c0_i32_1 : i32, i32, i32, i32, i32
  }
}

module attributes {stable_mosaic.version = 11 : i64} {
  func.func @_tail_kernel(%arg0: i32, %arg1: i32, %arg2: memref<1x1x10x34x32xf32, #tpu.memory_space<vmem>>, %arg3: memref<288x8xbf16, #tpu.memory_space<vmem>>, %arg4: memref<1x8xf32, #tpu.memory_space<vmem>>, %arg5: memref<1x1x8x32x8xf32, #tpu.memory_space<vmem>>) attributes {dimension_semantics = [#tpu.dimension_semantics<parallel>, #tpu.dimension_semantics<parallel>], iteration_bounds = array<i64: 2, 4>, scalar_prefetch = 0 : i64, scratch_operands = 0 : i64, tpu.core_type = #tpu.core_type<tc>, window_params = [{transform_indices = @transform_0, window_bounds = array<i64: 1, 1, 10, 34, 32>}, {pipeline_mode = #tpu.pipeline_mode<synchronous>, transform_indices = @transform_1, window_bounds = array<i64: 288, 8>}, {pipeline_mode = #tpu.pipeline_mode<synchronous>, transform_indices = @transform_2, window_bounds = array<i64: 1, 8>}, {transform_indices = @transform_3, window_bounds = array<i64: 1, 1, 8, 32, 8>}]} {
    %c0 = arith.constant 0 : index
    %c0_0 = arith.constant 0 : index
    %c0_1 = arith.constant 0 : index
    %c0_2 = arith.constant 0 : index
    %c0_3 = arith.constant 0 : index
    %0 = vector.load %arg2[%c0, %c0_0, %c0_1, %c0_2, %c0_3] : memref<1x1x10x34x32xf32, #tpu.memory_space<vmem>>, vector<1x1x10x34x32xf32>
    %1 = vector.shape_cast %0 : vector<1x1x10x34x32xf32> to vector<10x34x32xf32>
    %2 = vector.extract_strided_slice %1 {offsets = [0, 0, 0], sizes = [8, 32, 32], strides = [1, 1, 1]} : vector<10x34x32xf32> to vector<8x32x32xf32>
    %3 = vector.extract_strided_slice %1 {offsets = [0, 1, 0], sizes = [8, 32, 32], strides = [1, 1, 1]} : vector<10x34x32xf32> to vector<8x32x32xf32>
    %4 = vector.extract_strided_slice %1 {offsets = [0, 2, 0], sizes = [8, 32, 32], strides = [1, 1, 1]} : vector<10x34x32xf32> to vector<8x32x32xf32>
    %5 = vector.extract_strided_slice %1 {offsets = [1, 0, 0], sizes = [8, 32, 32], strides = [1, 1, 1]} : vector<10x34x32xf32> to vector<8x32x32xf32>
    %6 = vector.extract_strided_slice %1 {offsets = [1, 1, 0], sizes = [8, 32, 32], strides = [1, 1, 1]} : vector<10x34x32xf32> to vector<8x32x32xf32>
    %7 = vector.extract_strided_slice %1 {offsets = [1, 2, 0], sizes = [8, 32, 32], strides = [1, 1, 1]} : vector<10x34x32xf32> to vector<8x32x32xf32>
    %8 = vector.extract_strided_slice %1 {offsets = [2, 0, 0], sizes = [8, 32, 32], strides = [1, 1, 1]} : vector<10x34x32xf32> to vector<8x32x32xf32>
    %9 = vector.extract_strided_slice %1 {offsets = [2, 1, 0], sizes = [8, 32, 32], strides = [1, 1, 1]} : vector<10x34x32xf32> to vector<8x32x32xf32>
    %10 = vector.extract_strided_slice %1 {offsets = [2, 2, 0], sizes = [8, 32, 32], strides = [1, 1, 1]} : vector<10x34x32xf32> to vector<8x32x32xf32>
    %11 = tpu.concatenate %2, %3, %4, %5, %6, %7, %8, %9, %10 in 2 : vector<8x32x32xf32>, vector<8x32x32xf32>, vector<8x32x32xf32>, vector<8x32x32xf32>, vector<8x32x32xf32>, vector<8x32x32xf32>, vector<8x32x32xf32>, vector<8x32x32xf32>, vector<8x32x32xf32> -> vector<8x32x288xf32>
    %12 = vector.shape_cast %11 : vector<8x32x288xf32> to vector<256x288xf32>
    %13 = arith.truncf %12 : vector<256x288xf32> to vector<256x288xbf16>
    %c0_4 = arith.constant 0 : index
    %c0_5 = arith.constant 0 : index
    %14 = vector.load %arg3[%c0_4, %c0_5] : memref<288x8xbf16, #tpu.memory_space<vmem>>, vector<288x8xbf16>
    %cst = arith.constant dense<0.000000e+00> : vector<256x8xf32>
    %15 = tpu.matmul %13, %14, %cst {dimension_numbers = #tpu.dot_dimension_numbers<[1], [0], [0], [1], [0, 0, 1, 1], [], []>} : vector<256x288xbf16>, vector<288x8xbf16>, vector<256x8xf32> -> vector<256x8xf32>
    %c0_6 = arith.constant 0 : index
    %c0_7 = arith.constant 0 : index
    %16 = vector.load %arg4[%c0_6, %c0_7] : memref<1x8xf32, #tpu.memory_space<vmem>>, vector<1x8xf32>
    %17 = vector.broadcast %16 : vector<1x8xf32> to vector<256x8xf32>
    %18 = arith.addf %15, %17 : vector<256x8xf32>
    %19 = arith.negf %18 : vector<256x8xf32>
    %20 = math.exp %19 : vector<256x8xf32>
    %cst_8 = arith.constant 1.000000e+00 : f32
    %21 = vector.broadcast %cst_8 : f32 to vector<256x8xf32>
    %22 = arith.addf %21, %20 : vector<256x8xf32>
    %23 = arith.divf %21, %22 : vector<256x8xf32>
    %24 = vector.shape_cast %23 : vector<256x8xf32> to vector<8x32x8xf32>
    %c0_9 = arith.constant 0 : index
    %c0_10 = arith.constant 0 : index
    %c0_11 = arith.constant 0 : index
    %c0_12 = arith.constant 0 : index
    %c0_13 = arith.constant 0 : index
    %25 = vector.load %arg5[%c0_9, %c0_10, %c0_11, %c0_12, %c0_13] : memref<1x1x8x32x8xf32, #tpu.memory_space<vmem>>, vector<1x1x8x32x8xf32>
    %26 = vector.shape_cast %25 : vector<1x1x8x32x8xf32> to vector<8x32x8xf32>
    %27 = vector.shape_cast %24 : vector<8x32x8xf32> to vector<1x1x8x32x8xf32>
    tpu.vector_store %arg5[%c0_9, %c0_10, %c0_11, %c0_12, %c0_13], %27 {strides = array<i32>} : memref<1x1x8x32x8xf32, #tpu.memory_space<vmem>>, vector<1x1x8x32x8xf32>,
    return
  }
  func.func @transform_0(%arg0: i32, %arg1: i32) -> (i32, i32, i32, i32, i32) {
    %c0_i32 = arith.constant 0 : i32
    %c0_i32_0 = arith.constant 0 : i32
    %c0_i32_1 = arith.constant 0 : i32
    %c0_i32_2 = arith.constant 0 : i32
    return %arg0, %arg1, %c0_i32, %c0_i32_0, %c0_i32_1 : i32, i32, i32, i32, i32
  }
  func.func @transform_1(%arg0: i32, %arg1: i32) -> (i32, i32) {
    %c0_i32 = arith.constant 0 : i32
    %c0_i32_0 = arith.constant 0 : i32
    %c0_i32_1 = arith.constant 0 : i32
    return %c0_i32, %c0_i32_0 : i32, i32
  }
  func.func @transform_2(%arg0: i32, %arg1: i32) -> (i32, i32) {
    %c0_i32 = arith.constant 0 : i32
    %c0_i32_0 = arith.constant 0 : i32
    %c0_i32_1 = arith.constant 0 : i32
    return %c0_i32, %c0_i32_0 : i32, i32
  }
  func.func @transform_3(%arg0: i32, %arg1: i32) -> (i32, i32, i32, i32, i32) {
    %c0_i32 = arith.constant 0 : i32
    %c0_i32_0 = arith.constant 0 : i32
    %c0_i32_1 = arith.constant 0 : i32
    %c0_i32_2 = arith.constant 0 : i32
    return %arg0, %arg1, %c0_i32, %c0_i32_0, %c0_i32_1 : i32, i32, i32, i32, i32
  }
}

</mosaic_0001>

<llo_original>
// kernel: srresnet_forward.4
$region0: #{srresnet_forward.4}
  #allocation0 [shape = 'u32[]', space=smem, size = 0x4, offset = 0x4, fixed_abs, tag = 'smem constant byte address 0x4 - core index']
  #allocation1 [shape = 'u32[144,128]{1,0:T(1,128)}', space=vmem, size = 0x12000, scoped, tag = 'internal scratch']
  %s0 = inlined_call_operand.vmem [shape: f32[2,2,10,18,32], index: 0, kind: input, shape index: {}]
  %s1 = inlined_call_operand.vmem [shape: bf16[288,128], index: 1, kind: input, shape index: {}]
  %s2 = inlined_call_operand.vmem [shape: f32[1,128], index: 2, kind: input, shape index: {}]
  %s3 = inlined_call_operand.vmem [shape: f32[2,2,8,32,64], index: 3, kind: output, shape index: {}]
  %s4 = sld [smem:[#allocation0]]
  $region45: #{srresnet_forward.4} parent=0
    _
  %s6 = ssub.s32 1, %s4
  %s7 = scalar_select 0, %s6, %s4
  loop: start=0, step=1, limit=6
  $region2: #{srresnet_forward.4} parent=0 // loop_pre_header
    _
  $region3: #{srresnet_forward.4} parent=0 // loop_header
    %s9 = sphi 0, %s13
    %p10 = scmp.ge.s32.totalorder %s9, 6
    %s16 = sphi 0, %s28
    %s17 = sphi 0, %s24
    %s18 = sphi 0, %s16
    %s19 = sphi 0, %s17
    %s20 = sphi 0, %s18
    %s21 = sphi 0, %s19
    %s33 = sphi 0, %s35
    %s36 = sphi 0, %s33
    %s37 = sphi 0, %s36
    %s53 = sphi 0, %s37
    %s57 = sphi 0, %s57
    %s59 = sphi 0, %s57
    %s60 = sphi 0, %s59
    %s74 = sphi 0, %s60
    %s78 = sphi 0, %s78
    %s80 = sphi 0, %s78
    %s81 = sphi 0, %s80
    %s95 = sphi 0, %s81
    %s103 = sphi 0, %s105
    %s106 = sphi 0, %s103
    %s107 = sphi 0, %s106
    %s123 = sphi 0, %s107
  $region4: #{srresnet_forward.4} parent=0 // loop_header_branch
    %12 = sbr.rel (%p10) target = $region8
  $region5: #{srresnet_forward.4} parent=0 // loop_body
    %s14 = ssub.s32 %s9, 1
    %s15 = ssub.s32 %s9, 2
    %s22 = sadd.s32 1, %s17
    %p23 = scmp.ge.s32.totalorder %s22, 2
    %s24 = scalar_select %p23, 0, %s22
    %s25 = sadd.s32 1, %s16
    %s26 = scalar_select %p23, %s25, %s16
    %p27 = scmp.ge.s32.totalorder %s26, 2
    %s28 = scalar_select %p27, 0, %s26
    %s29 = ssub.s32 %s16, %s28
    %s30 = ssub.s32 %s17, %s24
    %s31 = sor.u32 %s29, %s30
    %p32 = scmp.eq.s32.totalorder %s31, 0
    %s34 = sadd.s32 %s33, 1
    %s35 = scalar_select %p32, %s33, %s34
    %p38 = pneg %p32
    %p39 = scmp.eq.s32.totalorder %s9, 3
    %p40 = por %p38, %p39
    %p41 = scmp.ne.s32.totalorder %s33, %s36
    %p42 = scmp.eq.s32.totalorder %s9, 0
    %p43 = por %p41, %p42
    %p44 = scmp.ne.s32.totalorder %s33, %s36
    %p45 = scmp.eq.s32.totalorder %s14, 3
    %p46 = por %p44, %p45
    %p47 = scmp.ne.s32.totalorder %s36, %s37
    %p48 = scmp.eq.s32.totalorder %s14, 0
    %p49 = por %p47, %p48
    %p50 = scmp.ne.s32.totalorder %s36, %s37
    %p51 = scmp.eq.s32.totalorder %s15, 3
    %p52 = por %p50, %p51
    %p54 = scmp.ne.s32.totalorder %s37, %s53
    %p55 = scmp.eq.s32.totalorder %s15, 0
    %p56 = por %p54, %p55
    %s58 = sadd.s32 %s57, 1
    %p61 = scmp.eq.s32.totalorder %s9, 3
    %p62 = scmp.ne.s32.totalorder %s57, %s59
    %p63 = scmp.eq.s32.totalorder %s9, 0
    %p64 = por %p62, %p63
    %p65 = scmp.ne.s32.totalorder %s57, %s59
    %p66 = scmp.eq.s32.totalorder %s14, 3
    %p67 = por %p65, %p66
    %p68 = scmp.ne.s32.totalorder %s59, %s60
    %p69 = scmp.eq.s32.totalorder %s14, 0
    %p70 = por %p68, %p69
    %p71 = scmp.ne.s32.totalorder %s59, %s60
    %p72 = scmp.eq.s32.totalorder %s15, 3
    %p73 = por %p71, %p72
    %p75 = scmp.ne.s32.totalorder %s60, %s74
    %p76 = scmp.eq.s32.totalorder %s15, 0
    %p77 = por %p75, %p76
    %s79 = sadd.s32 %s78, 1
    %p82 = scmp.eq.s32.totalorder %s9, 3
    %p83 = scmp.ne.s32.totalorder %s78, %s80
    %p84 = scmp.eq.s32.totalorder %s9, 0
    %p85 = por %p83, %p84
    %p86 = scmp.ne.s32.totalorder %s78, %s80
    %p87 = scmp.eq.s32.totalorder %s14, 3
    %p88 = por %p86, %p87
    %p89 = scmp.ne.s32.totalorder %s80, %s81
    %p90 = scmp.eq.s32.totalorder %s14, 0
    %p91 = por %p89, %p90
    %p92 = scmp.ne.s32.totalorder %s80, %s81
    %p93 = scmp.eq.s32.totalorder %s15, 3
    %p94 = por %p92, %p93
    %p96 = scmp.ne.s32.totalorder %s81, %s95
    %p97 = scmp.eq.s32.totalorder %s15, 0
    %p98 = por %p96, %p97
    %s99 = ssub.s32 %s16, %s28
    %s100 = ssub.s32 %s17, %s24
    %s101 = sor.u32 %s99, %s100
    %p102 = scmp.eq.s32.totalorder %s101, 0
    %s104 = sadd.s32 %s103, 1
    %s105 = scalar_select %p102, %s103, %s104
    %p108 = pneg %p102
    %p109 = scmp.eq.s32.totalorder %s9, 3
    %p110 = por %p108, %p109
    %p111 = scmp.ne.s32.totalorder %s103, %s106
    %p112 = scmp.eq.s32.totalorder %s9, 0
    %p113 = por %p111, %p112
    %p114 = scmp.ne.s32.totalorder %s103, %s106
    %p115 = scmp.eq.s32.totalorder %s14, 3
    %p116 = por %p114, %p115
    %p117 = scmp.ne.s32.totalorder %s106, %s107
    %p118 = scmp.eq.s32.totalorder %s14, 0
    %p119 = por %p117, %p118
    %p120 = scmp.ne.s32.totalorder %s106, %s107
    %p121 = scmp.eq.s32.totalorder %s15, 3
    %p122 = por %p120, %p121
    %p124 = scmp.ne.s32.totalorder %s107, %s123
    %p125 = scmp.eq.s32.totalorder %s15, 0
    %p126 = por %p124, %p125
    %p127 = scmp.le.s32.totalorder 1, %s9
    %p128 = scmp.lt.s32.totalorder %s9, 5
    %p129 = pnand %p127, %p128
    %p130 = pneg %p129
    // Predicated region
    $region9: #{srresnet_forward.4} parent=5 // pred_check
      _
    $region10: #{srresnet_forward.4} parent=5 // pred_check_branch
      %132 = sbr.rel (%p129) target = $region12
    $region11: #{srresnet_forward.4} parent=5 // pred_region
      %s133 = ssub.s32 %s9, 1
      // Predicated region
      $region13: #{srresnet_forward.4} parent=11 // pred_check
        %p134 = pneg %p70
      $region14: #{srresnet_forward.4} parent=11 // pred_check_branch
        %136 = sbr.rel (%p134) target = $region16
      $region15: #{srresnet_forward.4} parent=11 // pred_region
        _
      $region16: #{srresnet_forward.4} parent=11 // pred_fallthru
        _
      // Predicated region
      $region17: #{srresnet_forward.4} parent=11 // pred_check
        %p137 = pneg %p91
      $region18: #{srresnet_forward.4} parent=11 // pred_check_branch
        %139 = sbr.rel (%p137) target = $region20
      $region19: #{srresnet_forward.4} parent=11 // pred_region
        _
      $region20: #{srresnet_forward.4} parent=11 // pred_fallthru
        _
    $region12: #{srresnet_forward.4} parent=5 // pred_fallthru
      _
    %p140 = scmp.lt.s32.totalorder %s9, 4
    // Predicated region
    $region21: #{srresnet_forward.4} parent=5 // pred_check
      %p141 = pneg %p140
    $region22: #{srresnet_forward.4} parent=5 // pred_check_branch
      %143 = sbr.rel (%p141) target = $region24
    $region23: #{srresnet_forward.4} parent=5 // pred_region
      // Predicated region
      $region25: #{srresnet_forward.4} parent=23 // pred_check
        %p144 = pneg %p43
      $region26: #{srresnet_forward.4} parent=23 // pred_check_branch
        %146 = sbr.rel (%p144) target = $region28
      $region27: #{srresnet_forward.4} parent=23 // pred_region
        %p147 = scmp.lt.s32.totalorder %s16, 1
        %s148 = scalar_select %p147, %s16, 1
        %p149 = scmp.lt.s32.totalorder %s17, 1
        %s150 = scalar_select %p149, %s17, 1
        %s151 = smul.addr %s150, 30
        %s152 = smul.addr %s148, 60
        %s153 = sadd.s32 %s151, %s152
        %s154 = smul.addr %s153, 8
        %s155 = scalar_lea.vmem %s0, %s154
      $region28: #{srresnet_forward.4} parent=23 // pred_fallthru
        _
    $region24: #{srresnet_forward.4} parent=5 // pred_fallthru
      _
    %p156 = scmp.le.s32.totalorder 1, %s9
    %p157 = scmp.lt.s32.totalorder %s9, 5
    %p158 = pnand %p156, %p157
    %p159 = pneg %p158
    // Predicated region
    $region29: #{srresnet_forward.4} parent=5 // pred_check
      _
    $region30: #{srresnet_forward.4} parent=5 // pred_check_branch
      %161 = sbr.rel (%p158) target = $region32
    $region31: #{srresnet_forward.4} parent=5 // pred_region
      %s162 = ssub.s32 %s9, 1
      %p163 = scmp.lt.s32.totalorder %s18, 1
      %s164 = scalar_select %p163, %s18, 1
      %p165 = scmp.lt.s32.totalorder %s19, 1
      %s166 = scalar_select %p165, %s19, 1
      %s167 = smul.addr %s166, 30
      %s168 = smul.addr %s164, 60
      %s169 = sadd.s32 %s167, %s168
      %s170 = smul.addr %s169, 8
      %s171 = scalar_lea.vmem %s0, %s170
      %p172 = pneg %p49
      %p173 = pneg %p46
      %p174 = pneg %p70
      %p175 = pneg %p67
      %p176 = pneg %p91
      %p177 = pneg %p88
      %p178 = pneg %p119
      %p179 = pneg %p116
      %p180 = scmp.lt.s32.totalorder %s18, 1
      %s181 = scalar_select %p180, %s18, 1
      %p182 = scmp.lt.s32.totalorder %s19, 1
      %s183 = scalar_select %p182, %s19, 1
      %s184 = smul.addr %s183, 32
      %s185 = smul.addr %s181, 64
      %s186 = sadd.s32 %s184, %s185
      %s187 = smul.addr %s186, 8
      %s188 = scalar_lea.vmem %s3, %s187
      %p189 = scmp.lt.s32.totalorder %s18, 1
      %s190 = scalar_select %p189, %s18, 1
      %p191 = scmp.lt.s32.totalorder %s19, 1
      %s192 = scalar_select %p191, %s19, 1
      %s193 = smul.addr %s192, 30
      %s194 = smul.addr %s190, 60
      %s195 = sadd.s32 %s193, %s194
      %s196 = smul.addr %s195, 8
      %s197 = scalar_lea.vmem %s0, %s196
      %p198 = scmp.lt.s32.totalorder %s18, 1
      %s199 = scalar_select %p198, %s18, 1
      %p200 = scmp.lt.s32.totalorder %s19, 1
      %s201 = scalar_select %p200, %s19, 1
      %s202 = smul.addr %s201, 32
      %s203 = smul.addr %s199, 64
      %s204 = sadd.s32 %s202, %s203
      %s205 = smul.addr %s204, 8
      %s206 = scalar_lea.vmem %s3, %s205
      %v208 = vld [vmem:[%s197] sm:$0xff]
      %v209 = vld [vmem:[%s197 + $0x8] sm:$0xff]
      %v210 = vld [vmem:[%s197 + $0x10] sm:$0x3]
      %v211 = vld [vmem:[%s197 + $0x18] sm:$0xff]
      %v212 = vld [vmem:[%s197 + $0x20] sm:$0xff]
      %v213 = vld [vmem:[%s197 + $0x28] sm:$0x3]
      %v214 = vld [vmem:[%s197 + $0x30] sm:$0xff]
      %v215 = vld [vmem:[%s197 + $0x38] sm:$0xff]
      %v216 = vld [vmem:[%s197 + $0x40] sm:$0x3]
      %v217 = vld [vmem:[%s197 + $0x48] sm:$0xff]
      %v218 = vld [vmem:[%s197 + $0x50] sm:$0xff]
      %v219 = vld [vmem:[%s197 + $0x58] sm:$0x3]
      %v220 = vld [vmem:[%s197 + $0x60] sm:$0xff]
      %v221 = vld [vmem:[%s197 + $0x68] sm:$0xff]
      %v222 = vld [vmem:[%s197 + $0x70] sm:$0x3]
      %v223 = vld [vmem:[%s197 + $0x78] sm:$0xff]
      %v224 = vld [vmem:[%s197 + $0x80] sm:$0xff]
      %v225 = vld [vmem:[%s197 + $0x88] sm:$0x3]
      %v226 = vld [vmem:[%s197 + $0x90] sm:$0xff]
      %v227 = vld [vmem:[%s197 + $0x98] sm:$0xff]
      %v228 = vld [vmem:[%s197 + $0xa0] sm:$0x3]
      %v229 = vld [vmem:[%s197 + $0xa8] sm:$0xff]
      %v230 = vld [vmem:[%s197 + $0xb0] sm:$0xff]
      %v231 = vld [vmem:[%s197 + $0xb8] sm:$0x3]
      %v232 = vld [vmem:[%s197 + $0xc0] sm:$0xff]
      %v233 = vld [vmem:[%s197 + $0xc8] sm:$0xff]
      %v234 = vld [vmem:[%s197 + $0xd0] sm:$0x3]
      %v235 = vld [vmem:[%s197 + $0xd8] sm:$0xff]
      %v236 = vld [vmem:[%s197 + $0xe0] sm:$0xff]
      %v237 = vld [vmem:[%s197 + $0xe8] sm:$0x3]
      %vm262 = vcmask 1046528
      %v263 = vrot.slane %v208, 1
      %v264 = vrot.slane %v209, 1
      %v265 = vsel %vm262, %v263, %v264
      %v266 = vrot.slane %v210, 1
      %v267 = vsel %vm262, %v264, %v266
      %v268 = vrot.slane %v211, 1
      %v269 = vrot.slane %v212, 1
      %v270 = vsel %vm262, %v268, %v269
      %v271 = vrot.slane %v213, 1
      %v272 = vsel %vm262, %v269, %v271
      %v273 = vrot.slane %v214, 1
      %v274 = vrot.slane %v215, 1
      %v275 = vsel %vm262, %v273, %v274
      %v276 = vrot.slane %v216, 1
      %v277 = vsel %vm262, %v274, %v276
      %v278 = vrot.slane %v217, 1
      %v279 = vrot.slane %v218, 1
      %v280 = vsel %vm262, %v278, %v279
      %v281 = vrot.slane %v219, 1
      %v282 = vsel %vm262, %v279, %v281
      %v283 = vrot.slane %v220, 1
      %v284 = vrot.slane %v221, 1
      %v285 = vsel %vm262, %v283, %v284
      %v286 = vrot.slane %v222, 1
      %v287 = vsel %vm262, %v284, %v286
      %v288 = vrot.slane %v223, 1
      %v289 = vrot.slane %v224, 1
      %v290 = vsel %vm262, %v288, %v289
      %v291 = vrot.slane %v225, 1
      %v292 = vsel %vm262, %v289, %v291
      %v293 = vrot.slane %v226, 1
      %v294 = vrot.slane %v227, 1
      %v295 = vsel %vm262, %v293, %v294
      %v296 = vrot.slane %v228, 1
      %v297 = vsel %vm262, %v294, %v296
      %v298 = vrot.slane %v229, 1
      %v299 = vrot.slane %v230, 1
      %v300 = vsel %vm262, %v298, %v299
      %v301 = vrot.slane %v231, 1
      %v302 = vsel %vm262, %v299, %v301
      %303 = vrot.lane.b32.xlu0 %v265, 32
      %v304 = vpop.permute.xlu0 %303
      %305 = vrot.lane.b32.xlu0 %v267, 32
      %v306 = vpop.permute.xlu0 %305
      %307 = vrot.lane.b32.xlu0 %v270, 32
      %v308 = vpop.permute.xlu0 %307
      %309 = vrot.lane.b32.xlu0 %v272, 32
      %v310 = vpop.permute.xlu0 %309
      %311 = vrot.lane.b32.xlu0 %v275, 32
      %v312 = vpop.permute.xlu0 %311
      %313 = vrot.lane.b32.xlu0 %v277, 32
      %v314 = vpop.permute.xlu0 %313
      %315 = vrot.lane.b32.xlu0 %v280, 32
      %v316 = vpop.permute.xlu0 %315
      %317 = vrot.lane.b32.xlu0 %v282, 32
      %v318 = vpop.permute.xlu0 %317
      %319 = vrot.lane.b32.xlu0 %v285, 32
      %v320 = vpop.permute.xlu0 %319
      %321 = vrot.lane.b32.xlu0 %v287, 32
      %v322 = vpop.permute.xlu0 %321
      %323 = vrot.lane.b32.xlu0 %v290, 32
      %v324 = vpop.permute.xlu0 %323
      %325 = vrot.lane.b32.xlu0 %v292, 32
      %v326 = vpop.permute.xlu0 %325
      %327 = vrot.lane.b32.xlu0 %v295, 32
      %v328 = vpop.permute.xlu0 %327
      %329 = vrot.lane.b32.xlu0 %v297, 32
      %v330 = vpop.permute.xlu0 %329
      %331 = vrot.lane.b32.xlu0 %v300, 32
      %v332 = vpop.permute.xlu0 %331
      %333 = vrot.lane.b32.xlu0 %v302, 32
      %v334 = vpop.permute.xlu0 %333
      %vm351 = vcmask 1045504
      %v352 = vrot.slane %v208, 2
      %v353 = vrot.slane %v209, 2
      %v354 = vsel %vm351, %v352, %v353
      %v355 = vrot.slane %v210, 2
      %v356 = vsel %vm351, %v353, %v355
      %v357 = vrot.slane %v211, 2
      %v358 = vrot.slane %v212, 2
      %v359 = vsel %vm351, %v357, %v358
      %v360 = vrot.slane %v213, 2
      %v361 = vsel %vm351, %v358, %v360
      %v362 = vrot.slane %v214, 2
      %v363 = vrot.slane %v215, 2
      %v364 = vsel %vm351, %v362, %v363
      %v365 = vrot.slane %v216, 2
      %v366 = vsel %vm351, %v363, %v365
      %v367 = vrot.slane %v217, 2
      %v368 = vrot.slane %v218, 2
      %v369 = vsel %vm351, %v367, %v368
      %v370 = vrot.slane %v219, 2
      %v371 = vsel %vm351, %v368, %v370
      %v372 = vrot.slane %v220, 2
      %v373 = vrot.slane %v221, 2
      %v374 = vsel %vm351, %v372, %v373
      %v375 = vrot.slane %v222, 2
      %v376 = vsel %vm351, %v373, %v375
      %v377 = vrot.slane %v223, 2
      %v378 = vrot.slane %v224, 2
      %v379 = vsel %vm351, %v377, %v378
      %v380 = vrot.slane %v225, 2
      %v381 = vsel %vm351, %v378, %v380
      %v382 = vrot.slane %v226, 2
      %v383 = vrot.slane %v227, 2
      %v384 = vsel %vm351, %v382, %v383
      %v385 = vrot.slane %v228, 2
      %v386 = vsel %vm351, %v383, %v385
      %v387 = vrot.slane %v229, 2
      %v388 = vrot.slane %v230, 2
      %v389 = vsel %vm351, %v387, %v388
      %v390 = vrot.slane %v231, 2
      %v391 = vsel %vm351, %v388, %v390
      %392 = vrot.lane.b32.xlu0 %v354, 64
      %v393 = vpop.permute.xlu0 %392
      %394 = vrot.lane.b32.xlu0 %v356, 64
      %v395 = vpop.permute.xlu0 %394
      %396 = vrot.lane.b32.xlu0 %v359, 64
      %v397 = vpop.permute.xlu0 %396
      %398 = vrot.lane.b32.xlu0 %v361, 64
      %v399 = vpop.permute.xlu0 %398
      %400 = vrot.lane.b32.xlu0 %v364, 64
      %v401 = vpop.permute.xlu0 %400
      %402 = vrot.lane.b32.xlu0 %v366, 64
      %v403 = vpop.permute.xlu0 %402
      %404 = vrot.lane.b32.xlu0 %v369, 64
      %v405 = vpop.permute.xlu0 %404
      %406 = vrot.lane.b32.xlu0 %v371, 64
      %v407 = vpop.permute.xlu0 %406
      %408 = vrot.lane.b32.xlu0 %v374, 64
      %v409 = vpop.permute.xlu0 %408
      %410 = vrot.lane.b32.xlu0 %v376, 64
      %v411 = vpop.permute.xlu0 %410
      %412 = vrot.lane.b32.xlu0 %v379, 64
      %v413 = vpop.permute.xlu0 %412
      %414 = vrot.lane.b32.xlu0 %v381, 64
      %v415 = vpop.permute.xlu0 %414
      %416 = vrot.lane.b32.xlu0 %v384, 64
      %v417 = vpop.permute.xlu0 %416
      %418 = vrot.lane.b32.xlu0 %v386, 64
      %v419 = vpop.permute.xlu0 %418
      %420 = vrot.lane.b32.xlu0 %v389, 64
      %v421 = vpop.permute.xlu0 %420
      %422 = vrot.lane.b32.xlu0 %v391, 64
      %v423 = vpop.permute.xlu0 %422
      %442 = vrot.lane.b32.xlu0 %v211, 96
      %v443 = vpop.permute.xlu0 %442
      %444 = vrot.lane.b32.xlu0 %v212, 96
      %v445 = vpop.permute.xlu0 %444
      %446 = vrot.lane.b32.xlu0 %v214, 96
      %v447 = vpop.permute.xlu0 %446
      %448 = vrot.lane.b32.xlu0 %v215, 96
      %v449 = vpop.permute.xlu0 %448
      %450 = vrot.lane.b32.xlu0 %v217, 96
      %v451 = vpop.permute.xlu0 %450
      %452 = vrot.lane.b32.xlu0 %v218, 96
      %v453 = vpop.permute.xlu0 %452
      %454 = vrot.lane.b32.xlu0 %v220, 96
      %v455 = vpop.permute.xlu0 %454
      %456 = vrot.lane.b32.xlu0 %v221, 96
      %v457 = vpop.permute.xlu0 %456
      %458 = vrot.lane.b32.xlu0 %v223, 96
      %v459 = vpop.permute.xlu0 %458
      %460 = vrot.lane.b32.xlu0 %v224, 96
      %v461 = vpop.permute.xlu0 %460
      %462 = vrot.lane.b32.xlu0 %v226, 96
      %v463 = vpop.permute.xlu0 %462
      %464 = vrot.lane.b32.xlu0 %v227, 96
      %v465 = vpop.permute.xlu0 %464
      %466 = vrot.lane.b32.xlu0 %v229, 96
      %v467 = vpop.permute.xlu0 %466
      %468 = vrot.lane.b32.xlu0 %v230, 96
      %v469 = vpop.permute.xlu0 %468
      %470 = vrot.lane.b32.xlu0 %v232, 96
      %v471 = vpop.permute.xlu0 %470
      %472 = vrot.lane.b32.xlu0 %v233, 96
      %v473 = vpop.permute.xlu0 %472
      %v491 = vrot.slane %v232, 1
      %v492 = vrot.slane %v233, 1
      %v493 = vsel %vm262, %v491, %v492
      %v494 = vrot.slane %v234, 1
      %v495 = vsel %vm262, %v492, %v494
      %v512 = vrot.slane %v232, 2
      %v513 = vrot.slane %v233, 2
      %v514 = vsel %vm351, %v512, %v513
      %v515 = vrot.slane %v234, 2
      %v516 = vsel %vm351, %v513, %v515
      %517 = vrot.lane.b32.xlu0 %v359, 32
      %v518 = vpop.permute.xlu0 %517
      %519 = vrot.lane.b32.xlu0 %v361, 32
      %v520 = vpop.permute.xlu0 %519
      %521 = vrot.lane.b32.xlu0 %v364, 32
      %v522 = vpop.permute.xlu0 %521
      %523 = vrot.lane.b32.xlu0 %v366, 32
      %v524 = vpop.permute.xlu0 %523
      %525 = vrot.lane.b32.xlu0 %v369, 32
      %v526 = vpop.permute.xlu0 %525
      %527 = vrot.lane.b32.xlu0 %v371, 32
      %v528 = vpop.permute.xlu0 %527
      %529 = vrot.lane.b32.xlu0 %v374, 32
      %v530 = vpop.permute.xlu0 %529
      %531 = vrot.lane.b32.xlu0 %v376, 32
      %v532 = vpop.permute.xlu0 %531
      %533 = vrot.lane.b32.xlu0 %v379, 32
      %v534 = vpop.permute.xlu0 %533
      %535 = vrot.lane.b32.xlu0 %v381, 32
      %v536 = vpop.permute.xlu0 %535
      %537 = vrot.lane.b32.xlu0 %v384, 32
      %v538 = vpop.permute.xlu0 %537
      %539 = vrot.lane.b32.xlu0 %v386, 32
      %v540 = vpop.permute.xlu0 %539
      %541 = vrot.lane.b32.xlu0 %v389, 32
      %v542 = vpop.permute.xlu0 %541
      %543 = vrot.lane.b32.xlu0 %v391, 32
      %v544 = vpop.permute.xlu0 %543
      %545 = vrot.lane.b32.xlu0 %v514, 32
      %v546 = vpop.permute.xlu0 %545
      %547 = vrot.lane.b32.xlu0 %v516, 32
      %v548 = vpop.permute.xlu0 %547
      %567 = vrot.lane.b32.xlu0 %v214, 64
      %v568 = vpop.permute.xlu0 %567
      %569 = vrot.lane.b32.xlu0 %v215, 64
      %v570 = vpop.permute.xlu0 %569
      %571 = vrot.lane.b32.xlu0 %v217, 64
      %v572 = vpop.permute.xlu0 %571
      %573 = vrot.lane.b32.xlu0 %v218, 64
      %v574 = vpop.permute.xlu0 %573
      %575 = vrot.lane.b32.xlu0 %v220, 64
      %v576 = vpop.permute.xlu0 %575
      %577 = vrot.lane.b32.xlu0 %v221, 64
      %v578 = vpop.permute.xlu0 %577
      %579 = vrot.lane.b32.xlu0 %v223, 64
      %v580 = vpop.permute.xlu0 %579
      %581 = vrot.lane.b32.xlu0 %v224, 64
      %v582 = vpop.permute.xlu0 %581
      %583 = vrot.lane.b32.xlu0 %v226, 64
      %v584 = vpop.permute.xlu0 %583
      %585 = vrot.lane.b32.xlu0 %v227, 64
      %v586 = vpop.permute.xlu0 %585
      %587 = vrot.lane.b32.xlu0 %v229, 64
      %v588 = vpop.permute.xlu0 %587
      %589 = vrot.lane.b32.xlu0 %v230, 64
      %v590 = vpop.permute.xlu0 %589
      %591 = vrot.lane.b32.xlu0 %v232, 64
      %v592 = vpop.permute.xlu0 %591
      %593 = vrot.lane.b32.xlu0 %v233, 64
      %v594 = vpop.permute.xlu0 %593
      %595 = vrot.lane.b32.xlu0 %v235, 64
      %v596 = vpop.permute.xlu0 %595
      %597 = vrot.lane.b32.xlu0 %v236, 64
      %v598 = vpop.permute.xlu0 %597
      %v616 = vrot.slane %v235, 1
      %v617 = vrot.slane %v236, 1
      %v618 = vsel %vm262, %v616, %v617
      %v619 = vrot.slane %v237, 1
      %v620 = vsel %vm262, %v617, %v619
      %621 = vrot.lane.b32.xlu0 %v275, 96
      %v622 = vpop.permute.xlu0 %621
      %623 = vrot.lane.b32.xlu0 %v277, 96
      %v624 = vpop.permute.xlu0 %623
      %625 = vrot.lane.b32.xlu0 %v280, 96
      %v626 = vpop.permute.xlu0 %625
      %627 = vrot.lane.b32.xlu0 %v282, 96
      %v628 = vpop.permute.xlu0 %627
      %629 = vrot.lane.b32.xlu0 %v285, 96
      %v630 = vpop.permute.xlu0 %629
      %631 = vrot.lane.b32.xlu0 %v287, 96
      %v632 = vpop.permute.xlu0 %631
      %633 = vrot.lane.b32.xlu0 %v290, 96
      %v634 = vpop.permute.xlu0 %633
      %635 = vrot.lane.b32.xlu0 %v292, 96
      %v636 = vpop.permute.xlu0 %635
      %637 = vrot.lane.b32.xlu0 %v295, 96
      %v638 = vpop.permute.xlu0 %637
      %639 = vrot.lane.b32.xlu0 %v297, 96
      %v640 = vpop.permute.xlu0 %639
      %641 = vrot.lane.b32.xlu0 %v300, 96
      %v642 = vpop.permute.xlu0 %641
      %643 = vrot.lane.b32.xlu0 %v302, 96
      %v644 = vpop.permute.xlu0 %643
      %645 = vrot.lane.b32.xlu0 %v493, 96
      %v646 = vpop.permute.xlu0 %645
      %647 = vrot.lane.b32.xlu0 %v495, 96
      %v648 = vpop.permute.xlu0 %647
      %649 = vrot.lane.b32.xlu0 %v618, 96
      %v650 = vpop.permute.xlu0 %649
      %651 = vrot.lane.b32.xlu0 %v620, 96
      %v652 = vpop.permute.xlu0 %651
      %v669 = vrot.slane %v235, 2
      %v670 = vrot.slane %v236, 2
      %v671 = vsel %vm351, %v669, %v670
      %v672 = vrot.slane %v237, 2
      %v673 = vsel %vm351, %v670, %v672
      %vm690 = vcmask 261120
      %v691 = vsel %vm690, %v208, %v304
      %v692 = vsel %vm690, %v209, %v306
      %v693 = vsel %vm690, %v211, %v308
      %v694 = vsel %vm690, %v212, %v310
      %v695 = vsel %vm690, %v214, %v312
      %v696 = vsel %vm690, %v215, %v314
      %v697 = vsel %vm690, %v217, %v316
      %v698 = vsel %vm690, %v218, %v318
      %v699 = vsel %vm690, %v220, %v320
      %v700 = vsel %vm690, %v221, %v322
      %v701 = vsel %vm690, %v223, %v324
      %v702 = vsel %vm690, %v224, %v326
      %v703 = vsel %vm690, %v226, %v328
      %v704 = vsel %vm690, %v227, %v330
      %v705 = vsel %vm690, %v229, %v332
      %v706 = vsel %vm690, %v230, %v334
      %vm707 = vcmask 523264
      %v708 = vsel %vm707, %v691, %v393
      %v709 = vsel %vm707, %v692, %v395
      %v710 = vsel %vm707, %v693, %v397
      %v711 = vsel %vm707, %v694, %v399
      %v712 = vsel %vm707, %v695, %v401
      %v713 = vsel %vm707, %v696, %v403
      %v714 = vsel %vm707, %v697, %v405
      %v715 = vsel %vm707, %v698, %v407
      %v716 = vsel %vm707, %v699, %v409
      %v717 = vsel %vm707, %v700, %v411
      %v718 = vsel %vm707, %v701, %v413
      %v719 = vsel %vm707, %v702, %v415
      %v720 = vsel %vm707, %v703, %v417
      %v721 = vsel %vm707, %v704, %v419
      %v722 = vsel %vm707, %v705, %v421
      %v723 = vsel %vm707, %v706, %v423
      %vm724 = vcmask 785408
      %v725 = vsel %vm724, %v708, %v443
      %v726 = vsel %vm724, %v709, %v445
      %v727 = vsel %vm724, %v710, %v447
      %v728 = vsel %vm724, %v711, %v449
      %v729 = vsel %vm724, %v712, %v451
      %v730 = vsel %vm724, %v713, %v453
      %v731 = vsel %vm724, %v714, %v455
      %v732 = vsel %vm724, %v715, %v457
      %v733 = vsel %vm724, %v716, %v459
      %v734 = vsel %vm724, %v717, %v461
      %v735 = vsel %vm724, %v718, %v463
      %v736 = vsel %vm724, %v719, %v465
      %v737 = vsel %vm724, %v720, %v467
      %v738 = vsel %vm724, %v721, %v469
      %v739 = vsel %vm724, %v722, %v471
      %v740 = vsel %vm724, %v723, %v473
      %v741 = vsel %vm690, %v270, %v518
      %v742 = vsel %vm690, %v272, %v520
      %v743 = vsel %vm690, %v275, %v522
      %v744 = vsel %vm690, %v277, %v524
      %v745 = vsel %vm690, %v280, %v526
      %v746 = vsel %vm690, %v282, %v528
      %v747 = vsel %vm690, %v285, %v530
      %v748 = vsel %vm690, %v287, %v532
      %v749 = vsel %vm690, %v290, %v534
      %v750 = vsel %vm690, %v292, %v536
      %v751 = vsel %vm690, %v295, %v538
      %v752 = vsel %vm690, %v297, %v540
      %v753 = vsel %vm690, %v300, %v542
      %v754 = vsel %vm690, %v302, %v544
      %v755 = vsel %vm690, %v493, %v546
      %v756 = vsel %vm690, %v495, %v548
      %v757 = vsel %vm707, %v741, %v568
      %v758 = vsel %vm707, %v742, %v570
      %v759 = vsel %vm707, %v743, %v572
      %v760 = vsel %vm707, %v744, %v574
      %v761 = vsel %vm707, %v745, %v576
      %v762 = vsel %vm707, %v746, %v578
      %v763 = vsel %vm707, %v747, %v580
      %v764 = vsel %vm707, %v748, %v582
      %v765 = vsel %vm707, %v749, %v584
      %v766 = vsel %vm707, %v750, %v586
      %v767 = vsel %vm707, %v751, %v588
      %v768 = vsel %vm707, %v752, %v590
      %v769 = vsel %vm707, %v753, %v592
      %v770 = vsel %vm707, %v754, %v594
      %v771 = vsel %vm707, %v755, %v596
      %v772 = vsel %vm707, %v756, %v598
      %v773 = vsel %vm724, %v757, %v622
      %v774 = vsel %vm724, %v758, %v624
      %v775 = vsel %vm724, %v759, %v626
      %v776 = vsel %vm724, %v760, %v628
      %v777 = vsel %vm724, %v761, %v630
      %v778 = vsel %vm724, %v762, %v632
      %v779 = vsel %vm724, %v763, %v634
      %v780 = vsel %vm724, %v764, %v636
      %v781 = vsel %vm724, %v765, %v638
      %v782 = vsel %vm724, %v766, %v640
      %v783 = vsel %vm724, %v767, %v642
      %v784 = vsel %vm724, %v768, %v644
      %v785 = vsel %vm724, %v769, %v646
      %v786 = vsel %vm724, %v770, %v648
      %v787 = vsel %vm724, %v771, %v650
      %v788 = vsel %vm724, %v772, %v652
      %v789 = vpack.c.bf16 %v726, %v725
      %v790 = vpack.c.bf16 %v774, %v773
      %v791 = vpack.c.bf16 %v366, %v364
      %v792 = vpack.c.bf16 %v728, %v727
      %v793 = vpack.c.bf16 %v776, %v775
      %v794 = vpack.c.bf16 %v371, %v369
      %v795 = vpack.c.bf16 %v730, %v729
      %v796 = vpack.c.bf16 %v778, %v777
      %v797 = vpack.c.bf16 %v376, %v374
      %v798 = vpack.c.bf16 %v732, %v731
      %v799 = vpack.c.bf16 %v780, %v779
      %v800 = vpack.c.bf16 %v381, %v379
      %v801 = vpack.c.bf16 %v734, %v733
      %v802 = vpack.c.bf16 %v782, %v781
      %v803 = vpack.c.bf16 %v386, %v384
      %v804 = vpack.c.bf16 %v736, %v735
      %v805 = vpack.c.bf16 %v784, %v783
      %v806 = vpack.c.bf16 %v391, %v389
      %v807 = vpack.c.bf16 %v738, %v737
      %v808 = vpack.c.bf16 %v786, %v785
      %v809 = vpack.c.bf16 %v516, %v514
      %v810 = vpack.c.bf16 %v740, %v739
      %v811 = vpack.c.bf16 %v788, %v787
      %v812 = vpack.c.bf16 %v673, %v671
      %v813 = vld [vmem:[%s1] sm:$0xf]
      %v814 = vld [vmem:[%s1 + $0x4] sm:$0xf]
      %v815 = vld [vmem:[%s1 + $0x8] sm:$0xf]
      %v816 = vld [vmem:[%s1 + $0xc] sm:$0xf]
      %v817 = vld [vmem:[%s1 + $0x10] sm:$0xf]
      %v818 = vld [vmem:[%s1 + $0x14] sm:$0xf]
      %v819 = vld [vmem:[%s1 + $0x18] sm:$0xf]
      %v820 = vld [vmem:[%s1 + $0x1c] sm:$0xf]
      %v821 = vld [vmem:[%s1 + $0x20] sm:$0xf]
      %v822 = vld [vmem:[%s1 + $0x24] sm:$0xf]
      %v823 = vld [vmem:[%s1 + $0x28] sm:$0xf]
      %v824 = vld [vmem:[%s1 + $0x2c] sm:$0xf]
      %v825 = vld [vmem:[%s1 + $0x30] sm:$0xf]
      %v826 = vld [vmem:[%s1 + $0x34] sm:$0xf]
      %v827 = vld [vmem:[%s1 + $0x38] sm:$0xf]
      %v828 = vld [vmem:[%s1 + $0x3c] sm:$0xf]
      %v829 = vld [vmem:[%s1 + $0x40] sm:$0xf]
      %v830 = vld [vmem:[%s1 + $0x44] sm:$0xf]
      %v831 = vld [vmem:[%s1 + $0x48] sm:$0xf]
      %v832 = vld [vmem:[%s1 + $0x4c] sm:$0xf]
      %v833 = vld [vmem:[%s1 + $0x50] sm:$0xf]
      %v834 = vld [vmem:[%s1 + $0x54] sm:$0xf]
      %v835 = vld [vmem:[%s1 + $0x58] sm:$0xf]
      %v836 = vld [vmem:[%s1 + $0x5c] sm:$0xf]
      %v837 = vld [vmem:[%s1 + $0x60] sm:$0xf]
      %v838 = vld [vmem:[%s1 + $0x64] sm:$0xf]
      %v839 = vld [vmem:[%s1 + $0x68] sm:$0xf]
      %v840 = vld [vmem:[%s1 + $0x6c] sm:$0xf]
      %v841 = vld [vmem:[%s1 + $0x70] sm:$0xf]
      %v842 = vld [vmem:[%s1 + $0x74] sm:$0xf]
      %v843 = vld [vmem:[%s1 + $0x78] sm:$0xf]
      %v844 = vld [vmem:[%s1 + $0x7c] sm:$0xf]
      %v845 = vld [vmem:[%s1 + $0x80] sm:$0xf]
      %v846 = vld [vmem:[%s1 + $0x84] sm:$0xf]
      %v847 = vld [vmem:[%s1 + $0x88] sm:$0xf]
      %v848 = vld [vmem:[%s1 + $0x8c] sm:$0xf]
      %v849 = vld [vmem:[%s2] sm:$0x1]
      %v851 = vlaneseq
      %v852 = vshrl.u32 %v851, 7
      %v853 = vsub.s32 0, %v852
      %v854 = vrot.slane %v849, %v853
      %v892 = vunpack.c.l.b16 %v813
      %v893 = vunpack.c.l.b16 %v814
      %v894 = vunpack.c.l.b16 %v815
      %v895 = vunpack.c.l.b16 %v816
      %v896 = vunpack.c.l.b16 %v817
      %v897 = vunpack.c.l.b16 %v818
      %v898 = vunpack.c.l.b16 %v819
      %v899 = vunpack.c.l.b16 %v820
      %v900 = vunpack.c.l.b16 %v821
      %v901 = vunpack.c.l.b16 %v822
      %v902 = vunpack.c.l.b16 %v823
      %v903 = vunpack.c.l.b16 %v824
      %v904 = vunpack.c.l.b16 %v825
      %v905 = vunpack.c.l.b16 %v826
      %v906 = vunpack.c.l.b16 %v827
      %v907 = vunpack.c.l.b16 %v828
      %v908 = vunpack.c.l.b16 %v829
      %v909 = vunpack.c.l.b16 %v830
      %v910 = vunpack.c.l.b16 %v831
      %v911 = vunpack.c.l.b16 %v832
      %v912 = vunpack.c.l.b16 %v833
      %v913 = vunpack.c.l.b16 %v834
      %v914 = vunpack.c.l.b16 %v835
      %v915 = vunpack.c.l.b16 %v836
      %v916 = vunpack.c.l.b16 %v837
      %v917 = vunpack.c.l.b16 %v838
      %v918 = vunpack.c.l.b16 %v839
      %v919 = vunpack.c.l.b16 %v840
      %v920 = vunpack.c.l.b16 %v841
      %v921 = vunpack.c.l.b16 %v842
      %v922 = vunpack.c.l.b16 %v843
      %v923 = vunpack.c.l.b16 %v844
      %v924 = vunpack.c.l.b16 %v845
      %v925 = vunpack.c.l.b16 %v846
      %v926 = vunpack.c.l.b16 %v847
      %v927 = vunpack.c.l.b16 %v848
      %v928 = vpack.c.b16 %v893, %v892
      %v929 = vpack.c.b16 %v895, %v894
      %v930 = vpack.c.b16 %v897, %v896
      %v931 = vpack.c.b16 %v899, %v898
      %v932 = vpack.c.b16 %v901, %v900
      %v933 = vpack.c.b16 %v903, %v902
      %v934 = vpack.c.b16 %v905, %v904
      %v935 = vpack.c.b16 %v907, %v906
      %v936 = vpack.c.b16 %v909, %v908
      %v937 = vpack.c.b16 %v911, %v910
      %v938 = vpack.c.b16 %v913, %v912
      %v939 = vpack.c.b16 %v915, %v914
      %v940 = vpack.c.b16 %v917, %v916
      %v941 = vpack.c.b16 %v919, %v918
      %v942 = vpack.c.b16 %v921, %v920
      %v943 = vpack.c.b16 %v923, %v922
      %v944 = vpack.c.b16 %v925, %v924
      %v945 = vpack.c.b16 %v927, %v926
      %v965 = vsel %vm690, %v791, 0
      %v968 = vsel %vm690, %v794, 0
      %v971 = vsel %vm690, %v797, 0
      %v974 = vsel %vm690, %v800, 0
      %v977 = vsel %vm690, %v803, 0
      %v980 = vsel %vm690, %v806, 0
      %v983 = vsel %vm690, %v809, 0
      %v986 = vsel %vm690, %v812, 0
      %988 = vmatprep.subr.bf16.mxu0 0
      %989 = vmatpush1.bf16.msra.mxu0 %v928
      %990 = vmatprep.subr.bf16.mxu0 0
      %991 = vmatpush1.bf16.msra.mxu0 %v929
      %992 = vmatprep.subr.bf16.mxu0 0
      %993 = vmatpush1.bf16.msra.mxu0 %v930
      %994 = vmatprep.subr.bf16.mxu0 0
      %995 = vmatpush1.bf16.msra.mxu0 %v931
      %996 = vmatprep.subr.bf16.mxu0 0
      %997 = vmatpush1.bf16.msra.mxu0 %v932
      %998 = vmatprep.subr.bf16.mxu0 0
      %999 = vmatpush1.bf16.msra.mxu0 %v933
      %1000 = vmatprep.subr.bf16.mxu0 0
      %1001 = vmatpush1.bf16.msra.mxu0 %v934
      %1002 = vmatprep.subr.bf16.mxu0 0
      %1003 = vmatpush1.bf16.msra.mxu0 %v935
      %1004 = vmatprep.subr.bf16.mxu0 0
      %1005 = vmatpush1.bf16.msra.mxu0 %v936
      %1006 = vmatprep.subr.bf16.mxu0 0
      %1007 = vmatpush1.bf16.msra.mxu0 %v937
      %1008 = vmatprep.subr.bf16.mxu0 0
      %1009 = vmatpush1.bf16.msra.mxu0 %v938
      %1010 = vmatprep.subr.bf16.mxu0 0
      %1011 = vmatpush1.bf16.msra.mxu0 %v939
      %1012 = vmatprep.subr.bf16.mxu0 0
      %1013 = vmatpush1.bf16.msra.mxu0 %v940
      %1014 = vmatprep.subr.bf16.mxu0 0
      %1015 = vmatpush1.bf16.msra.mxu0 %v941
      %1016 = vmatprep.subr.bf16.mxu0 0
      %1017 = vmatpush1.bf16.msra.mxu0 %v942
      %1018 = vmatprep.subr.bf16.mxu0 0
      %1019 = vmatpush1.bf16.msra.mxu0 %v943
      %1020 = vmatprep.mubr.bf16.mxu0 %v790
      %1021 = vmatmul.mubr.bf16.gmra.mrb[0].mxu0 %v789
      %v1022 = vpop.f32.mrb[0].mxu0
      %v1023 = vadd.f32 %v854, %v1022
      %v1024 = vpop.f32.mrb[0].mxu0
      %v1025 = vpop.f32.mrb[0].mxu0
      %v1026 = vadd.f32 %v854, %v1025
      %v1027 = vpop.f32.mrb[0].mxu0
      %1028 = vmatprep.mubr.bf16.mxu0 %v793
      %1029 = vmatmul.mubr.bf16.gmra.mrb[0].mxu0 %v792
      %v1030 = vpop.f32.mrb[0].mxu0
      %v1031 = vadd.f32 %v854, %v1030
      %v1032 = vpop.f32.mrb[0].mxu0
      %v1033 = vpop.f32.mrb[0].mxu0
      %v1034 = vadd.f32 %v854, %v1033
      %v1035 = vpop.f32.mrb[0].mxu0
      %1036 = vmatprep.mubr.bf16.mxu0 %v796
      %1037 = vmatmul.mubr.bf16.gmra.mrb[0].mxu0 %v795
      %v1038 = vpop.f32.mrb[0].mxu0
      %v1039 = vadd.f32 %v854, %v1038
      %v1040 = vpop.f32.mrb[0].mxu0
      %v1041 = vpop.f32.mrb[0].mxu0
      %v1042 = vadd.f32 %v854, %v1041
      %v1043 = vpop.f32.mrb[0].mxu0
      %1044 = vmatprep.mubr.bf16.mxu0 %v799
      %1045 = vmatmul.mubr.bf16.gmra.mrb[0].mxu0 %v798
      %v1046 = vpop.f32.mrb[0].mxu0
      %v1047 = vadd.f32 %v854, %v1046
      %v1048 = vpop.f32.mrb[0].mxu0
      %v1049 = vpop.f32.mrb[0].mxu0
      %v1050 = vadd.f32 %v854, %v1049
      %v1051 = vpop.f32.mrb[0].mxu0
      %1052 = vmatprep.mubr.bf16.mxu0 %v802
      %1053 = vmatmul.mubr.bf16.gmra.mrb[0].mxu0 %v801
      %v1054 = vpop.f32.mrb[0].mxu0
      %v1055 = vadd.f32 %v854, %v1054
      %v1056 = vpop.f32.mrb[0].mxu0
      %v1057 = vpop.f32.mrb[0].mxu0
      %v1058 = vadd.f32 %v854, %v1057
      %v1059 = vpop.f32.mrb[0].mxu0
      %1060 = vmatprep.mubr.bf16.mxu0 %v805
      %1061 = vmatmul.mubr.bf16.gmra.mrb[0].mxu0 %v804
      %v1062 = vpop.f32.mrb[0].mxu0
      %v1063 = vadd.f32 %v854, %v1062
      %v1064 = vpop.f32.mrb[0].mxu0
      %v1065 = vpop.f32.mrb[0].mxu0
      %v1066 = vadd.f32 %v854, %v1065
      %v1067 = vpop.f32.mrb[0].mxu0
      %1068 = vmatprep.mubr.bf16.mxu0 %v808
      %1069 = vmatmul.mubr.bf16.gmra.mrb[0].mxu0 %v807
      %v1070 = vpop.f32.mrb[0].mxu0
      %v1071 = vadd.f32 %v854, %v1070
      %v1072 = vpop.f32.mrb[0].mxu0
      %v1073 = vpop.f32.mrb[0].mxu0
      %v1074 = vadd.f32 %v854, %v1073
      %v1075 = vpop.f32.mrb[0].mxu0
      %1076 = vmatprep.mubr.bf16.mxu0 %v811
      %1077 = vmatmul.mubr.bf16.gmra.mrb[0].mxu0 %v810
      %v1078 = vpop.f32.mrb[0].mxu0
      %v1079 = vadd.f32 %v854, %v1078
      %v1080 = vpop.f32.mrb[0].mxu0
      %v1081 = vpop.f32.mrb[0].mxu0
      %v1082 = vadd.f32 %v854, %v1081
      %v1083 = vpop.f32.mrb[0].mxu0
      %1084 = vdwg.mxu0
      %1085 = vmatprep.subr.bf16.mxu0 0
      %1086 = vmatpush1.bf16.msra.mxu0 %v944
      %1087 = vmatprep.subr.bf16.mxu0 0
      %1088 = vmatpush1.bf16.msra.mxu0 %v945
      %1089 = vmatprep.subr.bf16.mxu0 0
      %1090 = vmatpush1.bf16.msra.mxu0 0
      %1091 = vmatprep.subr.bf16.mxu0 0
      %1092 = vmatpush1.bf16.msra.mxu0 0
      %1093 = vmatprep.subr.bf16.mxu0 0
      %1094 = vmatpush1.bf16.msra.mxu0 0
      %1095 = vmatprep.subr.bf16.mxu0 0
      %1096 = vmatpush1.bf16.msra.mxu0 0
      %1097 = vmatprep.subr.bf16.mxu0 0
      %1098 = vmatpush1.bf16.msra.mxu0 0
      %1099 = vmatprep.subr.bf16.mxu0 0
      %1100 = vmatpush1.bf16.msra.mxu0 0
      %1101 = vmatprep.subr.bf16.mxu0 0
      %1102 = vmatpush1.bf16.msra.mxu0 0
      %1103 = vmatprep.subr.bf16.mxu0 0
      %1104 = vmatpush1.bf16.msra.mxu0 0
      %1105 = vmatprep.subr.bf16.mxu0 0
      %1106 = vmatpush1.bf16.msra.mxu0 0
      %1107 = vmatprep.subr.bf16.mxu0 0
      %1108 = vmatpush1.bf16.msra.mxu0 0
      %1109 = vmatprep.subr.bf16.mxu0 0
      %1110 = vmatpush1.bf16.msra.mxu0 0
      %1111 = vmatprep.subr.bf16.mxu0 0
      %1112 = vmatpush1.bf16.msra.mxu0 0
      %1113 = vmatprep.subr.bf16.mxu0 0
      %1114 = vmatpush1.bf16.msra.mxu0 0
      %1115 = vmatprep.subr.bf16.mxu0 0
      %1116 = vmatpush1.bf16.msra.mxu0 0
      %1117 = vmatprep.mubr.bf16.mxu0 0
      %1118 = vmatmul.mubr.bf16.gmra.mrb[0].mxu0 %v965
      %v1119 = vpop.f32.mrb[0].mxu0
      %v1120 = vadd.f32 %v1023, %v1119
      %v1121 = vpop.f32.mrb[0].mxu0
      %v1122 = vpop.f32.mrb[0].mxu0
      %v1123 = vadd.f32 %v1026, %v1122
      %v1124 = vpop.f32.mrb[0].mxu0
      %1125 = vmatprep.mubr.bf16.mxu0 0
      %1126 = vmatmul.mubr.bf16.gmra.mrb[0].mxu0 %v968
      %v1127 = vpop.f32.mrb[0].mxu0
      %v1128 = vadd.f32 %v1031, %v1127
      %v1129 = vpop.f32.mrb[0].mxu0
      %v1130 = vpop.f32.mrb[0].mxu0
      %v1131 = vadd.f32 %v1034, %v1130
      %v1132 = vpop.f32.mrb[0].mxu0
      %1133 = vmatprep.mubr.bf16.mxu0 0
      %1134 = vmatmul.mubr.bf16.gmra.mrb[0].mxu0 %v971
      %v1135 = vpop.f32.mrb[0].mxu0
      %v1136 = vadd.f32 %v1039, %v1135
      %v1137 = vpop.f32.mrb[0].mxu0
      %v1138 = vpop.f32.mrb[0].mxu0
      %v1139 = vadd.f32 %v1042, %v1138
      %v1140 = vpop.f32.mrb[0].mxu0
      %1141 = vmatprep.mubr.bf16.mxu0 0
      %1142 = vmatmul.mubr.bf16.gmra.mrb[0].mxu0 %v974
      %v1143 = vpop.f32.mrb[0].mxu0
      %v1144 = vadd.f32 %v1047, %v1143
      %v1145 = vpop.f32.mrb[0].mxu0
      %v1146 = vpop.f32.mrb[0].mxu0
      %v1147 = vadd.f32 %v1050, %v1146
      %v1148 = vpop.f32.mrb[0].mxu0
      %1149 = vmatprep.mubr.bf16.mxu0 0
      %1150 = vmatmul.mubr.bf16.gmra.mrb[0].mxu0 %v977
      %v1151 = vpop.f32.mrb[0].mxu0
      %v1152 = vadd.f32 %v1055, %v1151
      %v1153 = vpop.f32.mrb[0].mxu0
      %v1154 = vpop.f32.mrb[0].mxu0
      %v1155 = vadd.f32 %v1058, %v1154
      %v1156 = vpop.f32.mrb[0].mxu0
      %1157 = vmatprep.mubr.bf16.mxu0 0
      %1158 = vmatmul.mubr.bf16.gmra.mrb[0].mxu0 %v980
      %v1159 = vpop.f32.mrb[0].mxu0
      %v1160 = vadd.f32 %v1063, %v1159
      %v1161 = vpop.f32.mrb[0].mxu0
      %v1162 = vpop.f32.mrb[0].mxu0
      %v1163 = vadd.f32 %v1066, %v1162
      %v1164 = vpop.f32.mrb[0].mxu0
      %1165 = vmatprep.mubr.bf16.mxu0 0
      %1166 = vmatmul.mubr.bf16.gmra.mrb[0].mxu0 %v983
      %v1167 = vpop.f32.mrb[0].mxu0
      %v1168 = vadd.f32 %v1071, %v1167
      %v1169 = vpop.f32.mrb[0].mxu0
      %v1170 = vpop.f32.mrb[0].mxu0
      %v1171 = vadd.f32 %v1074, %v1170
      %v1172 = vpop.f32.mrb[0].mxu0
      %1173 = vmatprep.mubr.bf16.mxu0 0
      %1174 = vmatmul.mubr.bf16.gmra.mrb[0].mxu0 %v986
      %v1175 = vpop.f32.mrb[0].mxu0
      %v1176 = vadd.f32 %v1079, %v1175
      %v1177 = vpop.f32.mrb[0].mxu0
      %v1178 = vpop.f32.mrb[0].mxu0
      %v1179 = vadd.f32 %v1082, %v1178
      %v1180 = vpop.f32.mrb[0].mxu0
      %1181 = vdwg.mxu0
      %v1182 = vmax.f32 %v1120, 0.0
      %v1183 = vmax.f32 %v1123, 0.0
      %v1184 = vmax.f32 %v1128, 0.0
      %v1185 = vmax.f32 %v1131, 0.0
      %v1186 = vmax.f32 %v1136, 0.0
      %v1187 = vmax.f32 %v1139, 0.0
      %v1188 = vmax.f32 %v1144, 0.0
      %v1189 = vmax.f32 %v1147, 0.0
      %v1190 = vmax.f32 %v1152, 0.0
      %v1191 = vmax.f32 %v1155, 0.0
      %v1192 = vmax.f32 %v1160, 0.0
      %v1193 = vmax.f32 %v1163, 0.0
      %v1194 = vmax.f32 %v1168, 0.0
      %v1195 = vmax.f32 %v1171, 0.0
      %v1196 = vmax.f32 %v1176, 0.0
      %v1197 = vmax.f32 %v1179, 0.0
      %1198 = vst.msk [vmem:[%s206] sm:$0xff] %vm707, %v1182
      %1199 = vst.msk [vmem:[%s206 + $0x8] sm:$0xff] %vm707, %v1183
      %1200 = vst.msk [vmem:[%s206 + $0x20] sm:$0xff] %vm707, %v1184
      %1201 = vst.msk [vmem:[%s206 + $0x28] sm:$0xff] %vm707, %v1185
      %1202 = vst.msk [vmem:[%s206 + $0x40] sm:$0xff] %vm707, %v1186
      %1203 = vst.msk [vmem:[%s206 + $0x48] sm:$0xff] %vm707, %v1187
      %1204 = vst.msk [vmem:[%s206 + $0x60] sm:$0xff] %vm707, %v1188
      %1205 = vst.msk [vmem:[%s206 + $0x68] sm:$0xff] %vm707, %v1189
      %1206 = vst.msk [vmem:[%s206 + $0x80] sm:$0xff] %vm707, %v1190
      %1207 = vst.msk [vmem:[%s206 + $0x88] sm:$0xff] %vm707, %v1191
      %1208 = vst.msk [vmem:[%s206 + $0xa0] sm:$0xff] %vm707, %v1192
      %1209 = vst.msk [vmem:[%s206 + $0xa8] sm:$0xff] %vm707, %v1193
      %1210 = vst.msk [vmem:[%s206 + $0xc0] sm:$0xff] %vm707, %v1194
      %1211 = vst.msk [vmem:[%s206 + $0xc8] sm:$0xff] %vm707, %v1195
      %1212 = vst.msk [vmem:[%s206 + $0xe0] sm:$0xff] %vm707, %v1196
      %1213 = vst.msk [vmem:[%s206 + $0xe8] sm:$0xff] %vm707, %v1197
      %1230 = vrot.lane.b32.xlu0 %v1182, 64
      %v1231 = vpop.permute.xlu0 %1230
      %1232 = vrot.lane.b32.xlu0 %v1183, 64
      %v1233 = vpop.permute.xlu0 %1232
      %1234 = vrot.lane.b32.xlu0 %v1184, 64
      %v1235 = vpop.permute.xlu0 %1234
      %1236 = vrot.lane.b32.xlu0 %v1185, 64
      %v1237 = vpop.permute.xlu0 %1236
      %1238 = vrot.lane.b32.xlu0 %v1186, 64
      %v1239 = vpop.permute.xlu0 %1238
      %1240 = vrot.lane.b32.xlu0 %v1187, 64
      %v1241 = vpop.permute.xlu0 %1240
      %1242 = vrot.lane.b32.xlu0 %v1188, 64
      %v1243 = vpop.permute.xlu0 %1242
      %1244 = vrot.lane.b32.xlu0 %v1189, 64
      %v1245 = vpop.permute.xlu0 %1244
      %1246 = vrot.lane.b32.xlu0 %v1190, 64
      %v1247 = vpop.permute.xlu0 %1246
      %1248 = vrot.lane.b32.xlu0 %v1191, 64
      %v1249 = vpop.permute.xlu0 %1248
      %1250 = vrot.lane.b32.xlu0 %v1192, 64
      %v1251 = vpop.permute.xlu0 %1250
      %1252 = vrot.lane.b32.xlu0 %v1193, 64
      %v1253 = vpop.permute.xlu0 %1252
      %1254 = vrot.lane.b32.xlu0 %v1194, 64
      %v1255 = vpop.permute.xlu0 %1254
      %1256 = vrot.lane.b32.xlu0 %v1195, 64
      %v1257 = vpop.permute.xlu0 %1256
      %1258 = vrot.lane.b32.xlu0 %v1196, 64
      %v1259 = vpop.permute.xlu0 %1258
      %1260 = vrot.lane.b32.xlu0 %v1197, 64
      %v1261 = vpop.permute.xlu0 %1260
      %1278 = vst.msk [vmem:[%s206 + $0x10] sm:$0xff] %vm707, %v1231
      %1279 = vst.msk [vmem:[%s206 + $0x18] sm:$0xff] %vm707, %v1233
      %1280 = vst.msk [vmem:[%s206 + $0x30] sm:$0xff] %vm707, %v1235
      %1281 = vst.msk [vmem:[%s206 + $0x38] sm:$0xff] %vm707, %v1237
      %1282 = vst.msk [vmem:[%s206 + $0x50] sm:$0xff] %vm707, %v1239
      %1283 = vst.msk [vmem:[%s206 + $0x58] sm:$0xff] %vm707, %v1241
      %1284 = vst.msk [vmem:[%s206 + $0x70] sm:$0xff] %vm707, %v1243
      %1285 = vst.msk [vmem:[%s206 + $0x78] sm:$0xff] %vm707, %v1245
      %1286 = vst.msk [vmem:[%s206 + $0x90] sm:$0xff] %vm707, %v1247
      %1287 = vst.msk [vmem:[%s206 + $0x98] sm:$0xff] %vm707, %v1249
      %1288 = vst.msk [vmem:[%s206 + $0xb0] sm:$0xff] %vm707, %v1251
      %1289 = vst.msk [vmem:[%s206 + $0xb8] sm:$0xff] %vm707, %v1253
      %1290 = vst.msk [vmem:[%s206 + $0xd0] sm:$0xff] %vm707, %v1255
      %1291 = vst.msk [vmem:[%s206 + $0xd8] sm:$0xff] %vm707, %v1257
      %1292 = vst.msk [vmem:[%s206 + $0xf0] sm:$0xff] %vm707, %v1259
      %1293 = vst.msk [vmem:[%s206 + $0xf8] sm:$0xff] %vm707, %v1261
      %p1294 = scmp.lt.s32.totalorder %s18, 1
      %s1295 = scalar_select %p1294, %s18, 1
      %p1296 = scmp.lt.s32.totalorder %s19, 1
      %s1297 = scalar_select %p1296, %s19, 1
      %s1298 = smul.addr %s1297, 32
      %s1299 = smul.addr %s1295, 64
      %s1300 = sadd.s32 %s1298, %s1299
      %s1301 = smul.addr %s1300, 8
      %s1302 = scalar_lea.vmem %s3, %s1301
      // Predicated region
      $region33: #{srresnet_forward.4} parent=31 // pred_check
        %p1303 = pneg %p116
      $region34: #{srresnet_forward.4} parent=31 // pred_check_branch
        %1305 = sbr.rel (%p1303) target = $region36
      $region35: #{srresnet_forward.4} parent=31 // pred_region
        _
      $region36: #{srresnet_forward.4} parent=31 // pred_fallthru
        _
    $region32: #{srresnet_forward.4} parent=5 // pred_fallthru
      _
    %p1306 = scmp.le.s32.totalorder 2, %s9
    // Predicated region
    $region37: #{srresnet_forward.4} parent=5 // pred_check
      %p1307 = pneg %p1306
    $region38: #{srresnet_forward.4} parent=5 // pred_check_branch
      %1309 = sbr.rel (%p1307) target = $region40
    $region39: #{srresnet_forward.4} parent=5 // pred_region
      %s1310 = ssub.s32 %s9, 2
      // Predicated region
      $region41: #{srresnet_forward.4} parent=39 // pred_check
        %p1311 = pneg %p122
      $region42: #{srresnet_forward.4} parent=39 // pred_check_branch
        %1313 = sbr.rel (%p1311) target = $region44
      $region43: #{srresnet_forward.4} parent=39 // pred_region
        %p1314 = scmp.lt.s32.totalorder %s20, 1
        %s1315 = scalar_select %p1314, %s20, 1
        %p1316 = scmp.lt.s32.totalorder %s21, 1
        %s1317 = scalar_select %p1316, %s21, 1
        %s1318 = smul.addr %s1317, 32
        %s1319 = smul.addr %s1315, 64
        %s1320 = sadd.s32 %s1318, %s1319
        %s1321 = smul.addr %s1320, 8
        %s1322 = scalar_lea.vmem %s3, %s1321
      $region44: #{srresnet_forward.4} parent=39 // pred_fallthru
        _
    $region40: #{srresnet_forward.4} parent=5 // pred_fallthru
      _
  $region6: #{srresnet_forward.4} parent=0 // loop_footer
    %s13 = sadd.s32 1, %s9
  $region7: #{srresnet_forward.4} parent=0 // loop_footer_branch
    %8 = sbr.rel target = $region3
  $region8: #{srresnet_forward.4} parent=0 // loop_exit
    _

// kernel: srresnet_forward.3
$region0: #{srresnet_forward.3}
  #allocation0 [shape = 'u32[]', space=smem, size = 0x4, offset = 0x4, fixed_abs, tag = 'smem constant byte address 0x4 - core index']
  #allocation1 [shape = 'u32[144,128]{1,0:T(1,128)}', space=vmem, size = 0x12000, scoped, tag = 'internal scratch']
  #allocation2 [shape = 'f32[180,64]{1,0:T(8,128)}', space=vmem, size = 0x17000, scoped, tag = 'scratch operand']
  %s0 = inlined_call_operand.vmem [shape: f32[2,2,14,22,4], index: 0, kind: input, shape index: {}]
  %s1 = inlined_call_operand.vmem [shape: bf16[100,64], index: 1, kind: input, shape index: {}]
  %s2 = inlined_call_operand.vmem [shape: f32[1,64], index: 2, kind: input, shape index: {}]
  %s3 = inlined_call_operand.vmem [shape: bf16[4,64,32], index: 3, kind: input, shape index: {}]
  %s4 = inlined_call_operand.vmem [shape: f32[4,1,32], index: 4, kind: input, shape index: {}]
  %s5 = inlined_call_operand.vmem [shape: bf16[4,32,64], index: 5, kind: input, shape index: {}]
  %s6 = inlined_call_operand.vmem [shape: f32[4,1,64], index: 6, kind: input, shape index: {}]
  %s7 = inlined_call_operand.vmem [shape: bf16[576,32], index: 7, kind: input, shape index: {}]
  %s8 = inlined_call_operand.vmem [shape: f32[1,32], index: 8, kind: input, shape index: {}]
  %s9 = inlined_call_operand.vmem [shape: f32[2,2,8,16,32], index: 9, kind: output, shape index: {}]
  %s10 = sld [smem:[#allocation0]]
  $region69: #{srresnet_forward.3} parent=0
    _
  %s12 = ssub.s32 1, %s10
  %s13 = scalar_select 0, %s12, %s10
  loop: start=0, step=1, limit=6
  $region2: #{srresnet_forward.3} parent=0 // loop_pre_header
    _
  $region3: #{srresnet_forward.3} parent=0 // loop_header
    %s15 = sphi 0, %s19
    %p16 = scmp.ge.s32.totalorder %s15, 6
    %s22 = sphi 0, %s34
    %s23 = sphi 0, %s30
    %s24 = sphi 0, %s22
    %s25 = sphi 0, %s23
    %s26 = sphi 0, %s24
    %s27 = sphi 0, %s25
    %s39 = sphi 0, %s41
    %s42 = sphi 0, %s39
    %s43 = sphi 0, %s42
    %s59 = sphi 0, %s43
    %s63 = sphi 0, %s63
    %s65 = sphi 0, %s63
    %s66 = sphi 0, %s65
    %s80 = sphi 0, %s66
    %s84 = sphi 0, %s84
    %s86 = sphi 0, %s84
    %s87 = sphi 0, %s86
    %s101 = sphi 0, %s87
    %s105 = sphi 0, %s105
    %s107 = sphi 0, %s105
    %s108 = sphi 0, %s107
    %s122 = sphi 0, %s108
    %s126 = sphi 0, %s126
    %s128 = sphi 0, %s126
    %s129 = sphi 0, %s128
    %s143 = sphi 0, %s129
    %s147 = sphi 0, %s147
    %s149 = sphi 0, %s147
    %s150 = sphi 0, %s149
    %s164 = sphi 0, %s150
    %s168 = sphi 0, %s168
    %s170 = sphi 0, %s168
    %s171 = sphi 0, %s170
    %s185 = sphi 0, %s171
    %s189 = sphi 0, %s189
    %s191 = sphi 0, %s189
    %s192 = sphi 0, %s191
    %s206 = sphi 0, %s192
    %s210 = sphi 0, %s210
    %s212 = sphi 0, %s210
    %s213 = sphi 0, %s212
    %s227 = sphi 0, %s213
    %s235 = sphi 0, %s237
    %s238 = sphi 0, %s235
    %s239 = sphi 0, %s238
    %s255 = sphi 0, %s239
  $region4: #{srresnet_forward.3} parent=0 // loop_header_branch
    %18 = sbr.rel (%p16) target = $region8
  $region5: #{srresnet_forward.3} parent=0 // loop_body
    %s20 = ssub.s32 %s15, 1
    %s21 = ssub.s32 %s15, 2
    %s28 = sadd.s32 1, %s23
    %p29 = scmp.ge.s32.totalorder %s28, 2
    %s30 = scalar_select %p29, 0, %s28
    %s31 = sadd.s32 1, %s22
    %s32 = scalar_select %p29, %s31, %s22
    %p33 = scmp.ge.s32.totalorder %s32, 2
    %s34 = scalar_select %p33, 0, %s32
    %s35 = ssub.s32 %s22, %s34
    %s36 = ssub.s32 %s23, %s30
    %s37 = sor.u32 %s35, %s36
    %p38 = scmp.eq.s32.totalorder %s37, 0
    %s40 = sadd.s32 %s39, 1
    %s41 = scalar_select %p38, %s39, %s40
    %p44 = pneg %p38
    %p45 = scmp.eq.s32.totalorder %s15, 3
    %p46 = por %p44, %p45
    %p47 = scmp.ne.s32.totalorder %s39, %s42
    %p48 = scmp.eq.s32.totalorder %s15, 0
    %p49 = por %p47, %p48
    %p50 = scmp.ne.s32.totalorder %s39, %s42
    %p51 = scmp.eq.s32.totalorder %s20, 3
    %p52 = por %p50, %p51
    %p53 = scmp.ne.s32.totalorder %s42, %s43
    %p54 = scmp.eq.s32.totalorder %s20, 0
    %p55 = por %p53, %p54
    %p56 = scmp.ne.s32.totalorder %s42, %s43
    %p57 = scmp.eq.s32.totalorder %s21, 3
    %p58 = por %p56, %p57
    %p60 = scmp.ne.s32.totalorder %s43, %s59
    %p61 = scmp.eq.s32.totalorder %s21, 0
    %p62 = por %p60, %p61
    %s64 = sadd.s32 %s63, 1
    %p67 = scmp.eq.s32.totalorder %s15, 3
    %p68 = scmp.ne.s32.totalorder %s63, %s65
    %p69 = scmp.eq.s32.totalorder %s15, 0
    %p70 = por %p68, %p69
    %p71 = scmp.ne.s32.totalorder %s63, %s65
    %p72 = scmp.eq.s32.totalorder %s20, 3
    %p73 = por %p71, %p72
    %p74 = scmp.ne.s32.totalorder %s65, %s66
    %p75 = scmp.eq.s32.totalorder %s20, 0
    %p76 = por %p74, %p75
    %p77 = scmp.ne.s32.totalorder %s65, %s66
    %p78 = scmp.eq.s32.totalorder %s21, 3
    %p79 = por %p77, %p78
    %p81 = scmp.ne.s32.totalorder %s66, %s80
    %p82 = scmp.eq.s32.totalorder %s21, 0
    %p83 = por %p81, %p82
    %s85 = sadd.s32 %s84, 1
    %p88 = scmp.eq.s32.totalorder %s15, 3
    %p89 = scmp.ne.s32.totalorder %s84, %s86
    %p90 = scmp.eq.s32.totalorder %s15, 0
    %p91 = por %p89, %p90
    %p92 = scmp.ne.s32.totalorder %s84, %s86
    %p93 = scmp.eq.s32.totalorder %s20, 3
    %p94 = por %p92, %p93
    %p95 = scmp.ne.s32.totalorder %s86, %s87
    %p96 = scmp.eq.s32.totalorder %s20, 0
    %p97 = por %p95, %p96
    %p98 = scmp.ne.s32.totalorder %s86, %s87
    %p99 = scmp.eq.s32.totalorder %s21, 3
    %p100 = por %p98, %p99
    %p102 = scmp.ne.s32.totalorder %s87, %s101
    %p103 = scmp.eq.s32.totalorder %s21, 0
    %p104 = por %p102, %p103
    %s106 = sadd.s32 %s105, 1
    %p109 = scmp.eq.s32.totalorder %s15, 3
    %p110 = scmp.ne.s32.totalorder %s105, %s107
    %p111 = scmp.eq.s32.totalorder %s15, 0
    %p112 = por %p110, %p111
    %p113 = scmp.ne.s32.totalorder %s105, %s107
    %p114 = scmp.eq.s32.totalorder %s20, 3
    %p115 = por %p113, %p114
    %p116 = scmp.ne.s32.totalorder %s107, %s108
    %p117 = scmp.eq.s32.totalorder %s20, 0
    %p118 = por %p116, %p117
    %p119 = scmp.ne.s32.totalorder %s107, %s108
    %p120 = scmp.eq.s32.totalorder %s21, 3
    %p121 = por %p119, %p120
    %p123 = scmp.ne.s32.totalorder %s108, %s122
    %p124 = scmp.eq.s32.totalorder %s21, 0
    %p125 = por %p123, %p124
    %s127 = sadd.s32 %s126, 1
    %p130 = scmp.eq.s32.totalorder %s15, 3
    %p131 = scmp.ne.s32.totalorder %s126, %s128
    %p132 = scmp.eq.s32.totalorder %s15, 0
    %p133 = por %p131, %p132
    %p134 = scmp.ne.s32.totalorder %s126, %s128
    %p135 = scmp.eq.s32.totalorder %s20, 3
    %p136 = por %p134, %p135
    %p137 = scmp.ne.s32.totalorder %s128, %s129
    %p138 = scmp.eq.s32.totalorder %s20, 0
    %p139 = por %p137, %p138
    %p140 = scmp.ne.s32.totalorder %s128, %s129
    %p141 = scmp.eq.s32.totalorder %s21, 3
    %p142 = por %p140, %p141
    %p144 = scmp.ne.s32.totalorder %s129, %s143
    %p145 = scmp.eq.s32.totalorder %s21, 0
    %p146 = por %p144, %p145
    %s148 = sadd.s32 %s147, 1
    %p151 = scmp.eq.s32.totalorder %s15, 3
    %p152 = scmp.ne.s32.totalorder %s147, %s149
    %p153 = scmp.eq.s32.totalorder %s15, 0
    %p154 = por %p152, %p153
    %p155 = scmp.ne.s32.totalorder %s147, %s149
    %p156 = scmp.eq.s32.totalorder %s20, 3
    %p157 = por %p155, %p156
    %p158 = scmp.ne.s32.totalorder %s149, %s150
    %p159 = scmp.eq.s32.totalorder %s20, 0
    %p160 = por %p158, %p159
    %p161 = scmp.ne.s32.totalorder %s149, %s150
    %p162 = scmp.eq.s32.totalorder %s21, 3
    %p163 = por %p161, %p162
    %p165 = scmp.ne.s32.totalorder %s150, %s164
    %p166 = scmp.eq.s32.totalorder %s21, 0
    %p167 = por %p165, %p166
    %s169 = sadd.s32 %s168, 1
    %p172 = scmp.eq.s32.totalorder %s15, 3
    %p173 = scmp.ne.s32.totalorder %s168, %s170
    %p174 = scmp.eq.s32.totalorder %s15, 0
    %p175 = por %p173, %p174
    %p176 = scmp.ne.s32.totalorder %s168, %s170
    %p177 = scmp.eq.s32.totalorder %s20, 3
    %p178 = por %p176, %p177
    %p179 = scmp.ne.s32.totalorder %s170, %s171
    %p180 = scmp.eq.s32.totalorder %s20, 0
    %p181 = por %p179, %p180
    %p182 = scmp.ne.s32.totalorder %s170, %s171
    %p183 = scmp.eq.s32.totalorder %s21, 3
    %p184 = por %p182, %p183
    %p186 = scmp.ne.s32.totalorder %s171, %s185
    %p187 = scmp.eq.s32.totalorder %s21, 0
    %p188 = por %p186, %p187
    %s190 = sadd.s32 %s189, 1
    %p193 = scmp.eq.s32.totalorder %s15, 3
    %p194 = scmp.ne.s32.totalorder %s189, %s191
    %p195 = scmp.eq.s32.totalorder %s15, 0
    %p196 = por %p194, %p195
    %p197 = scmp.ne.s32.totalorder %s189, %s191
    %p198 = scmp.eq.s32.totalorder %s20, 3
    %p199 = por %p197, %p198
    %p200 = scmp.ne.s32.totalorder %s191, %s192
    %p201 = scmp.eq.s32.totalorder %s20, 0
    %p202 = por %p200, %p201
    %p203 = scmp.ne.s32.totalorder %s191, %s192
    %p204 = scmp.eq.s32.totalorder %s21, 3
    %p205 = por %p203, %p204
    %p207 = scmp.ne.s32.totalorder %s192, %s206
    %p208 = scmp.eq.s32.totalorder %s21, 0
    %p209 = por %p207, %p208
    %s211 = sadd.s32 %s210, 1
    %p214 = scmp.eq.s32.totalorder %s15, 3
    %p215 = scmp.ne.s32.totalorder %s210, %s212
    %p216 = scmp.eq.s32.totalorder %s15, 0
    %p217 = por %p215, %p216
    %p218 = scmp.ne.s32.totalorder %s210, %s212
    %p219 = scmp.eq.s32.totalorder %s20, 3
    %p220 = por %p218, %p219
    %p221 = scmp.ne.s32.totalorder %s212, %s213
    %p222 = scmp.eq.s32.totalorder %s20, 0
    %p223 = por %p221, %p222
    %p224 = scmp.ne.s32.totalorder %s212, %s213
    %p225 = scmp.eq.s32.totalorder %s21, 3
    %p226 = por %p224, %p225
    %p228 = scmp.ne.s32.totalorder %s213, %s227
    %p229 = scmp.eq.s32.totalorder %s21, 0
    %p230 = por %p228, %p229
    %s231 = ssub.s32 %s22, %s34
    %s232 = ssub.s32 %s23, %s30
    %s233 = sor.u32 %s231, %s232
    %p234 = scmp.eq.s32.totalorder %s233, 0
    %s236 = sadd.s32 %s235, 1
    %s237 = scalar_select %p234, %s235, %s236
    %p240 = pneg %p234
    %p241 = scmp.eq.s32.totalorder %s15, 3
    %p242 = por %p240, %p241
    %p243 = scmp.ne.s32.totalorder %s235, %s238
    %p244 = scmp.eq.s32.totalorder %s15, 0
    %p245 = por %p243, %p244
    %p246 = scmp.ne.s32.totalorder %s235, %s238
    %p247 = scmp.eq.s32.totalorder %s20, 3
    %p248 = por %p246, %p247
    %p249 = scmp.ne.s32.totalorder %s238, %s239
    %p250 = scmp.eq.s32.totalorder %s20, 0
    %p251 = por %p249, %p250
    %p252 = scmp.ne.s32.totalorder %s238, %s239
    %p253 = scmp.eq.s32.totalorder %s21, 3
    %p254 = por %p252, %p253
    %p256 = scmp.ne.s32.totalorder %s239, %s255
    %p257 = scmp.eq.s32.totalorder %s21, 0
    %p258 = por %p256, %p257
    %p259 = scmp.le.s32.totalorder 1, %s15
    %p260 = scmp.lt.s32.totalorder %s15, 5
    %p261 = pnand %p259, %p260
    %p262 = pneg %p261
    // Predicated region
    $region9: #{srresnet_forward.3} parent=5 // pred_check
      _
    $region10: #{srresnet_forward.3} parent=5 // pred_check_branch
      %264 = sbr.rel (%p261) target = $region12
    $region11: #{srresnet_forward.3} parent=5 // pred_region
      %s265 = ssub.s32 %s15, 1
      // Predicated region
      $region13: #{srresnet_forward.3} parent=11 // pred_check
        %p266 = pneg %p76
      $region14: #{srresnet_forward.3} parent=11 // pred_check_branch
        %268 = sbr.rel (%p266) target = $region16
      $region15: #{srresnet_forward.3} parent=11 // pred_region
        _
      $region16: #{srresnet_forward.3} parent=11 // pred_fallthru
        _
      // Predicated region
      $region17: #{srresnet_forward.3} parent=11 // pred_check
        %p269 = pneg %p97
      $region18: #{srresnet_forward.3} parent=11 // pred_check_branch
        %271 = sbr.rel (%p269) target = $region20
      $region19: #{srresnet_forward.3} parent=11 // pred_region
        _
      $region20: #{srresnet_forward.3} parent=11 // pred_fallthru
        _
      // Predicated region
      $region21: #{srresnet_forward.3} parent=11 // pred_check
        %p272 = pneg %p118
      $region22: #{srresnet_forward.3} parent=11 // pred_check_branch
        %274 = sbr.rel (%p272) target = $region24
      $region23: #{srresnet_forward.3} parent=11 // pred_region
        _
      $region24: #{srresnet_forward.3} parent=11 // pred_fallthru
        _
      // Predicated region
      $region25: #{srresnet_forward.3} parent=11 // pred_check
        %p275 = pneg %p139
      $region26: #{srresnet_forward.3} parent=11 // pred_check_branch
        %277 = sbr.rel (%p275) target = $region28
      $region27: #{srresnet_forward.3} parent=11 // pred_region
        _
      $region28: #{srresnet_forward.3} parent=11 // pred_fallthru
        _
      // Predicated region
      $region29: #{srresnet_forward.3} parent=11 // pred_check
        %p278 = pneg %p160
      $region30: #{srresnet_forward.3} parent=11 // pred_check_branch
        %280 = sbr.rel (%p278) target = $region32
      $region31: #{srresnet_forward.3} parent=11 // pred_region
        _
      $region32: #{srresnet_forward.3} parent=11 // pred_fallthru
        _
      // Predicated region
      $region33: #{srresnet_forward.3} parent=11 // pred_check
        %p281 = pneg %p181
      $region34: #{srresnet_forward.3} parent=11 // pred_check_branch
        %283 = sbr.rel (%p281) target = $region36
      $region35: #{srresnet_forward.3} parent=11 // pred_region
        _
      $region36: #{srresnet_forward.3} parent=11 // pred_fallthru
        _
      // Predicated region
      $region37: #{srresnet_forward.3} parent=11 // pred_check
        %p284 = pneg %p202
      $region38: #{srresnet_forward.3} parent=11 // pred_check_branch
        %286 = sbr.rel (%p284) target = $region40
      $region39: #{srresnet_forward.3} parent=11 // pred_region
        _
      $region40: #{srresnet_forward.3} parent=11 // pred_fallthru
        _
      // Predicated region
      $region41: #{srresnet_forward.3} parent=11 // pred_check
        %p287 = pneg %p223
      $region42: #{srresnet_forward.3} parent=11 // pred_check_branch
        %289 = sbr.rel (%p287) target = $region44
      $region43: #{srresnet_forward.3} parent=11 // pred_region
        _
      $region44: #{srresnet_forward.3} parent=11 // pred_fallthru
        _
    $region12: #{srresnet_forward.3} parent=5 // pred_fallthru
      _
    %p290 = scmp.lt.s32.totalorder %s15, 4
    // Predicated region
    $region45: #{srresnet_forward.3} parent=5 // pred_check
      %p291 = pneg %p290
    $region46: #{srresnet_forward.3} parent=5 // pred_check_branch
      %293 = sbr.rel (%p291) target = $region48
    $region47: #{srresnet_forward.3} parent=5 // pred_region
      // Predicated region
      $region49: #{srresnet_forward.3} parent=47 // pred_check
        %p294 = pneg %p49
      $region50: #{srresnet_forward.3} parent=47 // pred_check_branch
        %296 = sbr.rel (%p294) target = $region52
      $region51: #{srresnet_forward.3} parent=47 // pred_region
        %p297 = scmp.lt.s32.totalorder %s22, 1
        %s298 = scalar_select %p297, %s22, 1
        %p299 = scmp.lt.s32.totalorder %s23, 1
        %s300 = scalar_select %p299, %s23, 1
        %s301 = smul.addr %s300, 42
        %s302 = smul.addr %s298, 84
        %s303 = sadd.s32 %s301, %s302
        %s304 = smul.addr %s303, 8
        %s305 = scalar_lea.vmem %s0, %s304
      $region52: #{srresnet_forward.3} parent=47 // pred_fallthru
        _
    $region48: #{srresnet_forward.3} parent=5 // pred_fallthru
      _
    %p306 = scmp.le.s32.totalorder 1, %s15
    %p307 = scmp.lt.s32.totalorder %s15, 5
    %p308 = pnand %p306, %p307
    %p309 = pneg %p308
    // Predicated region
    $region53: #{srresnet_forward.3} parent=5 // pred_check
      _
    $region54: #{srresnet_forward.3} parent=5 // pred_check_branch
      %311 = sbr.rel (%p308) target = $region56
    $region55: #{srresnet_forward.3} parent=5 // pred_region
      %s312 = ssub.s32 %s15, 1
      %p313 = scmp.lt.s32.totalorder %s24, 1
      %s314 = scalar_select %p313, %s24, 1
      %p315 = scmp.lt.s32.totalorder %s25, 1
      %s316 = scalar_select %p315, %s25, 1
      %s317 = smul.addr %s316, 42
      %s318 = smul.addr %s314, 84
      %s319 = sadd.s32 %s317, %s318
      %s320 = smul.addr %s319, 8
      %s321 = scalar_lea.vmem %s0, %s320
      %p322 = pneg %p55
      %p323 = pneg %p52
      %p324 = pneg %p76
      %p325 = pneg %p73
      %p326 = pneg %p97
      %p327 = pneg %p94
      %p328 = pneg %p118
      %p329 = pneg %p115
      %p330 = pneg %p139
      %p331 = pneg %p136
      %p332 = pneg %p160
      %p333 = pneg %p157
      %p334 = pneg %p181
      %p335 = pneg %p178
      %p336 = pneg %p202
      %p337 = pneg %p199
      %p338 = pneg %p223
      %p339 = pneg %p220
      %p340 = pneg %p251
      %p341 = pneg %p248
      %p342 = scmp.lt.s32.totalorder %s24, 1
      %s343 = scalar_select %p342, %s24, 1
      %p344 = scmp.lt.s32.totalorder %s25, 1
      %s345 = scalar_select %p344, %s25, 1
      %s346 = smul.addr %s345, 16
      %s347 = smul.addr %s343, 32
      %s348 = sadd.s32 %s346, %s347
      %s349 = smul.addr %s348, 8
      %s350 = scalar_lea.vmem %s9, %s349
      %p351 = scmp.lt.s32.totalorder %s24, 1
      %s352 = scalar_select %p351, %s24, 1
      %p353 = scmp.lt.s32.totalorder %s25, 1
      %s354 = scalar_select %p353, %s25, 1
      %s355 = smul.addr %s354, 42
      %s356 = smul.addr %s352, 84
      %s357 = sadd.s32 %s355, %s356
      %s358 = smul.addr %s357, 8
      %s359 = scalar_lea.vmem %s0, %s358
      %p360 = scmp.lt.s32.totalorder %s24, 1
      %s361 = scalar_select %p360, %s24, 1
      %p362 = scmp.lt.s32.totalorder %s25, 1
      %s363 = scalar_select %p362, %s25, 1
      %s364 = smul.addr %s363, 16
      %s365 = smul.addr %s361, 32
      %s366 = sadd.s32 %s364, %s365
      %s367 = smul.addr %s366, 8
      %s368 = scalar_lea.vmem %s9, %s367
      %v370 = vld [vmem:[%s359] sm:$0xff]
      %v371 = vld [vmem:[%s359 + $0x8] sm:$0xff]
      %v372 = vld [vmem:[%s359 + $0x10] sm:$0x3f]
      %v373 = vld [vmem:[%s359 + $0x18] sm:$0xff]
      %v374 = vld [vmem:[%s359 + $0x20] sm:$0xff]
      %v375 = vld [vmem:[%s359 + $0x28] sm:$0x3f]
      %v376 = vld [vmem:[%s359 + $0x30] sm:$0xff]
      %v377 = vld [vmem:[%s359 + $0x38] sm:$0xff]
      %v378 = vld [vmem:[%s359 + $0x40] sm:$0x3f]
      %v379 = vld [vmem:[%s359 + $0x48] sm:$0xff]
      %v380 = vld [vmem:[%s359 + $0x50] sm:$0xff]
      %v381 = vld [vmem:[%s359 + $0x58] sm:$0x3f]
      %v382 = vld [vmem:[%s359 + $0x60] sm:$0xff]
      %v383 = vld [vmem:[%s359 + $0x68] sm:$0xff]
      %v384 = vld [vmem:[%s359 + $0x70] sm:$0x3f]
      %v385 = vld [vmem:[%s359 + $0x78] sm:$0xff]
      %v386 = vld [vmem:[%s359 + $0x80] sm:$0xff]
      %v387 = vld [vmem:[%s359 + $0x88] sm:$0x3f]
      %v388 = vld [vmem:[%s359 + $0x90] sm:$0xff]
      %v389 = vld [vmem:[%s359 + $0x98] sm:$0xff]
      %v390 = vld [vmem:[%s359 + $0xa0] sm:$0x3f]
      %v391 = vld [vmem:[%s359 + $0xa8] sm:$0xff]
      %v392 = vld [vmem:[%s359 + $0xb0] sm:$0xff]
      %v393 = vld [vmem:[%s359 + $0xb8] sm:$0x3f]
      %v394 = vld [vmem:[%s359 + $0xc0] sm:$0xff]
      %v395 = vld [vmem:[%s359 + $0xc8] sm:$0xff]
      %v396 = vld [vmem:[%s359 + $0xd0] sm:$0x3f]
      %v397 = vld [vmem:[%s359 + $0xd8] sm:$0xff]
      %v398 = vld [vmem:[%s359 + $0xe0] sm:$0xff]
      %v399 = vld [vmem:[%s359 + $0xe8] sm:$0x3f]
      %v400 = vld [vmem:[%s359 + $0xf0] sm:$0xff]
      %v401 = vld [vmem:[%s359 + $0xf8] sm:$0xff]
      %v402 = vld [vmem:[%s359 + $0x100] sm:$0x3f]
      %v403 = vld [vmem:[%s359 + $0x108] sm:$0xff]
      %v404 = vld [vmem:[%s359 + $0x110] sm:$0xff]
      %v405 = vld [vmem:[%s359 + $0x118] sm:$0x3f]
      %v406 = vld [vmem:[%s359 + $0x120] sm:$0xff]
      %v407 = vld [vmem:[%s359 + $0x128] sm:$0xff]
      %v408 = vld [vmem:[%s359 + $0x130] sm:$0x3f]
      %v409 = vld [vmem:[%s359 + $0x138] sm:$0xff]
      %v410 = vld [vmem:[%s359 + $0x140] sm:$0xff]
      %v411 = vld [vmem:[%s359 + $0x148] sm:$0x3f]
      %vm442 = vcmask 1046528
      %v443 = vrot.slane %v370, 1
      %v444 = vrot.slane %v371, 1
      %v445 = vsel %vm442, %v443, %v444
      %v446 = vrot.slane %v372, 1
      %v447 = vsel %vm442, %v444, %v446
      %v448 = vrot.slane %v373, 1
      %v449 = vrot.slane %v374, 1
      %v450 = vsel %vm442, %v448, %v449
      %v451 = vrot.slane %v375, 1
      %v452 = vsel %vm442, %v449, %v451
      %v453 = vrot.slane %v376, 1
      %v454 = vrot.slane %v377, 1
      %v455 = vsel %vm442, %v453, %v454
      %v456 = vrot.slane %v378, 1
      %v457 = vsel %vm442, %v454, %v456
      %v458 = vrot.slane %v379, 1
      %v459 = vrot.slane %v380, 1
      %v460 = vsel %vm442, %v458, %v459
      %v461 = vrot.slane %v381, 1
      %v462 = vsel %vm442, %v459, %v461
      %v463 = vrot.slane %v382, 1
      %v464 = vrot.slane %v383, 1
      %v465 = vsel %vm442, %v463, %v464
      %v466 = vrot.slane %v384, 1
      %v467 = vsel %vm442, %v464, %v466
      %v468 = vrot.slane %v385, 1
      %v469 = vrot.slane %v386, 1
      %v470 = vsel %vm442, %v468, %v469
      %v471 = vrot.slane %v387, 1
      %v472 = vsel %vm442, %v469, %v471
      %v473 = vrot.slane %v388, 1
      %v474 = vrot.slane %v389, 1
      %v475 = vsel %vm442, %v473, %v474
      %v476 = vrot.slane %v390, 1
      %v477 = vsel %vm442, %v474, %v476
      %v478 = vrot.slane %v391, 1
      %v479 = vrot.slane %v392, 1
      %v480 = vsel %vm442, %v478, %v479
      %v481 = vrot.slane %v393, 1
      %v482 = vsel %vm442, %v479, %v481
      %v483 = vrot.slane %v394, 1
      %v484 = vrot.slane %v395, 1
      %v485 = vsel %vm442, %v483, %v484
      %v486 = vrot.slane %v396, 1
      %v487 = vsel %vm442, %v484, %v486
      %v488 = vrot.slane %v397, 1
      %v489 = vrot.slane %v398, 1
      %v490 = vsel %vm442, %v488, %v489
      %v491 = vrot.slane %v399, 1
      %v492 = vsel %vm442, %v489, %v491
      %493 = vrot.lane.b32.xlu0 %v445, 4
      %v494 = vpop.permute.xlu0 %493
      %495 = vrot.lane.b32.xlu0 %v447, 4
      %v496 = vpop.permute.xlu0 %495
      %497 = vrot.lane.b32.xlu0 %v446, 4
      %v498 = vpop.permute.xlu0 %497
      %499 = vrot.lane.b32.xlu0 %v450, 4
      %v500 = vpop.permute.xlu0 %499
      %501 = vrot.lane.b32.xlu0 %v452, 4
      %v502 = vpop.permute.xlu0 %501
      %503 = vrot.lane.b32.xlu0 %v451, 4
      %v504 = vpop.permute.xlu0 %503
      %505 = vrot.lane.b32.xlu0 %v455, 4
      %v506 = vpop.permute.xlu0 %505
      %507 = vrot.lane.b32.xlu0 %v457, 4
      %v508 = vpop.permute.xlu0 %507
      %509 = vrot.lane.b32.xlu0 %v456, 4
      %v510 = vpop.permute.xlu0 %509
      %511 = vrot.lane.b32.xlu0 %v460, 4
      %v512 = vpop.permute.xlu0 %511
      %513 = vrot.lane.b32.xlu0 %v462, 4
      %v514 = vpop.permute.xlu0 %513
      %515 = vrot.lane.b32.xlu0 %v461, 4
      %v516 = vpop.permute.xlu0 %515
      %517 = vrot.lane.b32.xlu0 %v465, 4
      %v518 = vpop.permute.xlu0 %517
      %519 = vrot.lane.b32.xlu0 %v467, 4
      %v520 = vpop.permute.xlu0 %519
      %521 = vrot.lane.b32.xlu0 %v466, 4
      %v522 = vpop.permute.xlu0 %521
      %523 = vrot.lane.b32.xlu0 %v470, 4
      %v524 = vpop.permute.xlu0 %523
      %525 = vrot.lane.b32.xlu0 %v472, 4
      %v526 = vpop.permute.xlu0 %525
      %527 = vrot.lane.b32.xlu0 %v471, 4
      %v528 = vpop.permute.xlu0 %527
      %529 = vrot.lane.b32.xlu0 %v475, 4
      %v530 = vpop.permute.xlu0 %529
      %531 = vrot.lane.b32.xlu0 %v477, 4
      %v532 = vpop.permute.xlu0 %531
      %533 = vrot.lane.b32.xlu0 %v476, 4
      %v534 = vpop.permute.xlu0 %533
      %535 = vrot.lane.b32.xlu0 %v480, 4
      %v536 = vpop.permute.xlu0 %535
      %537 = vrot.lane.b32.xlu0 %v482, 4
      %v538 = vpop.permute.xlu0 %537
      %539 = vrot.lane.b32.xlu0 %v481, 4
      %v540 = vpop.permute.xlu0 %539
      %541 = vrot.lane.b32.xlu0 %v485, 4
      %v542 = vpop.permute.xlu0 %541
      %543 = vrot.lane.b32.xlu0 %v487, 4
      %v544 = vpop.permute.xlu0 %543
      %545 = vrot.lane.b32.xlu0 %v486, 4
      %v546 = vpop.permute.xlu0 %545
      %547 = vrot.lane.b32.xlu0 %v490, 4
      %v548 = vpop.permute.xlu0 %547
      %549 = vrot.lane.b32.xlu0 %v492, 4
      %v550 = vpop.permute.xlu0 %549
      %551 = vrot.lane.b32.xlu0 %v491, 4
      %v552 = vpop.permute.xlu0 %551
      %vm583 = vcmask 1045504
      %v584 = vrot.slane %v370, 2
      %v585 = vrot.slane %v371, 2
      %v586 = vsel %vm583, %v584, %v585
      %v587 = vrot.slane %v372, 2
      %v588 = vsel %vm583, %v585, %v587
      %v589 = vrot.slane %v373, 2
      %v590 = vrot.slane %v374, 2
      %v591 = vsel %vm583, %v589, %v590
      %v592 = vrot.slane %v375, 2
      %v593 = vsel %vm583, %v590, %v592
      %v594 = vrot.slane %v376, 2
      %v595 = vrot.slane %v377, 2
      %v596 = vsel %vm583, %v594, %v595
      %v597 = vrot.slane %v378, 2
      %v598 = vsel %vm583, %v595, %v597
      %v599 = vrot.slane %v379, 2
      %v600 = vrot.slane %v380, 2
      %v601 = vsel %vm583, %v599, %v600
      %v602 = vrot.slane %v381, 2
      %v603 = vsel %vm583, %v600, %v602
      %v604 = vrot.slane %v382, 2
      %v605 = vrot.slane %v383, 2
      %v606 = vsel %vm583, %v604, %v605
      %v607 = vrot.slane %v384, 2
      %v608 = vsel %vm583, %v605, %v607
      %v609 = vrot.slane %v385, 2
      %v610 = vrot.slane %v386, 2
      %v611 = vsel %vm583, %v609, %v610
      %v612 = vrot.slane %v387, 2
      %v613 = vsel %vm583, %v610, %v612
      %v614 = vrot.slane %v388, 2
      %v615 = vrot.slane %v389, 2
      %v616 = vsel %vm583, %v614, %v615
      %v617 = vrot.slane %v390, 2
      %v618 = vsel %vm583, %v615, %v617
      %v619 = vrot.slane %v391, 2
      %v620 = vrot.slane %v392, 2
      %v621 = vsel %vm583, %v619, %v620
      %v622 = vrot.slane %v393, 2
      %v623 = vsel %vm583, %v620, %v622
      %v624 = vrot.slane %v394, 2
      %v625 = vrot.slane %v395, 2
      %v626 = vsel %vm583, %v624, %v625
      %v627 = vrot.slane %v396, 2
      %v628 = vsel %vm583, %v625, %v627
      %v629 = vrot.slane %v397, 2
      %v630 = vrot.slane %v398, 2
      %v631 = vsel %vm583, %v629, %v630
      %v632 = vrot.slane %v399, 2
      %v633 = vsel %vm583, %v630, %v632
      %634 = vrot.lane.b32.xlu0 %v586, 8
      %v635 = vpop.permute.xlu0 %634
      %636 = vrot.lane.b32.xlu0 %v588, 8
      %v637 = vpop.permute.xlu0 %636
      %638 = vrot.lane.b32.xlu0 %v587, 8
      %v639 = vpop.permute.xlu0 %638
      %640 = vrot.lane.b32.xlu0 %v591, 8
      %v641 = vpop.permute.xlu0 %640
      %642 = vrot.lane.b32.xlu0 %v593, 8
      %v643 = vpop.permute.xlu0 %642
      %644 = vrot.lane.b32.xlu0 %v592, 8
      %v645 = vpop.permute.xlu0 %644
      %646 = vrot.lane.b32.xlu0 %v596, 8
      %v647 = vpop.permute.xlu0 %646
      %648 = vrot.lane.b32.xlu0 %v598, 8
      %v649 = vpop.permute.xlu0 %648
      %650 = vrot.lane.b32.xlu0 %v597, 8
      %v651 = vpop.permute.xlu0 %650
      %652 = vrot.lane.b32.xlu0 %v601, 8
      %v653 = vpop.permute.xlu0 %652
      %654 = vrot.lane.b32.xlu0 %v603, 8
      %v655 = vpop.permute.xlu0 %654
      %656 = vrot.lane.b32.xlu0 %v602, 8
      %v657 = vpop.permute.xlu0 %656
      %658 = vrot.lane.b32.xlu0 %v606, 8
      %v659 = vpop.permute.xlu0 %658
      %660 = vrot.lane.b32.xlu0 %v608, 8
      %v661 = vpop.permute.xlu0 %660
      %662 = vrot.lane.b32.xlu0 %v607, 8
      %v663 = vpop.permute.xlu0 %662
      %664 = vrot.lane.b32.xlu0 %v611, 8
      %v665 = vpop.permute.xlu0 %664
      %666 = vrot.lane.b32.xlu0 %v613, 8
      %v667 = vpop.permute.xlu0 %666
      %668 = vrot.lane.b32.xlu0 %v612, 8
      %v669 = vpop.permute.xlu0 %668
      %670 = vrot.lane.b32.xlu0 %v616, 8
      %v671 = vpop.permute.xlu0 %670
      %672 = vrot.lane.b32.xlu0 %v618, 8
      %v673 = vpop.permute.xlu0 %672
      %674 = vrot.lane.b32.xlu0 %v617, 8
      %v675 = vpop.permute.xlu0 %674
      %676 = vrot.lane.b32.xlu0 %v621, 8
      %v677 = vpop.permute.xlu0 %676
      %678 = vrot.lane.b32.xlu0 %v623, 8
      %v679 = vpop.permute.xlu0 %678
      %680 = vrot.lane.b32.xlu0 %v622, 8
      %v681 = vpop.permute.xlu0 %680
      %682 = vrot.lane.b32.xlu0 %v626, 8
      %v683 = vpop.permute.xlu0 %682
      %684 = vrot.lane.b32.xlu0 %v628, 8
      %v685 = vpop.permute.xlu0 %684
      %686 = vrot.lane.b32.xlu0 %v627, 8
      %v687 = vpop.permute.xlu0 %686
      %688 = vrot.lane.b32.xlu0 %v631, 8
      %v689 = vpop.permute.xlu0 %688
      %690 = vrot.lane.b32.xlu0 %v633, 8
      %v691 = vpop.permute.xlu0 %690
      %692 = vrot.lane.b32.xlu0 %v632, 8
      %v693 = vpop.permute.xlu0 %692
      %vm724 = vcmask 1044480
      %v725 = vrot.slane %v370, 3
      %v726 = vrot.slane %v371, 3
      %v727 = vsel %vm724, %v725, %v726
      %v728 = vrot.slane %v372, 3
      %v729 = vsel %vm724, %v726, %v728
      %v730 = vrot.slane %v373, 3
      %v731 = vrot.slane %v374, 3
      %v732 = vsel %vm724, %v730, %v731
      %v733 = vrot.slane %v375, 3
      %v734 = vsel %vm724, %v731, %v733
      %v735 = vrot.slane %v376, 3
      %v736 = vrot.slane %v377, 3
      %v737 = vsel %vm724, %v735, %v736
      %v738 = vrot.slane %v378, 3
      %v739 = vsel %vm724, %v736, %v738
      %v740 = vrot.slane %v379, 3
      %v741 = vrot.slane %v380, 3
      %v742 = vsel %vm724, %v740, %v741
      %v743 = vrot.slane %v381, 3
      %v744 = vsel %vm724, %v741, %v743
      %v745 = vrot.slane %v382, 3
      %v746 = vrot.slane %v383, 3
      %v747 = vsel %vm724, %v745, %v746
      %v748 = vrot.slane %v384, 3
      %v749 = vsel %vm724, %v746, %v748
      %v750 = vrot.slane %v385, 3
      %v751 = vrot.slane %v386, 3
      %v752 = vsel %vm724, %v750, %v751
      %v753 = vrot.slane %v387, 3
      %v754 = vsel %vm724, %v751, %v753
      %v755 = vrot.slane %v388, 3
      %v756 = vrot.slane %v389, 3
      %v757 = vsel %vm724, %v755, %v756
      %v758 = vrot.slane %v390, 3
      %v759 = vsel %vm724, %v756, %v758
      %v760 = vrot.slane %v391, 3
      %v761 = vrot.slane %v392, 3
      %v762 = vsel %vm724, %v760, %v761
      %v763 = vrot.slane %v393, 3
      %v764 = vsel %vm724, %v761, %v763
      %v765 = vrot.slane %v394, 3
      %v766 = vrot.slane %v395, 3
      %v767 = vsel %vm724, %v765, %v766
      %v768 = vrot.slane %v396, 3
      %v769 = vsel %vm724, %v766, %v768
      %v770 = vrot.slane %v397, 3
      %v771 = vrot.slane %v398, 3
      %v772 = vsel %vm724, %v770, %v771
      %v773 = vrot.slane %v399, 3
      %v774 = vsel %vm724, %v771, %v773
      %775 = vrot.lane.b32.xlu0 %v727, 12
      %v776 = vpop.permute.xlu0 %775
      %777 = vrot.lane.b32.xlu0 %v729, 12
      %v778 = vpop.permute.xlu0 %777
      %779 = vrot.lane.b32.xlu0 %v728, 12
      %v780 = vpop.permute.xlu0 %779
      %781 = vrot.lane.b32.xlu0 %v732, 12
      %v782 = vpop.permute.xlu0 %781
      %783 = vrot.lane.b32.xlu0 %v734, 12
      %v784 = vpop.permute.xlu0 %783
      %785 = vrot.lane.b32.xlu0 %v733, 12
      %v786 = vpop.permute.xlu0 %785
      %787 = vrot.lane.b32.xlu0 %v737, 12
      %v788 = vpop.permute.xlu0 %787
      %789 = vrot.lane.b32.xlu0 %v739, 12
      %v790 = vpop.permute.xlu0 %789
      %791 = vrot.lane.b32.xlu0 %v738, 12
      %v792 = vpop.permute.xlu0 %791
      %793 = vrot.lane.b32.xlu0 %v742, 12
      %v794 = vpop.permute.xlu0 %793
      %795 = vrot.lane.b32.xlu0 %v744, 12
      %v796 = vpop.permute.xlu0 %795
      %797 = vrot.lane.b32.xlu0 %v743, 12
      %v798 = vpop.permute.xlu0 %797
      %799 = vrot.lane.b32.xlu0 %v747, 12
      %v800 = vpop.permute.xlu0 %799
      %801 = vrot.lane.b32.xlu0 %v749, 12
      %v802 = vpop.permute.xlu0 %801
      %803 = vrot.lane.b32.xlu0 %v748, 12
      %v804 = vpop.permute.xlu0 %803
      %805 = vrot.lane.b32.xlu0 %v752, 12
      %v806 = vpop.permute.xlu0 %805
      %807 = vrot.lane.b32.xlu0 %v754, 12
      %v808 = vpop.permute.xlu0 %807
      %809 = vrot.lane.b32.xlu0 %v753, 12
      %v810 = vpop.permute.xlu0 %809
      %811 = vrot.lane.b32.xlu0 %v757, 12
      %v812 = vpop.permute.xlu0 %811
      %813 = vrot.lane.b32.xlu0 %v759, 12
      %v814 = vpop.permute.xlu0 %813
      %815 = vrot.lane.b32.xlu0 %v758, 12
      %v816 = vpop.permute.xlu0 %815
      %817 = vrot.lane.b32.xlu0 %v762, 12
      %v818 = vpop.permute.xlu0 %817
      %819 = vrot.lane.b32.xlu0 %v764, 12
      %v820 = vpop.permute.xlu0 %819
      %821 = vrot.lane.b32.xlu0 %v763, 12
      %v822 = vpop.permute.xlu0 %821
      %823 = vrot.lane.b32.xlu0 %v767, 12
      %v824 = vpop.permute.xlu0 %823
      %825 = vrot.lane.b32.xlu0 %v769, 12
      %v826 = vpop.permute.xlu0 %825
      %827 = vrot.lane.b32.xlu0 %v768, 12
      %v828 = vpop.permute.xlu0 %827
      %829 = vrot.lane.b32.xlu0 %v772, 12
      %v830 = vpop.permute.xlu0 %829
      %831 = vrot.lane.b32.xlu0 %v774, 12
      %v832 = vpop.permute.xlu0 %831
      %833 = vrot.lane.b32.xlu0 %v773, 12
      %v834 = vpop.permute.xlu0 %833
      %vm865 = vcmask 1043456
      %v866 = vrot.slane %v370, 4
      %v867 = vrot.slane %v371, 4
      %v868 = vsel %vm865, %v866, %v867
      %v869 = vrot.slane %v372, 4
      %v870 = vsel %vm865, %v867, %v869
      %v871 = vrot.slane %v373, 4
      %v872 = vrot.slane %v374, 4
      %v873 = vsel %vm865, %v871, %v872
      %v874 = vrot.slane %v375, 4
      %v875 = vsel %vm865, %v872, %v874
      %v876 = vrot.slane %v376, 4
      %v877 = vrot.slane %v377, 4
      %v878 = vsel %vm865, %v876, %v877
      %v879 = vrot.slane %v378, 4
      %v880 = vsel %vm865, %v877, %v879
      %v881 = vrot.slane %v379, 4
      %v882 = vrot.slane %v380, 4
      %v883 = vsel %vm865, %v881, %v882
      %v884 = vrot.slane %v381, 4
      %v885 = vsel %vm865, %v882, %v884
      %v886 = vrot.slane %v382, 4
      %v887 = vrot.slane %v383, 4
      %v888 = vsel %vm865, %v886, %v887
      %v889 = vrot.slane %v384, 4
      %v890 = vsel %vm865, %v887, %v889
      %v891 = vrot.slane %v385, 4
      %v892 = vrot.slane %v386, 4
      %v893 = vsel %vm865, %v891, %v892
      %v894 = vrot.slane %v387, 4
      %v895 = vsel %vm865, %v892, %v894
      %v896 = vrot.slane %v388, 4
      %v897 = vrot.slane %v389, 4
      %v898 = vsel %vm865, %v896, %v897
      %v899 = vrot.slane %v390, 4
      %v900 = vsel %vm865, %v897, %v899
      %v901 = vrot.slane %v391, 4
      %v902 = vrot.slane %v392, 4
      %v903 = vsel %vm865, %v901, %v902
      %v904 = vrot.slane %v393, 4
      %v905 = vsel %vm865, %v902, %v904
      %v906 = vrot.slane %v394, 4
      %v907 = vrot.slane %v395, 4
      %v908 = vsel %vm865, %v906, %v907
      %v909 = vrot.slane %v396, 4
      %v910 = vsel %vm865, %v907, %v909
      %v911 = vrot.slane %v397, 4
      %v912 = vrot.slane %v398, 4
      %v913 = vsel %vm865, %v911, %v912
      %v914 = vrot.slane %v399, 4
      %v915 = vsel %vm865, %v912, %v914
      %916 = vrot.lane.b32.xlu0 %v868, 16
      %v917 = vpop.permute.xlu0 %916
      %918 = vrot.lane.b32.xlu0 %v870, 16
      %v919 = vpop.permute.xlu0 %918
      %920 = vrot.lane.b32.xlu0 %v869, 16
      %v921 = vpop.permute.xlu0 %920
      %922 = vrot.lane.b32.xlu0 %v873, 16
      %v923 = vpop.permute.xlu0 %922
      %924 = vrot.lane.b32.xlu0 %v875, 16
      %v925 = vpop.permute.xlu0 %924
      %926 = vrot.lane.b32.xlu0 %v874, 16
      %v927 = vpop.permute.xlu0 %926
      %928 = vrot.lane.b32.xlu0 %v878, 16
      %v929 = vpop.permute.xlu0 %928
      %930 = vrot.lane.b32.xlu0 %v880, 16
      %v931 = vpop.permute.xlu0 %930
      %932 = vrot.lane.b32.xlu0 %v879, 16
      %v933 = vpop.permute.xlu0 %932
      %934 = vrot.lane.b32.xlu0 %v883, 16
      %v935 = vpop.permute.xlu0 %934
      %936 = vrot.lane.b32.xlu0 %v885, 16
      %v937 = vpop.permute.xlu0 %936
      %938 = vrot.lane.b32.xlu0 %v884, 16
      %v939 = vpop.permute.xlu0 %938
      %940 = vrot.lane.b32.xlu0 %v888, 16
      %v941 = vpop.permute.xlu0 %940
      %942 = vrot.lane.b32.xlu0 %v890, 16
      %v943 = vpop.permute.xlu0 %942
      %944 = vrot.lane.b32.xlu0 %v889, 16
      %v945 = vpop.permute.xlu0 %944
      %946 = vrot.lane.b32.xlu0 %v893, 16
      %v947 = vpop.permute.xlu0 %946
      %948 = vrot.lane.b32.xlu0 %v895, 16
      %v949 = vpop.permute.xlu0 %948
      %950 = vrot.lane.b32.xlu0 %v894, 16
      %v951 = vpop.permute.xlu0 %950
      %952 = vrot.lane.b32.xlu0 %v898, 16
      %v953 = vpop.permute.xlu0 %952
      %954 = vrot.lane.b32.xlu0 %v900, 16
      %v955 = vpop.permute.xlu0 %954
      %956 = vrot.lane.b32.xlu0 %v899, 16
      %v957 = vpop.permute.xlu0 %956
      %958 = vrot.lane.b32.xlu0 %v903, 16
      %v959 = vpop.permute.xlu0 %958
      %960 = vrot.lane.b32.xlu0 %v905, 16
      %v961 = vpop.permute.xlu0 %960
      %962 = vrot.lane.b32.xlu0 %v904, 16
      %v963 = vpop.permute.xlu0 %962
      %964 = vrot.lane.b32.xlu0 %v908, 16
      %v965 = vpop.permute.xlu0 %964
      %966 = vrot.lane.b32.xlu0 %v910, 16
      %v967 = vpop.permute.xlu0 %966
      %968 = vrot.lane.b32.xlu0 %v909, 16
      %v969 = vpop.permute.xlu0 %968
      %970 = vrot.lane.b32.xlu0 %v913, 16
      %v971 = vpop.permute.xlu0 %970
      %972 = vrot.lane.b32.xlu0 %v915, 16
      %v973 = vpop.permute.xlu0 %972
      %974 = vrot.lane.b32.xlu0 %v914, 16
      %v975 = vpop.permute.xlu0 %974
      %1009 = vrot.lane.b32.xlu0 %v373, 20
      %v1010 = vpop.permute.xlu0 %1009
      %1011 = vrot.lane.b32.xlu0 %v374, 20
      %v1012 = vpop.permute.xlu0 %1011
      %1013 = vrot.lane.b32.xlu0 %v375, 20
      %v1014 = vpop.permute.xlu0 %1013
      %1015 = vrot.lane.b32.xlu0 %v376, 20
      %v1016 = vpop.permute.xlu0 %1015
      %1017 = vrot.lane.b32.xlu0 %v377, 20
      %v1018 = vpop.permute.xlu0 %1017
      %1019 = vrot.lane.b32.xlu0 %v378, 20
      %v1020 = vpop.permute.xlu0 %1019
      %1021 = vrot.lane.b32.xlu0 %v379, 20
      %v1022 = vpop.permute.xlu0 %1021
      %1023 = vrot.lane.b32.xlu0 %v380, 20
      %v1024 = vpop.permute.xlu0 %1023
      %1025 = vrot.lane.b32.xlu0 %v381, 20
      %v1026 = vpop.permute.xlu0 %1025
      %1027 = vrot.lane.b32.xlu0 %v382, 20
      %v1028 = vpop.permute.xlu0 %1027
      %1029 = vrot.lane.b32.xlu0 %v383, 20
      %v1030 = vpop.permute.xlu0 %1029
      %1031 = vrot.lane.b32.xlu0 %v384, 20
      %v1032 = vpop.permute.xlu0 %1031
      %1033 = vrot.lane.b32.xlu0 %v385, 20
      %v1034 = vpop.permute.xlu0 %1033
      %1035 = vrot.lane.b32.xlu0 %v386, 20
      %v1036 = vpop.permute.xlu0 %1035
      %1037 = vrot.lane.b32.xlu0 %v387, 20
      %v1038 = vpop.permute.xlu0 %1037
      %1039 = vrot.lane.b32.xlu0 %v388, 20
      %v1040 = vpop.permute.xlu0 %1039
      %1041 = vrot.lane.b32.xlu0 %v389, 20
      %v1042 = vpop.permute.xlu0 %1041
      %1043 = vrot.lane.b32.xlu0 %v390, 20
      %v1044 = vpop.permute.xlu0 %1043
      %1045 = vrot.lane.b32.xlu0 %v391, 20
      %v1046 = vpop.permute.xlu0 %1045
      %1047 = vrot.lane.b32.xlu0 %v392, 20
      %v1048 = vpop.permute.xlu0 %1047
      %1049 = vrot.lane.b32.xlu0 %v393, 20
      %v1050 = vpop.permute.xlu0 %1049
      %1051 = vrot.lane.b32.xlu0 %v394, 20
      %v1052 = vpop.permute.xlu0 %1051
      %1053 = vrot.lane.b32.xlu0 %v395, 20
      %v1054 = vpop.permute.xlu0 %1053
      %1055 = vrot.lane.b32.xlu0 %v396, 20
      %v1056 = vpop.permute.xlu0 %1055
      %1057 = vrot.lane.b32.xlu0 %v397, 20
      %v1058 = vpop.permute.xlu0 %1057
      %1059 = vrot.lane.b32.xlu0 %v398, 20
      %v1060 = vpop.permute.xlu0 %1059
      %1061 = vrot.lane.b32.xlu0 %v399, 20
      %v1062 = vpop.permute.xlu0 %1061
      %1063 = vrot.lane.b32.xlu0 %v400, 20
      %v1064 = vpop.permute.xlu0 %1063
      %1065 = vrot.lane.b32.xlu0 %v401, 20
      %v1066 = vpop.permute.xlu0 %1065
      %1067 = vrot.lane.b32.xlu0 %v402, 20
      %v1068 = vpop.permute.xlu0 %1067
      %v1099 = vrot.slane %v400, 1
      %v1100 = vrot.slane %v401, 1
      %v1101 = vsel %vm442, %v1099, %v1100
      %v1102 = vrot.slane %v402, 1
      %v1103 = vsel %vm442, %v1100, %v1102
      %1104 = vrot.lane.b32.xlu0 %v450, 24
      %v1105 = vpop.permute.xlu0 %1104
      %1106 = vrot.lane.b32.xlu0 %v452, 24
      %v1107 = vpop.permute.xlu0 %1106
      %1108 = vrot.lane.b32.xlu0 %v451, 24
      %v1109 = vpop.permute.xlu0 %1108
      %1110 = vrot.lane.b32.xlu0 %v455, 24
      %v1111 = vpop.permute.xlu0 %1110
      %1112 = vrot.lane.b32.xlu0 %v457, 24
      %v1113 = vpop.permute.xlu0 %1112
      %1114 = vrot.lane.b32.xlu0 %v456, 24
      %v1115 = vpop.permute.xlu0 %1114
      %1116 = vrot.lane.b32.xlu0 %v460, 24
      %v1117 = vpop.permute.xlu0 %1116
      %1118 = vrot.lane.b32.xlu0 %v462, 24
      %v1119 = vpop.permute.xlu0 %1118
      %1120 = vrot.lane.b32.xlu0 %v461, 24
      %v1121 = vpop.permute.xlu0 %1120
      %1122 = vrot.lane.b32.xlu0 %v465, 24
      %v1123 = vpop.permute.xlu0 %1122
      %1124 = vrot.lane.b32.xlu0 %v467, 24
      %v1125 = vpop.permute.xlu0 %1124
      %1126 = vrot.lane.b32.xlu0 %v466, 24
      %v1127 = vpop.permute.xlu0 %1126
      %1128 = vrot.lane.b32.xlu0 %v470, 24
      %v1129 = vpop.permute.xlu0 %1128
      %1130 = vrot.lane.b32.xlu0 %v472, 24
      %v1131 = vpop.permute.xlu0 %1130
      %1132 = vrot.lane.b32.xlu0 %v471, 24
      %v1133 = vpop.permute.xlu0 %1132
      %1134 = vrot.lane.b32.xlu0 %v475, 24
      %v1135 = vpop.permute.xlu0 %1134
      %1136 = vrot.lane.b32.xlu0 %v477, 24
      %v1137 = vpop.permute.xlu0 %1136
      %1138 = vrot.lane.b32.xlu0 %v476, 24
      %v1139 = vpop.permute.xlu0 %1138
      %1140 = vrot.lane.b32.xlu0 %v480, 24
      %v1141 = vpop.permute.xlu0 %1140
      %1142 = vrot.lane.b32.xlu0 %v482, 24
      %v1143 = vpop.permute.xlu0 %1142
      %1144 = vrot.lane.b32.xlu0 %v481, 24
      %v1145 = vpop.permute.xlu0 %1144
      %1146 = vrot.lane.b32.xlu0 %v485, 24
      %v1147 = vpop.permute.xlu0 %1146
      %1148 = vrot.lane.b32.xlu0 %v487, 24
      %v1149 = vpop.permute.xlu0 %1148
      %1150 = vrot.lane.b32.xlu0 %v486, 24
      %v1151 = vpop.permute.xlu0 %1150
      %1152 = vrot.lane.b32.xlu0 %v490, 24
      %v1153 = vpop.permute.xlu0 %1152
      %1154 = vrot.lane.b32.xlu0 %v492, 24
      %v1155 = vpop.permute.xlu0 %1154
      %1156 = vrot.lane.b32.xlu0 %v491, 24
      %v1157 = vpop.permute.xlu0 %1156
      %1158 = vrot.lane.b32.xlu0 %v1101, 24
      %v1159 = vpop.permute.xlu0 %1158
      %1160 = vrot.lane.b32.xlu0 %v1103, 24
      %v1161 = vpop.permute.xlu0 %1160
      %1162 = vrot.lane.b32.xlu0 %v1102, 24
      %v1163 = vpop.permute.xlu0 %1162
      %v1194 = vrot.slane %v400, 2
      %v1195 = vrot.slane %v401, 2
      %v1196 = vsel %vm583, %v1194, %v1195
      %v1197 = vrot.slane %v402, 2
      %v1198 = vsel %vm583, %v1195, %v1197
      %1199 = vrot.lane.b32.xlu0 %v591, 28
      %v1200 = vpop.permute.xlu0 %1199
      %1201 = vrot.lane.b32.xlu0 %v593, 28
      %v1202 = vpop.permute.xlu0 %1201
      %1203 = vrot.lane.b32.xlu0 %v592, 28
      %v1204 = vpop.permute.xlu0 %1203
      %1205 = vrot.lane.b32.xlu0 %v596, 28
      %v1206 = vpop.permute.xlu0 %1205
      %1207 = vrot.lane.b32.xlu0 %v598, 28
      %v1208 = vpop.permute.xlu0 %1207
      %1209 = vrot.lane.b32.xlu0 %v597, 28
      %v1210 = vpop.permute.xlu0 %1209
      %1211 = vrot.lane.b32.xlu0 %v601, 28
      %v1212 = vpop.permute.xlu0 %1211
      %1213 = vrot.lane.b32.xlu0 %v603, 28
      %v1214 = vpop.permute.xlu0 %1213
      %1215 = vrot.lane.b32.xlu0 %v602, 28
      %v1216 = vpop.permute.xlu0 %1215
      %1217 = vrot.lane.b32.xlu0 %v606, 28
      %v1218 = vpop.permute.xlu0 %1217
      %1219 = vrot.lane.b32.xlu0 %v608, 28
      %v1220 = vpop.permute.xlu0 %1219
      %1221 = vrot.lane.b32.xlu0 %v607, 28
      %v1222 = vpop.permute.xlu0 %1221
      %1223 = vrot.lane.b32.xlu0 %v611, 28
      %v1224 = vpop.permute.xlu0 %1223
      %1225 = vrot.lane.b32.xlu0 %v613, 28
      %v1226 = vpop.permute.xlu0 %1225
      %1227 = vrot.lane.b32.xlu0 %v612, 28
      %v1228 = vpop.permute.xlu0 %1227
      %1229 = vrot.lane.b32.xlu0 %v616, 28
      %v1230 = vpop.permute.xlu0 %1229
      %1231 = vrot.lane.b32.xlu0 %v618, 28
      %v1232 = vpop.permute.xlu0 %1231
      %1233 = vrot.lane.b32.xlu0 %v617, 28
      %v1234 = vpop.permute.xlu0 %1233
      %1235 = vrot.lane.b32.xlu0 %v621, 28
      %v1236 = vpop.permute.xlu0 %1235
      %1237 = vrot.lane.b32.xlu0 %v623, 28
      %v1238 = vpop.permute.xlu0 %1237
      %1239 = vrot.lane.b32.xlu0 %v622, 28
      %v1240 = vpop.permute.xlu0 %1239
      %1241 = vrot.lane.b32.xlu0 %v626, 28
      %v1242 = vpop.permute.xlu0 %1241
      %1243 = vrot.lane.b32.xlu0 %v628, 28
      %v1244 = vpop.permute.xlu0 %1243
      %1245 = vrot.lane.b32.xlu0 %v627, 28
      %v1246 = vpop.permute.xlu0 %1245
      %1247 = vrot.lane.b32.xlu0 %v631, 28
      %v1248 = vpop.permute.xlu0 %1247
      %1249 = vrot.lane.b32.xlu0 %v633, 28
      %v1250 = vpop.permute.xlu0 %1249
      %1251 = vrot.lane.b32.xlu0 %v632, 28
      %v1252 = vpop.permute.xlu0 %1251
      %1253 = vrot.lane.b32.xlu0 %v1196, 28
      %v1254 = vpop.permute.xlu0 %1253
      %1255 = vrot.lane.b32.xlu0 %v1198, 28
      %v1256 = vpop.permute.xlu0 %1255
      %1257 = vrot.lane.b32.xlu0 %v1197, 28
      %v1258 = vpop.permute.xlu0 %1257
      %v1289 = vrot.slane %v400, 3
      %v1290 = vrot.slane %v401, 3
      %v1291 = vsel %vm724, %v1289, %v1290
      %v1292 = vrot.slane %v402, 3
      %v1293 = vsel %vm724, %v1290, %v1292
      %1294 = vrot.lane.b32.xlu0 %v732, 32
      %v1295 = vpop.permute.xlu0 %1294
      %1296 = vrot.lane.b32.xlu0 %v734, 32
      %v1297 = vpop.permute.xlu0 %1296
      %1298 = vrot.lane.b32.xlu0 %v733, 32
      %v1299 = vpop.permute.xlu0 %1298
      %1300 = vrot.lane.b32.xlu0 %v737, 32
      %v1301 = vpop.permute.xlu0 %1300
      %1302 = vrot.lane.b32.xlu0 %v739, 32
      %v1303 = vpop.permute.xlu0 %1302
      %1304 = vrot.lane.b32.xlu0 %v738, 32
      %v1305 = vpop.permute.xlu0 %1304
      %1306 = vrot.lane.b32.xlu0 %v742, 32
      %v1307 = vpop.permute.xlu0 %1306
      %1308 = vrot.lane.b32.xlu0 %v744, 32
      %v1309 = vpop.permute.xlu0 %1308
      %1310 = vrot.lane.b32.xlu0 %v743, 32
      %v1311 = vpop.permute.xlu0 %1310
      %1312 = vrot.lane.b32.xlu0 %v747, 32
      %v1313 = vpop.permute.xlu0 %1312
      %1314 = vrot.lane.b32.xlu0 %v749, 32
      %v1315 = vpop.permute.xlu0 %1314
      %1316 = vrot.lane.b32.xlu0 %v748, 32
      %v1317 = vpop.permute.xlu0 %1316
      %1318 = vrot.lane.b32.xlu0 %v752, 32
      %v1319 = vpop.permute.xlu0 %1318
      %1320 = vrot.lane.b32.xlu0 %v754, 32
      %v1321 = vpop.permute.xlu0 %1320
      %1322 = vrot.lane.b32.xlu0 %v753, 32
      %v1323 = vpop.permute.xlu0 %1322
      %1324 = vrot.lane.b32.xlu0 %v757, 32
      %v1325 = vpop.permute.xlu0 %1324
      %1326 = vrot.lane.b32.xlu0 %v759, 32
      %v1327 = vpop.permute.xlu0 %1326
      %1328 = vrot.lane.b32.xlu0 %v758, 32
      %v1329 = vpop.permute.xlu0 %1328
      %1330 = vrot.lane.b32.xlu0 %v762, 32
      %v1331 = vpop.permute.xlu0 %1330
      %1332 = vrot.lane.b32.xlu0 %v764, 32
      %v1333 = vpop.permute.xlu0 %1332
      %1334 = vrot.lane.b32.xlu0 %v763, 32
      %v1335 = vpop.permute.xlu0 %1334
      %1336 = vrot.lane.b32.xlu0 %v767, 32
      %v1337 = vpop.permute.xlu0 %1336
      %1338 = vrot.lane.b32.xlu0 %v769, 32
      %v1339 = vpop.permute.xlu0 %1338
      %1340 = vrot.lane.b32.xlu0 %v768, 32
      %v1341 = vpop.permute.xlu0 %1340
      %1342 = vrot.lane.b32.xlu0 %v772, 32
      %v1343 = vpop.permute.xlu0 %1342
      %1344 = vrot.lane.b32.xlu0 %v774, 32
      %v1345 = vpop.permute.xlu0 %1344
      %1346 = vrot.lane.b32.xlu0 %v773, 32
      %v1347 = vpop.permute.xlu0 %1346
      %1348 = vrot.lane.b32.xlu0 %v1291, 32
      %v1349 = vpop.permute.xlu0 %1348
      %1350 = vrot.lane.b32.xlu0 %v1293, 32
      %v1351 = vpop.permute.xlu0 %1350
      %1352 = vrot.lane.b32.xlu0 %v1292, 32
      %v1353 = vpop.permute.xlu0 %1352
      %v1384 = vrot.slane %v400, 4
      %v1385 = vrot.slane %v401, 4
      %v1386 = vsel %vm865, %v1384, %v1385
      %v1387 = vrot.slane %v402, 4
      %v1388 = vsel %vm865, %v1385, %v1387
      %1389 = vrot.lane.b32.xlu0 %v873, 36
      %v1390 = vpop.permute.xlu0 %1389
      %1391 = vrot.lane.b32.xlu0 %v875, 36
      %v1392 = vpop.permute.xlu0 %1391
      %1393 = vrot.lane.b32.xlu0 %v874, 36
      %v1394 = vpop.permute.xlu0 %1393
      %1395 = vrot.lane.b32.xlu0 %v878, 36
      %v1396 = vpop.permute.xlu0 %1395
      %1397 = vrot.lane.b32.xlu0 %v880, 36
      %v1398 = vpop.permute.xlu0 %1397
      %1399 = vrot.lane.b32.xlu0 %v879, 36
      %v1400 = vpop.permute.xlu0 %1399
      %1401 = vrot.lane.b32.xlu0 %v883, 36
      %v1402 = vpop.permute.xlu0 %1401
      %1403 = vrot.lane.b32.xlu0 %v885, 36
      %v1404 = vpop.permute.xlu0 %1403
      %1405 = vrot.lane.b32.xlu0 %v884, 36
      %v1406 = vpop.permute.xlu0 %1405
      %1407 = vrot.lane.b32.xlu0 %v888, 36
      %v1408 = vpop.permute.xlu0 %1407
      %1409 = vrot.lane.b32.xlu0 %v890, 36
      %v1410 = vpop.permute.xlu0 %1409
      %1411 = vrot.lane.b32.xlu0 %v889, 36
      %v1412 = vpop.permute.xlu0 %1411
      %1413 = vrot.lane.b32.xlu0 %v893, 36
      %v1414 = vpop.permute.xlu0 %1413
      %1415 = vrot.lane.b32.xlu0 %v895, 36
      %v1416 = vpop.permute.xlu0 %1415
      %1417 = vrot.lane.b32.xlu0 %v894, 36
      %v1418 = vpop.permute.xlu0 %1417
      %1419 = vrot.lane.b32.xlu0 %v898, 36
      %v1420 = vpop.permute.xlu0 %1419
      %1421 = vrot.lane.b32.xlu0 %v900, 36
      %v1422 = vpop.permute.xlu0 %1421
      %1423 = vrot.lane.b32.xlu0 %v899, 36
      %v1424 = vpop.permute.xlu0 %1423
      %1425 = vrot.lane.b32.xlu0 %v903, 36
      %v1426 = vpop.permute.xlu0 %1425
      %1427 = vrot.lane.b32.xlu0 %v905, 36
      %v1428 = vpop.permute.xlu0 %1427
      %1429 = vrot.lane.b32.xlu0 %v904, 36
      %v1430 = vpop.permute.xlu0 %1429
      %1431 = vrot.lane.b32.xlu0 %v908, 36
      %v1432 = vpop.permute.xlu0 %1431
      %1433 = vrot.lane.b32.xlu0 %v910, 36
      %v1434 = vpop.permute.xlu0 %1433
      %1435 = vrot.lane.b32.xlu0 %v909, 36
      %v1436 = vpop.permute.xlu0 %1435
      %1437 = vrot.lane.b32.xlu0 %v913, 36
      %v1438 = vpop.permute.xlu0 %1437
      %1439 = vrot.lane.b32.xlu0 %v915, 36
      %v1440 = vpop.permute.xlu0 %1439
      %1441 = vrot.lane.b32.xlu0 %v914, 36
      %v1442 = vpop.permute.xlu0 %1441
      %1443 = vrot.lane.b32.xlu0 %v1386, 36
      %v1444 = vpop.permute.xlu0 %1443
      %1445 = vrot.lane.b32.xlu0 %v1388, 36
      %v1446 = vpop.permute.xlu0 %1445
      %1447 = vrot.lane.b32.xlu0 %v1387, 36
      %v1448 = vpop.permute.xlu0 %1447
      %1482 = vrot.lane.b32.xlu0 %v376, 40
      %v1483 = vpop.permute.xlu0 %1482
      %1484 = vrot.lane.b32.xlu0 %v377, 40
      %v1485 = vpop.permute.xlu0 %1484
      %1486 = vrot.lane.b32.xlu0 %v378, 40
      %v1487 = vpop.permute.xlu0 %1486
      %1488 = vrot.lane.b32.xlu0 %v379, 40
      %v1489 = vpop.permute.xlu0 %1488
      %1490 = vrot.lane.b32.xlu0 %v380, 40
      %v1491 = vpop.permute.xlu0 %1490
      %1492 = vrot.lane.b32.xlu0 %v381, 40
      %v1493 = vpop.permute.xlu0 %1492
      %1494 = vrot.lane.b32.xlu0 %v382, 40
      %v1495 = vpop.permute.xlu0 %1494
      %1496 = vrot.lane.b32.xlu0 %v383, 40
      %v1497 = vpop.permute.xlu0 %1496
      %1498 = vrot.lane.b32.xlu0 %v384, 40
      %v1499 = vpop.permute.xlu0 %1498
      %1500 = vrot.lane.b32.xlu0 %v385, 40
      %v1501 = vpop.permute.xlu0 %1500
      %1502 = vrot.lane.b32.xlu0 %v386, 40
      %v1503 = vpop.permute.xlu0 %1502
      %1504 = vrot.lane.b32.xlu0 %v387, 40
      %v1505 = vpop.permute.xlu0 %1504
      %1506 = vrot.lane.b32.xlu0 %v388, 40
      %v1507 = vpop.permute.xlu0 %1506
      %1508 = vrot.lane.b32.xlu0 %v389, 40
      %v1509 = vpop.permute.xlu0 %1508
      %1510 = vrot.lane.b32.xlu0 %v390, 40
      %v1511 = vpop.permute.xlu0 %1510
      %1512 = vrot.lane.b32.xlu0 %v391, 40
      %v1513 = vpop.permute.xlu0 %1512
      %1514 = vrot.lane.b32.xlu0 %v392, 40
      %v1515 = vpop.permute.xlu0 %1514
      %1516 = vrot.lane.b32.xlu0 %v393, 40
      %v1517 = vpop.permute.xlu0 %1516
      %1518 = vrot.lane.b32.xlu0 %v394, 40
      %v1519 = vpop.permute.xlu0 %1518
      %1520 = vrot.lane.b32.xlu0 %v395, 40
      %v1521 = vpop.permute.xlu0 %1520
      %1522 = vrot.lane.b32.xlu0 %v396, 40
      %v1523 = vpop.permute.xlu0 %1522
      %1524 = vrot.lane.b32.xlu0 %v397, 40
      %v1525 = vpop.permute.xlu0 %1524
      %1526 = vrot.lane.b32.xlu0 %v398, 40
      %v1527 = vpop.permute.xlu0 %1526
      %1528 = vrot.lane.b32.xlu0 %v399, 40
      %v1529 = vpop.permute.xlu0 %1528
      %1530 = vrot.lane.b32.xlu0 %v400, 40
      %v1531 = vpop.permute.xlu0 %1530
      %1532 = vrot.lane.b32.xlu0 %v401, 40
      %v1533 = vpop.permute.xlu0 %1532
      %1534 = vrot.lane.b32.xlu0 %v402, 40
      %v1535 = vpop.permute.xlu0 %1534
      %1536 = vrot.lane.b32.xlu0 %v403, 40
      %v1537 = vpop.permute.xlu0 %1536
      %1538 = vrot.lane.b32.xlu0 %v404, 40
      %v1539 = vpop.permute.xlu0 %1538
      %1540 = vrot.lane.b32.xlu0 %v405, 40
      %v1541 = vpop.permute.xlu0 %1540
      %v1572 = vrot.slane %v403, 1
      %v1573 = vrot.slane %v404, 1
      %v1574 = vsel %vm442, %v1572, %v1573
      %v1575 = vrot.slane %v405, 1
      %v1576 = vsel %vm442, %v1573, %v1575
      %1577 = vrot.lane.b32.xlu0 %v455, 44
      %v1578 = vpop.permute.xlu0 %1577
      %1579 = vrot.lane.b32.xlu0 %v457, 44
      %v1580 = vpop.permute.xlu0 %1579
      %1581 = vrot.lane.b32.xlu0 %v456, 44
      %v1582 = vpop.permute.xlu0 %1581
      %1583 = vrot.lane.b32.xlu0 %v460, 44
      %v1584 = vpop.permute.xlu0 %1583
      %1585 = vrot.lane.b32.xlu0 %v462, 44
      %v1586 = vpop.permute.xlu0 %1585
      %1587 = vrot.lane.b32.xlu0 %v461, 44
      %v1588 = vpop.permute.xlu0 %1587
      %1589 = vrot.lane.b32.xlu0 %v465, 44
      %v1590 = vpop.permute.xlu0 %1589
      %1591 = vrot.lane.b32.xlu0 %v467, 44
      %v1592 = vpop.permute.xlu0 %1591
      %1593 = vrot.lane.b32.xlu0 %v466, 44
      %v1594 = vpop.permute.xlu0 %1593
      %1595 = vrot.lane.b32.xlu0 %v470, 44
      %v1596 = vpop.permute.xlu0 %1595
      %1597 = vrot.lane.b32.xlu0 %v472, 44
      %v1598 = vpop.permute.xlu0 %1597
      %1599 = vrot.lane.b32.xlu0 %v471, 44
      %v1600 = vpop.permute.xlu0 %1599
      %1601 = vrot.lane.b32.xlu0 %v475, 44
      %v1602 = vpop.permute.xlu0 %1601
      %1603 = vrot.lane.b32.xlu0 %v477, 44
      %v1604 = vpop.permute.xlu0 %1603
      %1605 = vrot.lane.b32.xlu0 %v476, 44
      %v1606 = vpop.permute.xlu0 %1605
      %1607 = vrot.lane.b32.xlu0 %v480, 44
      %v1608 = vpop.permute.xlu0 %1607
      %1609 = vrot.lane.b32.xlu0 %v482, 44
      %v1610 = vpop.permute.xlu0 %1609
      %1611 = vrot.lane.b32.xlu0 %v481, 44
      %v1612 = vpop.permute.xlu0 %1611
      %1613 = vrot.lane.b32.xlu0 %v485, 44
      %v1614 = vpop.permute.xlu0 %1613
      %1615 = vrot.lane.b32.xlu0 %v487, 44
      %v1616 = vpop.permute.xlu0 %1615
      %1617 = vrot.lane.b32.xlu0 %v486, 44
      %v1618 = vpop.permute.xlu0 %1617
      %1619 = vrot.lane.b32.xlu0 %v490, 44
      %v1620 = vpop.permute.xlu0 %1619
      %1621 = vrot.lane.b32.xlu0 %v492, 44
      %v1622 = vpop.permute.xlu0 %1621
      %1623 = vrot.lane.b32.xlu0 %v491, 44
      %v1624 = vpop.permute.xlu0 %1623
      %1625 = vrot.lane.b32.xlu0 %v1101, 44
      %v1626 = vpop.permute.xlu0 %1625
      %1627 = vrot.lane.b32.xlu0 %v1103, 44
      %v1628 = vpop.permute.xlu0 %1627
      %1629 = vrot.lane.b32.xlu0 %v1102, 44
      %v1630 = vpop.permute.xlu0 %1629
      %1631 = vrot.lane.b32.xlu0 %v1574, 44
      %v1632 = vpop.permute.xlu0 %1631
      %1633 = vrot.lane.b32.xlu0 %v1576, 44
      %v1634 = vpop.permute.xlu0 %1633
      %1635 = vrot.lane.b32.xlu0 %v1575, 44
      %v1636 = vpop.permute.xlu0 %1635
      %v1667 = vrot.slane %v403, 2
      %v1668 = vrot.slane %v404, 2
      %v1669 = vsel %vm583, %v1667, %v1668
      %v1670 = vrot.slane %v405, 2
      %v1671 = vsel %vm583, %v1668, %v1670
      %1672 = vrot.lane.b32.xlu0 %v596, 48
      %v1673 = vpop.permute.xlu0 %1672
      %1674 = vrot.lane.b32.xlu0 %v598, 48
      %v1675 = vpop.permute.xlu0 %1674
      %1676 = vrot.lane.b32.xlu0 %v597, 48
      %v1677 = vpop.permute.xlu0 %1676
      %1678 = vrot.lane.b32.xlu0 %v601, 48
      %v1679 = vpop.permute.xlu0 %1678
      %1680 = vrot.lane.b32.xlu0 %v603, 48
      %v1681 = vpop.permute.xlu0 %1680
      %1682 = vrot.lane.b32.xlu0 %v602, 48
      %v1683 = vpop.permute.xlu0 %1682
      %1684 = vrot.lane.b32.xlu0 %v606, 48
      %v1685 = vpop.permute.xlu0 %1684
      %1686 = vrot.lane.b32.xlu0 %v608, 48
      %v1687 = vpop.permute.xlu0 %1686
      %1688 = vrot.lane.b32.xlu0 %v607, 48
      %v1689 = vpop.permute.xlu0 %1688
      %1690 = vrot.lane.b32.xlu0 %v611, 48
      %v1691 = vpop.permute.xlu0 %1690
      %1692 = vrot.lane.b32.xlu0 %v613, 48
      %v1693 = vpop.permute.xlu0 %1692
      %1694 = vrot.lane.b32.xlu0 %v612, 48
      %v1695 = vpop.permute.xlu0 %1694
      %1696 = vrot.lane.b32.xlu0 %v616, 48
      %v1697 = vpop.permute.xlu0 %1696
      %1698 = vrot.lane.b32.xlu0 %v618, 48
      %v1699 = vpop.permute.xlu0 %1698
      %1700 = vrot.lane.b32.xlu0 %v617, 48
      %v1701 = vpop.permute.xlu0 %1700
      %1702 = vrot.lane.b32.xlu0 %v621, 48
      %v1703 = vpop.permute.xlu0 %1702
      %1704 = vrot.lane.b32.xlu0 %v623, 48
      %v1705 = vpop.permute.xlu0 %1704
      %1706 = vrot.lane.b32.xlu0 %v622, 48
      %v1707 = vpop.permute.xlu0 %1706
      %1708 = vrot.lane.b32.xlu0 %v626, 48
      %v1709 = vpop.permute.xlu0 %1708
      %1710 = vrot.lane.b32.xlu0 %v628, 48
      %v1711 = vpop.permute.xlu0 %1710
      %1712 = vrot.lane.b32.xlu0 %v627, 48
      %v1713 = vpop.permute.xlu0 %1712
      %1714 = vrot.lane.b32.xlu0 %v631, 48
      %v1715 = vpop.permute.xlu0 %1714
      %1716 = vrot.lane.b32.xlu0 %v633, 48
      %v1717 = vpop.permute.xlu0 %1716
      %1718 = vrot.lane.b32.xlu0 %v632, 48
      %v1719 = vpop.permute.xlu0 %1718
      %1720 = vrot.lane.b32.xlu0 %v1196, 48
      %v1721 = vpop.permute.xlu0 %1720
      %1722 = vrot.lane.b32.xlu0 %v1198, 48
      %v1723 = vpop.permute.xlu0 %1722
      %1724 = vrot.lane.b32.xlu0 %v1197, 48
      %v1725 = vpop.permute.xlu0 %1724
      %1726 = vrot.lane.b32.xlu0 %v1669, 48
      %v1727 = vpop.permute.xlu0 %1726
      %1728 = vrot.lane.b32.xlu0 %v1671, 48
      %v1729 = vpop.permute.xlu0 %1728
      %1730 = vrot.lane.b32.xlu0 %v1670, 48
      %v1731 = vpop.permute.xlu0 %1730
      %v1762 = vrot.slane %v403, 3
      %v1763 = vrot.slane %v404, 3
      %v1764 = vsel %vm724, %v1762, %v1763
      %v1765 = vrot.slane %v405, 3
      %v1766 = vsel %vm724, %v1763, %v1765
      %1767 = vrot.lane.b32.xlu0 %v737, 52
      %v1768 = vpop.permute.xlu0 %1767
      %1769 = vrot.lane.b32.xlu0 %v739, 52
      %v1770 = vpop.permute.xlu0 %1769
      %1771 = vrot.lane.b32.xlu0 %v738, 52
      %v1772 = vpop.permute.xlu0 %1771
      %1773 = vrot.lane.b32.xlu0 %v742, 52
      %v1774 = vpop.permute.xlu0 %1773
      %1775 = vrot.lane.b32.xlu0 %v744, 52
      %v1776 = vpop.permute.xlu0 %1775
      %1777 = vrot.lane.b32.xlu0 %v743, 52
      %v1778 = vpop.permute.xlu0 %1777
      %1779 = vrot.lane.b32.xlu0 %v747, 52
      %v1780 = vpop.permute.xlu0 %1779
      %1781 = vrot.lane.b32.xlu0 %v749, 52
      %v1782 = vpop.permute.xlu0 %1781
      %1783 = vrot.lane.b32.xlu0 %v748, 52
      %v1784 = vpop.permute.xlu0 %1783
      %1785 = vrot.lane.b32.xlu0 %v752, 52
      %v1786 = vpop.permute.xlu0 %1785
      %1787 = vrot.lane.b32.xlu0 %v754, 52
      %v1788 = vpop.permute.xlu0 %1787
      %1789 = vrot.lane.b32.xlu0 %v753, 52
      %v1790 = vpop.permute.xlu0 %1789
      %1791 = vrot.lane.b32.xlu0 %v757, 52
      %v1792 = vpop.permute.xlu0 %1791
      %1793 = vrot.lane.b32.xlu0 %v759, 52
      %v1794 = vpop.permute.xlu0 %1793
      %1795 = vrot.lane.b32.xlu0 %v758, 52
      %v1796 = vpop.permute.xlu0 %1795
      %1797 = vrot.lane.b32.xlu0 %v762, 52
      %v1798 = vpop.permute.xlu0 %1797
      %1799 = vrot.lane.b32.xlu0 %v764, 52
      %v1800 = vpop.permute.xlu0 %1799
      %1801 = vrot.lane.b32.xlu0 %v763, 52
      %v1802 = vpop.permute.xlu0 %1801
      %1803 = vrot.lane.b32.xlu0 %v767, 52
      %v1804 = vpop.permute.xlu0 %1803
      %1805 = vrot.lane.b32.xlu0 %v769, 52
      %v1806 = vpop.permute.xlu0 %1805
      %1807 = vrot.lane.b32.xlu0 %v768, 52
      %v1808 = vpop.permute.xlu0 %1807
      %1809 = vrot.lane.b32.xlu0 %v772, 52
      %v1810 = vpop.permute.xlu0 %1809
      %1811 = vrot.lane.b32.xlu0 %v774, 52
      %v1812 = vpop.permute.xlu0 %1811
      %1813 = vrot.lane.b32.xlu0 %v773, 52
      %v1814 = vpop.permute.xlu0 %1813
      %1815 = vrot.lane.b32.xlu0 %v1291, 52
      %v1816 = vpop.permute.xlu0 %1815
      %1817 = vrot.lane.b32.xlu0 %v1293, 52
      %v1818 = vpop.permute.xlu0 %1817
      %1819 = vrot.lane.b32.xlu0 %v1292, 52
      %v1820 = vpop.permute.xlu0 %1819
      %1821 = vrot.lane.b32.xlu0 %v1764, 52
      %v1822 = vpop.permute.xlu0 %1821
      %1823 = vrot.lane.b32.xlu0 %v1766, 52
      %v1824 = vpop.permute.xlu0 %1823
      %1825 = vrot.lane.b32.xlu0 %v1765, 52
      %v1826 = vpop.permute.xlu0 %1825
      %v1857 = vrot.slane %v403, 4
      %v1858 = vrot.slane %v404, 4
      %v1859 = vsel %vm865, %v1857, %v1858
      %v1860 = vrot.slane %v405, 4
      %v1861 = vsel %vm865, %v1858, %v1860
      %1862 = vrot.lane.b32.xlu0 %v878, 56
      %v1863 = vpop.permute.xlu0 %1862
      %1864 = vrot.lane.b32.xlu0 %v880, 56
      %v1865 = vpop.permute.xlu0 %1864
      %1866 = vrot.lane.b32.xlu0 %v879, 56
      %v1867 = vpop.permute.xlu0 %1866
      %1868 = vrot.lane.b32.xlu0 %v883, 56
      %v1869 = vpop.permute.xlu0 %1868
      %1870 = vrot.lane.b32.xlu0 %v885, 56
      %v1871 = vpop.permute.xlu0 %1870
      %1872 = vrot.lane.b32.xlu0 %v884, 56
      %v1873 = vpop.permute.xlu0 %1872
      %1874 = vrot.lane.b32.xlu0 %v888, 56
      %v1875 = vpop.permute.xlu0 %1874
      %1876 = vrot.lane.b32.xlu0 %v890, 56
      %v1877 = vpop.permute.xlu0 %1876
      %1878 = vrot.lane.b32.xlu0 %v889, 56
      %v1879 = vpop.permute.xlu0 %1878
      %1880 = vrot.lane.b32.xlu0 %v893, 56
      %v1881 = vpop.permute.xlu0 %1880
      %1882 = vrot.lane.b32.xlu0 %v895, 56
      %v1883 = vpop.permute.xlu0 %1882
      %1884 = vrot.lane.b32.xlu0 %v894, 56
      %v1885 = vpop.permute.xlu0 %1884
      %1886 = vrot.lane.b32.xlu0 %v898, 56
      %v1887 = vpop.permute.xlu0 %1886
      %1888 = vrot.lane.b32.xlu0 %v900, 56
      %v1889 = vpop.permute.xlu0 %1888
      %1890 = vrot.lane.b32.xlu0 %v899, 56
      %v1891 = vpop.permute.xlu0 %1890
      %1892 = vrot.lane.b32.xlu0 %v903, 56
      %v1893 = vpop.permute.xlu0 %1892
      %1894 = vrot.lane.b32.xlu0 %v905, 56
      %v1895 = vpop.permute.xlu0 %1894
      %1896 = vrot.lane.b32.xlu0 %v904, 56
      %v1897 = vpop.permute.xlu0 %1896
      %1898 = vrot.lane.b32.xlu0 %v908, 56
      %v1899 = vpop.permute.xlu0 %1898
      %1900 = vrot.lane.b32.xlu0 %v910, 56
      %v1901 = vpop.permute.xlu0 %1900
      %1902 = vrot.lane.b32.xlu0 %v909, 56
      %v1903 = vpop.permute.xlu0 %1902
      %1904 = vrot.lane.b32.xlu0 %v913, 56
      %v1905 = vpop.permute.xlu0 %1904
      %1906 = vrot.lane.b32.xlu0 %v915, 56
      %v1907 = vpop.permute.xlu0 %1906
      %1908 = vrot.lane.b32.xlu0 %v914, 56
      %v1909 = vpop.permute.xlu0 %1908
      %1910 = vrot.lane.b32.xlu0 %v1386, 56
      %v1911 = vpop.permute.xlu0 %1910
      %1912 = vrot.lane.b32.xlu0 %v1388, 56
      %v1913 = vpop.permute.xlu0 %1912
      %1914 = vrot.lane.b32.xlu0 %v1387, 56
      %v1915 = vpop.permute.xlu0 %1914
      %1916 = vrot.lane.b32.xlu0 %v1859, 56
      %v1917 = vpop.permute.xlu0 %1916
      %1918 = vrot.lane.b32.xlu0 %v1861, 56
      %v1919 = vpop.permute.xlu0 %1918
      %1920 = vrot.lane.b32.xlu0 %v1860, 56
      %v1921 = vpop.permute.xlu0 %1920
      %1955 = vrot.lane.b32.xlu0 %v379, 60
      %v1956 = vpop.permute.xlu0 %1955
      %1957 = vrot.lane.b32.xlu0 %v380, 60
      %v1958 = vpop.permute.xlu0 %1957
      %1959 = vrot.lane.b32.xlu0 %v381, 60
      %v1960 = vpop.permute.xlu0 %1959
      %1961 = vrot.lane.b32.xlu0 %v382, 60
      %v1962 = vpop.permute.xlu0 %1961
      %1963 = vrot.lane.b32.xlu0 %v383, 60
      %v1964 = vpop.permute.xlu0 %1963
      %1965 = vrot.lane.b32.xlu0 %v384, 60
      %v1966 = vpop.permute.xlu0 %1965
      %1967 = vrot.lane.b32.xlu0 %v385, 60
      %v1968 = vpop.permute.xlu0 %1967
      %1969 = vrot.lane.b32.xlu0 %v386, 60
      %v1970 = vpop.permute.xlu0 %1969
      %1971 = vrot.lane.b32.xlu0 %v387, 60
      %v1972 = vpop.permute.xlu0 %1971
      %1973 = vrot.lane.b32.xlu0 %v388, 60
      %v1974 = vpop.permute.xlu0 %1973
      %1975 = vrot.lane.b32.xlu0 %v389, 60
      %v1976 = vpop.permute.xlu0 %1975
      %1977 = vrot.lane.b32.xlu0 %v390, 60
      %v1978 = vpop.permute.xlu0 %1977
      %1979 = vrot.lane.b32.xlu0 %v391, 60
      %v1980 = vpop.permute.xlu0 %1979
      %1981 = vrot.lane.b32.xlu0 %v392, 60
      %v1982 = vpop.permute.xlu0 %1981
      %1983 = vrot.lane.b32.xlu0 %v393, 60
      %v1984 = vpop.permute.xlu0 %1983
      %1985 = vrot.lane.b32.xlu0 %v394, 60
      %v1986 = vpop.permute.xlu0 %1985
      %1987 = vrot.lane.b32.xlu0 %v395, 60
      %v1988 = vpop.permute.xlu0 %1987
      %1989 = vrot.lane.b32.xlu0 %v396, 60
      %v1990 = vpop.permute.xlu0 %1989
      %1991 = vrot.lane.b32.xlu0 %v397, 60
      %v1992 = vpop.permute.xlu0 %1991
      %1993 = vrot.lane.b32.xlu0 %v398, 60
      %v1994 = vpop.permute.xlu0 %1993
      %1995 = vrot.lane.b32.xlu0 %v399, 60
      %v1996 = vpop.permute.xlu0 %1995
      %1997 = vrot.lane.b32.xlu0 %v400, 60
      %v1998 = vpop.permute.xlu0 %1997
      %1999 = vrot.lane.b32.xlu0 %v401, 60
      %v2000 = vpop.permute.xlu0 %1999
      %2001 = vrot.lane.b32.xlu0 %v402, 60
      %v2002 = vpop.permute.xlu0 %2001
      %2003 = vrot.lane.b32.xlu0 %v403, 60
      %v2004 = vpop.permute.xlu0 %2003
      %2005 = vrot.lane.b32.xlu0 %v404, 60
      %v2006 = vpop.permute.xlu0 %2005
      %2007 = vrot.lane.b32.xlu0 %v405, 60
      %v2008 = vpop.permute.xlu0 %2007
      %2009 = vrot.lane.b32.xlu0 %v406, 60
      %v2010 = vpop.permute.xlu0 %2009
      %2011 = vrot.lane.b32.xlu0 %v407, 60
      %v2012 = vpop.permute.xlu0 %2011
      %2013 = vrot.lane.b32.xlu0 %v408, 60
      %v2014 = vpop.permute.xlu0 %2013
      %vm2045 = vcmask 31744
      %v2046 = vsel %vm2045, %v370, %v494
      %v2047 = vsel %vm2045, %v371, %v496
      %v2048 = vsel %vm2045, %v372, %v498
      %v2049 = vsel %vm2045, %v373, %v500
      %v2050 = vsel %vm2045, %v374, %v502
      %v2051 = vsel %vm2045, %v375, %v504
      %v2052 = vsel %vm2045, %v376, %v506
      %v2053 = vsel %vm2045, %v377, %v508
      %v2054 = vsel %vm2045, %v378, %v510
      %v2055 = vsel %vm2045, %v379, %v512
      %v2056 = vsel %vm2045, %v380, %v514
      %v2057 = vsel %vm2045, %v381, %v516
      %v2058 = vsel %vm2045, %v382, %v518
      %v2059 = vsel %vm2045, %v383, %v520
      %v2060 = vsel %vm2045, %v384, %v522
      %v2061 = vsel %vm2045, %v385, %v524
      %v2062 = vsel %vm2045, %v386, %v526
      %v2063 = vsel %vm2045, %v387, %v528
      %v2064 = vsel %vm2045, %v388, %v530
      %v2065 = vsel %vm2045, %v389, %v532
      %v2066 = vsel %vm2045, %v390, %v534
      %v2067 = vsel %vm2045, %v391, %v536
      %v2068 = vsel %vm2045, %v392, %v538
      %v2069 = vsel %vm2045, %v393, %v540
      %v2070 = vsel %vm2045, %v394, %v542
      %v2071 = vsel %vm2045, %v395, %v544
      %v2072 = vsel %vm2045, %v396, %v546
      %v2073 = vsel %vm2045, %v397, %v548
      %v2074 = vsel %vm2045, %v398, %v550
      %v2075 = vsel %vm2045, %v399, %v552
      %vm2076 = vcmask 64512
      %v2077 = vsel %vm2076, %v2046, %v635
      %v2078 = vsel %vm2076, %v2047, %v637
      %v2079 = vsel %vm2076, %v2048, %v639
      %v2080 = vsel %vm2076, %v2049, %v641
      %v2081 = vsel %vm2076, %v2050, %v643
      %v2082 = vsel %vm2076, %v2051, %v645
      %v2083 = vsel %vm2076, %v2052, %v647
      %v2084 = vsel %vm2076, %v2053, %v649
      %v2085 = vsel %vm2076, %v2054, %v651
      %v2086 = vsel %vm2076, %v2055, %v653
      %v2087 = vsel %vm2076, %v2056, %v655
      %v2088 = vsel %vm2076, %v2057, %v657
      %v2089 = vsel %vm2076, %v2058, %v659
      %v2090 = vsel %vm2076, %v2059, %v661
      %v2091 = vsel %vm2076, %v2060, %v663
      %v2092 = vsel %vm2076, %v2061, %v665
      %v2093 = vsel %vm2076, %v2062, %v667
      %v2094 = vsel %vm2076, %v2063, %v669
      %v2095 = vsel %vm2076, %v2064, %v671
      %v2096 = vsel %vm2076, %v2065, %v673
      %v2097 = vsel %vm2076, %v2066, %v675
      %v2098 = vsel %vm2076, %v2067, %v677
      %v2099 = vsel %vm2076, %v2068, %v679
      %v2100 = vsel %vm2076, %v2069, %v681
      %v2101 = vsel %vm2076, %v2070, %v683
      %v2102 = vsel %vm2076, %v2071, %v685
      %v2103 = vsel %vm2076, %v2072, %v687
      %v2104 = vsel %vm2076, %v2073, %v689
      %v2105 = vsel %vm2076, %v2074, %v691
      %v2106 = vsel %vm2076, %v2075, %v693
      %vm2107 = vcmask 97280
      %v2108 = vsel %vm2107, %v2077, %v776
      %v2109 = vsel %vm2107, %v2078, %v778
      %v2110 = vsel %vm2107, %v2079, %v780
      %v2111 = vsel %vm2107, %v2080, %v782
      %v2112 = vsel %vm2107, %v2081, %v784
      %v2113 = vsel %vm2107, %v2082, %v786
      %v2114 = vsel %vm2107, %v2083, %v788
      %v2115 = vsel %vm2107, %v2084, %v790
      %v2116 = vsel %vm2107, %v2085, %v792
      %v2117 = vsel %vm2107, %v2086, %v794
      %v2118 = vsel %vm2107, %v2087, %v796
      %v2119 = vsel %vm2107, %v2088, %v798
      %v2120 = vsel %vm2107, %v2089, %v800
      %v2121 = vsel %vm2107, %v2090, %v802
      %v2122 = vsel %vm2107, %v2091, %v804
      %v2123 = vsel %vm2107, %v2092, %v806
      %v2124 = vsel %vm2107, %v2093, %v808
      %v2125 = vsel %vm2107, %v2094, %v810
      %v2126 = vsel %vm2107, %v2095, %v812
      %v2127 = vsel %vm2107, %v2096, %v814
      %v2128 = vsel %vm2107, %v2097, %v816
      %v2129 = vsel %vm2107, %v2098, %v818
      %v2130 = vsel %vm2107, %v2099, %v820
      %v2131 = vsel %vm2107, %v2100, %v822
      %v2132 = vsel %vm2107, %v2101, %v824
      %v2133 = vsel %vm2107, %v2102, %v826
      %v2134 = vsel %vm2107, %v2103, %v828
      %v2135 = vsel %vm2107, %v2104, %v830
      %v2136 = vsel %vm2107, %v2105, %v832
      %v2137 = vsel %vm2107, %v2106, %v834
      %vm2138 = vcmask 130048
      %v2139 = vsel %vm2138, %v2108, %v917
      %v2140 = vsel %vm2138, %v2109, %v919
      %v2141 = vsel %vm2138, %v2110, %v921
      %v2142 = vsel %vm2138, %v2111, %v923
      %v2143 = vsel %vm2138, %v2112, %v925
      %v2144 = vsel %vm2138, %v2113, %v927
      %v2145 = vsel %vm2138, %v2114, %v929
      %v2146 = vsel %vm2138, %v2115, %v931
      %v2147 = vsel %vm2138, %v2116, %v933
      %v2148 = vsel %vm2138, %v2117, %v935
      %v2149 = vsel %vm2138, %v2118, %v937
      %v2150 = vsel %vm2138, %v2119, %v939
      %v2151 = vsel %vm2138, %v2120, %v941
      %v2152 = vsel %vm2138, %v2121, %v943
      %v2153 = vsel %vm2138, %v2122, %v945
      %v2154 = vsel %vm2138, %v2123, %v947
      %v2155 = vsel %vm2138, %v2124, %v949
      %v2156 = vsel %vm2138, %v2125, %v951
      %v2157 = vsel %vm2138, %v2126, %v953
      %v2158 = vsel %vm2138, %v2127, %v955
      %v2159 = vsel %vm2138, %v2128, %v957
      %v2160 = vsel %vm2138, %v2129, %v959
      %v2161 = vsel %vm2138, %v2130, %v961
      %v2162 = vsel %vm2138, %v2131, %v963
      %v2163 = vsel %vm2138, %v2132, %v965
      %v2164 = vsel %vm2138, %v2133, %v967
      %v2165 = vsel %vm2138, %v2134, %v969
      %v2166 = vsel %vm2138, %v2135, %v971
      %v2167 = vsel %vm2138, %v2136, %v973
      %v2168 = vsel %vm2138, %v2137, %v975
      %vm2169 = vcmask 162816
      %v2170 = vsel %vm2169, %v2139, %v1010
      %v2171 = vsel %vm2169, %v2140, %v1012
      %v2172 = vsel %vm2169, %v2141, %v1014
      %v2173 = vsel %vm2169, %v2142, %v1016
      %v2174 = vsel %vm2169, %v2143, %v1018
      %v2175 = vsel %vm2169, %v2144, %v1020
      %v2176 = vsel %vm2169, %v2145, %v1022
      %v2177 = vsel %vm2169, %v2146, %v1024
      %v2178 = vsel %vm2169, %v2147, %v1026
      %v2179 = vsel %vm2169, %v2148, %v1028
      %v2180 = vsel %vm2169, %v2149, %v1030
      %v2181 = vsel %vm2169, %v2150, %v1032
      %v2182 = vsel %vm2169, %v2151, %v1034
      %v2183 = vsel %vm2169, %v2152, %v1036
      %v2184 = vsel %vm2169, %v2153, %v1038
      %v2185 = vsel %vm2169, %v2154, %v1040
      %v2186 = vsel %vm2169, %v2155, %v1042
      %v2187 = vsel %vm2169, %v2156, %v1044
      %v2188 = vsel %vm2169, %v2157, %v1046
      %v2189 = vsel %vm2169, %v2158, %v1048
      %v2190 = vsel %vm2169, %v2159, %v1050
      %v2191 = vsel %vm2169, %v2160, %v1052
      %v2192 = vsel %vm2169, %v2161, %v1054
      %v2193 = vsel %vm2169, %v2162, %v1056
      %v2194 = vsel %vm2169, %v2163, %v1058
      %v2195 = vsel %vm2169, %v2164, %v1060
      %v2196 = vsel %vm2169, %v2165, %v1062
      %v2197 = vsel %vm2169, %v2166, %v1064
      %v2198 = vsel %vm2169, %v2167, %v1066
      %v2199 = vsel %vm2169, %v2168, %v1068
      %vm2200 = vcmask 195584
      %v2201 = vsel %vm2200, %v2170, %v1105
      %v2202 = vsel %vm2200, %v2171, %v1107
      %v2203 = vsel %vm2200, %v2172, %v1109
      %v2204 = vsel %vm2200, %v2173, %v1111
      %v2205 = vsel %vm2200, %v2174, %v1113
      %v2206 = vsel %vm2200, %v2175, %v1115
      %v2207 = vsel %vm2200, %v2176, %v1117
      %v2208 = vsel %vm2200, %v2177, %v1119
      %v2209 = vsel %vm2200, %v2178, %v1121
      %v2210 = vsel %vm2200, %v2179, %v1123
      %v2211 = vsel %vm2200, %v2180, %v1125
      %v2212 = vsel %vm2200, %v2181, %v1127
      %v2213 = vsel %vm2200, %v2182, %v1129
      %v2214 = vsel %vm2200, %v2183, %v1131
      %v2215 = vsel %vm2200, %v2184, %v1133
      %v2216 = vsel %vm2200, %v2185, %v1135
      %v2217 = vsel %vm2200, %v2186, %v1137
      %v2218 = vsel %vm2200, %v2187, %v1139
      %v2219 = vsel %vm2200, %v2188, %v1141
      %v2220 = vsel %vm2200, %v2189, %v1143
      %v2221 = vsel %vm2200, %v2190, %v1145
      %v2222 = vsel %vm2200, %v2191, %v1147
      %v2223 = vsel %vm2200, %v2192, %v1149
      %v2224 = vsel %vm2200, %v2193, %v1151
      %v2225 = vsel %vm2200, %v2194, %v1153
      %v2226 = vsel %vm2200, %v2195, %v1155
      %v2227 = vsel %vm2200, %v2196, %v1157
      %v2228 = vsel %vm2200, %v2197, %v1159
      %v2229 = vsel %vm2200, %v2198, %v1161
      %v2230 = vsel %vm2200, %v2199, %v1163
      %vm2231 = vcmask 228352
      %v2232 = vsel %vm2231, %v2201, %v1200
      %v2233 = vsel %vm2231, %v2202, %v1202
      %v2234 = vsel %vm2231, %v2203, %v1204
      %v2235 = vsel %vm2231, %v2204, %v1206
      %v2236 = vsel %vm2231, %v2205, %v1208
      %v2237 = vsel %vm2231, %v2206, %v1210
      %v2238 = vsel %vm2231, %v2207, %v1212
      %v2239 = vsel %vm2231, %v2208, %v1214
      %v2240 = vsel %vm2231, %v2209, %v1216
      %v2241 = vsel %vm2231, %v2210, %v1218
      %v2242 = vsel %vm2231, %v2211, %v1220
      %v2243 = vsel %vm2231, %v2212, %v1222
      %v2244 = vsel %vm2231, %v2213, %v1224
      %v2245 = vsel %vm2231, %v2214, %v1226
      %v2246 = vsel %vm2231, %v2215, %v1228
      %v2247 = vsel %vm2231, %v2216, %v1230
      %v2248 = vsel %vm2231, %v2217, %v1232
      %v2249 = vsel %vm2231, %v2218, %v1234
      %v2250 = vsel %vm2231, %v2219, %v1236
      %v2251 = vsel %vm2231, %v2220, %v1238
      %v2252 = vsel %vm2231, %v2221, %v1240
      %v2253 = vsel %vm2231, %v2222, %v1242
      %v2254 = vsel %vm2231, %v2223, %v1244
      %v2255 = vsel %vm2231, %v2224, %v1246
      %v2256 = vsel %vm2231, %v2225, %v1248
      %v2257 = vsel %vm2231, %v2226, %v1250
      %v2258 = vsel %vm2231, %v2227, %v1252
      %v2259 = vsel %vm2231, %v2228, %v1254
      %v2260 = vsel %vm2231, %v2229, %v1256
      %v2261 = vsel %vm2231, %v2230, %v1258
      %vm2262 = vcmask 261120
      %v2263 = vsel %vm2262, %v2232, %v1295
      %v2264 = vsel %vm2262, %v2233, %v1297
      %v2265 = vsel %vm2262, %v2234, %v1299
      %v2266 = vsel %vm2262, %v2235, %v1301
      %v2267 = vsel %vm2262, %v2236, %v1303
      %v2268 = vsel %vm2262, %v2237, %v1305
      %v2269 = vsel %vm2262, %v2238, %v1307
      %v2270 = vsel %vm2262, %v2239, %v1309
      %v2271 = vsel %vm2262, %v2240, %v1311
      %v2272 = vsel %vm2262, %v2241, %v1313
      %v2273 = vsel %vm2262, %v2242, %v1315
      %v2274 = vsel %vm2262, %v2243, %v1317
      %v2275 = vsel %vm2262, %v2244, %v1319
      %v2276 = vsel %vm2262, %v2245, %v1321
      %v2277 = vsel %vm2262, %v2246, %v1323
      %v2278 = vsel %vm2262, %v2247, %v1325
      %v2279 = vsel %vm2262, %v2248, %v1327
      %v2280 = vsel %vm2262, %v2249, %v1329
      %v2281 = vsel %vm2262, %v2250, %v1331
      %v2282 = vsel %vm2262, %v2251, %v1333
      %v2283 = vsel %vm2262, %v2252, %v1335
      %v2284 = vsel %vm2262, %v2253, %v1337
      %v2285 = vsel %vm2262, %v2254, %v1339
      %v2286 = vsel %vm2262, %v2255, %v1341
      %v2287 = vsel %vm2262, %v2256, %v1343
      %v2288 = vsel %vm2262, %v2257, %v1345
      %v2289 = vsel %vm2262, %v2258, %v1347
      %v2290 = vsel %vm2262, %v2259, %v1349
      %v2291 = vsel %vm2262, %v2260, %v1351
      %v2292 = vsel %vm2262, %v2261, %v1353
      %vm2293 = vcmask 293888
      %v2294 = vsel %vm2293, %v2263, %v1390
      %v2295 = vsel %vm2293, %v2264, %v1392
      %v2296 = vsel %vm2293, %v2265, %v1394
      %v2297 = vsel %vm2293, %v2266, %v1396
      %v2298 = vsel %vm2293, %v2267, %v1398
      %v2299 = vsel %vm2293, %v2268, %v1400
      %v2300 = vsel %vm2293, %v2269, %v1402
      %v2301 = vsel %vm2293, %v2270, %v1404
      %v2302 = vsel %vm2293, %v2271, %v1406
      %v2303 = vsel %vm2293, %v2272, %v1408
      %v2304 = vsel %vm2293, %v2273, %v1410
      %v2305 = vsel %vm2293, %v2274, %v1412
      %v2306 = vsel %vm2293, %v2275, %v1414
      %v2307 = vsel %vm2293, %v2276, %v1416
      %v2308 = vsel %vm2293, %v2277, %v1418
      %v2309 = vsel %vm2293, %v2278, %v1420
      %v2310 = vsel %vm2293, %v2279, %v1422
      %v2311 = vsel %vm2293, %v2280, %v1424
      %v2312 = vsel %vm2293, %v2281, %v1426
      %v2313 = vsel %vm2293, %v2282, %v1428
      %v2314 = vsel %vm2293, %v2283, %v1430
      %v2315 = vsel %vm2293, %v2284, %v1432
      %v2316 = vsel %vm2293, %v2285, %v1434
      %v2317 = vsel %vm2293, %v2286, %v1436
      %v2318 = vsel %vm2293, %v2287, %v1438
      %v2319 = vsel %vm2293, %v2288, %v1440
      %v2320 = vsel %vm2293, %v2289, %v1442
      %v2321 = vsel %vm2293, %v2290, %v1444
      %v2322 = vsel %vm2293, %v2291, %v1446
      %v2323 = vsel %vm2293, %v2292, %v1448
      %vm2324 = vcmask 326656
      %v2325 = vsel %vm2324, %v2294, %v1483
      %v2326 = vsel %vm2324, %v2295, %v1485
      %v2327 = vsel %vm2324, %v2296, %v1487
      %v2328 = vsel %vm2324, %v2297, %v1489
      %v2329 = vsel %vm2324, %v2298, %v1491
      %v2330 = vsel %vm2324, %v2299, %v1493
      %v2331 = vsel %vm2324, %v2300, %v1495
      %v2332 = vsel %vm2324, %v2301, %v1497
      %v2333 = vsel %vm2324, %v2302, %v1499
      %v2334 = vsel %vm2324, %v2303, %v1501
      %v2335 = vsel %vm2324, %v2304, %v1503
      %v2336 = vsel %vm2324, %v2305, %v1505
      %v2337 = vsel %vm2324, %v2306, %v1507
      %v2338 = vsel %vm2324, %v2307, %v1509
      %v2339 = vsel %vm2324, %v2308, %v1511
      %v2340 = vsel %vm2324, %v2309, %v1513
      %v2341 = vsel %vm2324, %v2310, %v1515
      %v2342 = vsel %vm2324, %v2311, %v1517
      %v2343 = vsel %vm2324, %v2312, %v1519
      %v2344 = vsel %vm2324, %v2313, %v1521
      %v2345 = vsel %vm2324, %v2314, %v1523
      %v2346 = vsel %vm2324, %v2315, %v1525
      %v2347 = vsel %vm2324, %v2316, %v1527
      %v2348 = vsel %vm2324, %v2317, %v1529
      %v2349 = vsel %vm2324, %v2318, %v1531
      %v2350 = vsel %vm2324, %v2319, %v1533
      %v2351 = vsel %vm2324, %v2320, %v1535
      %v2352 = vsel %vm2324, %v2321, %v1537
      %v2353 = vsel %vm2324, %v2322, %v1539
      %v2354 = vsel %vm2324, %v2323, %v1541
      %vm2355 = vcmask 359424
      %v2356 = vsel %vm2355, %v2325, %v1578
      %v2357 = vsel %vm2355, %v2326, %v1580
      %v2358 = vsel %vm2355, %v2327, %v1582
      %v2359 = vsel %vm2355, %v2328, %v1584
      %v2360 = vsel %vm2355, %v2329, %v1586
      %v2361 = vsel %vm2355, %v2330, %v1588
      %v2362 = vsel %vm2355, %v2331, %v1590
      %v2363 = vsel %vm2355, %v2332, %v1592
      %v2364 = vsel %vm2355, %v2333, %v1594
      %v2365 = vsel %vm2355, %v2334, %v1596
      %v2366 = vsel %vm2355, %v2335, %v1598
      %v2367 = vsel %vm2355, %v2336, %v1600
      %v2368 = vsel %vm2355, %v2337, %v1602
      %v2369 = vsel %vm2355, %v2338, %v1604
      %v2370 = vsel %vm2355, %v2339, %v1606
      %v2371 = vsel %vm2355, %v2340, %v1608
      %v2372 = vsel %vm2355, %v2341, %v1610
      %v2373 = vsel %vm2355, %v2342, %v1612
      %v2374 = vsel %vm2355, %v2343, %v1614
      %v2375 = vsel %vm2355, %v2344, %v1616
      %v2376 = vsel %vm2355, %v2345, %v1618
      %v2377 = vsel %vm2355, %v2346, %v1620
      %v2378 = vsel %vm2355, %v2347, %v1622
      %v2379 = vsel %vm2355, %v2348, %v1624
      %v2380 = vsel %vm2355, %v2349, %v1626
      %v2381 = vsel %vm2355, %v2350, %v1628
      %v2382 = vsel %vm2355, %v2351, %v1630
      %v2383 = vsel %vm2355, %v2352, %v1632
      %v2384 = vsel %vm2355, %v2353, %v1634
      %v2385 = vsel %vm2355, %v2354, %v1636
      %vm2386 = vcmask 392192
      %v2387 = vsel %vm2386, %v2356, %v1673
      %v2388 = vsel %vm2386, %v2357, %v1675
      %v2389 = vsel %vm2386, %v2358, %v1677
      %v2390 = vsel %vm2386, %v2359, %v1679
      %v2391 = vsel %vm2386, %v2360, %v1681
      %v2392 = vsel %vm2386, %v2361, %v1683
      %v2393 = vsel %vm2386, %v2362, %v1685
      %v2394 = vsel %vm2386, %v2363, %v1687
      %v2395 = vsel %vm2386, %v2364, %v1689
      %v2396 = vsel %vm2386, %v2365, %v1691
      %v2397 = vsel %vm2386, %v2366, %v1693
      %v2398 = vsel %vm2386, %v2367, %v1695
      %v2399 = vsel %vm2386, %v2368, %v1697
      %v2400 = vsel %vm2386, %v2369, %v1699
      %v2401 = vsel %vm2386, %v2370, %v1701
      %v2402 = vsel %vm2386, %v2371, %v1703
      %v2403 = vsel %vm2386, %v2372, %v1705
      %v2404 = vsel %vm2386, %v2373, %v1707
      %v2405 = vsel %vm2386, %v2374, %v1709
      %v2406 = vsel %vm2386, %v2375, %v1711
      %v2407 = vsel %vm2386, %v2376, %v1713
      %v2408 = vsel %vm2386, %v2377, %v1715
      %v2409 = vsel %vm2386, %v2378, %v1717
      %v2410 = vsel %vm2386, %v2379, %v1719
      %v2411 = vsel %vm2386, %v2380, %v1721
      %v2412 = vsel %vm2386, %v2381, %v1723
      %v2413 = vsel %vm2386, %v2382, %v1725
      %v2414 = vsel %vm2386, %v2383, %v1727
      %v2415 = vsel %vm2386, %v2384, %v1729
      %v2416 = vsel %vm2386, %v2385, %v1731
      %vm2417 = vcmask 424960
      %v2418 = vsel %vm2417, %v2387, %v1768
      %v2419 = vsel %vm2417, %v2388, %v1770
      %v2420 = vsel %vm2417, %v2389, %v1772
      %v2421 = vsel %vm2417, %v2390, %v1774
      %v2422 = vsel %vm2417, %v2391, %v1776
      %v2423 = vsel %vm2417, %v2392, %v1778
      %v2424 = vsel %vm2417, %v2393, %v1780
      %v2425 = vsel %vm2417, %v2394, %v1782
      %v2426 = vsel %vm2417, %v2395, %v1784
      %v2427 = vsel %vm2417, %v2396, %v1786
      %v2428 = vsel %vm2417, %v2397, %v1788
      %v2429 = vsel %vm2417, %v2398, %v1790
      %v2430 = vsel %vm2417, %v2399, %v1792
      %v2431 = vsel %vm2417, %v2400, %v1794
      %v2432 = vsel %vm2417, %v2401, %v1796
      %v2433 = vsel %vm2417, %v2402, %v1798
      %v2434 = vsel %vm2417, %v2403, %v1800
      %v2435 = vsel %vm2417, %v2404, %v1802
      %v2436 = vsel %vm2417, %v2405, %v1804
      %v2437 = vsel %vm2417, %v2406, %v1806
      %v2438 = vsel %vm2417, %v2407, %v1808
      %v2439 = vsel %vm2417, %v2408, %v1810
      %v2440 = vsel %vm2417, %v2409, %v1812
      %v2441 = vsel %vm2417, %v2410, %v1814
      %v2442 = vsel %vm2417, %v2411, %v1816
      %v2443 = vsel %vm2417, %v2412, %v1818
      %v2444 = vsel %vm2417, %v2413, %v1820
      %v2445 = vsel %vm2417, %v2414, %v1822
      %v2446 = vsel %vm2417, %v2415, %v1824
      %v2447 = vsel %vm2417, %v2416, %v1826
      %vm2448 = vcmask 457728
      %v2449 = vsel %vm2448, %v2418, %v1863
      %v2450 = vsel %vm2448, %v2419, %v1865
      %v2451 = vsel %vm2448, %v2420, %v1867
      %v2452 = vsel %vm2448, %v2421, %v1869
      %v2453 = vsel %vm2448, %v2422, %v1871
      %v2454 = vsel %vm2448, %v2423, %v1873
      %v2455 = vsel %vm2448, %v2424, %v1875
      %v2456 = vsel %vm2448, %v2425, %v1877
      %v2457 = vsel %vm2448, %v2426, %v1879
      %v2458 = vsel %vm2448, %v2427, %v1881
      %v2459 = vsel %vm2448, %v2428, %v1883
      %v2460 = vsel %vm2448, %v2429, %v1885
      %v2461 = vsel %vm2448, %v2430, %v1887
      %v2462 = vsel %vm2448, %v2431, %v1889
      %v2463 = vsel %vm2448, %v2432, %v1891
      %v2464 = vsel %vm2448, %v2433, %v1893
      %v2465 = vsel %vm2448, %v2434, %v1895
      %v2466 = vsel %vm2448, %v2435, %v1897
      %v2467 = vsel %vm2448, %v2436, %v1899
      %v2468 = vsel %vm2448, %v2437, %v1901
      %v2469 = vsel %vm2448, %v2438, %v1903
      %v2470 = vsel %vm2448, %v2439, %v1905
      %v2471 = vsel %vm2448, %v2440, %v1907
      %v2472 = vsel %vm2448, %v2441, %v1909
      %v2473 = vsel %vm2448, %v2442, %v1911
      %v2474 = vsel %vm2448, %v2443, %v1913
      %v2475 = vsel %vm2448, %v2444, %v1915
      %v2476 = vsel %vm2448, %v2445, %v1917
      %v2477 = vsel %vm2448, %v2446, %v1919
      %v2478 = vsel %vm2448, %v2447, %v1921
      %vm2479 = vcmask 490496
      %v2480 = vsel %vm2479, %v2449, %v1956
      %v2481 = vsel %vm2479, %v2450, %v1958
      %v2482 = vsel %vm2479, %v2451, %v1960
      %v2483 = vsel %vm2479, %v2452, %v1962
      %v2484 = vsel %vm2479, %v2453, %v1964
      %v2485 = vsel %vm2479, %v2454, %v1966
      %v2486 = vsel %vm2479, %v2455, %v1968
      %v2487 = vsel %vm2479, %v2456, %v1970
      %v2488 = vsel %vm2479, %v2457, %v1972
      %v2489 = vsel %vm2479, %v2458, %v1974
      %v2490 = vsel %vm2479, %v2459, %v1976
      %v2491 = vsel %vm2479, %v2460, %v1978
      %v2492 = vsel %vm2479, %v2461, %v1980
      %v2493 = vsel %vm2479, %v2462, %v1982
      %v2494 = vsel %vm2479, %v2463, %v1984
      %v2495 = vsel %vm2479, %v2464, %v1986
      %v2496 = vsel %vm2479, %v2465, %v1988
      %v2497 = vsel %vm2479, %v2466, %v1990
      %v2498 = vsel %vm2479, %v2467, %v1992
      %v2499 = vsel %vm2479, %v2468, %v1994
      %v2500 = vsel %vm2479, %v2469, %v1996
      %v2501 = vsel %vm2479, %v2470, %v1998
      %v2502 = vsel %vm2479, %v2471, %v2000
      %v2503 = vsel %vm2479, %v2472, %v2002
      %v2504 = vsel %vm2479, %v2473, %v2004
      %v2505 = vsel %vm2479, %v2474, %v2006
      %v2506 = vsel %vm2479, %v2475, %v2008
      %v2507 = vsel %vm2479, %v2476, %v2010
      %v2508 = vsel %vm2479, %v2477, %v2012
      %v2509 = vsel %vm2479, %v2478, %v2014
      %v2510 = vrot.slane %v406, 1
      %v2511 = vrot.slane %v407, 1
      %v2512 = vsel %vm442, %v2510, %v2511
      %v2513 = vrot.slane %v408, 1
      %v2514 = vsel %vm442, %v2511, %v2513
      %2515 = vrot.lane.b32.xlu0 %v1101, 4
      %v2516 = vpop.permute.xlu0 %2515
      %2517 = vrot.lane.b32.xlu0 %v1103, 4
      %v2518 = vpop.permute.xlu0 %2517
      %2519 = vrot.lane.b32.xlu0 %v1102, 4
      %v2520 = vpop.permute.xlu0 %2519
      %2521 = vrot.lane.b32.xlu0 %v1574, 4
      %v2522 = vpop.permute.xlu0 %2521
      %2523 = vrot.lane.b32.xlu0 %v1576, 4
      %v2524 = vpop.permute.xlu0 %2523
      %2525 = vrot.lane.b32.xlu0 %v1575, 4
      %v2526 = vpop.permute.xlu0 %2525
      %2527 = vrot.lane.b32.xlu0 %v2512, 4
      %v2528 = vpop.permute.xlu0 %2527
      %2529 = vrot.lane.b32.xlu0 %v2514, 4
      %v2530 = vpop.permute.xlu0 %2529
      %2531 = vrot.lane.b32.xlu0 %v2513, 4
      %v2532 = vpop.permute.xlu0 %2531
      %v2542 = vrot.slane %v406, 2
      %v2543 = vrot.slane %v407, 2
      %v2544 = vsel %vm583, %v2542, %v2543
      %v2545 = vrot.slane %v408, 2
      %v2546 = vsel %vm583, %v2543, %v2545
      %2547 = vrot.lane.b32.xlu0 %v1196, 8
      %v2548 = vpop.permute.xlu0 %2547
      %2549 = vrot.lane.b32.xlu0 %v1198, 8
      %v2550 = vpop.permute.xlu0 %2549
      %2551 = vrot.lane.b32.xlu0 %v1197, 8
      %v2552 = vpop.permute.xlu0 %2551
      %2553 = vrot.lane.b32.xlu0 %v1669, 8
      %v2554 = vpop.permute.xlu0 %2553
      %2555 = vrot.lane.b32.xlu0 %v1671, 8
      %v2556 = vpop.permute.xlu0 %2555
      %2557 = vrot.lane.b32.xlu0 %v1670, 8
      %v2558 = vpop.permute.xlu0 %2557
      %2559 = vrot.lane.b32.xlu0 %v2544, 8
      %v2560 = vpop.permute.xlu0 %2559
      %2561 = vrot.lane.b32.xlu0 %v2546, 8
      %v2562 = vpop.permute.xlu0 %2561
      %2563 = vrot.lane.b32.xlu0 %v2545, 8
      %v2564 = vpop.permute.xlu0 %2563
      %v2574 = vrot.slane %v406, 3
      %v2575 = vrot.slane %v407, 3
      %v2576 = vsel %vm724, %v2574, %v2575
      %v2577 = vrot.slane %v408, 3
      %v2578 = vsel %vm724, %v2575, %v2577
      %2579 = vrot.lane.b32.xlu0 %v1291, 12
      %v2580 = vpop.permute.xlu0 %2579
      %2581 = vrot.lane.b32.xlu0 %v1293, 12
      %v2582 = vpop.permute.xlu0 %2581
      %2583 = vrot.lane.b32.xlu0 %v1292, 12
      %v2584 = vpop.permute.xlu0 %2583
      %2585 = vrot.lane.b32.xlu0 %v1764, 12
      %v2586 = vpop.permute.xlu0 %2585
      %2587 = vrot.lane.b32.xlu0 %v1766, 12
      %v2588 = vpop.permute.xlu0 %2587
      %2589 = vrot.lane.b32.xlu0 %v1765, 12
      %v2590 = vpop.permute.xlu0 %2589
      %2591 = vrot.lane.b32.xlu0 %v2576, 12
      %v2592 = vpop.permute.xlu0 %2591
      %2593 = vrot.lane.b32.xlu0 %v2578, 12
      %v2594 = vpop.permute.xlu0 %2593
      %2595 = vrot.lane.b32.xlu0 %v2577, 12
      %v2596 = vpop.permute.xlu0 %2595
      %vm2609 = vcmask 1040384
      %v2610 = vrot.slane %v382, 7
      %v2611 = vrot.slane %v383, 7
      %v2612 = vsel %vm2609, %v2610, %v2611
      %v2613 = vrot.slane %v384, 7
      %v2614 = vsel %vm2609, %v2611, %v2613
      %v2615 = vrot.slane %v385, 7
      %v2616 = vrot.slane %v386, 7
      %v2617 = vsel %vm2609, %v2615, %v2616
      %v2618 = vrot.slane %v387, 7
      %v2619 = vsel %vm2609, %v2616, %v2618
      %v2620 = vrot.slane %v388, 7
      %v2621 = vrot.slane %v389, 7
      %v2622 = vsel %vm2609, %v2620, %v2621
      %v2623 = vrot.slane %v390, 7
      %v2624 = vsel %vm2609, %v2621, %v2623
      %v2625 = vrot.slane %v391, 7
      %v2626 = vrot.slane %v392, 7
      %v2627 = vsel %vm2609, %v2625, %v2626
      %v2628 = vrot.slane %v393, 7
      %v2629 = vsel %vm2609, %v2626, %v2628
      %v2630 = vrot.slane %v394, 7
      %v2631 = vrot.slane %v395, 7
      %v2632 = vsel %vm2609, %v2630, %v2631
      %v2633 = vrot.slane %v396, 7
      %v2634 = vsel %vm2609, %v2631, %v2633
      %v2635 = vrot.slane %v397, 7
      %v2636 = vrot.slane %v398, 7
      %v2637 = vsel %vm2609, %v2635, %v2636
      %v2638 = vrot.slane %v399, 7
      %v2639 = vsel %vm2609, %v2636, %v2638
      %v2640 = vrot.slane %v400, 7
      %v2641 = vrot.slane %v401, 7
      %v2642 = vsel %vm2609, %v2640, %v2641
      %v2643 = vrot.slane %v402, 7
      %v2644 = vsel %vm2609, %v2641, %v2643
      %v2645 = vrot.slane %v403, 7
      %v2646 = vrot.slane %v404, 7
      %v2647 = vsel %vm2609, %v2645, %v2646
      %v2648 = vrot.slane %v405, 7
      %v2649 = vsel %vm2609, %v2646, %v2648
      %v2650 = vrot.slane %v406, 7
      %v2651 = vrot.slane %v407, 7
      %v2652 = vsel %vm2609, %v2650, %v2651
      %v2653 = vrot.slane %v408, 7
      %v2654 = vsel %vm2609, %v2651, %v2653
      %v2655 = vrot.slane %v409, 7
      %v2656 = vrot.slane %v410, 7
      %v2657 = vsel %vm2609, %v2655, %v2656
      %v2658 = vrot.slane %v411, 7
      %v2659 = vsel %vm2609, %v2656, %v2658
      %2660 = vrot.lane.b32.xlu0 %v2610, 16
      %v2661 = vpop.permute.xlu0 %2660
      %2662 = vrot.lane.b32.xlu0 %v2612, 16
      %v2663 = vpop.permute.xlu0 %2662
      %2664 = vrot.lane.b32.xlu0 %v2614, 16
      %v2665 = vpop.permute.xlu0 %2664
      %2666 = vrot.lane.b32.xlu0 %v2615, 16
      %v2667 = vpop.permute.xlu0 %2666
      %2668 = vrot.lane.b32.xlu0 %v2617, 16
      %v2669 = vpop.permute.xlu0 %2668
      %2670 = vrot.lane.b32.xlu0 %v2619, 16
      %v2671 = vpop.permute.xlu0 %2670
      %2672 = vrot.lane.b32.xlu0 %v2620, 16
      %v2673 = vpop.permute.xlu0 %2672
      %2674 = vrot.lane.b32.xlu0 %v2622, 16
      %v2675 = vpop.permute.xlu0 %2674
      %2676 = vrot.lane.b32.xlu0 %v2624, 16
      %v2677 = vpop.permute.xlu0 %2676
      %2678 = vrot.lane.b32.xlu0 %v2625, 16
      %v2679 = vpop.permute.xlu0 %2678
      %2680 = vrot.lane.b32.xlu0 %v2627, 16
      %v2681 = vpop.permute.xlu0 %2680
      %2682 = vrot.lane.b32.xlu0 %v2629, 16
      %v2683 = vpop.permute.xlu0 %2682
      %2684 = vrot.lane.b32.xlu0 %v2630, 16
      %v2685 = vpop.permute.xlu0 %2684
      %2686 = vrot.lane.b32.xlu0 %v2632, 16
      %v2687 = vpop.permute.xlu0 %2686
      %2688 = vrot.lane.b32.xlu0 %v2634, 16
      %v2689 = vpop.permute.xlu0 %2688
      %2690 = vrot.lane.b32.xlu0 %v2635, 16
      %v2691 = vpop.permute.xlu0 %2690
      %2692 = vrot.lane.b32.xlu0 %v2637, 16
      %v2693 = vpop.permute.xlu0 %2692
      %2694 = vrot.lane.b32.xlu0 %v2639, 16
      %v2695 = vpop.permute.xlu0 %2694
      %2696 = vrot.lane.b32.xlu0 %v2640, 16
      %v2697 = vpop.permute.xlu0 %2696
      %2698 = vrot.lane.b32.xlu0 %v2642, 16
      %v2699 = vpop.permute.xlu0 %2698
      %2700 = vrot.lane.b32.xlu0 %v2644, 16
      %v2701 = vpop.permute.xlu0 %2700
      %2702 = vrot.lane.b32.xlu0 %v2645, 16
      %v2703 = vpop.permute.xlu0 %2702
      %2704 = vrot.lane.b32.xlu0 %v2647, 16
      %v2705 = vpop.permute.xlu0 %2704
      %2706 = vrot.lane.b32.xlu0 %v2649, 16
      %v2707 = vpop.permute.xlu0 %2706
      %2708 = vrot.lane.b32.xlu0 %v2650, 16
      %v2709 = vpop.permute.xlu0 %2708
      %2710 = vrot.lane.b32.xlu0 %v2652, 16
      %v2711 = vpop.permute.xlu0 %2710
      %2712 = vrot.lane.b32.xlu0 %v2654, 16
      %v2713 = vpop.permute.xlu0 %2712
      %2714 = vrot.lane.b32.xlu0 %v2655, 16
      %v2715 = vpop.permute.xlu0 %2714
      %2716 = vrot.lane.b32.xlu0 %v2657, 16
      %v2717 = vpop.permute.xlu0 %2716
      %2718 = vrot.lane.b32.xlu0 %v2659, 16
      %v2719 = vpop.permute.xlu0 %2718
      %2750 = vrot.lane.b32.xlu0 %v403, 20
      %v2751 = vpop.permute.xlu0 %2750
      %2752 = vrot.lane.b32.xlu0 %v404, 20
      %v2753 = vpop.permute.xlu0 %2752
      %2754 = vrot.lane.b32.xlu0 %v405, 20
      %v2755 = vpop.permute.xlu0 %2754
      %2756 = vrot.lane.b32.xlu0 %v406, 20
      %v2757 = vpop.permute.xlu0 %2756
      %2758 = vrot.lane.b32.xlu0 %v407, 20
      %v2759 = vpop.permute.xlu0 %2758
      %2760 = vrot.lane.b32.xlu0 %v408, 20
      %v2761 = vpop.permute.xlu0 %2760
      %2762 = vrot.lane.b32.xlu0 %v409, 20
      %v2763 = vpop.permute.xlu0 %2762
      %2764 = vrot.lane.b32.xlu0 %v410, 20
      %v2765 = vpop.permute.xlu0 %2764
      %2766 = vrot.lane.b32.xlu0 %v411, 20
      %v2767 = vpop.permute.xlu0 %2766
      %v2777 = vrot.slane %v409, 1
      %v2778 = vrot.slane %v410, 1
      %v2779 = vsel %vm442, %v2777, %v2778
      %v2780 = vrot.slane %v411, 1
      %v2781 = vsel %vm442, %v2778, %v2780
      %2782 = vrot.lane.b32.xlu0 %v1574, 24
      %v2783 = vpop.permute.xlu0 %2782
      %2784 = vrot.lane.b32.xlu0 %v1576, 24
      %v2785 = vpop.permute.xlu0 %2784
      %2786 = vrot.lane.b32.xlu0 %v1575, 24
      %v2787 = vpop.permute.xlu0 %2786
      %2788 = vrot.lane.b32.xlu0 %v2512, 24
      %v2789 = vpop.permute.xlu0 %2788
      %2790 = vrot.lane.b32.xlu0 %v2514, 24
      %v2791 = vpop.permute.xlu0 %2790
      %2792 = vrot.lane.b32.xlu0 %v2513, 24
      %v2793 = vpop.permute.xlu0 %2792
      %2794 = vrot.lane.b32.xlu0 %v2779, 24
      %v2795 = vpop.permute.xlu0 %2794
      %2796 = vrot.lane.b32.xlu0 %v2781, 24
      %v2797 = vpop.permute.xlu0 %2796
      %2798 = vrot.lane.b32.xlu0 %v2780, 24
      %v2799 = vpop.permute.xlu0 %2798
      %v2809 = vrot.slane %v409, 2
      %v2810 = vrot.slane %v410, 2
      %v2811 = vsel %vm583, %v2809, %v2810
      %v2812 = vrot.slane %v411, 2
      %v2813 = vsel %vm583, %v2810, %v2812
      %2814 = vrot.lane.b32.xlu0 %v1669, 28
      %v2815 = vpop.permute.xlu0 %2814
      %2816 = vrot.lane.b32.xlu0 %v1671, 28
      %v2817 = vpop.permute.xlu0 %2816
      %2818 = vrot.lane.b32.xlu0 %v1670, 28
      %v2819 = vpop.permute.xlu0 %2818
      %2820 = vrot.lane.b32.xlu0 %v2544, 28
      %v2821 = vpop.permute.xlu0 %2820
      %2822 = vrot.lane.b32.xlu0 %v2546, 28
      %v2823 = vpop.permute.xlu0 %2822
      %2824 = vrot.lane.b32.xlu0 %v2545, 28
      %v2825 = vpop.permute.xlu0 %2824
      %2826 = vrot.lane.b32.xlu0 %v2811, 28
      %v2827 = vpop.permute.xlu0 %2826
      %2828 = vrot.lane.b32.xlu0 %v2813, 28
      %v2829 = vpop.permute.xlu0 %2828
      %2830 = vrot.lane.b32.xlu0 %v2812, 28
      %v2831 = vpop.permute.xlu0 %2830
      %v2841 = vrot.slane %v409, 3
      %v2842 = vrot.slane %v410, 3
      %v2843 = vsel %vm724, %v2841, %v2842
      %v2844 = vrot.slane %v411, 3
      %v2845 = vsel %vm724, %v2842, %v2844
      %2846 = vrot.lane.b32.xlu0 %v1764, 32
      %v2847 = vpop.permute.xlu0 %2846
      %2848 = vrot.lane.b32.xlu0 %v1766, 32
      %v2849 = vpop.permute.xlu0 %2848
      %2850 = vrot.lane.b32.xlu0 %v1765, 32
      %v2851 = vpop.permute.xlu0 %2850
      %2852 = vrot.lane.b32.xlu0 %v2576, 32
      %v2853 = vpop.permute.xlu0 %2852
      %2854 = vrot.lane.b32.xlu0 %v2578, 32
      %v2855 = vpop.permute.xlu0 %2854
      %2856 = vrot.lane.b32.xlu0 %v2577, 32
      %v2857 = vpop.permute.xlu0 %2856
      %2858 = vrot.lane.b32.xlu0 %v2843, 32
      %v2859 = vpop.permute.xlu0 %2858
      %2860 = vrot.lane.b32.xlu0 %v2845, 32
      %v2861 = vpop.permute.xlu0 %2860
      %2862 = vrot.lane.b32.xlu0 %v2844, 32
      %v2863 = vpop.permute.xlu0 %2862
      %v2873 = vsel %vm2045, %v400, %v2516
      %v2874 = vsel %vm2045, %v401, %v2518
      %v2875 = vsel %vm2045, %v402, %v2520
      %v2876 = vsel %vm2045, %v403, %v2522
      %v2877 = vsel %vm2045, %v404, %v2524
      %v2878 = vsel %vm2045, %v405, %v2526
      %v2879 = vsel %vm2045, %v406, %v2528
      %v2880 = vsel %vm2045, %v407, %v2530
      %v2881 = vsel %vm2045, %v408, %v2532
      %v2882 = vsel %vm2076, %v2873, %v2548
      %v2883 = vsel %vm2076, %v2874, %v2550
      %v2884 = vsel %vm2076, %v2875, %v2552
      %v2885 = vsel %vm2076, %v2876, %v2554
      %v2886 = vsel %vm2076, %v2877, %v2556
      %v2887 = vsel %vm2076, %v2878, %v2558
      %v2888 = vsel %vm2076, %v2879, %v2560
      %v2889 = vsel %vm2076, %v2880, %v2562
      %v2890 = vsel %vm2076, %v2881, %v2564
      %v2891 = vsel %vm2107, %v2882, %v2580
      %v2892 = vsel %vm2107, %v2883, %v2582
      %v2893 = vsel %vm2107, %v2884, %v2584
      %v2894 = vsel %vm2107, %v2885, %v2586
      %v2895 = vsel %vm2107, %v2886, %v2588
      %v2896 = vsel %vm2107, %v2887, %v2590
      %v2897 = vsel %vm2107, %v2888, %v2592
      %v2898 = vsel %vm2107, %v2889, %v2594
      %v2899 = vsel %vm2107, %v2890, %v2596
      %v2900 = vsel %vm2138, %v2117, %v2661
      %v2901 = vsel %vm2138, %v2118, %v2663
      %v2902 = vsel %vm2138, %v2119, %v2665
      %v2903 = vsel %vm2138, %v2120, %v2667
      %v2904 = vsel %vm2138, %v2121, %v2669
      %v2905 = vsel %vm2138, %v2122, %v2671
      %v2906 = vsel %vm2138, %v2123, %v2673
      %v2907 = vsel %vm2138, %v2124, %v2675
      %v2908 = vsel %vm2138, %v2125, %v2677
      %v2909 = vsel %vm2138, %v2126, %v2679
      %v2910 = vsel %vm2138, %v2127, %v2681
      %v2911 = vsel %vm2138, %v2128, %v2683
      %v2912 = vsel %vm2138, %v2129, %v2685
      %v2913 = vsel %vm2138, %v2130, %v2687
      %v2914 = vsel %vm2138, %v2131, %v2689
      %v2915 = vsel %vm2138, %v2132, %v2691
      %v2916 = vsel %vm2138, %v2133, %v2693
      %v2917 = vsel %vm2138, %v2134, %v2695
      %v2918 = vsel %vm2138, %v2135, %v2697
      %v2919 = vsel %vm2138, %v2136, %v2699
      %v2920 = vsel %vm2138, %v2137, %v2701
      %v2921 = vsel %vm2138, %v2891, %v2703
      %v2922 = vsel %vm2138, %v2892, %v2705
      %v2923 = vsel %vm2138, %v2893, %v2707
      %v2924 = vsel %vm2138, %v2894, %v2709
      %v2925 = vsel %vm2138, %v2895, %v2711
      %v2926 = vsel %vm2138, %v2896, %v2713
      %v2927 = vsel %vm2138, %v2897, %v2715
      %v2928 = vsel %vm2138, %v2898, %v2717
      %v2929 = vsel %vm2138, %v2899, %v2719
      %v2930 = vsel %vm2169, %v2900, %v1028
      %v2931 = vsel %vm2169, %v2901, %v1030
      %v2932 = vsel %vm2169, %v2902, %v1032
      %v2933 = vsel %vm2169, %v2903, %v1034
      %v2934 = vsel %vm2169, %v2904, %v1036
      %v2935 = vsel %vm2169, %v2905, %v1038
      %v2936 = vsel %vm2169, %v2906, %v1040
      %v2937 = vsel %vm2169, %v2907, %v1042
      %v2938 = vsel %vm2169, %v2908, %v1044
      %v2939 = vsel %vm2169, %v2909, %v1046
      %v2940 = vsel %vm2169, %v2910, %v1048
      %v2941 = vsel %vm2169, %v2911, %v1050
      %v2942 = vsel %vm2169, %v2912, %v1052
      %v2943 = vsel %vm2169, %v2913, %v1054
      %v2944 = vsel %vm2169, %v2914, %v1056
      %v2945 = vsel %vm2169, %v2915, %v1058
      %v2946 = vsel %vm2169, %v2916, %v1060
      %v2947 = vsel %vm2169, %v2917, %v1062
      %v2948 = vsel %vm2169, %v2918, %v1064
      %v2949 = vsel %vm2169, %v2919, %v1066
      %v2950 = vsel %vm2169, %v2920, %v1068
      %v2951 = vsel %vm2169, %v2921, %v2751
      %v2952 = vsel %vm2169, %v2922, %v2753
      %v2953 = vsel %vm2169, %v2923, %v2755
      %v2954 = vsel %vm2169, %v2924, %v2757
      %v2955 = vsel %vm2169, %v2925, %v2759
      %v2956 = vsel %vm2169, %v2926, %v2761
      %v2957 = vsel %vm2169, %v2927, %v2763
      %v2958 = vsel %vm2169, %v2928, %v2765
      %v2959 = vsel %vm2169, %v2929, %v2767
      %v2960 = vsel %vm2200, %v2930, %v1123
      %v2961 = vsel %vm2200, %v2931, %v1125
      %v2962 = vsel %vm2200, %v2932, %v1127
      %v2963 = vsel %vm2200, %v2933, %v1129
      %v2964 = vsel %vm2200, %v2934, %v1131
      %v2965 = vsel %vm2200, %v2935, %v1133
      %v2966 = vsel %vm2200, %v2936, %v1135
      %v2967 = vsel %vm2200, %v2937, %v1137
      %v2968 = vsel %vm2200, %v2938, %v1139
      %v2969 = vsel %vm2200, %v2939, %v1141
      %v2970 = vsel %vm2200, %v2940, %v1143
      %v2971 = vsel %vm2200, %v2941, %v1145
      %v2972 = vsel %vm2200, %v2942, %v1147
      %v2973 = vsel %vm2200, %v2943, %v1149
      %v2974 = vsel %vm2200, %v2944, %v1151
      %v2975 = vsel %vm2200, %v2945, %v1153
      %v2976 = vsel %vm2200, %v2946, %v1155
      %v2977 = vsel %vm2200, %v2947, %v1157
      %v2978 = vsel %vm2200, %v2948, %v1159
      %v2979 = vsel %vm2200, %v2949, %v1161
      %v2980 = vsel %vm2200, %v2950, %v1163
      %v2981 = vsel %vm2200, %v2951, %v2783
      %v2982 = vsel %vm2200, %v2952, %v2785
      %v2983 = vsel %vm2200, %v2953, %v2787
      %v2984 = vsel %vm2200, %v2954, %v2789
      %v2985 = vsel %vm2200, %v2955, %v2791
      %v2986 = vsel %vm2200, %v2956, %v2793
      %v2987 = vsel %vm2200, %v2957, %v2795
      %v2988 = vsel %vm2200, %v2958, %v2797
      %v2989 = vsel %vm2200, %v2959, %v2799
      %v2990 = vsel %vm2231, %v2960, %v1218
      %v2991 = vsel %vm2231, %v2961, %v1220
      %v2992 = vsel %vm2231, %v2962, %v1222
      %v2993 = vsel %vm2231, %v2963, %v1224
      %v2994 = vsel %vm2231, %v2964, %v1226
      %v2995 = vsel %vm2231, %v2965, %v1228
      %v2996 = vsel %vm2231, %v2966, %v1230
      %v2997 = vsel %vm2231, %v2967, %v1232
      %v2998 = vsel %vm2231, %v2968, %v1234
      %v2999 = vsel %vm2231, %v2969, %v1236
      %v3000 = vsel %vm2231, %v2970, %v1238
      %v3001 = vsel %vm2231, %v2971, %v1240
      %v3002 = vsel %vm2231, %v2972, %v1242
      %v3003 = vsel %vm2231, %v2973, %v1244
      %v3004 = vsel %vm2231, %v2974, %v1246
      %v3005 = vsel %vm2231, %v2975, %v1248
      %v3006 = vsel %vm2231, %v2976, %v1250
      %v3007 = vsel %vm2231, %v2977, %v1252
      %v3008 = vsel %vm2231, %v2978, %v1254
      %v3009 = vsel %vm2231, %v2979, %v1256
      %v3010 = vsel %vm2231, %v2980, %v1258
      %v3011 = vsel %vm2231, %v2981, %v2815
      %v3012 = vsel %vm2231, %v2982, %v2817
      %v3013 = vsel %vm2231, %v2983, %v2819
      %v3014 = vsel %vm2231, %v2984, %v2821
      %v3015 = vsel %vm2231, %v2985, %v2823
      %v3016 = vsel %vm2231, %v2986, %v2825
      %v3017 = vsel %vm2231, %v2987, %v2827
      %v3018 = vsel %vm2231, %v2988, %v2829
      %v3019 = vsel %vm2231, %v2989, %v2831
      %v3020 = vsel %vm2262, %v2990, %v1313
      %v3021 = vsel %vm2262, %v2991, %v1315
      %v3022 = vsel %vm2262, %v2992, %v1317
      %v3023 = vsel %vm2262, %v2993, %v1319
      %v3024 = vsel %vm2262, %v2994, %v1321
      %v3025 = vsel %vm2262, %v2995, %v1323
      %v3026 = vsel %vm2262, %v2996, %v1325
      %v3027 = vsel %vm2262, %v2997, %v1327
      %v3028 = vsel %vm2262, %v2998, %v1329
      %v3029 = vsel %vm2262, %v2999, %v1331
      %v3030 = vsel %vm2262, %v3000, %v1333
      %v3031 = vsel %vm2262, %v3001, %v1335
      %v3032 = vsel %vm2262, %v3002, %v1337
      %v3033 = vsel %vm2262, %v3003, %v1339
      %v3034 = vsel %vm2262, %v3004, %v1341
      %v3035 = vsel %vm2262, %v3005, %v1343
      %v3036 = vsel %vm2262, %v3006, %v1345
      %v3037 = vsel %vm2262, %v3007, %v1347
      %v3038 = vsel %vm2262, %v3008, %v1349
      %v3039 = vsel %vm2262, %v3009, %v1351
      %v3040 = vsel %vm2262, %v3010, %v1353
      %v3041 = vsel %vm2262, %v3011, %v2847
      %v3042 = vsel %vm2262, %v3012, %v2849
      %v3043 = vsel %vm2262, %v3013, %v2851
      %v3044 = vsel %vm2262, %v3014, %v2853
      %v3045 = vsel %vm2262, %v3015, %v2855
      %v3046 = vsel %vm2262, %v3016, %v2857
      %v3047 = vsel %vm2262, %v3017, %v2859
      %v3048 = vsel %vm2262, %v3018, %v2861
      %v3049 = vsel %vm2262, %v3019, %v2863
      %v3080 = vrot.slane %v3020, 1
      %v3081 = vrot.slane %v3021, 1
      %v3082 = vsel %vm442, %v3080, %v3081
      %v3083 = vrot.slane %v3022, 1
      %v3084 = vsel %vm442, %v3081, %v3083
      %v3085 = vrot.slane %v3023, 1
      %v3086 = vrot.slane %v3024, 1
      %v3087 = vsel %vm442, %v3085, %v3086
      %v3088 = vrot.slane %v3025, 1
      %v3089 = vsel %vm442, %v3086, %v3088
      %v3090 = vrot.slane %v3026, 1
      %v3091 = vrot.slane %v3027, 1
      %v3092 = vsel %vm442, %v3090, %v3091
      %v3093 = vrot.slane %v3028, 1
      %v3094 = vsel %vm442, %v3091, %v3093
      %v3095 = vrot.slane %v3029, 1
      %v3096 = vrot.slane %v3030, 1
      %v3097 = vsel %vm442, %v3095, %v3096
      %v3098 = vrot.slane %v3031, 1
      %v3099 = vsel %vm442, %v3096, %v3098
      %v3100 = vrot.slane %v3032, 1
      %v3101 = vrot.slane %v3033, 1
      %v3102 = vsel %vm442, %v3100, %v3101
      %v3103 = vrot.slane %v3034, 1
      %v3104 = vsel %vm442, %v3101, %v3103
      %v3105 = vrot.slane %v3035, 1
      %v3106 = vrot.slane %v3036, 1
      %v3107 = vsel %vm442, %v3105, %v3106
      %v3108 = vrot.slane %v3037, 1
      %v3109 = vsel %vm442, %v3106, %v3108
      %v3110 = vrot.slane %v3038, 1
      %v3111 = vrot.slane %v3039, 1
      %v3112 = vsel %vm442, %v3110, %v3111
      %v3113 = vrot.slane %v3040, 1
      %v3114 = vsel %vm442, %v3111, %v3113
      %v3115 = vrot.slane %v3041, 1
      %v3116 = vrot.slane %v3042, 1
      %v3117 = vsel %vm442, %v3115, %v3116
      %v3118 = vrot.slane %v3043, 1
      %v3119 = vsel %vm442, %v3116, %v3118
      %v3120 = vrot.slane %v3044, 1
      %v3121 = vrot.slane %v3045, 1
      %v3122 = vsel %vm442, %v3120, %v3121
      %v3123 = vrot.slane %v3046, 1
      %v3124 = vsel %vm442, %v3121, %v3123
      %v3125 = vrot.slane %v3047, 1
      %v3126 = vrot.slane %v3048, 1
      %v3127 = vsel %vm442, %v3125, %v3126
      %v3128 = vrot.slane %v3049, 1
      %v3129 = vsel %vm442, %v3126, %v3128
      %3130 = vrot.lane.b32.xlu0 %v3082, 64
      %v3131 = vpop.permute.xlu0 %3130
      %3132 = vrot.lane.b32.xlu0 %v3084, 64
      %v3133 = vpop.permute.xlu0 %3132
      %3134 = vrot.lane.b32.xlu0 %v3083, 64
      %v3135 = vpop.permute.xlu0 %3134
      %3136 = vrot.lane.b32.xlu0 %v3087, 64
      %v3137 = vpop.permute.xlu0 %3136
      %3138 = vrot.lane.b32.xlu0 %v3089, 64
      %v3139 = vpop.permute.xlu0 %3138
      %3140 = vrot.lane.b32.xlu0 %v3088, 64
      %v3141 = vpop.permute.xlu0 %3140
      %3142 = vrot.lane.b32.xlu0 %v3092, 64
      %v3143 = vpop.permute.xlu0 %3142
      %3144 = vrot.lane.b32.xlu0 %v3094, 64
      %v3145 = vpop.permute.xlu0 %3144
      %3146 = vrot.lane.b32.xlu0 %v3093, 64
      %v3147 = vpop.permute.xlu0 %3146
      %3148 = vrot.lane.b32.xlu0 %v3097, 64
      %v3149 = vpop.permute.xlu0 %3148
      %3150 = vrot.lane.b32.xlu0 %v3099, 64
      %v3151 = vpop.permute.xlu0 %3150
      %3152 = vrot.lane.b32.xlu0 %v3098, 64
      %v3153 = vpop.permute.xlu0 %3152
      %3154 = vrot.lane.b32.xlu0 %v3102, 64
      %v3155 = vpop.permute.xlu0 %3154
      %3156 = vrot.lane.b32.xlu0 %v3104, 64
      %v3157 = vpop.permute.xlu0 %3156
      %3158 = vrot.lane.b32.xlu0 %v3103, 64
      %v3159 = vpop.permute.xlu0 %3158
      %3160 = vrot.lane.b32.xlu0 %v3107, 64
      %v3161 = vpop.permute.xlu0 %3160
      %3162 = vrot.lane.b32.xlu0 %v3109, 64
      %v3163 = vpop.permute.xlu0 %3162
      %3164 = vrot.lane.b32.xlu0 %v3108, 64
      %v3165 = vpop.permute.xlu0 %3164
      %3166 = vrot.lane.b32.xlu0 %v3112, 64
      %v3167 = vpop.permute.xlu0 %3166
      %3168 = vrot.lane.b32.xlu0 %v3114, 64
      %v3169 = vpop.permute.xlu0 %3168
      %3170 = vrot.lane.b32.xlu0 %v3113, 64
      %v3171 = vpop.permute.xlu0 %3170
      %3172 = vrot.lane.b32.xlu0 %v3117, 64
      %v3173 = vpop.permute.xlu0 %3172
      %3174 = vrot.lane.b32.xlu0 %v3119, 64
      %v3175 = vpop.permute.xlu0 %3174
      %3176 = vrot.lane.b32.xlu0 %v3118, 64
      %v3177 = vpop.permute.xlu0 %3176
      %3178 = vrot.lane.b32.xlu0 %v3122, 64
      %v3179 = vpop.permute.xlu0 %3178
      %3180 = vrot.lane.b32.xlu0 %v3124, 64
      %v3181 = vpop.permute.xlu0 %3180
      %3182 = vrot.lane.b32.xlu0 %v3123, 64
      %v3183 = vpop.permute.xlu0 %3182
      %3184 = vrot.lane.b32.xlu0 %v3127, 64
      %v3185 = vpop.permute.xlu0 %3184
      %3186 = vrot.lane.b32.xlu0 %v3129, 64
      %v3187 = vpop.permute.xlu0 %3186
      %3188 = vrot.lane.b32.xlu0 %v3128, 64
      %v3189 = vpop.permute.xlu0 %3188
      %vm3220 = vcmask 523264
      %v3221 = vsel %vm3220, %v2480, %v3131
      %v3222 = vsel %vm3220, %v2481, %v3133
      %v3223 = vsel %vm3220, %v2482, %v3135
      %v3224 = vsel %vm3220, %v2483, %v3137
      %v3225 = vsel %vm3220, %v2484, %v3139
      %v3226 = vsel %vm3220, %v2485, %v3141
      %v3227 = vsel %vm3220, %v2486, %v3143
      %v3228 = vsel %vm3220, %v2487, %v3145
      %v3229 = vsel %vm3220, %v2488, %v3147
      %v3230 = vsel %vm3220, %v2489, %v3149
      %v3231 = vsel %vm3220, %v2490, %v3151
      %v3232 = vsel %vm3220, %v2491, %v3153
      %v3233 = vsel %vm3220, %v2492, %v3155
      %v3234 = vsel %vm3220, %v2493, %v3157
      %v3235 = vsel %vm3220, %v2494, %v3159
      %v3236 = vsel %vm3220, %v2495, %v3161
      %v3237 = vsel %vm3220, %v2496, %v3163
      %v3238 = vsel %vm3220, %v2497, %v3165
      %v3239 = vsel %vm3220, %v2498, %v3167
      %v3240 = vsel %vm3220, %v2499, %v3169
      %v3241 = vsel %vm3220, %v2500, %v3171
      %v3242 = vsel %vm3220, %v2501, %v3173
      %v3243 = vsel %vm3220, %v2502, %v3175
      %v3244 = vsel %vm3220, %v2503, %v3177
      %v3245 = vsel %vm3220, %v2504, %v3179
      %v3246 = vsel %vm3220, %v2505, %v3181
      %v3247 = vsel %vm3220, %v2506, %v3183
      %v3248 = vsel %vm3220, %v2507, %v3185
      %v3249 = vsel %vm3220, %v2508, %v3187
      %v3250 = vsel %vm3220, %v2509, %v3189
      %v3281 = vcombine.high %v3221, %v3221
      %v3283 = vunpack.c.l.s4 1983009808
      %v3284 = vunpack.c.0.s8 %v3283
      %v3285 = vlaneseq
      %v3286 = vshrl.u32 %v3285, 7
      %v3287 = vsub.s32 %v3284, %v3286
      %v3288 = vrot.slane %v3221, %v3287
      %v3290 = vunpack.c.l.s4 1983009808
      %v3291 = vunpack.c.0.s8 %v3290
      %v3292 = vlaneseq
      %v3293 = vshrl.u32 %v3292, 7
      %v3294 = vsub.s32 %v3291, %v3293
      %v3295 = vrot.slane %v3281, %v3294
      %v3296 = vcombine.high %v3288, %v3288
      %v3297 = vcombine.high %v3295, %v3295
      %v3298 = vcombine.high %v3222, %v3222
      %v3300 = vunpack.c.l.s4 1983009808
      %v3301 = vunpack.c.0.s8 %v3300
      %v3302 = vlaneseq
      %v3303 = vshrl.u32 %v3302, 7
      %v3304 = vsub.s32 %v3301, %v3303
      %v3305 = vrot.slane %v3222, %v3304
      %v3307 = vunpack.c.l.s4 1983009808
      %v3308 = vunpack.c.0.s8 %v3307
      %v3309 = vlaneseq
      %v3310 = vshrl.u32 %v3309, 7
      %v3311 = vsub.s32 %v3308, %v3310
      %v3312 = vrot.slane %v3298, %v3311
      %v3313 = vcombine.high %v3305, %v3305
      %v3314 = vcombine.high %v3312, %v3312
      %v3316 = vunpack.c.l.s4 1983009808
      %v3317 = vunpack.c.0.s8 %v3316
      %v3318 = vlaneseq
      %v3319 = vshrl.u32 %v3318, 7
      %v3320 = vsub.s32 %v3317, %v3319
      %v3321 = vrot.slane %v3223, %v3320
      %v3322 = vcombine.high %v3224, %v3224
      %v3324 = vunpack.c.l.s4 1983009808
      %v3325 = vunpack.c.0.s8 %v3324
      %v3326 = vlaneseq
      %v3327 = vshrl.u32 %v3326, 7
      %v3328 = vsub.s32 %v3325, %v3327
      %v3329 = vrot.slane %v3224, %v3328
      %v3331 = vunpack.c.l.s4 1983009808
      %v3332 = vunpack.c.0.s8 %v3331
      %v3333 = vlaneseq
      %v3334 = vshrl.u32 %v3333, 7
      %v3335 = vsub.s32 %v3332, %v3334
      %v3336 = vrot.slane %v3322, %v3335
      %v3337 = vcombine.high %v3329, %v3329
      %v3338 = vcombine.high %v3336, %v3336
      %v3339 = vcombine.high %v3225, %v3225
      %v3341 = vunpack.c.l.s4 1983009808
      %v3342 = vunpack.c.0.s8 %v3341
      %v3343 = vlaneseq
      %v3344 = vshrl.u32 %v3343, 7
      %v3345 = vsub.s32 %v3342, %v3344
      %v3346 = vrot.slane %v3225, %v3345
      %v3348 = vunpack.c.l.s4 1983009808
      %v3349 = vunpack.c.0.s8 %v3348
      %v3350 = vlaneseq
      %v3351 = vshrl.u32 %v3350, 7
      %v3352 = vsub.s32 %v3349, %v3351
      %v3353 = vrot.slane %v3339, %v3352
      %v3354 = vcombine.high %v3346, %v3346
      %v3355 = vcombine.high %v3353, %v3353
      %v3357 = vunpack.c.l.s4 1983009808
      %v3358 = vunpack.c.0.s8 %v3357
      %v3359 = vlaneseq
      %v3360 = vshrl.u32 %v3359, 7
      %v3361 = vsub.s32 %v3358, %v3360
      %v3362 = vrot.slane %v3226, %v3361
      %v3363 = vcombine.high %v3227, %v3227
      %v3365 = vunpack.c.l.s4 1983009808
      %v3366 = vunpack.c.0.s8 %v3365
      %v3367 = vlaneseq
      %v3368 = vshrl.u32 %v3367, 7
      %v3369 = vsub.s32 %v3366, %v3368
      %v3370 = vrot.slane %v3227, %v3369
      %v3372 = vunpack.c.l.s4 1983009808
      %v3373 = vunpack.c.0.s8 %v3372
      %v3374 = vlaneseq
      %v3375 = vshrl.u32 %v3374, 7
      %v3376 = vsub.s32 %v3373, %v3375
      %v3377 = vrot.slane %v3363, %v3376
      %v3378 = vcombine.high %v3370, %v3370
      %v3379 = vcombine.high %v3377, %v3377
      %v3380 = vcombine.high %v3228, %v3228
      %v3382 = vunpack.c.l.s4 1983009808
      %v3383 = vunpack.c.0.s8 %v3382
      %v3384 = vlaneseq
      %v3385 = vshrl.u32 %v3384, 7
      %v3386 = vsub.s32 %v3383, %v3385
      %v3387 = vrot.slane %v3228, %v3386
      %v3389 = vunpack.c.l.s4 1983009808
      %v3390 = vunpack.c.0.s8 %v3389
      %v3391 = vlaneseq
      %v3392 = vshrl.u32 %v3391, 7
      %v3393 = vsub.s32 %v3390, %v3392
      %v3394 = vrot.slane %v3380, %v3393
      %v3395 = vcombine.high %v3387, %v3387
      %v3396 = vcombine.high %v3394, %v3394
      %v3398 = vunpack.c.l.s4 1983009808
      %v3399 = vunpack.c.0.s8 %v3398
      %v3400 = vlaneseq
      %v3401 = vshrl.u32 %v3400, 7
      %v3402 = vsub.s32 %v3399, %v3401
      %v3403 = vrot.slane %v3229, %v3402
      %v3404 = vcombine.high %v3230, %v3230
      %v3406 = vunpack.c.l.s4 1983009808
      %v3407 = vunpack.c.0.s8 %v3406
      %v3408 = vlaneseq
      %v3409 = vshrl.u32 %v3408, 7
      %v3410 = vsub.s32 %v3407, %v3409
      %v3411 = vrot.slane %v3230, %v3410
      %v3413 = vunpack.c.l.s4 1983009808
      %v3414 = vunpack.c.0.s8 %v3413
      %v3415 = vlaneseq
      %v3416 = vshrl.u32 %v3415, 7
      %v3417 = vsub.s32 %v3414, %v3416
      %v3418 = vrot.slane %v3404, %v3417
      %v3419 = vcombine.high %v3411, %v3411
      %v3420 = vcombine.high %v3418, %v3418
      %v3421 = vcombine.high %v3231, %v3231
      %v3423 = vunpack.c.l.s4 1983009808
      %v3424 = vunpack.c.0.s8 %v3423
      %v3425 = vlaneseq
      %v3426 = vshrl.u32 %v3425, 7
      %v3427 = vsub.s32 %v3424, %v3426
      %v3428 = vrot.slane %v3231, %v3427
      %v3430 = vunpack.c.l.s4 1983009808
      %v3431 = vunpack.c.0.s8 %v3430
      %v3432 = vlaneseq
      %v3433 = vshrl.u32 %v3432, 7
      %v3434 = vsub.s32 %v3431, %v3433
      %v3435 = vrot.slane %v3421, %v3434
      %v3436 = vcombine.high %v3428, %v3428
      %v3437 = vcombine.high %v3435, %v3435
      %v3439 = vunpack.c.l.s4 1983009808
      %v3440 = vunpack.c.0.s8 %v3439
      %v3441 = vlaneseq
      %v3442 = vshrl.u32 %v3441, 7
      %v3443 = vsub.s32 %v3440, %v3442
      %v3444 = vrot.slane %v3232, %v3443
      %v3445 = vcombine.high %v3233, %v3233
      %v3447 = vunpack.c.l.s4 1983009808
      %v3448 = vunpack.c.0.s8 %v3447
      %v3449 = vlaneseq
      %v3450 = vshrl.u32 %v3449, 7
      %v3451 = vsub.s32 %v3448, %v3450
      %v3452 = vrot.slane %v3233, %v3451
      %v3454 = vunpack.c.l.s4 1983009808
      %v3455 = vunpack.c.0.s8 %v3454
      %v3456 = vlaneseq
      %v3457 = vshrl.u32 %v3456, 7
      %v3458 = vsub.s32 %v3455, %v3457
      %v3459 = vrot.slane %v3445, %v3458
      %v3460 = vcombine.high %v3452, %v3452
      %v3461 = vcombine.high %v3459, %v3459
      %v3462 = vcombine.high %v3234, %v3234
      %v3464 = vunpack.c.l.s4 1983009808
      %v3465 = vunpack.c.0.s8 %v3464
      %v3466 = vlaneseq
      %v3467 = vshrl.u32 %v3466, 7
      %v3468 = vsub.s32 %v3465, %v3467
      %v3469 = vrot.slane %v3234, %v3468
      %v3471 = vunpack.c.l.s4 1983009808
      %v3472 = vunpack.c.0.s8 %v3471
      %v3473 = vlaneseq
      %v3474 = vshrl.u32 %v3473, 7
      %v3475 = vsub.s32 %v3472, %v3474
      %v3476 = vrot.slane %v3462, %v3475
      %v3477 = vcombine.high %v3469, %v3469
      %v3478 = vcombine.high %v3476, %v3476
      %v3480 = vunpack.c.l.s4 1983009808
      %v3481 = vunpack.c.0.s8 %v3480
      %v3482 = vlaneseq
      %v3483 = vshrl.u32 %v3482, 7
      %v3484 = vsub.s32 %v3481, %v3483
      %v3485 = vrot.slane %v3235, %v3484
      %v3486 = vcombine.high %v3236, %v3236
      %v3488 = vunpack.c.l.s4 1983009808
      %v3489 = vunpack.c.0.s8 %v3488
      %v3490 = vlaneseq
      %v3491 = vshrl.u32 %v3490, 7
      %v3492 = vsub.s32 %v3489, %v3491
      %v3493 = vrot.slane %v3236, %v3492
      %v3495 = vunpack.c.l.s4 1983009808
      %v3496 = vunpack.c.0.s8 %v3495
      %v3497 = vlaneseq
      %v3498 = vshrl.u32 %v3497, 7
      %v3499 = vsub.s32 %v3496, %v3498
      %v3500 = vrot.slane %v3486, %v3499
      %v3501 = vcombine.high %v3493, %v3493
      %v3502 = vcombine.high %v3500, %v3500
      %v3503 = vcombine.high %v3237, %v3237
      %v3505 = vunpack.c.l.s4 1983009808
      %v3506 = vunpack.c.0.s8 %v3505
      %v3507 = vlaneseq
      %v3508 = vshrl.u32 %v3507, 7
      %v3509 = vsub.s32 %v3506, %v3508
      %v3510 = vrot.slane %v3237, %v3509
      %v3512 = vunpack.c.l.s4 1983009808
      %v3513 = vunpack.c.0.s8 %v3512
      %v3514 = vlaneseq
      %v3515 = vshrl.u32 %v3514, 7
      %v3516 = vsub.s32 %v3513, %v3515
      %v3517 = vrot.slane %v3503, %v3516
      %v3518 = vcombine.high %v3510, %v3510
      %v3519 = vcombine.high %v3517, %v3517
      %v3521 = vunpack.c.l.s4 1983009808
      %v3522 = vunpack.c.0.s8 %v3521
      %v3523 = vlaneseq
      %v3524 = vshrl.u32 %v3523, 7
      %v3525 = vsub.s32 %v3522, %v3524
      %v3526 = vrot.slane %v3238, %v3525
      %v3527 = vcombine.high %v3239, %v3239
      %v3529 = vunpack.c.l.s4 1983009808
      %v3530 = vunpack.c.0.s8 %v3529
      %v3531 = vlaneseq
      %v3532 = vshrl.u32 %v3531, 7
      %v3533 = vsub.s32 %v3530, %v3532
      %v3534 = vrot.slane %v3239, %v3533
      %v3536 = vunpack.c.l.s4 1983009808
      %v3537 = vunpack.c.0.s8 %v3536
      %v3538 = vlaneseq
      %v3539 = vshrl.u32 %v3538, 7
      %v3540 = vsub.s32 %v3537, %v3539
      %v3541 = vrot.slane %v3527, %v3540
      %v3542 = vcombine.high %v3534, %v3534
      %v3543 = vcombine.high %v3541, %v3541
      %v3544 = vcombine.high %v3240, %v3240
      %v3546 = vunpack.c.l.s4 1983009808
      %v3547 = vunpack.c.0.s8 %v3546
      %v3548 = vlaneseq
      %v3549 = vshrl.u32 %v3548, 7
      %v3550 = vsub.s32 %v3547, %v3549
      %v3551 = vrot.slane %v3240, %v3550
      %v3553 = vunpack.c.l.s4 1983009808
      %v3554 = vunpack.c.0.s8 %v3553
      %v3555 = vlaneseq
      %v3556 = vshrl.u32 %v3555, 7
      %v3557 = vsub.s32 %v3554, %v3556
      %v3558 = vrot.slane %v3544, %v3557
      %v3559 = vcombine.high %v3551, %v3551
      %v3560 = vcombine.high %v3558, %v3558
      %v3562 = vunpack.c.l.s4 1983009808
      %v3563 = vunpack.c.0.s8 %v3562
      %v3564 = vlaneseq
      %v3565 = vshrl.u32 %v3564, 7
      %v3566 = vsub.s32 %v3563, %v3565
      %v3567 = vrot.slane %v3241, %v3566
      %v3568 = vcombine.high %v3242, %v3242
      %v3570 = vunpack.c.l.s4 1983009808
      %v3571 = vunpack.c.0.s8 %v3570
      %v3572 = vlaneseq
      %v3573 = vshrl.u32 %v3572, 7
      %v3574 = vsub.s32 %v3571, %v3573
      %v3575 = vrot.slane %v3242, %v3574
      %v3577 = vunpack.c.l.s4 1983009808
      %v3578 = vunpack.c.0.s8 %v3577
      %v3579 = vlaneseq
      %v3580 = vshrl.u32 %v3579, 7
      %v3581 = vsub.s32 %v3578, %v3580
      %v3582 = vrot.slane %v3568, %v3581
      %v3583 = vcombine.high %v3575, %v3575
      %v3584 = vcombine.high %v3582, %v3582
      %v3585 = vcombine.high %v3243, %v3243
      %v3587 = vunpack.c.l.s4 1983009808
      %v3588 = vunpack.c.0.s8 %v3587
      %v3589 = vlaneseq
      %v3590 = vshrl.u32 %v3589, 7
      %v3591 = vsub.s32 %v3588, %v3590
      %v3592 = vrot.slane %v3243, %v3591
      %v3594 = vunpack.c.l.s4 1983009808
      %v3595 = vunpack.c.0.s8 %v3594
      %v3596 = vlaneseq
      %v3597 = vshrl.u32 %v3596, 7
      %v3598 = vsub.s32 %v3595, %v3597
      %v3599 = vrot.slane %v3585, %v3598
      %v3600 = vcombine.high %v3592, %v3592
      %v3601 = vcombine.high %v3599, %v3599
      %v3603 = vunpack.c.l.s4 1983009808
      %v3604 = vunpack.c.0.s8 %v3603
      %v3605 = vlaneseq
      %v3606 = vshrl.u32 %v3605, 7
      %v3607 = vsub.s32 %v3604, %v3606
      %v3608 = vrot.slane %v3244, %v3607
      %v3609 = vcombine.high %v3245, %v3245
      %v3611 = vunpack.c.l.s4 1983009808
      %v3612 = vunpack.c.0.s8 %v3611
      %v3613 = vlaneseq
      %v3614 = vshrl.u32 %v3613, 7
      %v3615 = vsub.s32 %v3612, %v3614
      %v3616 = vrot.slane %v3245, %v3615
      %v3618 = vunpack.c.l.s4 1983009808
      %v3619 = vunpack.c.0.s8 %v3618
      %v3620 = vlaneseq
      %v3621 = vshrl.u32 %v3620, 7
      %v3622 = vsub.s32 %v3619, %v3621
      %v3623 = vrot.slane %v3609, %v3622
      %v3624 = vcombine.high %v3616, %v3616
      %v3625 = vcombine.high %v3623, %v3623
      %v3626 = vcombine.high %v3246, %v3246
      %v3628 = vunpack.c.l.s4 1983009808
      %v3629 = vunpack.c.0.s8 %v3628
      %v3630 = vlaneseq
      %v3631 = vshrl.u32 %v3630, 7
      %v3632 = vsub.s32 %v3629, %v3631
      %v3633 = vrot.slane %v3246, %v3632
      %v3635 = vunpack.c.l.s4 1983009808
      %v3636 = vunpack.c.0.s8 %v3635
      %v3637 = vlaneseq
      %v3638 = vshrl.u32 %v3637, 7
      %v3639 = vsub.s32 %v3636, %v3638
      %v3640 = vrot.slane %v3626, %v3639
      %v3641 = vcombine.high %v3633, %v3633
      %v3642 = vcombine.high %v3640, %v3640
      %v3644 = vunpack.c.l.s4 1983009808
      %v3645 = vunpack.c.0.s8 %v3644
      %v3646 = vlaneseq
      %v3647 = vshrl.u32 %v3646, 7
      %v3648 = vsub.s32 %v3645, %v3647
      %v3649 = vrot.slane %v3247, %v3648
      %v3650 = vcombine.high %v3248, %v3248
      %v3652 = vunpack.c.l.s4 1983009808
      %v3653 = vunpack.c.0.s8 %v3652
      %v3654 = vlaneseq
      %v3655 = vshrl.u32 %v3654, 7
      %v3656 = vsub.s32 %v3653, %v3655
      %v3657 = vrot.slane %v3248, %v3656
      %v3659 = vunpack.c.l.s4 1983009808
      %v3660 = vunpack.c.0.s8 %v3659
      %v3661 = vlaneseq
      %v3662 = vshrl.u32 %v3661, 7
      %v3663 = vsub.s32 %v3660, %v3662
      %v3664 = vrot.slane %v3650, %v3663
      %v3665 = vcombine.high %v3657, %v3657
      %v3666 = vcombine.high %v3664, %v3664
      %v3667 = vcombine.high %v3249, %v3249
      %v3669 = vunpack.c.l.s4 1983009808
      %v3670 = vunpack.c.0.s8 %v3669
      %v3671 = vlaneseq
      %v3672 = vshrl.u32 %v3671, 7
      %v3673 = vsub.s32 %v3670, %v3672
      %v3674 = vrot.slane %v3249, %v3673
      %v3676 = vunpack.c.l.s4 1983009808
      %v3677 = vunpack.c.0.s8 %v3676
      %v3678 = vlaneseq
      %v3679 = vshrl.u32 %v3678, 7
      %v3680 = vsub.s32 %v3677, %v3679
      %v3681 = vrot.slane %v3667, %v3680
      %v3682 = vcombine.high %v3674, %v3674
      %v3683 = vcombine.high %v3681, %v3681
      %v3685 = vunpack.c.l.s4 1983009808
      %v3686 = vunpack.c.0.s8 %v3685
      %v3687 = vlaneseq
      %v3688 = vshrl.u32 %v3687, 7
      %v3689 = vsub.s32 %v3686, %v3688
      %v3690 = vrot.slane %v3250, %v3689
      %v3691 = vcombine.low %v3288, %v3296
      %v3692 = vcombine.low %v3295, %v3297
      %v3694 = vunpack.c.l.s4 1983009808
      %v3695 = vunpack.c.0.s8 %v3694
      %v3696 = vlaneseq
      %v3697 = vshrl.u32 %v3696, 7
      %v3698 = vsub.s32 %v3695, %v3697
      %v3699 = vrot.slane %v3691, %v3698
      %v3701 = vunpack.c.l.s4 1983009808
      %v3702 = vunpack.c.0.s8 %v3701
      %v3703 = vlaneseq
      %v3704 = vshrl.u32 %v3703, 7
      %v3705 = vsub.s32 %v3702, %v3704
      %v3706 = vrot.slane %v3692, %v3705
      %v3707 = vcombine.low %v3699, %v3706
      %v3708 = vcombine.low %v3305, %v3313
      %v3709 = vcombine.low %v3312, %v3314
      %v3711 = vunpack.c.l.s4 1983009808
      %v3712 = vunpack.c.0.s8 %v3711
      %v3713 = vlaneseq
      %v3714 = vshrl.u32 %v3713, 7
      %v3715 = vsub.s32 %v3712, %v3714
      %v3716 = vrot.slane %v3708, %v3715
      %v3718 = vunpack.c.l.s4 1983009808
      %v3719 = vunpack.c.0.s8 %v3718
      %v3720 = vlaneseq
      %v3721 = vshrl.u32 %v3720, 7
      %v3722 = vsub.s32 %v3719, %v3721
      %v3723 = vrot.slane %v3709, %v3722
      %v3724 = vcombine.low %v3716, %v3723
      %v3725 = vcombine.low %v3321, %v3329
      %v3726 = vcombine.low %v3337, %v3336
      %v3728 = vunpack.c.l.s4 1983009808
      %v3729 = vunpack.c.0.s8 %v3728
      %v3730 = vlaneseq
      %v3731 = vshrl.u32 %v3730, 7
      %v3732 = vsub.s32 %v3729, %v3731
      %v3733 = vrot.slane %v3725, %v3732
      %v3735 = vunpack.c.l.s4 1983009808
      %v3736 = vunpack.c.0.s8 %v3735
      %v3737 = vlaneseq
      %v3738 = vshrl.u32 %v3737, 7
      %v3739 = vsub.s32 %v3736, %v3738
      %v3740 = vrot.slane %v3726, %v3739
      %v3741 = vcombine.low %v3733, %v3740
      %v3742 = vcombine.low %v3338, %v3346
      %v3743 = vcombine.low %v3354, %v3353
      %v3745 = vunpack.c.l.s4 1983009808
      %v3746 = vunpack.c.0.s8 %v3745
      %v3747 = vlaneseq
      %v3748 = vshrl.u32 %v3747, 7
      %v3749 = vsub.s32 %v3746, %v3748
      %v3750 = vrot.slane %v3742, %v3749
      %v3752 = vunpack.c.l.s4 1983009808
      %v3753 = vunpack.c.0.s8 %v3752
      %v3754 = vlaneseq
      %v3755 = vshrl.u32 %v3754, 7
      %v3756 = vsub.s32 %v3753, %v3755
      %v3757 = vrot.slane %v3743, %v3756
      %v3758 = vcombine.low %v3750, %v3757
      %v3759 = vcombine.low %v3355, %v3362
      %v3760 = vcombine.low %v3370, %v3378
      %v3762 = vunpack.c.l.s4 1983009808
      %v3763 = vunpack.c.0.s8 %v3762
      %v3764 = vlaneseq
      %v3765 = vshrl.u32 %v3764, 7
      %v3766 = vsub.s32 %v3763, %v3765
      %v3767 = vrot.slane %v3759, %v3766
      %v3769 = vunpack.c.l.s4 1983009808
      %v3770 = vunpack.c.0.s8 %v3769
      %v3771 = vlaneseq
      %v3772 = vshrl.u32 %v3771, 7
      %v3773 = vsub.s32 %v3770, %v3772
      %v3774 = vrot.slane %v3760, %v3773
      %v3775 = vcombine.low %v3767, %v3774
      %v3776 = vcombine.low %v3377, %v3379
      %v3777 = vcombine.low %v3387, %v3395
      %v3779 = vunpack.c.l.s4 1983009808
      %v3780 = vunpack.c.0.s8 %v3779
      %v3781 = vlaneseq
      %v3782 = vshrl.u32 %v3781, 7
      %v3783 = vsub.s32 %v3780, %v3782
      %v3784 = vrot.slane %v3776, %v3783
      %v3786 = vunpack.c.l.s4 1983009808
      %v3787 = vunpack.c.0.s8 %v3786
      %v3788 = vlaneseq
      %v3789 = vshrl.u32 %v3788, 7
      %v3790 = vsub.s32 %v3787, %v3789
      %v3791 = vrot.slane %v3777, %v3790
      %v3792 = vcombine.low %v3784, %v3791
      %v3793 = vcombine.low %v3394, %v3396
      %v3794 = vcombine.low %v3403, %v3411
      %v3796 = vunpack.c.l.s4 1983009808
      %v3797 = vunpack.c.0.s8 %v3796
      %v3798 = vlaneseq
      %v3799 = vshrl.u32 %v3798, 7
      %v3800 = vsub.s32 %v3797, %v3799
      %v3801 = vrot.slane %v3793, %v3800
      %v3803 = vunpack.c.l.s4 1983009808
      %v3804 = vunpack.c.0.s8 %v3803
      %v3805 = vlaneseq
      %v3806 = vshrl.u32 %v3805, 7
      %v3807 = vsub.s32 %v3804, %v3806
      %v3808 = vrot.slane %v3794, %v3807
      %v3809 = vcombine.low %v3801, %v3808
      %v3810 = vcombine.low %v3419, %v3418
      %v3811 = vcombine.low %v3420, %v3428
      %v3813 = vunpack.c.l.s4 1983009808
      %v3814 = vunpack.c.0.s8 %v3813
      %v3815 = vlaneseq
      %v3816 = vshrl.u32 %v3815, 7
      %v3817 = vsub.s32 %v3814, %v3816
      %v3818 = vrot.slane %v3810, %v3817
      %v3820 = vunpack.c.l.s4 1983009808
      %v3821 = vunpack.c.0.s8 %v3820
      %v3822 = vlaneseq
      %v3823 = vshrl.u32 %v3822, 7
      %v3824 = vsub.s32 %v3821, %v3823
      %v3825 = vrot.slane %v3811, %v3824
      %v3826 = vcombine.low %v3818, %v3825
      %v3827 = vcombine.low %v3436, %v3435
      %v3828 = vcombine.low %v3437, %v3444
      %v3830 = vunpack.c.l.s4 1983009808
      %v3831 = vunpack.c.0.s8 %v3830
      %v3832 = vlaneseq
      %v3833 = vshrl.u32 %v3832, 7
      %v3834 = vsub.s32 %v3831, %v3833
      %v3835 = vrot.slane %v3827, %v3834
      %v3837 = vunpack.c.l.s4 1983009808
      %v3838 = vunpack.c.0.s8 %v3837
      %v3839 = vlaneseq
      %v3840 = vshrl.u32 %v3839, 7
      %v3841 = vsub.s32 %v3838, %v3840
      %v3842 = vrot.slane %v3828, %v3841
      %v3843 = vcombine.low %v3835, %v3842
      %v3844 = vcombine.low %v3452, %v3460
      %v3845 = vcombine.low %v3459, %v3461
      %v3847 = vunpack.c.l.s4 1983009808
      %v3848 = vunpack.c.0.s8 %v3847
      %v3849 = vlaneseq
      %v3850 = vshrl.u32 %v3849, 7
      %v3851 = vsub.s32 %v3848, %v3850
      %v3852 = vrot.slane %v3844, %v3851
      %v3854 = vunpack.c.l.s4 1983009808
      %v3855 = vunpack.c.0.s8 %v3854
      %v3856 = vlaneseq
      %v3857 = vshrl.u32 %v3856, 7
      %v3858 = vsub.s32 %v3855, %v3857
      %v3859 = vrot.slane %v3845, %v3858
      %v3860 = vcombine.low %v3852, %v3859
      %v3861 = vcombine.low %v3469, %v3477
      %v3862 = vcombine.low %v3476, %v3478
      %v3864 = vunpack.c.l.s4 1983009808
      %v3865 = vunpack.c.0.s8 %v3864
      %v3866 = vlaneseq
      %v3867 = vshrl.u32 %v3866, 7
      %v3868 = vsub.s32 %v3865, %v3867
      %v3869 = vrot.slane %v3861, %v3868
      %v3871 = vunpack.c.l.s4 1983009808
      %v3872 = vunpack.c.0.s8 %v3871
      %v3873 = vlaneseq
      %v3874 = vshrl.u32 %v3873, 7
      %v3875 = vsub.s32 %v3872, %v3874
      %v3876 = vrot.slane %v3862, %v3875
      %v3877 = vcombine.low %v3869, %v3876
      %v3878 = vcombine.low %v3485, %v3493
      %v3879 = vcombine.low %v3501, %v3500
      %v3881 = vunpack.c.l.s4 1983009808
      %v3882 = vunpack.c.0.s8 %v3881
      %v3883 = vlaneseq
      %v3884 = vshrl.u32 %v3883, 7
      %v3885 = vsub.s32 %v3882, %v3884
      %v3886 = vrot.slane %v3878, %v3885
      %v3888 = vunpack.c.l.s4 1983009808
      %v3889 = vunpack.c.0.s8 %v3888
      %v3890 = vlaneseq
      %v3891 = vshrl.u32 %v3890, 7
      %v3892 = vsub.s32 %v3889, %v3891
      %v3893 = vrot.slane %v3879, %v3892
      %v3894 = vcombine.low %v3886, %v3893
      %v3895 = vcombine.low %v3502, %v3510
      %v3896 = vcombine.low %v3518, %v3517
      %v3898 = vunpack.c.l.s4 1983009808
      %v3899 = vunpack.c.0.s8 %v3898
      %v3900 = vlaneseq
      %v3901 = vshrl.u32 %v3900, 7
      %v3902 = vsub.s32 %v3899, %v3901
      %v3903 = vrot.slane %v3895, %v3902
      %v3905 = vunpack.c.l.s4 1983009808
      %v3906 = vunpack.c.0.s8 %v3905
      %v3907 = vlaneseq
      %v3908 = vshrl.u32 %v3907, 7
      %v3909 = vsub.s32 %v3906, %v3908
      %v3910 = vrot.slane %v3896, %v3909
      %v3911 = vcombine.low %v3903, %v3910
      %v3912 = vcombine.low %v3519, %v3526
      %v3913 = vcombine.low %v3534, %v3542
      %v3915 = vunpack.c.l.s4 1983009808
      %v3916 = vunpack.c.0.s8 %v3915
      %v3917 = vlaneseq
      %v3918 = vshrl.u32 %v3917, 7
      %v3919 = vsub.s32 %v3916, %v3918
      %v3920 = vrot.slane %v3912, %v3919
      %v3922 = vunpack.c.l.s4 1983009808
      %v3923 = vunpack.c.0.s8 %v3922
      %v3924 = vlaneseq
      %v3925 = vshrl.u32 %v3924, 7
      %v3926 = vsub.s32 %v3923, %v3925
      %v3927 = vrot.slane %v3913, %v3926
      %v3928 = vcombine.low %v3920, %v3927
      %v3929 = vcombine.low %v3541, %v3543
      %v3930 = vcombine.low %v3551, %v3559
      %v3932 = vunpack.c.l.s4 1983009808
      %v3933 = vunpack.c.0.s8 %v3932
      %v3934 = vlaneseq
      %v3935 = vshrl.u32 %v3934, 7
      %v3936 = vsub.s32 %v3933, %v3935
      %v3937 = vrot.slane %v3929, %v3936
      %v3939 = vunpack.c.l.s4 1983009808
      %v3940 = vunpack.c.0.s8 %v3939
      %v3941 = vlaneseq
      %v3942 = vshrl.u32 %v3941, 7
      %v3943 = vsub.s32 %v3940, %v3942
      %v3944 = vrot.slane %v3930, %v3943
      %v3945 = vcombine.low %v3937, %v3944
      %v3946 = vcombine.low %v3558, %v3560
      %v3947 = vcombine.low %v3567, %v3575
      %v3949 = vunpack.c.l.s4 1983009808
      %v3950 = vunpack.c.0.s8 %v3949
      %v3951 = vlaneseq
      %v3952 = vshrl.u32 %v3951, 7
      %v3953 = vsub.s32 %v3950, %v3952
      %v3954 = vrot.slane %v3946, %v3953
      %v3956 = vunpack.c.l.s4 1983009808
      %v3957 = vunpack.c.0.s8 %v3956
      %v3958 = vlaneseq
      %v3959 = vshrl.u32 %v3958, 7
      %v3960 = vsub.s32 %v3957, %v3959
      %v3961 = vrot.slane %v3947, %v3960
      %v3962 = vcombine.low %v3954, %v3961
      %v3963 = vcombine.low %v3583, %v3582
      %v3964 = vcombine.low %v3584, %v3592
      %v3966 = vunpack.c.l.s4 1983009808
      %v3967 = vunpack.c.0.s8 %v3966
      %v3968 = vlaneseq
      %v3969 = vshrl.u32 %v3968, 7
      %v3970 = vsub.s32 %v3967, %v3969
      %v3971 = vrot.slane %v3963, %v3970
      %v3973 = vunpack.c.l.s4 1983009808
      %v3974 = vunpack.c.0.s8 %v3973
      %v3975 = vlaneseq
      %v3976 = vshrl.u32 %v3975, 7
      %v3977 = vsub.s32 %v3974, %v3976
      %v3978 = vrot.slane %v3964, %v3977
      %v3979 = vcombine.low %v3971, %v3978
      %v3980 = vcombine.low %v3600, %v3599
      %v3981 = vcombine.low %v3601, %v3608
      %v3983 = vunpack.c.l.s4 1983009808
      %v3984 = vunpack.c.0.s8 %v3983
      %v3985 = vlaneseq
      %v3986 = vshrl.u32 %v3985, 7
      %v3987 = vsub.s32 %v3984, %v3986
      %v3988 = vrot.slane %v3980, %v3987
      %v3990 = vunpack.c.l.s4 1983009808
      %v3991 = vunpack.c.0.s8 %v3990
      %v3992 = vlaneseq
      %v3993 = vshrl.u32 %v3992, 7
      %v3994 = vsub.s32 %v3991, %v3993
      %v3995 = vrot.slane %v3981, %v3994
      %v3996 = vcombine.low %v3988, %v3995
      %v3997 = vcombine.low %v3616, %v3624
      %v3998 = vcombine.low %v3623, %v3625
      %v4000 = vunpack.c.l.s4 1983009808
      %v4001 = vunpack.c.0.s8 %v4000
      %v4002 = vlaneseq
      %v4003 = vshrl.u32 %v4002, 7
      %v4004 = vsub.s32 %v4001, %v4003
      %v4005 = vrot.slane %v3997, %v4004
      %v4007 = vunpack.c.l.s4 1983009808
      %v4008 = vunpack.c.0.s8 %v4007
      %v4009 = vlaneseq
      %v4010 = vshrl.u32 %v4009, 7
      %v4011 = vsub.s32 %v4008, %v4010
      %v4012 = vrot.slane %v3998, %v4011
      %v4013 = vcombine.low %v4005, %v4012
      %v4014 = vcombine.low %v3633, %v3641
      %v4015 = vcombine.low %v3640, %v3642
      %v4017 = vunpack.c.l.s4 1983009808
      %v4018 = vunpack.c.0.s8 %v4017
      %v4019 = vlaneseq
      %v4020 = vshrl.u32 %v4019, 7
      %v4021 = vsub.s32 %v4018, %v4020
      %v4022 = vrot.slane %v4014, %v4021
      %v4024 = vunpack.c.l.s4 1983009808
      %v4025 = vunpack.c.0.s8 %v4024
      %v4026 = vlaneseq
      %v4027 = vshrl.u32 %v4026, 7
      %v4028 = vsub.s32 %v4025, %v4027
      %v4029 = vrot.slane %v4015, %v4028
      %v4030 = vcombine.low %v4022, %v4029
      %v4031 = vcombine.low %v3649, %v3657
      %v4032 = vcombine.low %v3665, %v3664
      %v4034 = vunpack.c.l.s4 1983009808
      %v4035 = vunpack.c.0.s8 %v4034
      %v4036 = vlaneseq
      %v4037 = vshrl.u32 %v4036, 7
      %v4038 = vsub.s32 %v4035, %v4037
      %v4039 = vrot.slane %v4031, %v4038
      %v4041 = vunpack.c.l.s4 1983009808
      %v4042 = vunpack.c.0.s8 %v4041
      %v4043 = vlaneseq
      %v4044 = vshrl.u32 %v4043, 7
      %v4045 = vsub.s32 %v4042, %v4044
      %v4046 = vrot.slane %v4032, %v4045
      %v4047 = vcombine.low %v4039, %v4046
      %v4048 = vcombine.low %v3666, %v3674
      %v4049 = vcombine.low %v3682, %v3681
      %v4051 = vunpack.c.l.s4 1983009808
      %v4052 = vunpack.c.0.s8 %v4051
      %v4053 = vlaneseq
      %v4054 = vshrl.u32 %v4053, 7
      %v4055 = vsub.s32 %v4052, %v4054
      %v4056 = vrot.slane %v4048, %v4055
      %v4058 = vunpack.c.l.s4 1983009808
      %v4059 = vunpack.c.0.s8 %v4058
      %v4060 = vlaneseq
      %v4061 = vshrl.u32 %v4060, 7
      %v4062 = vsub.s32 %v4059, %v4061
      %v4063 = vrot.slane %v4049, %v4062
      %v4064 = vcombine.low %v4056, %v4063
      %v4065 = vcombine.low %v3683, %v3690
      %v4067 = vunpack.c.l.s4 1983009808
      %v4068 = vunpack.c.0.s8 %v4067
      %v4069 = vlaneseq
      %v4070 = vshrl.u32 %v4069, 7
      %v4071 = vsub.s32 %v4068, %v4070
      %v4072 = vrot.slane %v4065, %v4071
      %v4096 = vpack.c.bf16 %v3724, %v3707
      %v4097 = vpack.c.bf16 %v3758, %v3741
      %v4098 = vpack.c.bf16 %v3792, %v3775
      %v4099 = vpack.c.bf16 %v3826, %v3809
      %v4100 = vpack.c.bf16 %v3860, %v3843
      %v4101 = vpack.c.bf16 %v3894, %v3877
      %v4102 = vpack.c.bf16 %v3928, %v3911
      %v4103 = vpack.c.bf16 %v3962, %v3945
      %v4104 = vpack.c.bf16 %v3996, %v3979
      %v4105 = vpack.c.bf16 %v4030, %v4013
      %v4106 = vpack.c.bf16 %v4064, %v4047
      %v4107 = vpack.c.bf16 %v4072, %v4072
      %v4108 = vld [vmem:[%s1] sm:$0xf]
      %v4109 = vld [vmem:[%s1 + $0x4] sm:$0xf]
      %v4110 = vld [vmem:[%s1 + $0x8] sm:$0xf]
      %v4111 = vld [vmem:[%s1 + $0xc] sm:$0xf]
      %v4112 = vld [vmem:[%s1 + $0x10] sm:$0xf]
      %v4113 = vld [vmem:[%s1 + $0x14] sm:$0xf]
      %v4114 = vld [vmem:[%s1 + $0x18] sm:$0xf]
      %v4115 = vld [vmem:[%s1 + $0x1c] sm:$0xf]
      %v4116 = vld [vmem:[%s1 + $0x20] sm:$0xf]
      %v4117 = vld [vmem:[%s1 + $0x24] sm:$0xf]
      %v4118 = vld [vmem:[%s1 + $0x28] sm:$0xf]
      %v4119 = vld [vmem:[%s1 + $0x2c] sm:$0xf]
      %v4120 = vld [vmem:[%s1 + $0x30] sm:$0x3]
      %v4121 = vld [vmem:[%s2] sm:$0x1]
      %v4123 = vlaneseq
      %v4124 = vshrl.u32 %v4123, 7
      %v4125 = vsub.s32 0, %v4124
      %v4126 = vrot.slane %v4121, %v4125
      %v4141 = vunpack.c.l.b16 %v4108
      %v4142 = vunpack.c.l.b16 %v4109
      %v4143 = vunpack.c.l.b16 %v4110
      %v4144 = vunpack.c.l.b16 %v4111
      %v4145 = vunpack.c.l.b16 %v4112
      %v4146 = vunpack.c.l.b16 %v4113
      %v4147 = vunpack.c.l.b16 %v4114
      %v4148 = vunpack.c.l.b16 %v4115
      %v4149 = vunpack.c.l.b16 %v4116
      %v4150 = vunpack.c.l.b16 %v4117
      %v4151 = vunpack.c.l.b16 %v4118
      %v4152 = vunpack.c.l.b16 %v4119
      %v4153 = vunpack.c.l.b16 %v4120
      %v4154 = vpack.c.b16 %v4142, %v4141
      %v4155 = vpack.c.b16 %v4144, %v4143
      %v4156 = vpack.c.b16 %v4146, %v4145
      %v4157 = vpack.c.b16 %v4148, %v4147
      %v4158 = vpack.c.b16 %v4150, %v4149
      %v4159 = vpack.c.b16 %v4152, %v4151
      %v4160 = vpack.c.b16 %v4153, %v4153
      %vm4167 = vcmask 818176
      %v4169 = vsel %vm4167, %v4096, 0
      %v4172 = vsel %vm4167, %v4097, 0
      %v4175 = vsel %vm4167, %v4098, 0
      %v4178 = vsel %vm4167, %v4099, 0
      %v4181 = vsel %vm4167, %v4100, 0
      %v4184 = vsel %vm4167, %v4101, 0
      %v4187 = vsel %vm4167, %v4102, 0
      %v4190 = vsel %vm4167, %v4103, 0
      %v4193 = vsel %vm4167, %v4104, 0
      %v4196 = vsel %vm4167, %v4105, 0
      %v4199 = vsel %vm4167, %v4106, 0
      %v4202 = vsel %vm4167, %v4107, 0
      %vm4204 = vcmask 1041408
      %v4206 = vsel %vm4204, %v4160, 0
      %4208 = vmatprep.subr.bf16.mxu0 0
      %4209 = vmatpush1.bf16.msra.mxu0 %v4154
      %4210 = vmatprep.subr.bf16.mxu0 0
      %4211 = vmatpush1.bf16.msra.mxu0 %v4155
      %4212 = vmatprep.subr.bf16.mxu0 0
      %4213 = vmatpush1.bf16.msra.mxu0 %v4156
      %4214 = vmatprep.subr.bf16.mxu0 0
      %4215 = vmatpush1.bf16.msra.mxu0 %v4157
      %4216 = vmatprep.subr.bf16.mxu0 0
      %4217 = vmatpush1.bf16.msra.mxu0 %v4158
      %4218 = vmatprep.subr.bf16.mxu0 0
      %4219 = vmatpush1.bf16.msra.mxu0 %v4159
      %4220 = vmatprep.subr.bf16.mxu0 0
      %4221 = vmatpush1.bf16.msra.mxu0 %v4206
      %4222 = vmatprep.subr.bf16.mxu0 0
      %4223 = vmatpush1.bf16.msra.mxu0 0
      %4224 = vmatprep.subr.bf16.mxu0 0
      %4225 = vmatpush1.bf16.msra.mxu0 0
      %4226 = vmatprep.subr.bf16.mxu0 0
      %4227 = vmatpush1.bf16.msra.mxu0 0
      %4228 = vmatprep.subr.bf16.mxu0 0
      %4229 = vmatpush1.bf16.msra.mxu0 0
      %4230 = vmatprep.subr.bf16.mxu0 0
      %4231 = vmatpush1.bf16.msra.mxu0 0
      %4232 = vmatprep.subr.bf16.mxu0 0
      %4233 = vmatpush1.bf16.msra.mxu0 0
      %4234 = vmatprep.subr.bf16.mxu0 0
      %4235 = vmatpush1.bf16.msra.mxu0 0
      %4236 = vmatprep.subr.bf16.mxu0 0
      %4237 = vmatpush1.bf16.msra.mxu0 0
      %4238 = vmatprep.subr.bf16.mxu0 0
      %4239 = vmatpush1.bf16.msra.mxu0 0
      %4240 = vmatprep.mubr.bf16.mxu0 0
      %4241 = vmatmul.mubr.bf16.gmra.mrb[0].mxu0 %v4169
      %v4242 = vpop.f32.mrb[0].mxu0
      %v4243 = vadd.f32 %v4126, %v4242
      %v4244 = vpop.f32.mrb[0].mxu0
      %v4245 = vpop.f32.mrb[0].mxu0
      %v4246 = vadd.f32 %v4126, %v4245
      %v4247 = vpop.f32.mrb[0].mxu0
      %4248 = vmatprep.mubr.bf16.mxu0 0
      %4249 = vmatmul.mubr.bf16.gmra.mrb[0].mxu0 %v4172
      %v4250 = vpop.f32.mrb[0].mxu0
      %v4251 = vadd.f32 %v4126, %v4250
      %v4252 = vpop.f32.mrb[0].mxu0
      %v4253 = vpop.f32.mrb[0].mxu0
      %v4254 = vadd.f32 %v4126, %v4253
      %v4255 = vpop.f32.mrb[0].mxu0
      %4256 = vmatprep.mubr.bf16.mxu0 0
      %4257 = vmatmul.mubr.bf16.gmra.mrb[0].mxu0 %v4175
      %v4258 = vpop.f32.mrb[0].mxu0
      %v4259 = vadd.f32 %v4126, %v4258
      %v4260 = vpop.f32.mrb[0].mxu0
      %v4261 = vpop.f32.mrb[0].mxu0
      %v4262 = vadd.f32 %v4126, %v4261
      %v4263 = vpop.f32.mrb[0].mxu0
      %4264 = vmatprep.mubr.bf16.mxu0 0
      %4265 = vmatmul.mubr.bf16.gmra.mrb[0].mxu0 %v4178
      %v4266 = vpop.f32.mrb[0].mxu0
      %v4267 = vadd.f32 %v4126, %v4266
      %v4268 = vpop.f32.mrb[0].mxu0
      %v4269 = vpop.f32.mrb[0].mxu0
      %v4270 = vadd.f32 %v4126, %v4269
      %v4271 = vpop.f32.mrb[0].mxu0
      %4272 = vmatprep.mubr.bf16.mxu0 0
      %4273 = vmatmul.mubr.bf16.gmra.mrb[0].mxu0 %v4181
      %v4274 = vpop.f32.mrb[0].mxu0
      %v4275 = vadd.f32 %v4126, %v4274
      %v4276 = vpop.f32.mrb[0].mxu0
      %v4277 = vpop.f32.mrb[0].mxu0
      %v4278 = vadd.f32 %v4126, %v4277
      %v4279 = vpop.f32.mrb[0].mxu0
      %4280 = vmatprep.mubr.bf16.mxu0 0
      %4281 = vmatmul.mubr.bf16.gmra.mrb[0].mxu0 %v4184
      %v4282 = vpop.f32.mrb[0].mxu0
      %v4283 = vadd.f32 %v4126, %v4282
      %v4284 = vpop.f32.mrb[0].mxu0
      %v4285 = vpop.f32.mrb[0].mxu0
      %v4286 = vadd.f32 %v4126, %v4285
      %v4287 = vpop.f32.mrb[0].mxu0
      %4288 = vmatprep.mubr.bf16.mxu0 0
      %4289 = vmatmul.mubr.bf16.gmra.mrb[0].mxu0 %v4187
      %v4290 = vpop.f32.mrb[0].mxu0
      %v4291 = vadd.f32 %v4126, %v4290
      %v4292 = vpop.f32.mrb[0].mxu0
      %v4293 = vpop.f32.mrb[0].mxu0
      %v4294 = vadd.f32 %v4126, %v4293
      %v4295 = vpop.f32.mrb[0].mxu0
      %4296 = vmatprep.mubr.bf16.mxu0 0
      %4297 = vmatmul.mubr.bf16.gmra.mrb[0].mxu0 %v4190
      %v4298 = vpop.f32.mrb[0].mxu0
      %v4299 = vadd.f32 %v4126, %v4298
      %v4300 = vpop.f32.mrb[0].mxu0
      %v4301 = vpop.f32.mrb[0].mxu0
      %v4302 = vadd.f32 %v4126, %v4301
      %v4303 = vpop.f32.mrb[0].mxu0
      %4304 = vmatprep.mubr.bf16.mxu0 0
      %4305 = vmatmul.mubr.bf16.gmra.mrb[0].mxu0 %v4193
      %v4306 = vpop.f32.mrb[0].mxu0
      %v4307 = vadd.f32 %v4126, %v4306
      %v4308 = vpop.f32.mrb[0].mxu0
      %v4309 = vpop.f32.mrb[0].mxu0
      %v4310 = vadd.f32 %v4126, %v4309
      %v4311 = vpop.f32.mrb[0].mxu0
      %4312 = vmatprep.mubr.bf16.mxu0 0
      %4313 = vmatmul.mubr.bf16.gmra.mrb[0].mxu0 %v4196
      %v4314 = vpop.f32.mrb[0].mxu0
      %v4315 = vadd.f32 %v4126, %v4314
      %v4316 = vpop.f32.mrb[0].mxu0
      %v4317 = vpop.f32.mrb[0].mxu0
      %v4318 = vadd.f32 %v4126, %v4317
      %v4319 = vpop.f32.mrb[0].mxu0
      %4320 = vmatprep.mubr.bf16.mxu0 0
      %4321 = vmatmul.mubr.bf16.gmra.mrb[0].mxu0 %v4199
      %v4322 = vpop.f32.mrb[0].mxu0
      %v4323 = vadd.f32 %v4126, %v4322
      %v4324 = vpop.f32.mrb[0].mxu0
      %v4325 = vpop.f32.mrb[0].mxu0
      %v4326 = vadd.f32 %v4126, %v4325
      %v4327 = vpop.f32.mrb[0].mxu0
      %4328 = vmatprep.mubr.bf16.mxu0 0
      %4329 = vmatmul.mubr.bf16.gmra.mrb[0].mxu0 %v4202
      %v4330 = vpop.f32.mrb[0].mxu0
      %v4331 = vadd.f32 %v4126, %v4330
      %v4332 = vpop.f32.mrb[0].mxu0
      %v4333 = vpop.f32.mrb[0].mxu0
      %v4334 = vpop.f32.mrb[0].mxu0
      %4335 = vdwg.mxu0
      %4336 = vst.msk [vmem:[#allocation2] sm:$0xff] %vm3220, %v4243
      %4337 = vst.msk [vmem:[#allocation2 + $0x8] sm:$0xff] %vm3220, %v4246
      %4338 = vst.msk [vmem:[#allocation2 + $0x10] sm:$0xff] %vm3220, %v4251
      %4339 = vst.msk [vmem:[#allocation2 + $0x18] sm:$0xff] %vm3220, %v4254
      %4340 = vst.msk [vmem:[#allocation2 + $0x20] sm:$0xff] %vm3220, %v4259
      %4341 = vst.msk [vmem:[#allocation2 + $0x28] sm:$0xff] %vm3220, %v4262
      %4342 = vst.msk [vmem:[#allocation2 + $0x30] sm:$0xff] %vm3220, %v4267
      %4343 = vst.msk [vmem:[#allocation2 + $0x38] sm:$0xff] %vm3220, %v4270
      %4344 = vst.msk [vmem:[#allocation2 + $0x40] sm:$0xff] %vm3220, %v4275
      %4345 = vst.msk [vmem:[#allocation2 + $0x48] sm:$0xff] %vm3220, %v4278
      %4346 = vst.msk [vmem:[#allocation2 + $0x50] sm:$0xff] %vm3220, %v4283
      %4347 = vst.msk [vmem:[#allocation2 + $0x58] sm:$0xff] %vm3220, %v4286
      %4348 = vst.msk [vmem:[#allocation2 + $0x60] sm:$0xff] %vm3220, %v4291
      %4349 = vst.msk [vmem:[#allocation2 + $0x68] sm:$0xff] %vm3220, %v4294
      %4350 = vst.msk [vmem:[#allocation2 + $0x70] sm:$0xff] %vm3220, %v4299
      %4351 = vst.msk [vmem:[#allocation2 + $0x78] sm:$0xff] %vm3220, %v4302
      %4352 = vst.msk [vmem:[#allocation2 + $0x80] sm:$0xff] %vm3220, %v4307
      %4353 = vst.msk [vmem:[#allocation2 + $0x88] sm:$0xff] %vm3220, %v4310
      %4354 = vst.msk [vmem:[#allocation2 + $0x90] sm:$0xff] %vm3220, %v4315
      %4355 = vst.msk [vmem:[#allocation2 + $0x98] sm:$0xff] %vm3220, %v4318
      %4356 = vst.msk [vmem:[#allocation2 + $0xa0] sm:$0xff] %vm3220, %v4323
      %4357 = vst.msk [vmem:[#allocation2 + $0xa8] sm:$0xff] %vm3220, %v4326
      %vm4358 = vcmask 519168
      %4359 = vst.msk [vmem:[#allocation2 + $0xb0] sm:$0xf] %vm4358, %v4331
      %v4360 = vld [vmem:[#allocation2] sm:$0xff]
      %v4361 = vld [vmem:[#allocation2 + $0x8] sm:$0xff]
      %v4362 = vld [vmem:[#allocation2 + $0x10] sm:$0xff]
      %v4363 = vld [vmem:[#allocation2 + $0x18] sm:$0xff]
      %v4364 = vld [vmem:[#allocation2 + $0x20] sm:$0xff]
      %v4365 = vld [vmem:[#allocation2 + $0x28] sm:$0xff]
      %v4366 = vld [vmem:[#allocation2 + $0x30] sm:$0xff]
      %v4367 = vld [vmem:[#allocation2 + $0x38] sm:$0xff]
      %v4368 = vld [vmem:[#allocation2 + $0x40] sm:$0xff]
      %v4369 = vld [vmem:[#allocation2 + $0x48] sm:$0xff]
      %v4370 = vld [vmem:[#allocation2 + $0x50] sm:$0xff]
      %v4371 = vld [vmem:[#allocation2 + $0x58] sm:$0xff]
      %v4372 = vld [vmem:[#allocation2 + $0x60] sm:$0xff]
      %v4373 = vld [vmem:[#allocation2 + $0x68] sm:$0xff]
      %v4374 = vld [vmem:[#allocation2 + $0x70] sm:$0xff]
      %v4375 = vld [vmem:[#allocation2 + $0x78] sm:$0xff]
      %v4376 = vld [vmem:[#allocation2 + $0x80] sm:$0xff]
      %v4377 = vld [vmem:[#allocation2 + $0x88] sm:$0xff]
      %v4378 = vld [vmem:[#allocation2 + $0x90] sm:$0xff]
      %v4379 = vld [vmem:[#allocation2 + $0x98] sm:$0xff]
      %v4380 = vld [vmem:[#allocation2 + $0xa0] sm:$0xff]
      %v4381 = vld [vmem:[#allocation2 + $0xa8] sm:$0xff]
      %v4382 = vld [vmem:[#allocation2 + $0xb0] sm:$0xf]
      %v4383 = vpack.c.bf16 %v4361, %v4360
      %v4384 = vpack.c.bf16 %v4363, %v4362
      %v4385 = vpack.c.bf16 %v4365, %v4364
      %v4386 = vpack.c.bf16 %v4367, %v4366
      %v4387 = vpack.c.bf16 %v4369, %v4368
      %v4388 = vpack.c.bf16 %v4371, %v4370
      %v4389 = vpack.c.bf16 %v4373, %v4372
      %v4390 = vpack.c.bf16 %v4375, %v4374
      %v4391 = vpack.c.bf16 %v4377, %v4376
      %v4392 = vpack.c.bf16 %v4379, %v4378
      %v4393 = vpack.c.bf16 %v4381, %v4380
      %v4394 = vpack.c.bf16 %v4382, %v4382
      %v4395 = vld [vmem:[%s3] sm:$0xf]
      %v4396 = vld [vmem:[%s3 + $0x4] sm:$0xf]
      %v4397 = vld [vmem:[%s3 + $0x8] sm:$0xf]
      %v4398 = vld [vmem:[%s3 + $0xc] sm:$0xf]
      %v4399 = vld [vmem:[%s3 + $0x10] sm:$0xf]
      %v4400 = vld [vmem:[%s3 + $0x14] sm:$0xf]
      %v4401 = vld [vmem:[%s3 + $0x18] sm:$0xf]
      %v4402 = vld [vmem:[%s3 + $0x1c] sm:$0xf]
      %v4403 = vld [vmem:[%s4] sm:$0x1]
      %v4405 = vlaneseq
      %v4406 = vshrl.u32 %v4405, 7
      %v4407 = vsub.s32 0, %v4406
      %v4408 = vrot.slane %v4403, %v4407
      %v4418 = vunpack.c.l.b16 %v4395
      %v4419 = vunpack.c.l.b16 %v4396
      %v4420 = vunpack.c.l.b16 %v4397
      %v4421 = vunpack.c.l.b16 %v4398
      %v4422 = vunpack.c.l.b16 %v4399
      %v4423 = vunpack.c.l.b16 %v4400
      %v4424 = vunpack.c.l.b16 %v4401
      %v4425 = vunpack.c.l.b16 %v4402
      %v4426 = vpack.c.b16 %v4419, %v4418
      %v4427 = vpack.c.b16 %v4421, %v4420
      %v4428 = vpack.c.b16 %v4423, %v4422
      %v4429 = vpack.c.b16 %v4425, %v4424
      %v4435 = vsel %vm3220, %v4383, 0
      %v4438 = vsel %vm3220, %v4384, 0
      %v4441 = vsel %vm3220, %v4385, 0
      %v4444 = vsel %vm3220, %v4386, 0
      %v4447 = vsel %vm3220, %v4387, 0
      %v4450 = vsel %vm3220, %v4388, 0
      %v4453 = vsel %vm3220, %v4389, 0
      %v4456 = vsel %vm3220, %v4390, 0
      %v4459 = vsel %vm3220, %v4391, 0
      %v4462 = vsel %vm3220, %v4392, 0
      %v4465 = vsel %vm3220, %v4393, 0
      %v4468 = vsel %vm3220, %v4394, 0
      %4470 = vmatprep.subr.bf16.mxu0 0
      %4471 = vmatpush1.bf16.msra.mxu0 %v4426
      %4472 = vmatprep.subr.bf16.mxu0 0
      %4473 = vmatpush1.bf16.msra.mxu0 %v4427
      %4474 = vmatprep.subr.bf16.mxu0 0
      %4475 = vmatpush1.bf16.msra.mxu0 %v4428
      %4476 = vmatprep.subr.bf16.mxu0 0
      %4477 = vmatpush1.bf16.msra.mxu0 %v4429
      %4478 = vmatprep.subr.bf16.mxu0 0
      %4479 = vmatpush1.bf16.msra.mxu0 0
      %4480 = vmatprep.subr.bf16.mxu0 0
      %4481 = vmatpush1.bf16.msra.mxu0 0
      %4482 = vmatprep.subr.bf16.mxu0 0
      %4483 = vmatpush1.bf16.msra.mxu0 0
      %4484 = vmatprep.subr.bf16.mxu0 0
      %4485 = vmatpush1.bf16.msra.mxu0 0
      %4486 = vmatprep.subr.bf16.mxu0 0
      %4487 = vmatpush1.bf16.msra.mxu0 0
      %4488 = vmatprep.subr.bf16.mxu0 0
      %4489 = vmatpush1.bf16.msra.mxu0 0
      %4490 = vmatprep.subr.bf16.mxu0 0
      %4491 = vmatpush1.bf16.msra.mxu0 0
      %4492 = vmatprep.subr.bf16.mxu0 0
      %4493 = vmatpush1.bf16.msra.mxu0 0
      %4494 = vmatprep.subr.bf16.mxu0 0
      %4495 = vmatpush1.bf16.msra.mxu0 0
      %4496 = vmatprep.subr.bf16.mxu0 0
      %4497 = vmatpush1.bf16.msra.mxu0 0
      %4498 = vmatprep.subr.bf16.mxu0 0
      %4499 = vmatpush1.bf16.msra.mxu0 0
      %4500 = vmatprep.subr.bf16.mxu0 0
      %4501 = vmatpush1.bf16.msra.mxu0 0
      %4502 = vmatprep.mubr.bf16.mxu0 0
      %4503 = vmatmul.mubr.bf16.gmra.mrb[0].mxu0 %v4435
      %v4504 = vpop.f32.mrb[0].mxu0
      %v4505 = vadd.f32 %v4408, %v4504
      %v4506 = vpop.f32.mrb[0].mxu0
      %v4507 = vpop.f32.mrb[0].mxu0
      %v4508 = vadd.f32 %v4408, %v4507
      %v4509 = vpop.f32.mrb[0].mxu0
      %4510 = vmatprep.mubr.bf16.mxu0 0
      %4511 = vmatmul.mubr.bf16.gmra.mrb[0].mxu0 %v4438
      %v4512 = vpop.f32.mrb[0].mxu0
      %v4513 = vadd.f32 %v4408, %v4512
      %v4514 = vpop.f32.mrb[0].mxu0
      %v4515 = vpop.f32.mrb[0].mxu0
      %v4516 = vadd.f32 %v4408, %v4515
      %v4517 = vpop.f32.mrb[0].mxu0
      %4518 = vmatprep.mubr.bf16.mxu0 0
      %4519 = vmatmul.mubr.bf16.gmra.mrb[0].mxu0 %v4441
      %v4520 = vpop.f32.mrb[0].mxu0
      %v4521 = vadd.f32 %v4408, %v4520
      %v4522 = vpop.f32.mrb[0].mxu0
      %v4523 = vpop.f32.mrb[0].mxu0
      %v4524 = vadd.f32 %v4408, %v4523
      %v4525 = vpop.f32.mrb[0].mxu0
      %4526 = vmatprep.mubr.bf16.mxu0 0
      %4527 = vmatmul.mubr.bf16.gmra.mrb[0].mxu0 %v4444
      %v4528 = vpop.f32.mrb[0].mxu0
      %v4529 = vadd.f32 %v4408, %v4528
      %v4530 = vpop.f32.mrb[0].mxu0
      %v4531 = vpop.f32.mrb[0].mxu0
      %v4532 = vadd.f32 %v4408, %v4531
      %v4533 = vpop.f32.mrb[0].mxu0
      %4534 = vmatprep.mubr.bf16.mxu0 0
      %4535 = vmatmul.mubr.bf16.gmra.mrb[0].mxu0 %v4447
      %v4536 = vpop.f32.mrb[0].mxu0
      %v4537 = vadd.f32 %v4408, %v4536
      %v4538 = vpop.f32.mrb[0].mxu0
      %v4539 = vpop.f32.mrb[0].mxu0
      %v4540 = vadd.f32 %v4408, %v4539
      %v4541 = vpop.f32.mrb[0].mxu0
      %4542 = vmatprep.mubr.bf16.mxu0 0
      %4543 = vmatmul.mubr.bf16.gmra.mrb[0].mxu0 %v4450
      %v4544 = vpop.f32.mrb[0].mxu0
      %v4545 = vadd.f32 %v4408, %v4544
      %v4546 = vpop.f32.mrb[0].mxu0
      %v4547 = vpop.f32.mrb[0].mxu0
      %v4548 = vadd.f32 %v4408, %v4547
      %v4549 = vpop.f32.mrb[0].mxu0
      %4550 = vmatprep.mubr.bf16.mxu0 0
      %4551 = vmatmul.mubr.bf16.gmra.mrb[0].mxu0 %v4453
      %v4552 = vpop.f32.mrb[0].mxu0
      %v4553 = vadd.f32 %v4408, %v4552
      %v4554 = vpop.f32.mrb[0].mxu0
      %v4555 = vpop.f32.mrb[0].mxu0
      %v4556 = vadd.f32 %v4408, %v4555
      %v4557 = vpop.f32.mrb[0].mxu0
      %4558 = vmatprep.mubr.bf16.mxu0 0
      %4559 = vmatmul.mubr.bf16.gmra.mrb[0].mxu0 %v4456
      %v4560 = vpop.f32.mrb[0].mxu0
      %v4561 = vadd.f32 %v4408, %v4560
      %v4562 = vpop.f32.mrb[0].mxu0
      %v4563 = vpop.f32.mrb[0].mxu0
      %v4564 = vadd.f32 %v4408, %v4563
      %v4565 = vpop.f32.mrb[0].mxu0
      %4566 = vmatprep.mubr.bf16.mxu0 0
      %4567 = vmatmul.mubr.bf16.gmra.mrb[0].mxu0 %v4459
      %v4568 = vpop.f32.mrb[0].mxu0
      %v4569 = vadd.f32 %v4408, %v4568
      %v4570 = vpop.f32.mrb[0].mxu0
      %v4571 = vpop.f32.mrb[0].mxu0
      %v4572 = vadd.f32 %v4408, %v4571
      %v4573 = vpop.f32.mrb[0].mxu0
      %4574 = vmatprep.mubr.bf16.mxu0 0
      %4575 = vmatmul.mubr.bf16.gmra.mrb[0].mxu0 %v4462
      %v4576 = vpop.f32.mrb[0].mxu0
      %v4577 = vadd.f32 %v4408, %v4576
      %v4578 = vpop.f32.mrb[0].mxu0
      %v4579 = vpop.f32.mrb[0].mxu0
      %v4580 = vadd.f32 %v4408, %v4579
      %v4581 = vpop.f32.mrb[0].mxu0
      %4582 = vmatprep.mubr.bf16.mxu0 0
      %4583 = vmatmul.mubr.bf16.gmra.mrb[0].mxu0 %v4465
      %v4584 = vpop.f32.mrb[0].mxu0
      %v4585 = vadd.f32 %v4408, %v4584
      %v4586 = vpop.f32.mrb[0].mxu0
      %v4587 = vpop.f32.mrb[0].mxu0
      %v4588 = vadd.f32 %v4408, %v4587
      %v4589 = vpop.f32.mrb[0].mxu0
      %4590 = vmatprep.mubr.bf16.mxu0 0
      %4591 = vmatmul.mubr.bf16.gmra.mrb[0].mxu0 %v4468
      %v4592 = vpop.f32.mrb[0].mxu0
      %v4593 = vadd.f32 %v4408, %v4592
      %v4594 = vpop.f32.mrb[0].mxu0
      %v4595 = vpop.f32.mrb[0].mxu0
      %v4596 = vpop.f32.mrb[0].mxu0
      %4597 = vdwg.mxu0
      %v4598 = vmax.f32 %v4505, 0.0
      %v4599 = vmax.f32 %v4508, 0.0
      %v4600 = vmax.f32 %v4513, 0.0
      %v4601 = vmax.f32 %v4516, 0.0
      %v4602 = vmax.f32 %v4521, 0.0
      %v4603 = vmax.f32 %v4524, 0.0
      %v4604 = vmax.f32 %v4529, 0.0
      %v4605 = vmax.f32 %v4532, 0.0
      %v4606 = vmax.f32 %v4537, 0.0
      %v4607 = vmax.f32 %v4540, 0.0
      %v4608 = vmax.f32 %v4545, 0.0
      %v4609 = vmax.f32 %v4548, 0.0
      %v4610 = vmax.f32 %v4553, 0.0
      %v4611 = vmax.f32 %v4556, 0.0
      %v4612 = vmax.f32 %v4561, 0.0
      %v4613 = vmax.f32 %v4564, 0.0
      %v4614 = vmax.f32 %v4569, 0.0
      %v4615 = vmax.f32 %v4572, 0.0
      %v4616 = vmax.f32 %v4577, 0.0
      %v4617 = vmax.f32 %v4580, 0.0
      %v4618 = vmax.f32 %v4585, 0.0
      %v4619 = vmax.f32 %v4588, 0.0
      %v4620 = vmax.f32 %v4593, 0.0
      %v4621 = vpack.c.bf16 %v4599, %v4598
      %v4622 = vpack.c.bf16 %v4601, %v4600
      %v4623 = vpack.c.bf16 %v4603, %v4602
      %v4624 = vpack.c.bf16 %v4605, %v4604
      %v4625 = vpack.c.bf16 %v4607, %v4606
      %v4626 = vpack.c.bf16 %v4609, %v4608
      %v4627 = vpack.c.bf16 %v4611, %v4610
      %v4628 = vpack.c.bf16 %v4613, %v4612
      %v4629 = vpack.c.bf16 %v4615, %v4614
      %v4630 = vpack.c.bf16 %v4617, %v4616
      %v4631 = vpack.c.bf16 %v4619, %v4618
      %v4632 = vpack.c.bf16 %v4620, %v4620
      %v4633 = vld [vmem:[%s5] sm:$0xf]
      %v4634 = vld [vmem:[%s5 + $0x4] sm:$0xf]
      %v4635 = vld [vmem:[%s5 + $0x8] sm:$0xf]
      %v4636 = vld [vmem:[%s5 + $0xc] sm:$0xf]
      %v4637 = vld [vmem:[%s6] sm:$0x1]
      %v4639 = vlaneseq
      %v4640 = vshrl.u32 %v4639, 7
      %v4641 = vsub.s32 0, %v4640
      %v4642 = vrot.slane %v4637, %v4641
      %v4648 = vunpack.c.l.b16 %v4633
      %v4649 = vunpack.c.l.b16 %v4634
      %v4650 = vunpack.c.l.b16 %v4635
      %v4651 = vunpack.c.l.b16 %v4636
      %v4652 = vpack.c.b16 %v4649, %v4648
      %v4653 = vpack.c.b16 %v4651, %v4650
      %v4657 = vsel %vm2262, %v4621, 0
      %v4660 = vsel %vm2262, %v4622, 0
      %v4663 = vsel %vm2262, %v4623, 0
      %v4666 = vsel %vm2262, %v4624, 0
      %v4669 = vsel %vm2262, %v4625, 0
      %v4672 = vsel %vm2262, %v4626, 0
      %v4675 = vsel %vm2262, %v4627, 0
      %v4678 = vsel %vm2262, %v4628, 0
      %v4681 = vsel %vm2262, %v4629, 0
      %v4684 = vsel %vm2262, %v4630, 0
      %v4687 = vsel %vm2262, %v4631, 0
      %v4690 = vsel %vm2262, %v4632, 0
      %4692 = vmatprep.subr.bf16.mxu0 0
      %4693 = vmatpush1.bf16.msra.mxu0 %v4652
      %4694 = vmatprep.subr.bf16.mxu0 0
      %4695 = vmatpush1.bf16.msra.mxu0 %v4653
      %4696 = vmatprep.subr.bf16.mxu0 0
      %4697 = vmatpush1.bf16.msra.mxu0 0
      %4698 = vmatprep.subr.bf16.mxu0 0
      %4699 = vmatpush1.bf16.msra.mxu0 0
      %4700 = vmatprep.subr.bf16.mxu0 0
      %4701 = vmatpush1.bf16.msra.mxu0 0
      %4702 = vmatprep.subr.bf16.mxu0 0
      %4703 = vmatpush1.bf16.msra.mxu0 0
      %4704 = vmatprep.subr.bf16.mxu0 0
      %4705 = vmatpush1.bf16.msra.mxu0 0
      %4706 = vmatprep.subr.bf16.mxu0 0
      %4707 = vmatpush1.bf16.msra.mxu0 0
      %4708 = vmatprep.subr.bf16.mxu0 0
      %4709 = vmatpush1.bf16.msra.mxu0 0
      %4710 = vmatprep.subr.bf16.mxu0 0
      %4711 = vmatpush1.bf16.msra.mxu0 0
      %4712 = vmatprep.subr.bf16.mxu0 0
      %4713 = vmatpush1.bf16.msra.mxu0 0
      %4714 = vmatprep.subr.bf16.mxu0 0
      %4715 = vmatpush1.bf16.msra.mxu0 0
      %4716 = vmatprep.subr.bf16.mxu0 0
      %4717 = vmatpush1.bf16.msra.mxu0 0
      %4718 = vmatprep.subr.bf16.mxu0 0
      %4719 = vmatpush1.bf16.msra.mxu0 0
      %4720 = vmatprep.subr.bf16.mxu0 0
      %4721 = vmatpush1.bf16.msra.mxu0 0
      %4722 = vmatprep.subr.bf16.mxu0 0
      %4723 = vmatpush1.bf16.msra.mxu0 0
      %4724 = vmatprep.mubr.bf16.mxu0 0
      %4725 = vmatmul.mubr.bf16.gmra.mrb[0].mxu0 %v4657
      %v4726 = vpop.f32.mrb[0].mxu0
      %v4727 = vadd.f32 %v4642, %v4726
      %v4728 = vpop.f32.mrb[0].mxu0
      %v4729 = vpop.f32.mrb[0].mxu0
      %v4730 = vadd.f32 %v4642, %v4729
      %v4731 = vpop.f32.mrb[0].mxu0
      %4732 = vmatprep.mubr.bf16.mxu0 0
      %4733 = vmatmul.mubr.bf16.gmra.mrb[0].mxu0 %v4660
      %v4734 = vpop.f32.mrb[0].mxu0
      %v4735 = vadd.f32 %v4642, %v4734
      %v4736 = vpop.f32.mrb[0].mxu0
      %v4737 = vpop.f32.mrb[0].mxu0
      %v4738 = vadd.f32 %v4642, %v4737
      %v4739 = vpop.f32.mrb[0].mxu0
      %4740 = vmatprep.mubr.bf16.mxu0 0
      %4741 = vmatmul.mubr.bf16.gmra.mrb[0].mxu0 %v4663
      %v4742 = vpop.f32.mrb[0].mxu0
      %v4743 = vadd.f32 %v4642, %v4742
      %v4744 = vpop.f32.mrb[0].mxu0
      %v4745 = vpop.f32.mrb[0].mxu0
      %v4746 = vadd.f32 %v4642, %v4745
      %v4747 = vpop.f32.mrb[0].mxu0
      %4748 = vmatprep.mubr.bf16.mxu0 0
      %4749 = vmatmul.mubr.bf16.gmra.mrb[0].mxu0 %v4666
      %v4750 = vpop.f32.mrb[0].mxu0
      %v4751 = vadd.f32 %v4642, %v4750
      %v4752 = vpop.f32.mrb[0].mxu0
      %v4753 = vpop.f32.mrb[0].mxu0
      %v4754 = vadd.f32 %v4642, %v4753
      %v4755 = vpop.f32.mrb[0].mxu0
      %4756 = vmatprep.mubr.bf16.mxu0 0
      %4757 = vmatmul.mubr.bf16.gmra.mrb[0].mxu0 %v4669
      %v4758 = vpop.f32.mrb[0].mxu0
      %v4759 = vadd.f32 %v4642, %v4758
      %v4760 = vpop.f32.mrb[0].mxu0
      %v4761 = vpop.f32.mrb[0].mxu0
      %v4762 = vadd.f32 %v4642, %v4761
      %v4763 = vpop.f32.mrb[0].mxu0
      %4764 = vmatprep.mubr.bf16.mxu0 0
      %4765 = vmatmul.mubr.bf16.gmra.mrb[0].mxu0 %v4672
      %v4766 = vpop.f32.mrb[0].mxu0
      %v4767 = vadd.f32 %v4642, %v4766
      %v4768 = vpop.f32.mrb[0].mxu0
      %v4769 = vpop.f32.mrb[0].mxu0
      %v4770 = vadd.f32 %v4642, %v4769
      %v4771 = vpop.f32.mrb[0].mxu0
      %4772 = vmatprep.mubr.bf16.mxu0 0
      %4773 = vmatmul.mubr.bf16.gmra.mrb[0].mxu0 %v4675
      %v4774 = vpop.f32.mrb[0].mxu0
      %v4775 = vadd.f32 %v4642, %v4774
      %v4776 = vpop.f32.mrb[0].mxu0
      %v4777 = vpop.f32.mrb[0].mxu0
      %v4778 = vadd.f32 %v4642, %v4777
      %v4779 = vpop.f32.mrb[0].mxu0
      %4780 = vmatprep.mubr.bf16.mxu0 0
      %4781 = vmatmul.mubr.bf16.gmra.mrb[0].mxu0 %v4678
      %v4782 = vpop.f32.mrb[0].mxu0
      %v4783 = vadd.f32 %v4642, %v4782
      %v4784 = vpop.f32.mrb[0].mxu0
      %v4785 = vpop.f32.mrb[0].mxu0
      %v4786 = vadd.f32 %v4642, %v4785
      %v4787 = vpop.f32.mrb[0].mxu0
      %4788 = vmatprep.mubr.bf16.mxu0 0
      %4789 = vmatmul.mubr.bf16.gmra.mrb[0].mxu0 %v4681
      %v4790 = vpop.f32.mrb[0].mxu0
      %v4791 = vadd.f32 %v4642, %v4790
      %v4792 = vpop.f32.mrb[0].mxu0
      %v4793 = vpop.f32.mrb[0].mxu0
      %v4794 = vadd.f32 %v4642, %v4793
      %v4795 = vpop.f32.mrb[0].mxu0
      %4796 = vmatprep.mubr.bf16.mxu0 0
      %4797 = vmatmul.mubr.bf16.gmra.mrb[0].mxu0 %v4684
      %v4798 = vpop.f32.mrb[0].mxu0
      %v4799 = vadd.f32 %v4642, %v4798
      %v4800 = vpop.f32.mrb[0].mxu0
      %v4801 = vpop.f32.mrb[0].mxu0
      %v4802 = vadd.f32 %v4642, %v4801
      %v4803 = vpop.f32.mrb[0].mxu0
      %4804 = vmatprep.mubr.bf16.mxu0 0
      %4805 = vmatmul.mubr.bf16.gmra.mrb[0].mxu0 %v4687
      %v4806 = vpop.f32.mrb[0].mxu0
      %v4807 = vadd.f32 %v4642, %v4806
      %v4808 = vpop.f32.mrb[0].mxu0
      %v4809 = vpop.f32.mrb[0].mxu0
      %v4810 = vadd.f32 %v4642, %v4809
      %v4811 = vpop.f32.mrb[0].mxu0
      %4812 = vmatprep.mubr.bf16.mxu0 0
      %4813 = vmatmul.mubr.bf16.gmra.mrb[0].mxu0 %v4690
      %v4814 = vpop.f32.mrb[0].mxu0
      %v4815 = vadd.f32 %v4642, %v4814
      %v4816 = vpop.f32.mrb[0].mxu0
      %v4817 = vpop.f32.mrb[0].mxu0
      %v4818 = vpop.f32.mrb[0].mxu0
      %4819 = vdwg.mxu0
      %v4820 = vadd.f32 %v4360, %v4727
      %v4821 = vadd.f32 %v4361, %v4730
      %v4822 = vadd.f32 %v4362, %v4735
      %v4823 = vadd.f32 %v4363, %v4738
      %v4824 = vadd.f32 %v4364, %v4743
      %v4825 = vadd.f32 %v4365, %v4746
      %v4826 = vadd.f32 %v4366, %v4751
      %v4827 = vadd.f32 %v4367, %v4754
      %v4828 = vadd.f32 %v4368, %v4759
      %v4829 = vadd.f32 %v4369, %v4762
      %v4830 = vadd.f32 %v4370, %v4767
      %v4831 = vadd.f32 %v4371, %v4770
      %v4832 = vadd.f32 %v4372, %v4775
      %v4833 = vadd.f32 %v4373, %v4778
      %v4834 = vadd.f32 %v4374, %v4783
      %v4835 = vadd.f32 %v4375, %v4786
      %v4836 = vadd.f32 %v4376, %v4791
      %v4837 = vadd.f32 %v4377, %v4794
      %v4838 = vadd.f32 %v4378, %v4799
      %v4839 = vadd.f32 %v4379, %v4802
      %v4840 = vadd.f32 %v4380, %v4807
      %v4841 = vadd.f32 %v4381, %v4810
      %v4842 = vadd.f32 %v4382, %v4815
      %4843 = vst.msk [vmem:[#allocation2] sm:$0xff] %vm3220, %v4820
      %4844 = vst.msk [vmem:[#allocation2 + $0x8] sm:$0xff] %vm3220, %v4821
      %4845 = vst.msk [vmem:[#allocation2 + $0x10] sm:$0xff] %vm3220, %v4822
      %4846 = vst.msk [vmem:[#allocation2 + $0x18] sm:$0xff] %vm3220, %v4823
      %4847 = vst.msk [vmem:[#allocation2 + $0x20] sm:$0xff] %vm3220, %v4824
      %4848 = vst.msk [vmem:[#allocation2 + $0x28] sm:$0xff] %vm3220, %v4825
      %4849 = vst.msk [vmem:[#allocation2 + $0x30] sm:$0xff] %vm3220, %v4826
      %4850 = vst.msk [vmem:[#allocation2 + $0x38] sm:$0xff] %vm3220, %v4827
      %4851 = vst.msk [vmem:[#allocation2 + $0x40] sm:$0xff] %vm3220, %v4828
      %4852 = vst.msk [vmem:[#allocation2 + $0x48] sm:$0xff] %vm3220, %v4829
      %4853 = vst.msk [vmem:[#allocation2 + $0x50] sm:$0xff] %vm3220, %v4830
      %4854 = vst.msk [vmem:[#allocation2 + $0x58] sm:$0xff] %vm3220, %v4831
      %4855 = vst.msk [vmem:[#allocation2 + $0x60] sm:$0xff] %vm3220, %v4832
      %4856 = vst.msk [vmem:[#allocation2 + $0x68] sm:$0xff] %vm3220, %v4833
      %4857 = vst.msk [vmem:[#allocation2 + $0x70] sm:$0xff] %vm3220, %v4834
      %4858 = vst.msk [vmem:[#allocation2 + $0x78] sm:$0xff] %vm3220, %v4835
      %4859 = vst.msk [vmem:[#allocation2 + $0x80] sm:$0xff] %vm3220, %v4836
      %4860 = vst.msk [vmem:[#allocation2 + $0x88] sm:$0xff] %vm3220, %v4837
      %4861 = vst.msk [vmem:[#allocation2 + $0x90] sm:$0xff] %vm3220, %v4838
      %4862 = vst.msk [vmem:[#allocation2 + $0x98] sm:$0xff] %vm3220, %v4839
      %4863 = vst.msk [vmem:[#allocation2 + $0xa0] sm:$0xff] %vm3220, %v4840
      %4864 = vst.msk [vmem:[#allocation2 + $0xa8] sm:$0xff] %vm3220, %v4841
      %4865 = vst.msk [vmem:[#allocation2 + $0xb0] sm:$0xf] %vm4358, %v4842
      %v4866 = vld [vmem:[#allocation2] sm:$0xff]
      %v4867 = vld [vmem:[#allocation2 + $0x8] sm:$0xff]
      %v4868 = vld [vmem:[#allocation2 + $0x10] sm:$0xff]
      %v4869 = vld [vmem:[#allocation2 + $0x18] sm:$0xff]
      %v4870 = vld [vmem:[#allocation2 + $0x20] sm:$0xff]
      %v4871 = vld [vmem:[#allocation2 + $0x28] sm:$0xff]
      %v4872 = vld [vmem:[#allocation2 + $0x30] sm:$0xff]
      %v4873 = vld [vmem:[#allocation2 + $0x38] sm:$0xff]
      %v4874 = vld [vmem:[#allocation2 + $0x40] sm:$0xff]
      %v4875 = vld [vmem:[#allocation2 + $0x48] sm:$0xff]
      %v4876 = vld [vmem:[#allocation2 + $0x50] sm:$0xff]
      %v4877 = vld [vmem:[#allocation2 + $0x58] sm:$0xff]
      %v4878 = vld [vmem:[#allocation2 + $0x60] sm:$0xff]
      %v4879 = vld [vmem:[#allocation2 + $0x68] sm:$0xff]
      %v4880 = vld [vmem:[#allocation2 + $0x70] sm:$0xff]
      %v4881 = vld [vmem:[#allocation2 + $0x78] sm:$0xff]
      %v4882 = vld [vmem:[#allocation2 + $0x80] sm:$0xff]
      %v4883 = vld [vmem:[#allocation2 + $0x88] sm:$0xff]
      %v4884 = vld [vmem:[#allocation2 + $0x90] sm:$0xff]
      %v4885 = vld [vmem:[#allocation2 + $0x98] sm:$0xff]
      %v4886 = vld [vmem:[#allocation2 + $0xa0] sm:$0xff]
      %v4887 = vld [vmem:[#allocation2 + $0xa8] sm:$0xff]
      %v4888 = vld [vmem:[#allocation2 + $0xb0] sm:$0xf]
      %v4889 = vpack.c.bf16 %v4867, %v4866
      %v4890 = vpack.c.bf16 %v4869, %v4868
      %v4891 = vpack.c.bf16 %v4871, %v4870
      %v4892 = vpack.c.bf16 %v4873, %v4872
      %v4893 = vpack.c.bf16 %v4875, %v4874
      %v4894 = vpack.c.bf16 %v4877, %v4876
      %v4895 = vpack.c.bf16 %v4879, %v4878
      %v4896 = vpack.c.bf16 %v4881, %v4880
      %v4897 = vpack.c.bf16 %v4883, %v4882
      %v4898 = vpack.c.bf16 %v4885, %v4884
      %v4899 = vpack.c.bf16 %v4887, %v4886
      %v4900 = vpack.c.bf16 %v4888, %v4888
      %s4901 = scalar_lea.vmem %s3, 32
      %v4902 = vld [vmem:[%s4901] sm:$0xf]
      %v4903 = vld [vmem:[%s4901 + $0x4] sm:$0xf]
      %v4904 = vld [vmem:[%s4901 + $0x8] sm:$0xf]
      %v4905 = vld [vmem:[%s4901 + $0xc] sm:$0xf]
      %v4906 = vld [vmem:[%s4901 + $0x10] sm:$0xf]
      %v4907 = vld [vmem:[%s4901 + $0x14] sm:$0xf]
      %v4908 = vld [vmem:[%s4901 + $0x18] sm:$0xf]
      %v4909 = vld [vmem:[%s4901 + $0x1c] sm:$0xf]
      %s4910 = scalar_lea.vmem %s4, 1
      %v4911 = vld [vmem:[%s4910] sm:$0x1]
      %v4913 = vlaneseq
      %v4914 = vshrl.u32 %v4913, 7
      %v4915 = vsub.s32 0, %v4914
      %v4916 = vrot.slane %v4911, %v4915
      %v4926 = vunpack.c.l.b16 %v4902
      %v4927 = vunpack.c.l.b16 %v4903
      %v4928 = vunpack.c.l.b16 %v4904
      %v4929 = vunpack.c.l.b16 %v4905
      %v4930 = vunpack.c.l.b16 %v4906
      %v4931 = vunpack.c.l.b16 %v4907
      %v4932 = vunpack.c.l.b16 %v4908
      %v4933 = vunpack.c.l.b16 %v4909
      %v4934 = vpack.c.b16 %v4927, %v4926
      %v4935 = vpack.c.b16 %v4929, %v4928
      %v4936 = vpack.c.b16 %v4931, %v4930
      %v4937 = vpack.c.b16 %v4933, %v4932
      %v4943 = vsel %vm3220, %v4889, 0
      %v4946 = vsel %vm3220, %v4890, 0
      %v4949 = vsel %vm3220, %v4891, 0
      %v4952 = vsel %vm3220, %v4892, 0
      %v4955 = vsel %vm3220, %v4893, 0
      %v4958 = vsel %vm3220, %v4894, 0
      %v4961 = vsel %vm3220, %v4895, 0
      %v4964 = vsel %vm3220, %v4896, 0
      %v4967 = vsel %vm3220, %v4897, 0
      %v4970 = vsel %vm3220, %v4898, 0
      %v4973 = vsel %vm3220, %v4899, 0
      %v4976 = vsel %vm3220, %v4900, 0
      %4978 = vmatprep.subr.bf16.mxu0 0
      %4979 = vmatpush1.bf16.msra.mxu0 %v4934
      %4980 = vmatprep.subr.bf16.mxu0 0
      %4981 = vmatpush1.bf16.msra.mxu0 %v4935
      %4982 = vmatprep.subr.bf16.mxu0 0
      %4983 = vmatpush1.bf16.msra.mxu0 %v4936
      %4984 = vmatprep.subr.bf16.mxu0 0
      %4985 = vmatpush1.bf16.msra.mxu0 %v4937
      %4986 = vmatprep.subr.bf16.mxu0 0
      %4987 = vmatpush1.bf16.msra.mxu0 0
      %4988 = vmatprep.subr.bf16.mxu0 0
      %4989 = vmatpush1.bf16.msra.mxu0 0
      %4990 = vmatprep.subr.bf16.mxu0 0
      %4991 = vmatpush1.bf16.msra.mxu0 0
      %4992 = vmatprep.subr.bf16.mxu0 0
      %4993 = vmatpush1.bf16.msra.mxu0 0
      %4994 = vmatprep.subr.bf16.mxu0 0
      %4995 = vmatpush1.bf16.msra.mxu0 0
      %4996 = vmatprep.subr.bf16.mxu0 0
      %4997 = vmatpush1.bf16.msra.mxu0 0
      %4998 = vmatprep.subr.bf16.mxu0 0
      %4999 = vmatpush1.bf16.msra.mxu0 0
      %5000 = vmatprep.subr.bf16.mxu0 0
      %5001 = vmatpush1.bf16.msra.mxu0 0
      %5002 = vmatprep.subr.bf16.mxu0 0
      %5003 = vmatpush1.bf16.msra.mxu0 0
      %5004 = vmatprep.subr.bf16.mxu0 0
      %5005 = vmatpush1.bf16.msra.mxu0 0
      %5006 = vmatprep.subr.bf16.mxu0 0
      %5007 = vmatpush1.bf16.msra.mxu0 0
      %5008 = vmatprep.subr.bf16.mxu0 0
      %5009 = vmatpush1.bf16.msra.mxu0 0
      %5010 = vmatprep.mubr.bf16.mxu0 0
      %5011 = vmatmul.mubr.bf16.gmra.mrb[0].mxu0 %v4943
      %v5012 = vpop.f32.mrb[0].mxu0
      %v5013 = vadd.f32 %v4916, %v5012
      %v5014 = vpop.f32.mrb[0].mxu0
      %v5015 = vpop.f32.mrb[0].mxu0
      %v5016 = vadd.f32 %v4916, %v5015
      %v5017 = vpop.f32.mrb[0].mxu0
      %5018 = vmatprep.mubr.bf16.mxu0 0
      %5019 = vmatmul.mubr.bf16.gmra.mrb[0].mxu0 %v4946
      %v5020 = vpop.f32.mrb[0].mxu0
      %v5021 = vadd.f32 %v4916, %v5020
      %v5022 = vpop.f32.mrb[0].mxu0
      %v5023 = vpop.f32.mrb[0].mxu0
      %v5024 = vadd.f32 %v4916, %v5023
      %v5025 = vpop.f32.mrb[0].mxu0
      %5026 = vmatprep.mubr.bf16.mxu0 0
      %5027 = vmatmul.mubr.bf16.gmra.mrb[0].mxu0 %v4949
      %v5028 = vpop.f32.mrb[0].mxu0
      %v5029 = vadd.f32 %v4916, %v5028
      %v5030 = vpop.f32.mrb[0].mxu0
      %v5031 = vpop.f32.mrb[0].mxu0
      %v5032 = vadd.f32 %v4916, %v5031
      %v5033 = vpop.f32.mrb[0].mxu0
      %5034 = vmatprep.mubr.bf16.mxu0 0
      %5035 = vmatmul.mubr.bf16.gmra.mrb[0].mxu0 %v4952
      %v5036 = vpop.f32.mrb[0].mxu0
      %v5037 = vadd.f32 %v4916, %v5036
      %v5038 = vpop.f32.mrb[0].mxu0
      %v5039 = vpop.f32.mrb[0].mxu0
      %v5040 = vadd.f32 %v4916, %v5039
      %v5041 = vpop.f32.mrb[0].mxu0
      %5042 = vmatprep.mubr.bf16.mxu0 0
      %5043 = vmatmul.mubr.bf16.gmra.mrb[0].mxu0 %v4955
      %v5044 = vpop.f32.mrb[0].mxu0
      %v5045 = vadd.f32 %v4916, %v5044
      %v5046 = vpop.f32.mrb[0].mxu0
      %v5047 = vpop.f32.mrb[0].mxu0
      %v5048 = vadd.f32 %v4916, %v5047
      %v5049 = vpop.f32.mrb[0].mxu0
      %5050 = vmatprep.mubr.bf16.mxu0 0
      %5051 = vmatmul.mubr.bf16.gmra.mrb[0].mxu0 %v4958
      %v5052 = vpop.f32.mrb[0].mxu0
      %v5053 = vadd.f32 %v4916, %v5052
      %v5054 = vpop.f32.mrb[0].mxu0
      %v5055 = vpop.f32.mrb[0].mxu0
      %v5056 = vadd.f32 %v4916, %v5055
      %v5057 = vpop.f32.mrb[0].mxu0
      %5058 = vmatprep.mubr.bf16.mxu0 0
      %5059 = vmatmul.mubr.bf16.gmra.mrb[0].mxu0 %v4961
      %v5060 = vpop.f32.mrb[0].mxu0
      %v5061 = vadd.f32 %v4916, %v5060
      %v5062 = vpop.f32.mrb[0].mxu0
      %v5063 = vpop.f32.mrb[0].mxu0
      %v5064 = vadd.f32 %v4916, %v5063
      %v5065 = vpop.f32.mrb[0].mxu0
      %5066 = vmatprep.mubr.bf16.mxu0 0
      %5067 = vmatmul.mubr.bf16.gmra.mrb[0].mxu0 %v4964
      %v5068 = vpop.f32.mrb[0].mxu0
      %v5069 = vadd.f32 %v4916, %v5068
      %v5070 = vpop.f32.mrb[0].mxu0
      %v5071 = vpop.f32.mrb[0].mxu0
      %v5072 = vadd.f32 %v4916, %v5071
      %v5073 = vpop.f32.mrb[0].mxu0
      %5074 = vmatprep.mubr.bf16.mxu0 0
      %5075 = vmatmul.mubr.bf16.gmra.mrb[0].mxu0 %v4967
      %v5076 = vpop.f32.mrb[0].mxu0
      %v5077 = vadd.f32 %v4916, %v5076
      %v5078 = vpop.f32.mrb[0].mxu0
      %v5079 = vpop.f32.mrb[0].mxu0
      %v5080 = vadd.f32 %v4916, %v5079
      %v5081 = vpop.f32.mrb[0].mxu0
      %5082 = vmatprep.mubr.bf16.mxu0 0
      %5083 = vmatmul.mubr.bf16.gmra.mrb[0].mxu0 %v4970
      %v5084 = vpop.f32.mrb[0].mxu0
      %v5085 = vadd.f32 %v4916, %v5084
      %v5086 = vpop.f32.mrb[0].mxu0
      %v5087 = vpop.f32.mrb[0].mxu0
      %v5088 = vadd.f32 %v4916, %v5087
      %v5089 = vpop.f32.mrb[0].mxu0
      %5090 = vmatprep.mubr.bf16.mxu0 0
      %5091 = vmatmul.mubr.bf16.gmra.mrb[0].mxu0 %v4973
      %v5092 = vpop.f32.mrb[0].mxu0
      %v5093 = vadd.f32 %v4916, %v5092
      %v5094 = vpop.f32.mrb[0].mxu0
      %v5095 = vpop.f32.mrb[0].mxu0
      %v5096 = vadd.f32 %v4916, %v5095
      %v5097 = vpop.f32.mrb[0].mxu0
      %5098 = vmatprep.mubr.bf16.mxu0 0
      %5099 = vmatmul.mubr.bf16.gmra.mrb[0].mxu0 %v4976
      %v5100 = vpop.f32.mrb[0].mxu0
      %v5101 = vadd.f32 %v4916, %v5100
      %v5102 = vpop.f32.mrb[0].mxu0
      %v5103 = vpop.f32.mrb[0].mxu0
      %v5104 = vpop.f32.mrb[0].mxu0
      %5105 = vdwg.mxu0
      %v5106 = vmax.f32 %v5013, 0.0
      %v5107 = vmax.f32 %v5016, 0.0
      %v5108 = vmax.f32 %v5021, 0.0
      %v5109 = vmax.f32 %v5024, 0.0
      %v5110 = vmax.f32 %v5029, 0.0
      %v5111 = vmax.f32 %v5032, 0.0
      %v5112 = vmax.f32 %v5037, 0.0
      %v5113 = vmax.f32 %v5040, 0.0
      %v5114 = vmax.f32 %v5045, 0.0
      %v5115 = vmax.f32 %v5048, 0.0
      %v5116 = vmax.f32 %v5053, 0.0
      %v5117 = vmax.f32 %v5056, 0.0
      %v5118 = vmax.f32 %v5061, 0.0
      %v5119 = vmax.f32 %v5064, 0.0
      %v5120 = vmax.f32 %v5069, 0.0
      %v5121 = vmax.f32 %v5072, 0.0
      %v5122 = vmax.f32 %v5077, 0.0
      %v5123 = vmax.f32 %v5080, 0.0
      %v5124 = vmax.f32 %v5085, 0.0
      %v5125 = vmax.f32 %v5088, 0.0
      %v5126 = vmax.f32 %v5093, 0.0
      %v5127 = vmax.f32 %v5096, 0.0
      %v5128 = vmax.f32 %v5101, 0.0
      %v5129 = vpack.c.bf16 %v5107, %v5106
      %v5130 = vpack.c.bf16 %v5109, %v5108
      %v5131 = vpack.c.bf16 %v5111, %v5110
      %v5132 = vpack.c.bf16 %v5113, %v5112
      %v5133 = vpack.c.bf16 %v5115, %v5114
      %v5134 = vpack.c.bf16 %v5117, %v5116
      %v5135 = vpack.c.bf16 %v5119, %v5118
      %v5136 = vpack.c.bf16 %v5121, %v5120
      %v5137 = vpack.c.bf16 %v5123, %v5122
      %v5138 = vpack.c.bf16 %v5125, %v5124
      %v5139 = vpack.c.bf16 %v5127, %v5126
      %v5140 = vpack.c.bf16 %v5128, %v5128
      %s5141 = scalar_lea.vmem %s5, 16
      %v5142 = vld [vmem:[%s5141] sm:$0xf]
      %v5143 = vld [vmem:[%s5141 + $0x4] sm:$0xf]
      %v5144 = vld [vmem:[%s5141 + $0x8] sm:$0xf]
      %v5145 = vld [vmem:[%s5141 + $0xc] sm:$0xf]
      %s5146 = scalar_lea.vmem %s6, 1
      %v5147 = vld [vmem:[%s5146] sm:$0x1]
      %v5149 = vlaneseq
      %v5150 = vshrl.u32 %v5149, 7
      %v5151 = vsub.s32 0, %v5150
      %v5152 = vrot.slane %v5147, %v5151
      %v5158 = vunpack.c.l.b16 %v5142
      %v5159 = vunpack.c.l.b16 %v5143
      %v5160 = vunpack.c.l.b16 %v5144
      %v5161 = vunpack.c.l.b16 %v5145
      %v5162 = vpack.c.b16 %v5159, %v5158
      %v5163 = vpack.c.b16 %v5161, %v5160
      %v5167 = vsel %vm2262, %v5129, 0
      %v5170 = vsel %vm2262, %v5130, 0
      %v5173 = vsel %vm2262, %v5131, 0
      %v5176 = vsel %vm2262, %v5132, 0
      %v5179 = vsel %vm2262, %v5133, 0
      %v5182 = vsel %vm2262, %v5134, 0
      %v5185 = vsel %vm2262, %v5135, 0
      %v5188 = vsel %vm2262, %v5136, 0
      %v5191 = vsel %vm2262, %v5137, 0
      %v5194 = vsel %vm2262, %v5138, 0
      %v5197 = vsel %vm2262, %v5139, 0
      %v5200 = vsel %vm2262, %v5140, 0
      %5202 = vmatprep.subr.bf16.mxu0 0
      %5203 = vmatpush1.bf16.msra.mxu0 %v5162
      %5204 = vmatprep.subr.bf16.mxu0 0
      %5205 = vmatpush1.bf16.msra.mxu0 %v5163
      %5206 = vmatprep.subr.bf16.mxu0 0
      %5207 = vmatpush1.bf16.msra.mxu0 0
      %5208 = vmatprep.subr.bf16.mxu0 0
      %5209 = vmatpush1.bf16.msra.mxu0 0
      %5210 = vmatprep.subr.bf16.mxu0 0
      %5211 = vmatpush1.bf16.msra.mxu0 0
      %5212 = vmatprep.subr.bf16.mxu0 0
      %5213 = vmatpush1.bf16.msra.mxu0 0
      %5214 = vmatprep.subr.bf16.mxu0 0
      %5215 = vmatpush1.bf16.msra.mxu0 0
      %5216 = vmatprep.subr.bf16.mxu0 0
      %5217 = vmatpush1.bf16.msra.mxu0 0
      %5218 = vmatprep.subr.bf16.mxu0 0
      %5219 = vmatpush1.bf16.msra.mxu0 0
      %5220 = vmatprep.subr.bf16.mxu0 0
      %5221 = vmatpush1.bf16.msra.mxu0 0
      %5222 = vmatprep.subr.bf16.mxu0 0
      %5223 = vmatpush1.bf16.msra.mxu0 0
      %5224 = vmatprep.subr.bf16.mxu0 0
      %5225 = vmatpush1.bf16.msra.mxu0 0
      %5226 = vmatprep.subr.bf16.mxu0 0
      %5227 = vmatpush1.bf16.msra.mxu0 0
      %5228 = vmatprep.subr.bf16.mxu0 0
      %5229 = vmatpush1.bf16.msra.mxu0 0
      %5230 = vmatprep.subr.bf16.mxu0 0
      %5231 = vmatpush1.bf16.msra.mxu0 0
      %5232 = vmatprep.subr.bf16.mxu0 0
      %5233 = vmatpush1.bf16.msra.mxu0 0
      %5234 = vmatprep.mubr.bf16.mxu0 0
      %5235 = vmatmul.mubr.bf16.gmra.mrb[0].mxu0 %v5167
      %v5236 = vpop.f32.mrb[0].mxu0
      %v5237 = vadd.f32 %v5152, %v5236
      %v5238 = vpop.f32.mrb[0].mxu0
      %v5239 = vpop.f32.mrb[0].mxu0
      %v5240 = vadd.f32 %v5152, %v5239
      %v5241 = vpop.f32.mrb[0].mxu0
      %5242 = vmatprep.mubr.bf16.mxu0 0
      %5243 = vmatmul.mubr.bf16.gmra.mrb[0].mxu0 %v5170
      %v5244 = vpop.f32.mrb[0].mxu0
      %v5245 = vadd.f32 %v5152, %v5244
      %v5246 = vpop.f32.mrb[0].mxu0
      %v5247 = vpop.f32.mrb[0].mxu0
      %v5248 = vadd.f32 %v5152, %v5247
      %v5249 = vpop.f32.mrb[0].mxu0
      %5250 = vmatprep.mubr.bf16.mxu0 0
      %5251 = vmatmul.mubr.bf16.gmra.mrb[0].mxu0 %v5173
      %v5252 = vpop.f32.mrb[0].mxu0
      %v5253 = vadd.f32 %v5152, %v5252
      %v5254 = vpop.f32.mrb[0].mxu0
      %v5255 = vpop.f32.mrb[0].mxu0
      %v5256 = vadd.f32 %v5152, %v5255
      %v5257 = vpop.f32.mrb[0].mxu0
      %5258 = vmatprep.mubr.bf16.mxu0 0
      %5259 = vmatmul.mubr.bf16.gmra.mrb[0].mxu0 %v5176
      %v5260 = vpop.f32.mrb[0].mxu0
      %v5261 = vadd.f32 %v5152, %v5260
      %v5262 = vpop.f32.mrb[0].mxu0
      %v5263 = vpop.f32.mrb[0].mxu0
      %v5264 = vadd.f32 %v5152, %v5263
      %v5265 = vpop.f32.mrb[0].mxu0
      %5266 = vmatprep.mubr.bf16.mxu0 0
      %5267 = vmatmul.mubr.bf16.gmra.mrb[0].mxu0 %v5179
      %v5268 = vpop.f32.mrb[0].mxu0
      %v5269 = vadd.f32 %v5152, %v5268
      %v5270 = vpop.f32.mrb[0].mxu0
      %v5271 = vpop.f32.mrb[0].mxu0
      %v5272 = vadd.f32 %v5152, %v5271
      %v5273 = vpop.f32.mrb[0].mxu0
      %5274 = vmatprep.mubr.bf16.mxu0 0
      %5275 = vmatmul.mubr.bf16.gmra.mrb[0].mxu0 %v5182
      %v5276 = vpop.f32.mrb[0].mxu0
      %v5277 = vadd.f32 %v5152, %v5276
      %v5278 = vpop.f32.mrb[0].mxu0
      %v5279 = vpop.f32.mrb[0].mxu0
      %v5280 = vadd.f32 %v5152, %v5279
      %v5281 = vpop.f32.mrb[0].mxu0
      %5282 = vmatprep.mubr.bf16.mxu0 0
      %5283 = vmatmul.mubr.bf16.gmra.mrb[0].mxu0 %v5185
      %v5284 = vpop.f32.mrb[0].mxu0
      %v5285 = vadd.f32 %v5152, %v5284
      %v5286 = vpop.f32.mrb[0].mxu0
      %v5287 = vpop.f32.mrb[0].mxu0
      %v5288 = vadd.f32 %v5152, %v5287
      %v5289 = vpop.f32.mrb[0].mxu0
      %5290 = vmatprep.mubr.bf16.mxu0 0
      %5291 = vmatmul.mubr.bf16.gmra.mrb[0].mxu0 %v5188
      %v5292 = vpop.f32.mrb[0].mxu0
      %v5293 = vadd.f32 %v5152, %v5292
      %v5294 = vpop.f32.mrb[0].mxu0
      %v5295 = vpop.f32.mrb[0].mxu0
      %v5296 = vadd.f32 %v5152, %v5295
      %v5297 = vpop.f32.mrb[0].mxu0
      %5298 = vmatprep.mubr.bf16.mxu0 0
      %5299 = vmatmul.mubr.bf16.gmra.mrb[0].mxu0 %v5191
      %v5300 = vpop.f32.mrb[0].mxu0
      %v5301 = vadd.f32 %v5152, %v5300
      %v5302 = vpop.f32.mrb[0].mxu0
      %v5303 = vpop.f32.mrb[0].mxu0
      %v5304 = vadd.f32 %v5152, %v5303
      %v5305 = vpop.f32.mrb[0].mxu0
      %5306 = vmatprep.mubr.bf16.mxu0 0
      %5307 = vmatmul.mubr.bf16.gmra.mrb[0].mxu0 %v5194
      %v5308 = vpop.f32.mrb[0].mxu0
      %v5309 = vadd.f32 %v5152, %v5308
      %v5310 = vpop.f32.mrb[0].mxu0
      %v5311 = vpop.f32.mrb[0].mxu0
      %v5312 = vadd.f32 %v5152, %v5311
      %v5313 = vpop.f32.mrb[0].mxu0
      %5314 = vmatprep.mubr.bf16.mxu0 0
      %5315 = vmatmul.mubr.bf16.gmra.mrb[0].mxu0 %v5197
      %v5316 = vpop.f32.mrb[0].mxu0
      %v5317 = vadd.f32 %v5152, %v5316
      %v5318 = vpop.f32.mrb[0].mxu0
      %v5319 = vpop.f32.mrb[0].mxu0
      %v5320 = vadd.f32 %v5152, %v5319
      %v5321 = vpop.f32.mrb[0].mxu0
      %5322 = vmatprep.mubr.bf16.mxu0 0
      %5323 = vmatmul.mubr.bf16.gmra.mrb[0].mxu0 %v5200
      %v5324 = vpop.f32.mrb[0].mxu0
      %v5325 = vadd.f32 %v5152, %v5324
      %v5326 = vpop.f32.mrb[0].mxu0
      %v5327 = vpop.f32.mrb[0].mxu0
      %v5328 = vpop.f32.mrb[0].mxu0
      %5329 = vdwg.mxu0
      %v5330 = vadd.f32 %v4866, %v5237
      %v5331 = vadd.f32 %v4867, %v5240
      %v5332 = vadd.f32 %v4868, %v5245
      %v5333 = vadd.f32 %v4869, %v5248
      %v5334 = vadd.f32 %v4870, %v5253
      %v5335 = vadd.f32 %v4871, %v5256
      %v5336 = vadd.f32 %v4872, %v5261
      %v5337 = vadd.f32 %v4873, %v5264
      %v5338 = vadd.f32 %v4874, %v5269
      %v5339 = vadd.f32 %v4875, %v5272
      %v5340 = vadd.f32 %v4876, %v5277
      %v5341 = vadd.f32 %v4877, %v5280
      %v5342 = vadd.f32 %v4878, %v5285
      %v5343 = vadd.f32 %v4879, %v5288
      %v5344 = vadd.f32 %v4880, %v5293
      %v5345 = vadd.f32 %v4881, %v5296
      %v5346 = vadd.f32 %v4882, %v5301
      %v5347 = vadd.f32 %v4883, %v5304
      %v5348 = vadd.f32 %v4884, %v5309
      %v5349 = vadd.f32 %v4885, %v5312
      %v5350 = vadd.f32 %v4886, %v5317
      %v5351 = vadd.f32 %v4887, %v5320
      %v5352 = vadd.f32 %v4888, %v5325
      %5353 = vst.msk [vmem:[#allocation2] sm:$0xff] %vm3220, %v5330
      %5354 = vst.msk [vmem:[#allocation2 + $0x8] sm:$0xff] %vm3220, %v5331
      %5355 = vst.msk [vmem:[#allocation2 + $0x10] sm:$0xff] %vm3220, %v5332
      %5356 = vst.msk [vmem:[#allocation2 + $0x18] sm:$0xff] %vm3220, %v5333
      %5357 = vst.msk [vmem:[#allocation2 + $0x20] sm:$0xff] %vm3220, %v5334
      %5358 = vst.msk [vmem:[#allocation2 + $0x28] sm:$0xff] %vm3220, %v5335
      %5359 = vst.msk [vmem:[#allocation2 + $0x30] sm:$0xff] %vm3220, %v5336
      %5360 = vst.msk [vmem:[#allocation2 + $0x38] sm:$0xff] %vm3220, %v5337
      %5361 = vst.msk [vmem:[#allocation2 + $0x40] sm:$0xff] %vm3220, %v5338
      %5362 = vst.msk [vmem:[#allocation2 + $0x48] sm:$0xff] %vm3220, %v5339
      %5363 = vst.msk [vmem:[#allocation2 + $0x50] sm:$0xff] %vm3220, %v5340
      %5364 = vst.msk [vmem:[#allocation2 + $0x58] sm:$0xff] %vm3220, %v5341
      %5365 = vst.msk [vmem:[#allocation2 + $0x60] sm:$0xff] %vm3220, %v5342
      %5366 = vst.msk [vmem:[#allocation2 + $0x68] sm:$0xff] %vm3220, %v5343
      %5367 = vst.msk [vmem:[#allocation2 + $0x70] sm:$0xff] %vm3220, %v5344
      %5368 = vst.msk [vmem:[#allocation2 + $0x78] sm:$0xff] %vm3220, %v5345
      %5369 = vst.msk [vmem:[#allocation2 + $0x80] sm:$0xff] %vm3220, %v5346
      %5370 = vst.msk [vmem:[#allocation2 + $0x88] sm:$0xff] %vm3220, %v5347
      %5371 = vst.msk [vmem:[#allocation2 + $0x90] sm:$0xff] %vm3220, %v5348
      %5372 = vst.msk [vmem:[#allocation2 + $0x98] sm:$0xff] %vm3220, %v5349
      %5373 = vst.msk [vmem:[#allocation2 + $0xa0] sm:$0xff] %vm3220, %v5350
      %5374 = vst.msk [vmem:[#allocation2 + $0xa8] sm:$0xff] %vm3220, %v5351
      %5375 = vst.msk [vmem:[#allocation2 + $0xb0] sm:$0xf] %vm4358, %v5352
      %v5376 = vld [vmem:[#allocation2] sm:$0xff]
      %v5377 = vld [vmem:[#allocation2 + $0x8] sm:$0xff]
      %v5378 = vld [vmem:[#allocation2 + $0x10] sm:$0xff]
      %v5379 = vld [vmem:[#allocation2 + $0x18] sm:$0xff]
      %v5380 = vld [vmem:[#allocation2 + $0x20] sm:$0xff]
      %v5381 = vld [vmem:[#allocation2 + $0x28] sm:$0xff]
      %v5382 = vld [vmem:[#allocation2 + $0x30] sm:$0xff]
      %v5383 = vld [vmem:[#allocation2 + $0x38] sm:$0xff]
      %v5384 = vld [vmem:[#allocation2 + $0x40] sm:$0xff]
      %v5385 = vld [vmem:[#allocation2 + $0x48] sm:$0xff]
      %v5386 = vld [vmem:[#allocation2 + $0x50] sm:$0xff]
      %v5387 = vld [vmem:[#allocation2 + $0x58] sm:$0xff]
      %v5388 = vld [vmem:[#allocation2 + $0x60] sm:$0xff]
      %v5389 = vld [vmem:[#allocation2 + $0x68] sm:$0xff]
      %v5390 = vld [vmem:[#allocation2 + $0x70] sm:$0xff]
      %v5391 = vld [vmem:[#allocation2 + $0x78] sm:$0xff]
      %v5392 = vld [vmem:[#allocation2 + $0x80] sm:$0xff]
      %v5393 = vld [vmem:[#allocation2 + $0x88] sm:$0xff]
      %v5394 = vld [vmem:[#allocation2 + $0x90] sm:$0xff]
      %v5395 = vld [vmem:[#allocation2 + $0x98] sm:$0xff]
      %v5396 = vld [vmem:[#allocation2 + $0xa0] sm:$0xff]
      %v5397 = vld [vmem:[#allocation2 + $0xa8] sm:$0xff]
      %v5398 = vld [vmem:[#allocation2 + $0xb0] sm:$0xf]
      %v5399 = vpack.c.bf16 %v5377, %v5376
      %v5400 = vpack.c.bf16 %v5379, %v5378
      %v5401 = vpack.c.bf16 %v5381, %v5380
      %v5402 = vpack.c.bf16 %v5383, %v5382
      %v5403 = vpack.c.bf16 %v5385, %v5384
      %v5404 = vpack.c.bf16 %v5387, %v5386
      %v5405 = vpack.c.bf16 %v5389, %v5388
      %v5406 = vpack.c.bf16 %v5391, %v5390
      %v5407 = vpack.c.bf16 %v5393, %v5392
      %v5408 = vpack.c.bf16 %v5395, %v5394
      %v5409 = vpack.c.bf16 %v5397, %v5396
      %v5410 = vpack.c.bf16 %v5398, %v5398
      %s5411 = scalar_lea.vmem %s3, 64
      %v5412 = vld [vmem:[%s5411] sm:$0xf]
      %v5413 = vld [vmem:[%s5411 + $0x4] sm:$0xf]
      %v5414 = vld [vmem:[%s5411 + $0x8] sm:$0xf]
      %v5415 = vld [vmem:[%s5411 + $0xc] sm:$0xf]
      %v5416 = vld [vmem:[%s5411 + $0x10] sm:$0xf]
      %v5417 = vld [vmem:[%s5411 + $0x14] sm:$0xf]
      %v5418 = vld [vmem:[%s5411 + $0x18] sm:$0xf]
      %v5419 = vld [vmem:[%s5411 + $0x1c] sm:$0xf]
      %s5420 = scalar_lea.vmem %s4, 2
      %v5421 = vld [vmem:[%s5420] sm:$0x1]
      %v5423 = vlaneseq
      %v5424 = vshrl.u32 %v5423, 7
      %v5425 = vsub.s32 0, %v5424
      %v5426 = vrot.slane %v5421, %v5425
      %v5436 = vunpack.c.l.b16 %v5412
      %v5437 = vunpack.c.l.b16 %v5413
      %v5438 = vunpack.c.l.b16 %v5414
      %v5439 = vunpack.c.l.b16 %v5415
      %v5440 = vunpack.c.l.b16 %v5416
      %v5441 = vunpack.c.l.b16 %v5417
      %v5442 = vunpack.c.l.b16 %v5418
      %v5443 = vunpack.c.l.b16 %v5419
      %v5444 = vpack.c.b16 %v5437, %v5436
      %v5445 = vpack.c.b16 %v5439, %v5438
      %v5446 = vpack.c.b16 %v5441, %v5440
      %v5447 = vpack.c.b16 %v5443, %v5442
      %v5453 = vsel %vm3220, %v5399, 0
      %v5456 = vsel %vm3220, %v5400, 0
      %v5459 = vsel %vm3220, %v5401, 0
      %v5462 = vsel %vm3220, %v5402, 0
      %v5465 = vsel %vm3220, %v5403, 0
      %v5468 = vsel %vm3220, %v5404, 0
      %v5471 = vsel %vm3220, %v5405, 0
      %v5474 = vsel %vm3220, %v5406, 0
      %v5477 = vsel %vm3220, %v5407, 0
      %v5480 = vsel %vm3220, %v5408, 0
      %v5483 = vsel %vm3220, %v5409, 0
      %v5486 = vsel %vm3220, %v5410, 0
      %5488 = vmatprep.subr.bf16.mxu0 0
      %5489 = vmatpush1.bf16.msra.mxu0 %v5444
      %5490 = vmatprep.subr.bf16.mxu0 0
      %5491 = vmatpush1.bf16.msra.mxu0 %v5445
      %5492 = vmatprep.subr.bf16.mxu0 0
      %5493 = vmatpush1.bf16.msra.mxu0 %v5446
      %5494 = vmatprep.subr.bf16.mxu0 0
      %5495 = vmatpush1.bf16.msra.mxu0 %v5447
      %5496 = vmatprep.subr.bf16.mxu0 0
      %5497 = vmatpush1.bf16.msra.mxu0 0
      %5498 = vmatprep.subr.bf16.mxu0 0
      %5499 = vmatpush1.bf16.msra.mxu0 0
      %5500 = vmatprep.subr.bf16.mxu0 0
      %5501 = vmatpush1.bf16.msra.mxu0 0
      %5502 = vmatprep.subr.bf16.mxu0 0
      %5503 = vmatpush1.bf16.msra.mxu0 0
      %5504 = vmatprep.subr.bf16.mxu0 0
      %5505 = vmatpush1.bf16.msra.mxu0 0
      %5506 = vmatprep.subr.bf16.mxu0 0
      %5507 = vmatpush1.bf16.msra.mxu0 0
      %5508 = vmatprep.subr.bf16.mxu0 0
      %5509 = vmatpush1.bf16.msra.mxu0 0
      %5510 = vmatprep.subr.bf16.mxu0 0
      %5511 = vmatpush1.bf16.msra.mxu0 0
      %5512 = vmatprep.subr.bf16.mxu0 0
      %5513 = vmatpush1.bf16.msra.mxu0 0
      %5514 = vmatprep.subr.bf16.mxu0 0
      %5515 = vmatpush1.bf16.msra.mxu0 0
      %5516 = vmatprep.subr.bf16.mxu0 0
      %5517 = vmatpush1.bf16.msra.mxu0 0
      %5518 = vmatprep.subr.bf16.mxu0 0
      %5519 = vmatpush1.bf16.msra.mxu0 0
      %5520 = vmatprep.mubr.bf16.mxu0 0
      %5521 = vmatmul.mubr.bf16.gmra.mrb[0].mxu0 %v5453
      %v5522 = vpop.f32.mrb[0].mxu0
      %v5523 = vadd.f32 %v5426, %v5522
      %v5524 = vpop.f32.mrb[0].mxu0
      %v5525 = vpop.f32.mrb[0].mxu0
      %v5526 = vadd.f32 %v5426, %v5525
      %v5527 = vpop.f32.mrb[0].mxu0
      %5528 = vmatprep.mubr.bf16.mxu0 0
      %5529 = vmatmul.mubr.bf16.gmra.mrb[0].mxu0 %v5456
      %v5530 = vpop.f32.mrb[0].mxu0
      %v5531 = vadd.f32 %v5426, %v5530
      %v5532 = vpop.f32.mrb[0].mxu0
      %v5533 = vpop.f32.mrb[0].mxu0
      %v5534 = vadd.f32 %v5426, %v5533
      %v5535 = vpop.f32.mrb[0].mxu0
      %5536 = vmatprep.mubr.bf16.mxu0 0
      %5537 = vmatmul.mubr.bf16.gmra.mrb[0].mxu0 %v5459
      %v5538 = vpop.f32.mrb[0].mxu0
      %v5539 = vadd.f32 %v5426, %v5538
      %v5540 = vpop.f32.mrb[0].mxu0
      %v5541 = vpop.f32.mrb[0].mxu0
      %v5542 = vadd.f32 %v5426, %v5541
      %v5543 = vpop.f32.mrb[0].mxu0
      %5544 = vmatprep.mubr.bf16.mxu0 0
      %5545 = vmatmul.mubr.bf16.gmra.mrb[0].mxu0 %v5462
      %v5546 = vpop.f32.mrb[0].mxu0
      %v5547 = vadd.f32 %v5426, %v5546
      %v5548 = vpop.f32.mrb[0].mxu0
      %v5549 = vpop.f32.mrb[0].mxu0
      %v5550 = vadd.f32 %v5426, %v5549
      %v5551 = vpop.f32.mrb[0].mxu0
      %5552 = vmatprep.mubr.bf16.mxu0 0
      %5553 = vmatmul.mubr.bf16.gmra.mrb[0].mxu0 %v5465
      %v5554 = vpop.f32.mrb[0].mxu0
      %v5555 = vadd.f32 %v5426, %v5554
      %v5556 = vpop.f32.mrb[0].mxu0
      %v5557 = vpop.f32.mrb[0].mxu0
      %v5558 = vadd.f32 %v5426, %v5557
      %v5559 = vpop.f32.mrb[0].mxu0
      %5560 = vmatprep.mubr.bf16.mxu0 0
      %5561 = vmatmul.mubr.bf16.gmra.mrb[0].mxu0 %v5468
      %v5562 = vpop.f32.mrb[0].mxu0
      %v5563 = vadd.f32 %v5426, %v5562
      %v5564 = vpop.f32.mrb[0].mxu0
      %v5565 = vpop.f32.mrb[0].mxu0
      %v5566 = vadd.f32 %v5426, %v5565
      %v5567 = vpop.f32.mrb[0].mxu0
      %5568 = vmatprep.mubr.bf16.mxu0 0
      %5569 = vmatmul.mubr.bf16.gmra.mrb[0].mxu0 %v5471
      %v5570 = vpop.f32.mrb[0].mxu0
      %v5571 = vadd.f32 %v5426, %v5570
      %v5572 = vpop.f32.mrb[0].mxu0
      %v5573 = vpop.f32.mrb[0].mxu0
      %v5574 = vadd.f32 %v5426, %v5573
      %v5575 = vpop.f32.mrb[0].mxu0
      %5576 = vmatprep.mubr.bf16.mxu0 0
      %5577 = vmatmul.mubr.bf16.gmra.mrb[0].mxu0 %v5474
      %v5578 = vpop.f32.mrb[0].mxu0
      %v5579 = vadd.f32 %v5426, %v5578
      %v5580 = vpop.f32.mrb[0].mxu0
      %v5581 = vpop.f32.mrb[0].mxu0
      %v5582 = vadd.f32 %v5426, %v5581
      %v5583 = vpop.f32.mrb[0].mxu0
      %5584 = vmatprep.mubr.bf16.mxu0 0
      %5585 = vmatmul.mubr.bf16.gmra.mrb[0].mxu0 %v5477
      %v5586 = vpop.f32.mrb[0].mxu0
      %v5587 = vadd.f32 %v5426, %v5586
      %v5588 = vpop.f32.mrb[0].mxu0
      %v5589 = vpop.f32.mrb[0].mxu0
      %v5590 = vadd.f32 %v5426, %v5589
      %v5591 = vpop.f32.mrb[0].mxu0
      %5592 = vmatprep.mubr.bf16.mxu0 0
      %5593 = vmatmul.mubr.bf16.gmra.mrb[0].mxu0 %v5480
      %v5594 = vpop.f32.mrb[0].mxu0
      %v5595 = vadd.f32 %v5426, %v5594
      %v5596 = vpop.f32.mrb[0].mxu0
      %v5597 = vpop.f32.mrb[0].mxu0
      %v5598 = vadd.f32 %v5426, %v5597
      %v5599 = vpop.f32.mrb[0].mxu0
      %5600 = vmatprep.mubr.bf16.mxu0 0
      %5601 = vmatmul.mubr.bf16.gmra.mrb[0].mxu0 %v5483
      %v5602 = vpop.f32.mrb[0].mxu0
      %v5603 = vadd.f32 %v5426, %v5602
      %v5604 = vpop.f32.mrb[0].mxu0
      %v5605 = vpop.f32.mrb[0].mxu0
      %v5606 = vadd.f32 %v5426, %v5605
      %v5607 = vpop.f32.mrb[0].mxu0
      %5608 = vmatprep.mubr.bf16.mxu0 0
      %5609 = vmatmul.mubr.bf16.gmra.mrb[0].mxu0 %v5486
      %v5610 = vpop.f32.mrb[0].mxu0
      %v5611 = vadd.f32 %v5426, %v5610
      %v5612 = vpop.f32.mrb[0].mxu0
      %v5613 = vpop.f32.mrb[0].mxu0
      %v5614 = vpop.f32.mrb[0].mxu0
      %5615 = vdwg.mxu0
      %v5616 = vmax.f32 %v5523, 0.0
      %v5617 = vmax.f32 %v5526, 0.0
      %v5618 = vmax.f32 %v5531, 0.0
      %v5619 = vmax.f32 %v5534, 0.0
      %v5620 = vmax.f32 %v5539, 0.0
      %v5621 = vmax.f32 %v5542, 0.0
      %v5622 = vmax.f32 %v5547, 0.0
      %v5623 = vmax.f32 %v5550, 0.0
      %v5624 = vmax.f32 %v5555, 0.0
      %v5625 = vmax.f32 %v5558, 0.0
      %v5626 = vmax.f32 %v5563, 0.0
      %v5627 = vmax.f32 %v5566, 0.0
      %v5628 = vmax.f32 %v5571, 0.0
      %v5629 = vmax.f32 %v5574, 0.0
      %v5630 = vmax.f32 %v5579, 0.0
      %v5631 = vmax.f32 %v5582, 0.0
      %v5632 = vmax.f32 %v5587, 0.0
      %v5633 = vmax.f32 %v5590, 0.0
      %v5634 = vmax.f32 %v5595, 0.0
      %v5635 = vmax.f32 %v5598, 0.0
      %v5636 = vmax.f32 %v5603, 0.0
      %v5637 = vmax.f32 %v5606, 0.0
      %v5638 = vmax.f32 %v5611, 0.0
      %v5639 = vpack.c.bf16 %v5617, %v5616
      %v5640 = vpack.c.bf16 %v5619, %v5618
      %v5641 = vpack.c.bf16 %v5621, %v5620
      %v5642 = vpack.c.bf16 %v5623, %v5622
      %v5643 = vpack.c.bf16 %v5625, %v5624
      %v5644 = vpack.c.bf16 %v5627, %v5626
      %v5645 = vpack.c.bf16 %v5629, %v5628
      %v5646 = vpack.c.bf16 %v5631, %v5630
      %v5647 = vpack.c.bf16 %v5633, %v5632
      %v5648 = vpack.c.bf16 %v5635, %v5634
      %v5649 = vpack.c.bf16 %v5637, %v5636
      %v5650 = vpack.c.bf16 %v5638, %v5638
      %s5651 = scalar_lea.vmem %s5, 32
      %v5652 = vld [vmem:[%s5651] sm:$0xf]
      %v5653 = vld [vmem:[%s5651 + $0x4] sm:$0xf]
      %v5654 = vld [vmem:[%s5651 + $0x8] sm:$0xf]
      %v5655 = vld [vmem:[%s5651 + $0xc] sm:$0xf]
      %s5656 = scalar_lea.vmem %s6, 2
      %v5657 = vld [vmem:[%s5656] sm:$0x1]
      %v5659 = vlaneseq
      %v5660 = vshrl.u32 %v5659, 7
      %v5661 = vsub.s32 0, %v5660
      %v5662 = vrot.slane %v5657, %v5661
      %v5668 = vunpack.c.l.b16 %v5652
      %v5669 = vunpack.c.l.b16 %v5653
      %v5670 = vunpack.c.l.b16 %v5654
      %v5671 = vunpack.c.l.b16 %v5655
      %v5672 = vpack.c.b16 %v5669, %v5668
      %v5673 = vpack.c.b16 %v5671, %v5670
      %v5677 = vsel %vm2262, %v5639, 0
      %v5680 = vsel %vm2262, %v5640, 0
      %v5683 = vsel %vm2262, %v5641, 0
      %v5686 = vsel %vm2262, %v5642, 0
      %v5689 = vsel %vm2262, %v5643, 0
      %v5692 = vsel %vm2262, %v5644, 0
      %v5695 = vsel %vm2262, %v5645, 0
      %v5698 = vsel %vm2262, %v5646, 0
      %v5701 = vsel %vm2262, %v5647, 0
      %v5704 = vsel %vm2262, %v5648, 0
      %v5707 = vsel %vm2262, %v5649, 0
      %v5710 = vsel %vm2262, %v5650, 0
      %5712 = vmatprep.subr.bf16.mxu0 0
      %5713 = vmatpush1.bf16.msra.mxu0 %v5672
      %5714 = vmatprep.subr.bf16.mxu0 0
      %5715 = vmatpush1.bf16.msra.mxu0 %v5673
      %5716 = vmatprep.subr.bf16.mxu0 0
      %5717 = vmatpush1.bf16.msra.mxu0 0
      %5718 = vmatprep.subr.bf16.mxu0 0
      %5719 = vmatpush1.bf16.msra.mxu0 0
      %5720 = vmatprep.subr.bf16.mxu0 0
      %5721 = vmatpush1.bf16.msra.mxu0 0
      %5722 = vmatprep.subr.bf16.mxu0 0
      %5723 = vmatpush1.bf16.msra.mxu0 0
      %5724 = vmatprep.subr.bf16.mxu0 0
      %5725 = vmatpush1.bf16.msra.mxu0 0
      %5726 = vmatprep.subr.bf16.mxu0 0
      %5727 = vmatpush1.bf16.msra.mxu0 0
      %5728 = vmatprep.subr.bf16.mxu0 0
      %5729 = vmatpush1.bf16.msra.mxu0 0
      %5730 = vmatprep.subr.bf16.mxu0 0
      %5731 = vmatpush1.bf16.msra.mxu0 0
      %5732 = vmatprep.subr.bf16.mxu0 0
      %5733 = vmatpush1.bf16.msra.mxu0 0
      %5734 = vmatprep.subr.bf16.mxu0 0
      %5735 = vmatpush1.bf16.msra.mxu0 0
      %5736 = vmatprep.subr.bf16.mxu0 0
      %5737 = vmatpush1.bf16.msra.mxu0 0
      %5738 = vmatprep.subr.bf16.mxu0 0
      %5739 = vmatpush1.bf16.msra.mxu0 0
      %5740 = vmatprep.subr.bf16.mxu0 0
      %5741 = vmatpush1.bf16.msra.mxu0 0
      %5742 = vmatprep.subr.bf16.mxu0 0
      %5743 = vmatpush1.bf16.msra.mxu0 0
      %5744 = vmatprep.mubr.bf16.mxu0 0
      %5745 = vmatmul.mubr.bf16.gmra.mrb[0].mxu0 %v5677
      %v5746 = vpop.f32.mrb[0].mxu0
      %v5747 = vadd.f32 %v5662, %v5746
      %v5748 = vpop.f32.mrb[0].mxu0
      %v5749 = vpop.f32.mrb[0].mxu0
      %v5750 = vadd.f32 %v5662, %v5749
      %v5751 = vpop.f32.mrb[0].mxu0
      %5752 = vmatprep.mubr.bf16.mxu0 0
      %5753 = vmatmul.mubr.bf16.gmra.mrb[0].mxu0 %v5680
      %v5754 = vpop.f32.mrb[0].mxu0
      %v5755 = vadd.f32 %v5662, %v5754
      %v5756 = vpop.f32.mrb[0].mxu0
      %v5757 = vpop.f32.mrb[0].mxu0
      %v5758 = vadd.f32 %v5662, %v5757
      %v5759 = vpop.f32.mrb[0].mxu0
      %5760 = vmatprep.mubr.bf16.mxu0 0
      %5761 = vmatmul.mubr.bf16.gmra.mrb[0].mxu0 %v5683
      %v5762 = vpop.f32.mrb[0].mxu0
      %v5763 = vadd.f32 %v5662, %v5762
      %v5764 = vpop.f32.mrb[0].mxu0
      %v5765 = vpop.f32.mrb[0].mxu0
      %v5766 = vadd.f32 %v5662, %v5765
      %v5767 = vpop.f32.mrb[0].mxu0
      %5768 = vmatprep.mubr.bf16.mxu0 0
      %5769 = vmatmul.mubr.bf16.gmra.mrb[0].mxu0 %v5686
      %v5770 = vpop.f32.mrb[0].mxu0
      %v5771 = vadd.f32 %v5662, %v5770
      %v5772 = vpop.f32.mrb[0].mxu0
      %v5773 = vpop.f32.mrb[0].mxu0
      %v5774 = vadd.f32 %v5662, %v5773
      %v5775 = vpop.f32.mrb[0].mxu0
      %5776 = vmatprep.mubr.bf16.mxu0 0
      %5777 = vmatmul.mubr.bf16.gmra.mrb[0].mxu0 %v5689
      %v5778 = vpop.f32.mrb[0].mxu0
      %v5779 = vadd.f32 %v5662, %v5778
      %v5780 = vpop.f32.mrb[0].mxu0
      %v5781 = vpop.f32.mrb[0].mxu0
      %v5782 = vadd.f32 %v5662, %v5781
      %v5783 = vpop.f32.mrb[0].mxu0
      %5784 = vmatprep.mubr.bf16.mxu0 0
      %5785 = vmatmul.mubr.bf16.gmra.mrb[0].mxu0 %v5692
      %v5786 = vpop.f32.mrb[0].mxu0
      %v5787 = vadd.f32 %v5662, %v5786
      %v5788 = vpop.f32.mrb[0].mxu0
      %v5789 = vpop.f32.mrb[0].mxu0
      %v5790 = vadd.f32 %v5662, %v5789
      %v5791 = vpop.f32.mrb[0].mxu0
      %5792 = vmatprep.mubr.bf16.mxu0 0
      %5793 = vmatmul.mubr.bf16.gmra.mrb[0].mxu0 %v5695
      %v5794 = vpop.f32.mrb[0].mxu0
      %v5795 = vadd.f32 %v5662, %v5794
      %v5796 = vpop.f32.mrb[0].mxu0
      %v5797 = vpop.f32.mrb[0].mxu0
      %v5798 = vadd.f32 %v5662, %v5797
      %v5799 = vpop.f32.mrb[0].mxu0
      %5800 = vmatprep.mubr.bf16.mxu0 0
      %5801 = vmatmul.mubr.bf16.gmra.mrb[0].mxu0 %v5698
      %v5802 = vpop.f32.mrb[0].mxu0
      %v5803 = vadd.f32 %v5662, %v5802
      %v5804 = vpop.f32.mrb[0].mxu0
      %v5805 = vpop.f32.mrb[0].mxu0
      %v5806 = vadd.f32 %v5662, %v5805
      %v5807 = vpop.f32.mrb[0].mxu0
      %5808 = vmatprep.mubr.bf16.mxu0 0
      %5809 = vmatmul.mubr.bf16.gmra.mrb[0].mxu0 %v5701
      %v5810 = vpop.f32.mrb[0].mxu0
      %v5811 = vadd.f32 %v5662, %v5810
      %v5812 = vpop.f32.mrb[0].mxu0
      %v5813 = vpop.f32.mrb[0].mxu0
      %v5814 = vadd.f32 %v5662, %v5813
      %v5815 = vpop.f32.mrb[0].mxu0
      %5816 = vmatprep.mubr.bf16.mxu0 0
      %5817 = vmatmul.mubr.bf16.gmra.mrb[0].mxu0 %v5704
      %v5818 = vpop.f32.mrb[0].mxu0
      %v5819 = vadd.f32 %v5662, %v5818
      %v5820 = vpop.f32.mrb[0].mxu0
      %v5821 = vpop.f32.mrb[0].mxu0
      %v5822 = vadd.f32 %v5662, %v5821
      %v5823 = vpop.f32.mrb[0].mxu0
      %5824 = vmatprep.mubr.bf16.mxu0 0
      %5825 = vmatmul.mubr.bf16.gmra.mrb[0].mxu0 %v5707
      %v5826 = vpop.f32.mrb[0].mxu0
      %v5827 = vadd.f32 %v5662, %v5826
      %v5828 = vpop.f32.mrb[0].mxu0
      %v5829 = vpop.f32.mrb[0].mxu0
      %v5830 = vadd.f32 %v5662, %v5829
      %v5831 = vpop.f32.mrb[0].mxu0
      %5832 = vmatprep.mubr.bf16.mxu0 0
      %5833 = vmatmul.mubr.bf16.gmra.mrb[0].mxu0 %v5710
      %v5834 = vpop.f32.mrb[0].mxu0
      %v5835 = vadd.f32 %v5662, %v5834
      %v5836 = vpop.f32.mrb[0].mxu0
      %v5837 = vpop.f32.mrb[0].mxu0
      %v5838 = vpop.f32.mrb[0].mxu0
      %5839 = vdwg.mxu0
      %v5840 = vadd.f32 %v5376, %v5747
      %v5841 = vadd.f32 %v5377, %v5750
      %v5842 = vadd.f32 %v5378, %v5755
      %v5843 = vadd.f32 %v5379, %v5758
      %v5844 = vadd.f32 %v5380, %v5763
      %v5845 = vadd.f32 %v5381, %v5766
      %v5846 = vadd.f32 %v5382, %v5771
      %v5847 = vadd.f32 %v5383, %v5774
      %v5848 = vadd.f32 %v5384, %v5779
      %v5849 = vadd.f32 %v5385, %v5782
      %v5850 = vadd.f32 %v5386, %v5787
      %v5851 = vadd.f32 %v5387, %v5790
      %v5852 = vadd.f32 %v5388, %v5795
      %v5853 = vadd.f32 %v5389, %v5798
      %v5854 = vadd.f32 %v5390, %v5803
      %v5855 = vadd.f32 %v5391, %v5806
      %v5856 = vadd.f32 %v5392, %v5811
      %v5857 = vadd.f32 %v5393, %v5814
      %v5858 = vadd.f32 %v5394, %v5819
      %v5859 = vadd.f32 %v5395, %v5822
      %v5860 = vadd.f32 %v5396, %v5827
      %v5861 = vadd.f32 %v5397, %v5830
      %v5862 = vadd.f32 %v5398, %v5835
      %5863 = vst.msk [vmem:[#allocation2] sm:$0xff] %vm3220, %v5840
      %5864 = vst.msk [vmem:[#allocation2 + $0x8] sm:$0xff] %vm3220, %v5841
      %5865 = vst.msk [vmem:[#allocation2 + $0x10] sm:$0xff] %vm3220, %v5842
      %5866 = vst.msk [vmem:[#allocation2 + $0x18] sm:$0xff] %vm3220, %v5843
      %5867 = vst.msk [vmem:[#allocation2 + $0x20] sm:$0xff] %vm3220, %v5844
      %5868 = vst.msk [vmem:[#allocation2 + $0x28] sm:$0xff] %vm3220, %v5845
      %5869 = vst.msk [vmem:[#allocation2 + $0x30] sm:$0xff] %vm3220, %v5846
      %5870 = vst.msk [vmem:[#allocation2 + $0x38] sm:$0xff] %vm3220, %v5847
      %5871 = vst.msk [vmem:[#allocation2 + $0x40] sm:$0xff] %vm3220, %v5848
      %5872 = vst.msk [vmem:[#allocation2 + $0x48] sm:$0xff] %vm3220, %v5849
      %5873 = vst.msk [vmem:[#allocation2 + $0x50] sm:$0xff] %vm3220, %v5850
      %5874 = vst.msk [vmem:[#allocation2 + $0x58] sm:$0xff] %vm3220, %v5851
      %5875 = vst.msk [vmem:[#allocation2 + $0x60] sm:$0xff] %vm3220, %v5852
      %5876 = vst.msk [vmem:[#allocation2 + $0x68] sm:$0xff] %vm3220, %v5853
      %5877 = vst.msk [vmem:[#allocation2 + $0x70] sm:$0xff] %vm3220, %v5854
      %5878 = vst.msk [vmem:[#allocation2 + $0x78] sm:$0xff] %vm3220, %v5855
      %5879 = vst.msk [vmem:[#allocation2 + $0x80] sm:$0xff] %vm3220, %v5856
      %5880 = vst.msk [vmem:[#allocation2 + $0x88] sm:$0xff] %vm3220, %v5857
      %5881 = vst.msk [vmem:[#allocation2 + $0x90] sm:$0xff] %vm3220, %v5858
      %5882 = vst.msk [vmem:[#allocation2 + $0x98] sm:$0xff] %vm3220, %v5859
      %5883 = vst.msk [vmem:[#allocation2 + $0xa0] sm:$0xff] %vm3220, %v5860
      %5884 = vst.msk [vmem:[#allocation2 + $0xa8] sm:$0xff] %vm3220, %v5861
      %5885 = vst.msk [vmem:[#allocation2 + $0xb0] sm:$0xf] %vm4358, %v5862
      %v5886 = vld [vmem:[#allocation2] sm:$0xff]
      %v5887 = vld [vmem:[#allocation2 + $0x8] sm:$0xff]
      %v5888 = vld [vmem:[#allocation2 + $0x10] sm:$0xff]
      %v5889 = vld [vmem:[#allocation2 + $0x18] sm:$0xff]
      %v5890 = vld [vmem:[#allocation2 + $0x20] sm:$0xff]
      %v5891 = vld [vmem:[#allocation2 + $0x28] sm:$0xff]
      %v5892 = vld [vmem:[#allocation2 + $0x30] sm:$0xff]
      %v5893 = vld [vmem:[#allocation2 + $0x38] sm:$0xff]
      %v5894 = vld [vmem:[#allocation2 + $0x40] sm:$0xff]
      %v5895 = vld [vmem:[#allocation2 + $0x48] sm:$0xff]
      %v5896 = vld [vmem:[#allocation2 + $0x50] sm:$0xff]
      %v5897 = vld [vmem:[#allocation2 + $0x58] sm:$0xff]
      %v5898 = vld [vmem:[#allocation2 + $0x60] sm:$0xff]
      %v5899 = vld [vmem:[#allocation2 + $0x68] sm:$0xff]
      %v5900 = vld [vmem:[#allocation2 + $0x70] sm:$0xff]
      %v5901 = vld [vmem:[#allocation2 + $0x78] sm:$0xff]
      %v5902 = vld [vmem:[#allocation2 + $0x80] sm:$0xff]
      %v5903 = vld [vmem:[#allocation2 + $0x88] sm:$0xff]
      %v5904 = vld [vmem:[#allocation2 + $0x90] sm:$0xff]
      %v5905 = vld [vmem:[#allocation2 + $0x98] sm:$0xff]
      %v5906 = vld [vmem:[#allocation2 + $0xa0] sm:$0xff]
      %v5907 = vld [vmem:[#allocation2 + $0xa8] sm:$0xff]
      %v5908 = vld [vmem:[#allocation2 + $0xb0] sm:$0xf]
      %v5909 = vpack.c.bf16 %v5887, %v5886
      %v5910 = vpack.c.bf16 %v5889, %v5888
      %v5911 = vpack.c.bf16 %v5891, %v5890
      %v5912 = vpack.c.bf16 %v5893, %v5892
      %v5913 = vpack.c.bf16 %v5895, %v5894
      %v5914 = vpack.c.bf16 %v5897, %v5896
      %v5915 = vpack.c.bf16 %v5899, %v5898
      %v5916 = vpack.c.bf16 %v5901, %v5900
      %v5917 = vpack.c.bf16 %v5903, %v5902
      %v5918 = vpack.c.bf16 %v5905, %v5904
      %v5919 = vpack.c.bf16 %v5907, %v5906
      %v5920 = vpack.c.bf16 %v5908, %v5908
      %s5921 = scalar_lea.vmem %s3, 96
      %v5922 = vld [vmem:[%s5921] sm:$0xf]
      %v5923 = vld [vmem:[%s5921 + $0x4] sm:$0xf]
      %v5924 = vld [vmem:[%s5921 + $0x8] sm:$0xf]
      %v5925 = vld [vmem:[%s5921 + $0xc] sm:$0xf]
      %v5926 = vld [vmem:[%s5921 + $0x10] sm:$0xf]
      %v5927 = vld [vmem:[%s5921 + $0x14] sm:$0xf]
      %v5928 = vld [vmem:[%s5921 + $0x18] sm:$0xf]
      %v5929 = vld [vmem:[%s5921 + $0x1c] sm:$0xf]
      %s5930 = scalar_lea.vmem %s4, 3
      %v5931 = vld [vmem:[%s5930] sm:$0x1]
      %v5933 = vlaneseq
      %v5934 = vshrl.u32 %v5933, 7
      %v5935 = vsub.s32 0, %v5934
      %v5936 = vrot.slane %v5931, %v5935
      %v5946 = vunpack.c.l.b16 %v5922
      %v5947 = vunpack.c.l.b16 %v5923
      %v5948 = vunpack.c.l.b16 %v5924
      %v5949 = vunpack.c.l.b16 %v5925
      %v5950 = vunpack.c.l.b16 %v5926
      %v5951 = vunpack.c.l.b16 %v5927
      %v5952 = vunpack.c.l.b16 %v5928
      %v5953 = vunpack.c.l.b16 %v5929
      %v5954 = vpack.c.b16 %v5947, %v5946
      %v5955 = vpack.c.b16 %v5949, %v5948
      %v5956 = vpack.c.b16 %v5951, %v5950
      %v5957 = vpack.c.b16 %v5953, %v5952
      %v5963 = vsel %vm3220, %v5909, 0
      %v5966 = vsel %vm3220, %v5910, 0
      %v5969 = vsel %vm3220, %v5911, 0
      %v5972 = vsel %vm3220, %v5912, 0
      %v5975 = vsel %vm3220, %v5913, 0
      %v5978 = vsel %vm3220, %v5914, 0
      %v5981 = vsel %vm3220, %v5915, 0
      %v5984 = vsel %vm3220, %v5916, 0
      %v5987 = vsel %vm3220, %v5917, 0
      %v5990 = vsel %vm3220, %v5918, 0
      %v5993 = vsel %vm3220, %v5919, 0
      %v5996 = vsel %vm3220, %v5920, 0
      %5998 = vmatprep.subr.bf16.mxu0 0
      %5999 = vmatpush1.bf16.msra.mxu0 %v5954
      %6000 = vmatprep.subr.bf16.mxu0 0
      %6001 = vmatpush1.bf16.msra.mxu0 %v5955
      %6002 = vmatprep.subr.bf16.mxu0 0
      %6003 = vmatpush1.bf16.msra.mxu0 %v5956
      %6004 = vmatprep.subr.bf16.mxu0 0
      %6005 = vmatpush1.bf16.msra.mxu0 %v5957
      %6006 = vmatprep.subr.bf16.mxu0 0
      %6007 = vmatpush1.bf16.msra.mxu0 0
      %6008 = vmatprep.subr.bf16.mxu0 0
      %6009 = vmatpush1.bf16.msra.mxu0 0
      %6010 = vmatprep.subr.bf16.mxu0 0
      %6011 = vmatpush1.bf16.msra.mxu0 0
      %6012 = vmatprep.subr.bf16.mxu0 0
      %6013 = vmatpush1.bf16.msra.mxu0 0
      %6014 = vmatprep.subr.bf16.mxu0 0
      %6015 = vmatpush1.bf16.msra.mxu0 0
      %6016 = vmatprep.subr.bf16.mxu0 0
      %6017 = vmatpush1.bf16.msra.mxu0 0
      %6018 = vmatprep.subr.bf16.mxu0 0
      %6019 = vmatpush1.bf16.msra.mxu0 0
      %6020 = vmatprep.subr.bf16.mxu0 0
      %6021 = vmatpush1.bf16.msra.mxu0 0
      %6022 = vmatprep.subr.bf16.mxu0 0
      %6023 = vmatpush1.bf16.msra.mxu0 0
      %6024 = vmatprep.subr.bf16.mxu0 0
      %6025 = vmatpush1.bf16.msra.mxu0 0
      %6026 = vmatprep.subr.bf16.mxu0 0
      %6027 = vmatpush1.bf16.msra.mxu0 0
      %6028 = vmatprep.subr.bf16.mxu0 0
      %6029 = vmatpush1.bf16.msra.mxu0 0
      %6030 = vmatprep.mubr.bf16.mxu0 0
      %6031 = vmatmul.mubr.bf16.gmra.mrb[0].mxu0 %v5963
      %v6032 = vpop.f32.mrb[0].mxu0
      %v6033 = vadd.f32 %v5936, %v6032
      %v6034 = vpop.f32.mrb[0].mxu0
      %v6035 = vpop.f32.mrb[0].mxu0
      %v6036 = vadd.f32 %v5936, %v6035
      %v6037 = vpop.f32.mrb[0].mxu0
      %6038 = vmatprep.mubr.bf16.mxu0 0
      %6039 = vmatmul.mubr.bf16.gmra.mrb[0].mxu0 %v5966
      %v6040 = vpop.f32.mrb[0].mxu0
      %v6041 = vadd.f32 %v5936, %v6040
      %v6042 = vpop.f32.mrb[0].mxu0
      %v6043 = vpop.f32.mrb[0].mxu0
      %v6044 = vadd.f32 %v5936, %v6043
      %v6045 = vpop.f32.mrb[0].mxu0
      %6046 = vmatprep.mubr.bf16.mxu0 0
      %6047 = vmatmul.mubr.bf16.gmra.mrb[0].mxu0 %v5969
      %v6048 = vpop.f32.mrb[0].mxu0
      %v6049 = vadd.f32 %v5936, %v6048
      %v6050 = vpop.f32.mrb[0].mxu0
      %v6051 = vpop.f32.mrb[0].mxu0
      %v6052 = vadd.f32 %v5936, %v6051
      %v6053 = vpop.f32.mrb[0].mxu0
      %6054 = vmatprep.mubr.bf16.mxu0 0
      %6055 = vmatmul.mubr.bf16.gmra.mrb[0].mxu0 %v5972
      %v6056 = vpop.f32.mrb[0].mxu0
      %v6057 = vadd.f32 %v5936, %v6056
      %v6058 = vpop.f32.mrb[0].mxu0
      %v6059 = vpop.f32.mrb[0].mxu0
      %v6060 = vadd.f32 %v5936, %v6059
      %v6061 = vpop.f32.mrb[0].mxu0
      %6062 = vmatprep.mubr.bf16.mxu0 0
      %6063 = vmatmul.mubr.bf16.gmra.mrb[0].mxu0 %v5975
      %v6064 = vpop.f32.mrb[0].mxu0
      %v6065 = vadd.f32 %v5936, %v6064
      %v6066 = vpop.f32.mrb[0].mxu0
      %v6067 = vpop.f32.mrb[0].mxu0
      %v6068 = vadd.f32 %v5936, %v6067
      %v6069 = vpop.f32.mrb[0].mxu0
      %6070 = vmatprep.mubr.bf16.mxu0 0
      %6071 = vmatmul.mubr.bf16.gmra.mrb[0].mxu0 %v5978
      %v6072 = vpop.f32.mrb[0].mxu0
      %v6073 = vadd.f32 %v5936, %v6072
      %v6074 = vpop.f32.mrb[0].mxu0
      %v6075 = vpop.f32.mrb[0].mxu0
      %v6076 = vadd.f32 %v5936, %v6075
      %v6077 = vpop.f32.mrb[0].mxu0
      %6078 = vmatprep.mubr.bf16.mxu0 0
      %6079 = vmatmul.mubr.bf16.gmra.mrb[0].mxu0 %v5981
      %v6080 = vpop.f32.mrb[0].mxu0
      %v6081 = vadd.f32 %v5936, %v6080
      %v6082 = vpop.f32.mrb[0].mxu0
      %v6083 = vpop.f32.mrb[0].mxu0
      %v6084 = vadd.f32 %v5936, %v6083
      %v6085 = vpop.f32.mrb[0].mxu0
      %6086 = vmatprep.mubr.bf16.mxu0 0
      %6087 = vmatmul.mubr.bf16.gmra.mrb[0].mxu0 %v5984
      %v6088 = vpop.f32.mrb[0].mxu0
      %v6089 = vadd.f32 %v5936, %v6088
      %v6090 = vpop.f32.mrb[0].mxu0
      %v6091 = vpop.f32.mrb[0].mxu0
      %v6092 = vadd.f32 %v5936, %v6091
      %v6093 = vpop.f32.mrb[0].mxu0
      %6094 = vmatprep.mubr.bf16.mxu0 0
      %6095 = vmatmul.mubr.bf16.gmra.mrb[0].mxu0 %v5987
      %v6096 = vpop.f32.mrb[0].mxu0
      %v6097 = vadd.f32 %v5936, %v6096
      %v6098 = vpop.f32.mrb[0].mxu0
      %v6099 = vpop.f32.mrb[0].mxu0
      %v6100 = vadd.f32 %v5936, %v6099
      %v6101 = vpop.f32.mrb[0].mxu0
      %6102 = vmatprep.mubr.bf16.mxu0 0
      %6103 = vmatmul.mubr.bf16.gmra.mrb[0].mxu0 %v5990
      %v6104 = vpop.f32.mrb[0].mxu0
      %v6105 = vadd.f32 %v5936, %v6104
      %v6106 = vpop.f32.mrb[0].mxu0
      %v6107 = vpop.f32.mrb[0].mxu0
      %v6108 = vadd.f32 %v5936, %v6107
      %v6109 = vpop.f32.mrb[0].mxu0
      %6110 = vmatprep.mubr.bf16.mxu0 0
      %6111 = vmatmul.mubr.bf16.gmra.mrb[0].mxu0 %v5993
      %v6112 = vpop.f32.mrb[0].mxu0
      %v6113 = vadd.f32 %v5936, %v6112
      %v6114 = vpop.f32.mrb[0].mxu0
      %v6115 = vpop.f32.mrb[0].mxu0
      %v6116 = vadd.f32 %v5936, %v6115
      %v6117 = vpop.f32.mrb[0].mxu0
      %6118 = vmatprep.mubr.bf16.mxu0 0
      %6119 = vmatmul.mubr.bf16.gmra.mrb[0].mxu0 %v5996
      %v6120 = vpop.f32.mrb[0].mxu0
      %v6121 = vadd.f32 %v5936, %v6120
      %v6122 = vpop.f32.mrb[0].mxu0
      %v6123 = vpop.f32.mrb[0].mxu0
      %v6124 = vpop.f32.mrb[0].mxu0
      %6125 = vdwg.mxu0
      %v6126 = vmax.f32 %v6033, 0.0
      %v6127 = vmax.f32 %v6036, 0.0
      %v6128 = vmax.f32 %v6041, 0.0
      %v6129 = vmax.f32 %v6044, 0.0
      %v6130 = vmax.f32 %v6049, 0.0
      %v6131 = vmax.f32 %v6052, 0.0
      %v6132 = vmax.f32 %v6057, 0.0
      %v6133 = vmax.f32 %v6060, 0.0
      %v6134 = vmax.f32 %v6065, 0.0
      %v6135 = vmax.f32 %v6068, 0.0
      %v6136 = vmax.f32 %v6073, 0.0
      %v6137 = vmax.f32 %v6076, 0.0
      %v6138 = vmax.f32 %v6081, 0.0
      %v6139 = vmax.f32 %v6084, 0.0
      %v6140 = vmax.f32 %v6089, 0.0
      %v6141 = vmax.f32 %v6092, 0.0
      %v6142 = vmax.f32 %v6097, 0.0
      %v6143 = vmax.f32 %v6100, 0.0
      %v6144 = vmax.f32 %v6105, 0.0
      %v6145 = vmax.f32 %v6108, 0.0
      %v6146 = vmax.f32 %v6113, 0.0
      %v6147 = vmax.f32 %v6116, 0.0
      %v6148 = vmax.f32 %v6121, 0.0
      %v6149 = vpack.c.bf16 %v6127, %v6126
      %v6150 = vpack.c.bf16 %v6129, %v6128
      %v6151 = vpack.c.bf16 %v6131, %v6130
      %v6152 = vpack.c.bf16 %v6133, %v6132
      %v6153 = vpack.c.bf16 %v6135, %v6134
      %v6154 = vpack.c.bf16 %v6137, %v6136
      %v6155 = vpack.c.bf16 %v6139, %v6138
      %v6156 = vpack.c.bf16 %v6141, %v6140
      %v6157 = vpack.c.bf16 %v6143, %v6142
      %v6158 = vpack.c.bf16 %v6145, %v6144
      %v6159 = vpack.c.bf16 %v6147, %v6146
      %v6160 = vpack.c.bf16 %v6148, %v6148
      %s6161 = scalar_lea.vmem %s5, 48
      %v6162 = vld [vmem:[%s6161] sm:$0xf]
      %v6163 = vld [vmem:[%s6161 + $0x4] sm:$0xf]
      %v6164 = vld [vmem:[%s6161 + $0x8] sm:$0xf]
      %v6165 = vld [vmem:[%s6161 + $0xc] sm:$0xf]
      %s6166 = scalar_lea.vmem %s6, 3
      %v6167 = vld [vmem:[%s6166] sm:$0x1]
      %v6169 = vlaneseq
      %v6170 = vshrl.u32 %v6169, 7
      %v6171 = vsub.s32 0, %v6170
      %v6172 = vrot.slane %v6167, %v6171
      %v6178 = vunpack.c.l.b16 %v6162
      %v6179 = vunpack.c.l.b16 %v6163
      %v6180 = vunpack.c.l.b16 %v6164
      %v6181 = vunpack.c.l.b16 %v6165
      %v6182 = vpack.c.b16 %v6179, %v6178
      %v6183 = vpack.c.b16 %v6181, %v6180
      %v6187 = vsel %vm2262, %v6149, 0
      %v6190 = vsel %vm2262, %v6150, 0
      %v6193 = vsel %vm2262, %v6151, 0
      %v6196 = vsel %vm2262, %v6152, 0
      %v6199 = vsel %vm2262, %v6153, 0
      %v6202 = vsel %vm2262, %v6154, 0
      %v6205 = vsel %vm2262, %v6155, 0
      %v6208 = vsel %vm2262, %v6156, 0
      %v6211 = vsel %vm2262, %v6157, 0
      %v6214 = vsel %vm2262, %v6158, 0
      %v6217 = vsel %vm2262, %v6159, 0
      %v6220 = vsel %vm2262, %v6160, 0
      %6222 = vmatprep.subr.bf16.mxu0 0
      %6223 = vmatpush1.bf16.msra.mxu0 %v6182
      %6224 = vmatprep.subr.bf16.mxu0 0
      %6225 = vmatpush1.bf16.msra.mxu0 %v6183
      %6226 = vmatprep.subr.bf16.mxu0 0
      %6227 = vmatpush1.bf16.msra.mxu0 0
      %6228 = vmatprep.subr.bf16.mxu0 0
      %6229 = vmatpush1.bf16.msra.mxu0 0
      %6230 = vmatprep.subr.bf16.mxu0 0
      %6231 = vmatpush1.bf16.msra.mxu0 0
      %6232 = vmatprep.subr.bf16.mxu0 0
      %6233 = vmatpush1.bf16.msra.mxu0 0
      %6234 = vmatprep.subr.bf16.mxu0 0
      %6235 = vmatpush1.bf16.msra.mxu0 0
      %6236 = vmatprep.subr.bf16.mxu0 0
      %6237 = vmatpush1.bf16.msra.mxu0 0
      %6238 = vmatprep.subr.bf16.mxu0 0
      %6239 = vmatpush1.bf16.msra.mxu0 0
      %6240 = vmatprep.subr.bf16.mxu0 0
      %6241 = vmatpush1.bf16.msra.mxu0 0
      %6242 = vmatprep.subr.bf16.mxu0 0
      %6243 = vmatpush1.bf16.msra.mxu0 0
      %6244 = vmatprep.subr.bf16.mxu0 0
      %6245 = vmatpush1.bf16.msra.mxu0 0
      %6246 = vmatprep.subr.bf16.mxu0 0
      %6247 = vmatpush1.bf16.msra.mxu0 0
      %6248 = vmatprep.subr.bf16.mxu0 0
      %6249 = vmatpush1.bf16.msra.mxu0 0
      %6250 = vmatprep.subr.bf16.mxu0 0
      %6251 = vmatpush1.bf16.msra.mxu0 0
      %6252 = vmatprep.subr.bf16.mxu0 0
      %6253 = vmatpush1.bf16.msra.mxu0 0
      %6254 = vmatprep.mubr.bf16.mxu0 0
      %6255 = vmatmul.mubr.bf16.gmra.mrb[0].mxu0 %v6187
      %v6256 = vpop.f32.mrb[0].mxu0
      %v6257 = vadd.f32 %v6172, %v6256
      %v6258 = vpop.f32.mrb[0].mxu0
      %v6259 = vpop.f32.mrb[0].mxu0
      %v6260 = vadd.f32 %v6172, %v6259
      %v6261 = vpop.f32.mrb[0].mxu0
      %6262 = vmatprep.mubr.bf16.mxu0 0
      %6263 = vmatmul.mubr.bf16.gmra.mrb[0].mxu0 %v6190
      %v6264 = vpop.f32.mrb[0].mxu0
      %v6265 = vadd.f32 %v6172, %v6264
      %v6266 = vpop.f32.mrb[0].mxu0
      %v6267 = vpop.f32.mrb[0].mxu0
      %v6268 = vadd.f32 %v6172, %v6267
      %v6269 = vpop.f32.mrb[0].mxu0
      %6270 = vmatprep.mubr.bf16.mxu0 0
      %6271 = vmatmul.mubr.bf16.gmra.mrb[0].mxu0 %v6193
      %v6272 = vpop.f32.mrb[0].mxu0
      %v6273 = vadd.f32 %v6172, %v6272
      %v6274 = vpop.f32.mrb[0].mxu0
      %v6275 = vpop.f32.mrb[0].mxu0
      %v6276 = vadd.f32 %v6172, %v6275
      %v6277 = vpop.f32.mrb[0].mxu0
      %6278 = vmatprep.mubr.bf16.mxu0 0
      %6279 = vmatmul.mubr.bf16.gmra.mrb[0].mxu0 %v6196
      %v6280 = vpop.f32.mrb[0].mxu0
      %v6281 = vadd.f32 %v6172, %v6280
      %v6282 = vpop.f32.mrb[0].mxu0
      %v6283 = vpop.f32.mrb[0].mxu0
      %v6284 = vadd.f32 %v6172, %v6283
      %v6285 = vpop.f32.mrb[0].mxu0
      %6286 = vmatprep.mubr.bf16.mxu0 0
      %6287 = vmatmul.mubr.bf16.gmra.mrb[0].mxu0 %v6199
      %v6288 = vpop.f32.mrb[0].mxu0
      %v6289 = vadd.f32 %v6172, %v6288
      %v6290 = vpop.f32.mrb[0].mxu0
      %v6291 = vpop.f32.mrb[0].mxu0
      %v6292 = vadd.f32 %v6172, %v6291
      %v6293 = vpop.f32.mrb[0].mxu0
      %6294 = vmatprep.mubr.bf16.mxu0 0
      %6295 = vmatmul.mubr.bf16.gmra.mrb[0].mxu0 %v6202
      %v6296 = vpop.f32.mrb[0].mxu0
      %v6297 = vadd.f32 %v6172, %v6296
      %v6298 = vpop.f32.mrb[0].mxu0
      %v6299 = vpop.f32.mrb[0].mxu0
      %v6300 = vadd.f32 %v6172, %v6299
      %v6301 = vpop.f32.mrb[0].mxu0
      %6302 = vmatprep.mubr.bf16.mxu0 0
      %6303 = vmatmul.mubr.bf16.gmra.mrb[0].mxu0 %v6205
      %v6304 = vpop.f32.mrb[0].mxu0
      %v6305 = vadd.f32 %v6172, %v6304
      %v6306 = vpop.f32.mrb[0].mxu0
      %v6307 = vpop.f32.mrb[0].mxu0
      %v6308 = vadd.f32 %v6172, %v6307
      %v6309 = vpop.f32.mrb[0].mxu0
      %6310 = vmatprep.mubr.bf16.mxu0 0
      %6311 = vmatmul.mubr.bf16.gmra.mrb[0].mxu0 %v6208
      %v6312 = vpop.f32.mrb[0].mxu0
      %v6313 = vadd.f32 %v6172, %v6312
      %v6314 = vpop.f32.mrb[0].mxu0
      %v6315 = vpop.f32.mrb[0].mxu0
      %v6316 = vadd.f32 %v6172, %v6315
      %v6317 = vpop.f32.mrb[0].mxu0
      %6318 = vmatprep.mubr.bf16.mxu0 0
      %6319 = vmatmul.mubr.bf16.gmra.mrb[0].mxu0 %v6211
      %v6320 = vpop.f32.mrb[0].mxu0
      %v6321 = vadd.f32 %v6172, %v6320
      %v6322 = vpop.f32.mrb[0].mxu0
      %v6323 = vpop.f32.mrb[0].mxu0
      %v6324 = vadd.f32 %v6172, %v6323
      %v6325 = vpop.f32.mrb[0].mxu0
      %6326 = vmatprep.mubr.bf16.mxu0 0
      %6327 = vmatmul.mubr.bf16.gmra.mrb[0].mxu0 %v6214
      %v6328 = vpop.f32.mrb[0].mxu0
      %v6329 = vadd.f32 %v6172, %v6328
      %v6330 = vpop.f32.mrb[0].mxu0
      %v6331 = vpop.f32.mrb[0].mxu0
      %v6332 = vadd.f32 %v6172, %v6331
      %v6333 = vpop.f32.mrb[0].mxu0
      %6334 = vmatprep.mubr.bf16.mxu0 0
      %6335 = vmatmul.mubr.bf16.gmra.mrb[0].mxu0 %v6217
      %v6336 = vpop.f32.mrb[0].mxu0
      %v6337 = vadd.f32 %v6172, %v6336
      %v6338 = vpop.f32.mrb[0].mxu0
      %v6339 = vpop.f32.mrb[0].mxu0
      %v6340 = vadd.f32 %v6172, %v6339
      %v6341 = vpop.f32.mrb[0].mxu0
      %6342 = vmatprep.mubr.bf16.mxu0 0
      %6343 = vmatmul.mubr.bf16.gmra.mrb[0].mxu0 %v6220
      %v6344 = vpop.f32.mrb[0].mxu0
      %v6345 = vadd.f32 %v6172, %v6344
      %v6346 = vpop.f32.mrb[0].mxu0
      %v6347 = vpop.f32.mrb[0].mxu0
      %v6348 = vpop.f32.mrb[0].mxu0
      %6349 = vdwg.mxu0
      %v6350 = vadd.f32 %v5886, %v6257
      %v6351 = vadd.f32 %v5887, %v6260
      %v6352 = vadd.f32 %v5888, %v6265
      %v6353 = vadd.f32 %v5889, %v6268
      %v6354 = vadd.f32 %v5890, %v6273
      %v6355 = vadd.f32 %v5891, %v6276
      %v6356 = vadd.f32 %v5892, %v6281
      %v6357 = vadd.f32 %v5893, %v6284
      %v6358 = vadd.f32 %v5894, %v6289
      %v6359 = vadd.f32 %v5895, %v6292
      %v6360 = vadd.f32 %v5896, %v6297
      %v6361 = vadd.f32 %v5897, %v6300
      %v6362 = vadd.f32 %v5898, %v6305
      %v6363 = vadd.f32 %v5899, %v6308
      %v6364 = vadd.f32 %v5900, %v6313
      %v6365 = vadd.f32 %v5901, %v6316
      %v6366 = vadd.f32 %v5902, %v6321
      %v6367 = vadd.f32 %v5903, %v6324
      %v6368 = vadd.f32 %v5904, %v6329
      %v6369 = vadd.f32 %v5905, %v6332
      %v6370 = vadd.f32 %v5906, %v6337
      %v6371 = vadd.f32 %v5907, %v6340
      %v6372 = vadd.f32 %v5908, %v6345
      %6373 = vst.msk [vmem:[#allocation2] sm:$0xff] %vm3220, %v6350
      %6374 = vst.msk [vmem:[#allocation2 + $0x8] sm:$0xff] %vm3220, %v6351
      %6375 = vst.msk [vmem:[#allocation2 + $0x10] sm:$0xff] %vm3220, %v6352
      %6376 = vst.msk [vmem:[#allocation2 + $0x18] sm:$0xff] %vm3220, %v6353
      %6377 = vst.msk [vmem:[#allocation2 + $0x20] sm:$0xff] %vm3220, %v6354
      %6378 = vst.msk [vmem:[#allocation2 + $0x28] sm:$0xff] %vm3220, %v6355
      %6379 = vst.msk [vmem:[#allocation2 + $0x30] sm:$0xff] %vm3220, %v6356
      %6380 = vst.msk [vmem:[#allocation2 + $0x38] sm:$0xff] %vm3220, %v6357
      %6381 = vst.msk [vmem:[#allocation2 + $0x40] sm:$0xff] %vm3220, %v6358
      %6382 = vst.msk [vmem:[#allocation2 + $0x48] sm:$0xff] %vm3220, %v6359
      %6383 = vst.msk [vmem:[#allocation2 + $0x50] sm:$0xff] %vm3220, %v6360
      %6384 = vst.msk [vmem:[#allocation2 + $0x58] sm:$0xff] %vm3220, %v6361
      %6385 = vst.msk [vmem:[#allocation2 + $0x60] sm:$0xff] %vm3220, %v6362
      %6386 = vst.msk [vmem:[#allocation2 + $0x68] sm:$0xff] %vm3220, %v6363
      %6387 = vst.msk [vmem:[#allocation2 + $0x70] sm:$0xff] %vm3220, %v6364
      %6388 = vst.msk [vmem:[#allocation2 + $0x78] sm:$0xff] %vm3220, %v6365
      %6389 = vst.msk [vmem:[#allocation2 + $0x80] sm:$0xff] %vm3220, %v6366
      %6390 = vst.msk [vmem:[#allocation2 + $0x88] sm:$0xff] %vm3220, %v6367
      %6391 = vst.msk [vmem:[#allocation2 + $0x90] sm:$0xff] %vm3220, %v6368
      %6392 = vst.msk [vmem:[#allocation2 + $0x98] sm:$0xff] %vm3220, %v6369
      %6393 = vst.msk [vmem:[#allocation2 + $0xa0] sm:$0xff] %vm3220, %v6370
      %6394 = vst.msk [vmem:[#allocation2 + $0xa8] sm:$0xff] %vm3220, %v6371
      %6395 = vst.msk [vmem:[#allocation2 + $0xb0] sm:$0xf] %vm4358, %v6372
      %v6396 = vld [vmem:[#allocation2] sm:$0xff]
      %v6397 = vld [vmem:[#allocation2 + $0x8] sm:$0xff]
      %v6398 = vld [vmem:[#allocation2 + $0x10] sm:$0xff]
      %v6399 = vld [vmem:[#allocation2 + $0x18] sm:$0xff]
      %v6400 = vld [vmem:[#allocation2 + $0x20] sm:$0xff]
      %v6401 = vld [vmem:[#allocation2 + $0x28] sm:$0xff]
      %v6402 = vld [vmem:[#allocation2 + $0x30] sm:$0xff]
      %v6403 = vld [vmem:[#allocation2 + $0x38] sm:$0xff]
      %v6404 = vld [vmem:[#allocation2 + $0x40] sm:$0xff]
      %v6405 = vld [vmem:[#allocation2 + $0x48] sm:$0xff]
      %v6406 = vld [vmem:[#allocation2 + $0x50] sm:$0xff]
      %v6407 = vld [vmem:[#allocation2 + $0x58] sm:$0xff]
      %v6408 = vld [vmem:[#allocation2 + $0x60] sm:$0xff]
      %v6409 = vld [vmem:[#allocation2 + $0x68] sm:$0xff]
      %v6410 = vld [vmem:[#allocation2 + $0x70] sm:$0xff]
      %v6411 = vld [vmem:[#allocation2 + $0x78] sm:$0xff]
      %v6412 = vld [vmem:[#allocation2 + $0x80] sm:$0xff]
      %v6413 = vld [vmem:[#allocation2 + $0x88] sm:$0xff]
      %v6414 = vld [vmem:[#allocation2 + $0x90] sm:$0xff]
      %v6415 = vld [vmem:[#allocation2 + $0x98] sm:$0xff]
      %v6416 = vld [vmem:[#allocation2 + $0xa0] sm:$0xff]
      %v6417 = vld [vmem:[#allocation2 + $0xa8] sm:$0xff]
      %v6418 = vld [vmem:[#allocation2 + $0xb0] sm:$0xf]
      %v6442 = vcombine.high %v6396, %v6396
      %v6444 = vunpack.c.l.s4 1983009808
      %v6445 = vunpack.c.0.s8 %v6444
      %v6446 = vlaneseq
      %v6447 = vshrl.u32 %v6446, 7
      %v6448 = vsub.s32 %v6445, %v6447
      %v6449 = vrot.slane %v6396, %v6448
      %v6451 = vunpack.c.l.s4 1983009808
      %v6452 = vunpack.c.0.s8 %v6451
      %v6453 = vlaneseq
      %v6454 = vshrl.u32 %v6453, 7
      %v6455 = vsub.s32 %v6452, %v6454
      %v6456 = vrot.slane %v6442, %v6455
      %v6457 = vcombine.high %v6449, %v6449
      %v6458 = vcombine.high %v6456, %v6456
      %v6459 = vcombine.high %v6397, %v6397
      %v6461 = vunpack.c.l.s4 1983009808
      %v6462 = vunpack.c.0.s8 %v6461
      %v6463 = vlaneseq
      %v6464 = vshrl.u32 %v6463, 7
      %v6465 = vsub.s32 %v6462, %v6464
      %v6466 = vrot.slane %v6397, %v6465
      %v6468 = vunpack.c.l.s4 1983009808
      %v6469 = vunpack.c.0.s8 %v6468
      %v6470 = vlaneseq
      %v6471 = vshrl.u32 %v6470, 7
      %v6472 = vsub.s32 %v6469, %v6471
      %v6473 = vrot.slane %v6459, %v6472
      %v6474 = vcombine.high %v6466, %v6466
      %v6475 = vcombine.high %v6473, %v6473
      %v6476 = vcombine.high %v6398, %v6398
      %v6478 = vunpack.c.l.s4 1983009808
      %v6479 = vunpack.c.0.s8 %v6478
      %v6480 = vlaneseq
      %v6481 = vshrl.u32 %v6480, 7
      %v6482 = vsub.s32 %v6479, %v6481
      %v6483 = vrot.slane %v6398, %v6482
      %v6485 = vunpack.c.l.s4 1983009808
      %v6486 = vunpack.c.0.s8 %v6485
      %v6487 = vlaneseq
      %v6488 = vshrl.u32 %v6487, 7
      %v6489 = vsub.s32 %v6486, %v6488
      %v6490 = vrot.slane %v6476, %v6489
      %v6491 = vcombine.high %v6483, %v6483
      %v6492 = vcombine.high %v6490, %v6490
      %v6493 = vcombine.high %v6399, %v6399
      %v6495 = vunpack.c.l.s4 1983009808
      %v6496 = vunpack.c.0.s8 %v6495
      %v6497 = vlaneseq
      %v6498 = vshrl.u32 %v6497, 7
      %v6499 = vsub.s32 %v6496, %v6498
      %v6500 = vrot.slane %v6399, %v6499
      %v6502 = vunpack.c.l.s4 1983009808
      %v6503 = vunpack.c.0.s8 %v6502
      %v6504 = vlaneseq
      %v6505 = vshrl.u32 %v6504, 7
      %v6506 = vsub.s32 %v6503, %v6505
      %v6507 = vrot.slane %v6493, %v6506
      %v6508 = vcombine.high %v6500, %v6500
      %v6509 = vcombine.high %v6507, %v6507
      %v6510 = vcombine.high %v6400, %v6400
      %v6512 = vunpack.c.l.s4 1983009808
      %v6513 = vunpack.c.0.s8 %v6512
      %v6514 = vlaneseq
      %v6515 = vshrl.u32 %v6514, 7
      %v6516 = vsub.s32 %v6513, %v6515
      %v6517 = vrot.slane %v6400, %v6516
      %v6519 = vunpack.c.l.s4 1983009808
      %v6520 = vunpack.c.0.s8 %v6519
      %v6521 = vlaneseq
      %v6522 = vshrl.u32 %v6521, 7
      %v6523 = vsub.s32 %v6520, %v6522
      %v6524 = vrot.slane %v6510, %v6523
      %v6525 = vcombine.high %v6517, %v6517
      %v6526 = vcombine.high %v6524, %v6524
      %v6527 = vcombine.high %v6401, %v6401
      %v6529 = vunpack.c.l.s4 1983009808
      %v6530 = vunpack.c.0.s8 %v6529
      %v6531 = vlaneseq
      %v6532 = vshrl.u32 %v6531, 7
      %v6533 = vsub.s32 %v6530, %v6532
      %v6534 = vrot.slane %v6401, %v6533
      %v6536 = vunpack.c.l.s4 1983009808
      %v6537 = vunpack.c.0.s8 %v6536
      %v6538 = vlaneseq
      %v6539 = vshrl.u32 %v6538, 7
      %v6540 = vsub.s32 %v6537, %v6539
      %v6541 = vrot.slane %v6527, %v6540
      %v6542 = vcombine.high %v6534, %v6534
      %v6543 = vcombine.high %v6541, %v6541
      %v6544 = vcombine.high %v6402, %v6402
      %v6546 = vunpack.c.l.s4 1983009808
      %v6547 = vunpack.c.0.s8 %v6546
      %v6548 = vlaneseq
      %v6549 = vshrl.u32 %v6548, 7
      %v6550 = vsub.s32 %v6547, %v6549
      %v6551 = vrot.slane %v6402, %v6550
      %v6553 = vunpack.c.l.s4 1983009808
      %v6554 = vunpack.c.0.s8 %v6553
      %v6555 = vlaneseq
      %v6556 = vshrl.u32 %v6555, 7
      %v6557 = vsub.s32 %v6554, %v6556
      %v6558 = vrot.slane %v6544, %v6557
      %v6559 = vcombine.high %v6551, %v6551
      %v6560 = vcombine.high %v6558, %v6558
      %v6561 = vcombine.high %v6403, %v6403
      %v6563 = vunpack.c.l.s4 1983009808
      %v6564 = vunpack.c.0.s8 %v6563
      %v6565 = vlaneseq
      %v6566 = vshrl.u32 %v6565, 7
      %v6567 = vsub.s32 %v6564, %v6566
      %v6568 = vrot.slane %v6403, %v6567
      %v6570 = vunpack.c.l.s4 1983009808
      %v6571 = vunpack.c.0.s8 %v6570
      %v6572 = vlaneseq
      %v6573 = vshrl.u32 %v6572, 7
      %v6574 = vsub.s32 %v6571, %v6573
      %v6575 = vrot.slane %v6561, %v6574
      %v6576 = vcombine.high %v6568, %v6568
      %v6577 = vcombine.high %v6575, %v6575
      %v6578 = vcombine.high %v6404, %v6404
      %v6580 = vunpack.c.l.s4 1983009808
      %v6581 = vunpack.c.0.s8 %v6580
      %v6582 = vlaneseq
      %v6583 = vshrl.u32 %v6582, 7
      %v6584 = vsub.s32 %v6581, %v6583
      %v6585 = vrot.slane %v6404, %v6584
      %v6587 = vunpack.c.l.s4 1983009808
      %v6588 = vunpack.c.0.s8 %v6587
      %v6589 = vlaneseq
      %v6590 = vshrl.u32 %v6589, 7
      %v6591 = vsub.s32 %v6588, %v6590
      %v6592 = vrot.slane %v6578, %v6591
      %v6593 = vcombine.high %v6585, %v6585
      %v6594 = vcombine.high %v6592, %v6592
      %v6595 = vcombine.high %v6405, %v6405
      %v6597 = vunpack.c.l.s4 1983009808
      %v6598 = vunpack.c.0.s8 %v6597
      %v6599 = vlaneseq
      %v6600 = vshrl.u32 %v6599, 7
      %v6601 = vsub.s32 %v6598, %v6600
      %v6602 = vrot.slane %v6405, %v6601
      %v6604 = vunpack.c.l.s4 1983009808
      %v6605 = vunpack.c.0.s8 %v6604
      %v6606 = vlaneseq
      %v6607 = vshrl.u32 %v6606, 7
      %v6608 = vsub.s32 %v6605, %v6607
      %v6609 = vrot.slane %v6595, %v6608
      %v6610 = vcombine.high %v6602, %v6602
      %v6611 = vcombine.high %v6609, %v6609
      %v6612 = vcombine.high %v6406, %v6406
      %v6614 = vunpack.c.l.s4 1983009808
      %v6615 = vunpack.c.0.s8 %v6614
      %v6616 = vlaneseq
      %v6617 = vshrl.u32 %v6616, 7
      %v6618 = vsub.s32 %v6615, %v6617
      %v6619 = vrot.slane %v6406, %v6618
      %v6621 = vunpack.c.l.s4 1983009808
      %v6622 = vunpack.c.0.s8 %v6621
      %v6623 = vlaneseq
      %v6624 = vshrl.u32 %v6623, 7
      %v6625 = vsub.s32 %v6622, %v6624
      %v6626 = vrot.slane %v6612, %v6625
      %v6627 = vcombine.high %v6619, %v6619
      %v6628 = vcombine.high %v6626, %v6626
      %v6629 = vcombine.high %v6407, %v6407
      %v6631 = vunpack.c.l.s4 1983009808
      %v6632 = vunpack.c.0.s8 %v6631
      %v6633 = vlaneseq
      %v6634 = vshrl.u32 %v6633, 7
      %v6635 = vsub.s32 %v6632, %v6634
      %v6636 = vrot.slane %v6407, %v6635
      %v6638 = vunpack.c.l.s4 1983009808
      %v6639 = vunpack.c.0.s8 %v6638
      %v6640 = vlaneseq
      %v6641 = vshrl.u32 %v6640, 7
      %v6642 = vsub.s32 %v6639, %v6641
      %v6643 = vrot.slane %v6629, %v6642
      %v6644 = vcombine.high %v6636, %v6636
      %v6645 = vcombine.high %v6643, %v6643
      %v6646 = vcombine.high %v6408, %v6408
      %v6648 = vunpack.c.l.s4 1983009808
      %v6649 = vunpack.c.0.s8 %v6648
      %v6650 = vlaneseq
      %v6651 = vshrl.u32 %v6650, 7
      %v6652 = vsub.s32 %v6649, %v6651
      %v6653 = vrot.slane %v6408, %v6652
      %v6655 = vunpack.c.l.s4 1983009808
      %v6656 = vunpack.c.0.s8 %v6655
      %v6657 = vlaneseq
      %v6658 = vshrl.u32 %v6657, 7
      %v6659 = vsub.s32 %v6656, %v6658
      %v6660 = vrot.slane %v6646, %v6659
      %v6661 = vcombine.high %v6653, %v6653
      %v6662 = vcombine.high %v6660, %v6660
      %v6663 = vcombine.high %v6409, %v6409
      %v6665 = vunpack.c.l.s4 1983009808
      %v6666 = vunpack.c.0.s8 %v6665
      %v6667 = vlaneseq
      %v6668 = vshrl.u32 %v6667, 7
      %v6669 = vsub.s32 %v6666, %v6668
      %v6670 = vrot.slane %v6409, %v6669
      %v6672 = vunpack.c.l.s4 1983009808
      %v6673 = vunpack.c.0.s8 %v6672
      %v6674 = vlaneseq
      %v6675 = vshrl.u32 %v6674, 7
      %v6676 = vsub.s32 %v6673, %v6675
      %v6677 = vrot.slane %v6663, %v6676
      %v6678 = vcombine.high %v6670, %v6670
      %v6679 = vcombine.high %v6677, %v6677
      %v6680 = vcombine.high %v6410, %v6410
      %v6682 = vunpack.c.l.s4 1983009808
      %v6683 = vunpack.c.0.s8 %v6682
      %v6684 = vlaneseq
      %v6685 = vshrl.u32 %v6684, 7
      %v6686 = vsub.s32 %v6683, %v6685
      %v6687 = vrot.slane %v6410, %v6686
      %v6689 = vunpack.c.l.s4 1983009808
      %v6690 = vunpack.c.0.s8 %v6689
      %v6691 = vlaneseq
      %v6692 = vshrl.u32 %v6691, 7
      %v6693 = vsub.s32 %v6690, %v6692
      %v6694 = vrot.slane %v6680, %v6693
      %v6695 = vcombine.high %v6687, %v6687
      %v6696 = vcombine.high %v6694, %v6694
      %v6697 = vcombine.high %v6411, %v6411
      %v6699 = vunpack.c.l.s4 1983009808
      %v6700 = vunpack.c.0.s8 %v6699
      %v6701 = vlaneseq
      %v6702 = vshrl.u32 %v6701, 7
      %v6703 = vsub.s32 %v6700, %v6702
      %v6704 = vrot.slane %v6411, %v6703
      %v6706 = vunpack.c.l.s4 1983009808
      %v6707 = vunpack.c.0.s8 %v6706
      %v6708 = vlaneseq
      %v6709 = vshrl.u32 %v6708, 7
      %v6710 = vsub.s32 %v6707, %v6709
      %v6711 = vrot.slane %v6697, %v6710
      %v6712 = vcombine.high %v6704, %v6704
      %v6713 = vcombine.high %v6711, %v6711
      %v6714 = vcombine.high %v6412, %v6412
      %v6716 = vunpack.c.l.s4 1983009808
      %v6717 = vunpack.c.0.s8 %v6716
      %v6718 = vlaneseq
      %v6719 = vshrl.u32 %v6718, 7
      %v6720 = vsub.s32 %v6717, %v6719
      %v6721 = vrot.slane %v6412, %v6720
      %v6723 = vunpack.c.l.s4 1983009808
      %v6724 = vunpack.c.0.s8 %v6723
      %v6725 = vlaneseq
      %v6726 = vshrl.u32 %v6725, 7
      %v6727 = vsub.s32 %v6724, %v6726
      %v6728 = vrot.slane %v6714, %v6727
      %v6729 = vcombine.high %v6721, %v6721
      %v6730 = vcombine.high %v6728, %v6728
      %v6731 = vcombine.high %v6413, %v6413
      %v6733 = vunpack.c.l.s4 1983009808
      %v6734 = vunpack.c.0.s8 %v6733
      %v6735 = vlaneseq
      %v6736 = vshrl.u32 %v6735, 7
      %v6737 = vsub.s32 %v6734, %v6736
      %v6738 = vrot.slane %v6413, %v6737
      %v6740 = vunpack.c.l.s4 1983009808
      %v6741 = vunpack.c.0.s8 %v6740
      %v6742 = vlaneseq
      %v6743 = vshrl.u32 %v6742, 7
      %v6744 = vsub.s32 %v6741, %v6743
      %v6745 = vrot.slane %v6731, %v6744
      %v6746 = vcombine.high %v6738, %v6738
      %v6747 = vcombine.high %v6745, %v6745
      %v6748 = vcombine.high %v6414, %v6414
      %v6750 = vunpack.c.l.s4 1983009808
      %v6751 = vunpack.c.0.s8 %v6750
      %v6752 = vlaneseq
      %v6753 = vshrl.u32 %v6752, 7
      %v6754 = vsub.s32 %v6751, %v6753
      %v6755 = vrot.slane %v6414, %v6754
      %v6757 = vunpack.c.l.s4 1983009808
      %v6758 = vunpack.c.0.s8 %v6757
      %v6759 = vlaneseq
      %v6760 = vshrl.u32 %v6759, 7
      %v6761 = vsub.s32 %v6758, %v6760
      %v6762 = vrot.slane %v6748, %v6761
      %v6763 = vcombine.high %v6755, %v6755
      %v6764 = vcombine.high %v6762, %v6762
      %v6765 = vcombine.high %v6415, %v6415
      %v6767 = vunpack.c.l.s4 1983009808
      %v6768 = vunpack.c.0.s8 %v6767
      %v6769 = vlaneseq
      %v6770 = vshrl.u32 %v6769, 7
      %v6771 = vsub.s32 %v6768, %v6770
      %v6772 = vrot.slane %v6415, %v6771
      %v6774 = vunpack.c.l.s4 1983009808
      %v6775 = vunpack.c.0.s8 %v6774
      %v6776 = vlaneseq
      %v6777 = vshrl.u32 %v6776, 7
      %v6778 = vsub.s32 %v6775, %v6777
      %v6779 = vrot.slane %v6765, %v6778
      %v6780 = vcombine.high %v6772, %v6772
      %v6781 = vcombine.high %v6779, %v6779
      %v6782 = vcombine.high %v6416, %v6416
      %v6784 = vunpack.c.l.s4 1983009808
      %v6785 = vunpack.c.0.s8 %v6784
      %v6786 = vlaneseq
      %v6787 = vshrl.u32 %v6786, 7
      %v6788 = vsub.s32 %v6785, %v6787
      %v6789 = vrot.slane %v6416, %v6788
      %v6791 = vunpack.c.l.s4 1983009808
      %v6792 = vunpack.c.0.s8 %v6791
      %v6793 = vlaneseq
      %v6794 = vshrl.u32 %v6793, 7
      %v6795 = vsub.s32 %v6792, %v6794
      %v6796 = vrot.slane %v6782, %v6795
      %v6797 = vcombine.high %v6789, %v6789
      %v6798 = vcombine.high %v6796, %v6796
      %v6799 = vcombine.high %v6417, %v6417
      %v6801 = vunpack.c.l.s4 1983009808
      %v6802 = vunpack.c.0.s8 %v6801
      %v6803 = vlaneseq
      %v6804 = vshrl.u32 %v6803, 7
      %v6805 = vsub.s32 %v6802, %v6804
      %v6806 = vrot.slane %v6417, %v6805
      %v6808 = vunpack.c.l.s4 1983009808
      %v6809 = vunpack.c.0.s8 %v6808
      %v6810 = vlaneseq
      %v6811 = vshrl.u32 %v6810, 7
      %v6812 = vsub.s32 %v6809, %v6811
      %v6813 = vrot.slane %v6799, %v6812
      %v6814 = vcombine.high %v6806, %v6806
      %v6815 = vcombine.high %v6813, %v6813
      %v6817 = vunpack.c.l.s4 1983009808
      %v6818 = vunpack.c.0.s8 %v6817
      %v6819 = vlaneseq
      %v6820 = vshrl.u32 %v6819, 7
      %v6821 = vsub.s32 %v6818, %v6820
      %v6822 = vrot.slane %v6418, %v6821
      %v6823 = vcombine.high %v6822, %v6822
      %v6824 = vlaneseq
      %v6825 = vshrl.u32 %v6824, 7
      %v6826 = vadd.s32 %v6825, 8
      %v6827 = vadd.s32 %v6825, 16
      %vm6828 = vcmp.eq.s32.totalorder %v6825, 0
      %vm6829 = vcmp.eq.s32.totalorder %v6826, 0
      %vm6830 = vcmp.eq.s32.totalorder %v6827, 0
      %vm6831 = vcmp.eq.s32.totalorder %v6825, 17
      %vm6832 = vcmp.eq.s32.totalorder %v6826, 17
      %vm6833 = vcmp.eq.s32.totalorder %v6827, 17
      %vm6834 = vmor %vm6828, %vm6831
      %vm6835 = vmor %vm6829, %vm6832
      %vm6836 = vmor %vm6830, %vm6833
      %p6837 = scmp.eq.s32.totalorder %s25, 0
      %s6838 = scalar_select %p6837, 1, 0
      %v6839 = vstv %s6838
      %vm6840 = vcmp.eq.s32.totalorder %v6839, 1
      %vm6841 = vmor %vm6834, %vm6840
      %vm6842 = vmor %vm6835, %vm6840
      %vm6843 = vmor %vm6836, %vm6840
      %vm6844 = vmor %vm6834, 0
      %vm6845 = vmor %vm6835, 0
      %vm6846 = vmor %vm6836, 0
      %p6847 = scmp.eq.s32.totalorder %s25, 1
      %s6848 = scalar_select %p6847, 1, 0
      %v6849 = vstv %s6848
      %vm6850 = vcmp.eq.s32.totalorder %v6849, 1
      %vm6851 = vmor %vm6841, 0
      %vm6852 = vmor %vm6842, 0
      %vm6853 = vmor %vm6843, 0
      %vm6854 = vmor %vm6844, 0
      %vm6855 = vmor %vm6845, 0
      %vm6856 = vmor %vm6846, 0
      %vm6857 = vmor %vm6844, %vm6850
      %vm6858 = vmor %vm6845, %vm6850
      %vm6859 = vmor %vm6846, %vm6850
      %v6860 = vsel %vm6851, 1, 0
      %v6861 = vsel %vm6852, 1, 0
      %v6862 = vsel %vm6853, 1, 0
      %v6863 = vsel %vm6854, 1, 0
      %v6864 = vsel %vm6855, 1, 0
      %v6865 = vsel %vm6856, 1, 0
      %v6866 = vsel %vm6857, 1, 0
      %v6867 = vsel %vm6858, 1, 0
      %v6868 = vsel %vm6859, 1, 0
      %vm6869 = vcmp.eq.s32.totalorder %v6860, 1
      %vm6870 = vcmp.eq.s32.totalorder %v6861, 1
      %vm6871 = vcmp.eq.s32.totalorder %v6862, 1
      %vm6872 = vcmp.eq.s32.totalorder %v6863, 1
      %vm6873 = vcmp.eq.s32.totalorder %v6864, 1
      %vm6874 = vcmp.eq.s32.totalorder %v6865, 1
      %vm6875 = vcmp.eq.s32.totalorder %v6866, 1
      %vm6876 = vcmp.eq.s32.totalorder %v6867, 1
      %vm6877 = vcmp.eq.s32.totalorder %v6868, 1
      %v6878 = vcombine.low %v6449, %v6457
      %v6879 = vcombine.low %v6456, %v6458
      %v6881 = vunpack.c.l.s4 1983009808
      %v6882 = vunpack.c.0.s8 %v6881
      %v6883 = vlaneseq
      %v6884 = vshrl.u32 %v6883, 7
      %v6885 = vsub.s32 %v6882, %v6884
      %v6886 = vrot.slane %v6878, %v6885
      %v6888 = vunpack.c.l.s4 1983009808
      %v6889 = vunpack.c.0.s8 %v6888
      %v6890 = vlaneseq
      %v6891 = vshrl.u32 %v6890, 7
      %v6892 = vsub.s32 %v6889, %v6891
      %v6893 = vrot.slane %v6879, %v6892
      %v6894 = vcombine.low %v6886, %v6893
      %v6895 = vcombine.low %v6466, %v6474
      %v6896 = vcombine.low %v6473, %v6475
      %v6898 = vunpack.c.l.s4 1983009808
      %v6899 = vunpack.c.0.s8 %v6898
      %v6900 = vlaneseq
      %v6901 = vshrl.u32 %v6900, 7
      %v6902 = vsub.s32 %v6899, %v6901
      %v6903 = vrot.slane %v6895, %v6902
      %v6905 = vunpack.c.l.s4 1983009808
      %v6906 = vunpack.c.0.s8 %v6905
      %v6907 = vlaneseq
      %v6908 = vshrl.u32 %v6907, 7
      %v6909 = vsub.s32 %v6906, %v6908
      %v6910 = vrot.slane %v6896, %v6909
      %v6911 = vcombine.low %v6903, %v6910
      %v6913 = vunpack.c.l.s4 1983009808
      %v6914 = vunpack.c.0.s8 %v6913
      %v6915 = vlaneseq
      %v6916 = vshrl.u32 %v6915, 7
      %v6917 = vsub.s32 %v6914, %v6916
      %v6918 = vrot.slane %v6483, %v6917
      %v6919 = vcombine.low %v6491, %v6490
      %v6920 = vcombine.low %v6492, %v6500
      %v6922 = vunpack.c.l.s4 1983009808
      %v6923 = vunpack.c.0.s8 %v6922
      %v6924 = vlaneseq
      %v6925 = vshrl.u32 %v6924, 7
      %v6926 = vsub.s32 %v6923, %v6925
      %v6927 = vrot.slane %v6919, %v6926
      %v6929 = vunpack.c.l.s4 1983009808
      %v6930 = vunpack.c.0.s8 %v6929
      %v6931 = vlaneseq
      %v6932 = vshrl.u32 %v6931, 7
      %v6933 = vsub.s32 %v6930, %v6932
      %v6934 = vrot.slane %v6920, %v6933
      %v6935 = vcombine.low %v6927, %v6934
      %v6936 = vcombine.low %v6508, %v6507
      %v6937 = vcombine.low %v6509, %v6517
      %v6939 = vunpack.c.l.s4 1983009808
      %v6940 = vunpack.c.0.s8 %v6939
      %v6941 = vlaneseq
      %v6942 = vshrl.u32 %v6941, 7
      %v6943 = vsub.s32 %v6940, %v6942
      %v6944 = vrot.slane %v6936, %v6943
      %v6946 = vunpack.c.l.s4 1983009808
      %v6947 = vunpack.c.0.s8 %v6946
      %v6948 = vlaneseq
      %v6949 = vshrl.u32 %v6948, 7
      %v6950 = vsub.s32 %v6947, %v6949
      %v6951 = vrot.slane %v6937, %v6950
      %v6952 = vcombine.low %v6944, %v6951
      %v6954 = vunpack.c.l.s4 1983009808
      %v6955 = vunpack.c.0.s8 %v6954
      %v6956 = vlaneseq
      %v6957 = vshrl.u32 %v6956, 7
      %v6958 = vsub.s32 %v6955, %v6957
      %v6959 = vrot.slane %v6525, %v6958
      %v6960 = vcombine.low %v6524, %v6526
      %v6961 = vcombine.low %v6534, %v6542
      %v6963 = vunpack.c.l.s4 1983009808
      %v6964 = vunpack.c.0.s8 %v6963
      %v6965 = vlaneseq
      %v6966 = vshrl.u32 %v6965, 7
      %v6967 = vsub.s32 %v6964, %v6966
      %v6968 = vrot.slane %v6960, %v6967
      %v6970 = vunpack.c.l.s4 1983009808
      %v6971 = vunpack.c.0.s8 %v6970
      %v6972 = vlaneseq
      %v6973 = vshrl.u32 %v6972, 7
      %v6974 = vsub.s32 %v6971, %v6973
      %v6975 = vrot.slane %v6961, %v6974
      %v6976 = vcombine.low %v6968, %v6975
      %v6977 = vcombine.low %v6541, %v6543
      %v6978 = vcombine.low %v6551, %v6559
      %v6980 = vunpack.c.l.s4 1983009808
      %v6981 = vunpack.c.0.s8 %v6980
      %v6982 = vlaneseq
      %v6983 = vshrl.u32 %v6982, 7
      %v6984 = vsub.s32 %v6981, %v6983
      %v6985 = vrot.slane %v6977, %v6984
      %v6987 = vunpack.c.l.s4 1983009808
      %v6988 = vunpack.c.0.s8 %v6987
      %v6989 = vlaneseq
      %v6990 = vshrl.u32 %v6989, 7
      %v6991 = vsub.s32 %v6988, %v6990
      %v6992 = vrot.slane %v6978, %v6991
      %v6993 = vcombine.low %v6985, %v6992
      %v6995 = vunpack.c.l.s4 1983009808
      %v6996 = vunpack.c.0.s8 %v6995
      %v6997 = vlaneseq
      %v6998 = vshrl.u32 %v6997, 7
      %v6999 = vsub.s32 %v6996, %v6998
      %v7000 = vrot.slane %v6558, %v6999
      %v7001 = vcombine.low %v6560, %v6568
      %v7002 = vcombine.low %v6576, %v6575
      %v7004 = vunpack.c.l.s4 1983009808
      %v7005 = vunpack.c.0.s8 %v7004
      %v7006 = vlaneseq
      %v7007 = vshrl.u32 %v7006, 7
      %v7008 = vsub.s32 %v7005, %v7007
      %v7009 = vrot.slane %v7001, %v7008
      %v7011 = vunpack.c.l.s4 1983009808
      %v7012 = vunpack.c.0.s8 %v7011
      %v7013 = vlaneseq
      %v7014 = vshrl.u32 %v7013, 7
      %v7015 = vsub.s32 %v7012, %v7014
      %v7016 = vrot.slane %v7002, %v7015
      %v7017 = vcombine.low %v7009, %v7016
      %v7018 = vcombine.low %v6577, %v6585
      %v7019 = vcombine.low %v6593, %v6592
      %v7021 = vunpack.c.l.s4 1983009808
      %v7022 = vunpack.c.0.s8 %v7021
      %v7023 = vlaneseq
      %v7024 = vshrl.u32 %v7023, 7
      %v7025 = vsub.s32 %v7022, %v7024
      %v7026 = vrot.slane %v7018, %v7025
      %v7028 = vunpack.c.l.s4 1983009808
      %v7029 = vunpack.c.0.s8 %v7028
      %v7030 = vlaneseq
      %v7031 = vshrl.u32 %v7030, 7
      %v7032 = vsub.s32 %v7029, %v7031
      %v7033 = vrot.slane %v7019, %v7032
      %v7034 = vcombine.low %v7026, %v7033
      %v7036 = vunpack.c.l.s4 1983009808
      %v7037 = vunpack.c.0.s8 %v7036
      %v7038 = vlaneseq
      %v7039 = vshrl.u32 %v7038, 7
      %v7040 = vsub.s32 %v7037, %v7039
      %v7041 = vrot.slane %v6594, %v7040
      %v7042 = vcombine.low %v6602, %v6610
      %v7043 = vcombine.low %v6609, %v6611
      %v7045 = vunpack.c.l.s4 1983009808
      %v7046 = vunpack.c.0.s8 %v7045
      %v7047 = vlaneseq
      %v7048 = vshrl.u32 %v7047, 7
      %v7049 = vsub.s32 %v7046, %v7048
      %v7050 = vrot.slane %v7042, %v7049
      %v7052 = vunpack.c.l.s4 1983009808
      %v7053 = vunpack.c.0.s8 %v7052
      %v7054 = vlaneseq
      %v7055 = vshrl.u32 %v7054, 7
      %v7056 = vsub.s32 %v7053, %v7055
      %v7057 = vrot.slane %v7043, %v7056
      %v7058 = vcombine.low %v7050, %v7057
      %v7059 = vcombine.low %v6619, %v6627
      %v7060 = vcombine.low %v6626, %v6628
      %v7062 = vunpack.c.l.s4 1983009808
      %v7063 = vunpack.c.0.s8 %v7062
      %v7064 = vlaneseq
      %v7065 = vshrl.u32 %v7064, 7
      %v7066 = vsub.s32 %v7063, %v7065
      %v7067 = vrot.slane %v7059, %v7066
      %v7069 = vunpack.c.l.s4 1983009808
      %v7070 = vunpack.c.0.s8 %v7069
      %v7071 = vlaneseq
      %v7072 = vshrl.u32 %v7071, 7
      %v7073 = vsub.s32 %v7070, %v7072
      %v7074 = vrot.slane %v7060, %v7073
      %v7075 = vcombine.low %v7067, %v7074
      %v7077 = vunpack.c.l.s4 1983009808
      %v7078 = vunpack.c.0.s8 %v7077
      %v7079 = vlaneseq
      %v7080 = vshrl.u32 %v7079, 7
      %v7081 = vsub.s32 %v7078, %v7080
      %v7082 = vrot.slane %v6636, %v7081
      %v7083 = vcombine.low %v6644, %v6643
      %v7084 = vcombine.low %v6645, %v6653
      %v7086 = vunpack.c.l.s4 1983009808
      %v7087 = vunpack.c.0.s8 %v7086
      %v7088 = vlaneseq
      %v7089 = vshrl.u32 %v7088, 7
      %v7090 = vsub.s32 %v7087, %v7089
      %v7091 = vrot.slane %v7083, %v7090
      %v7093 = vunpack.c.l.s4 1983009808
      %v7094 = vunpack.c.0.s8 %v7093
      %v7095 = vlaneseq
      %v7096 = vshrl.u32 %v7095, 7
      %v7097 = vsub.s32 %v7094, %v7096
      %v7098 = vrot.slane %v7084, %v7097
      %v7099 = vcombine.low %v7091, %v7098
      %v7100 = vcombine.low %v6661, %v6660
      %v7101 = vcombine.low %v6662, %v6670
      %v7103 = vunpack.c.l.s4 1983009808
      %v7104 = vunpack.c.0.s8 %v7103
      %v7105 = vlaneseq
      %v7106 = vshrl.u32 %v7105, 7
      %v7107 = vsub.s32 %v7104, %v7106
      %v7108 = vrot.slane %v7100, %v7107
      %v7110 = vunpack.c.l.s4 1983009808
      %v7111 = vunpack.c.0.s8 %v7110
      %v7112 = vlaneseq
      %v7113 = vshrl.u32 %v7112, 7
      %v7114 = vsub.s32 %v7111, %v7113
      %v7115 = vrot.slane %v7101, %v7114
      %v7116 = vcombine.low %v7108, %v7115
      %v7118 = vunpack.c.l.s4 1983009808
      %v7119 = vunpack.c.0.s8 %v7118
      %v7120 = vlaneseq
      %v7121 = vshrl.u32 %v7120, 7
      %v7122 = vsub.s32 %v7119, %v7121
      %v7123 = vrot.slane %v6678, %v7122
      %v7124 = vcombine.low %v6677, %v6679
      %v7125 = vcombine.low %v6687, %v6695
      %v7127 = vunpack.c.l.s4 1983009808
      %v7128 = vunpack.c.0.s8 %v7127
      %v7129 = vlaneseq
      %v7130 = vshrl.u32 %v7129, 7
      %v7131 = vsub.s32 %v7128, %v7130
      %v7132 = vrot.slane %v7124, %v7131
      %v7134 = vunpack.c.l.s4 1983009808
      %v7135 = vunpack.c.0.s8 %v7134
      %v7136 = vlaneseq
      %v7137 = vshrl.u32 %v7136, 7
      %v7138 = vsub.s32 %v7135, %v7137
      %v7139 = vrot.slane %v7125, %v7138
      %v7140 = vcombine.low %v7132, %v7139
      %v7141 = vcombine.low %v6694, %v6696
      %v7142 = vcombine.low %v6704, %v6712
      %v7144 = vunpack.c.l.s4 1983009808
      %v7145 = vunpack.c.0.s8 %v7144
      %v7146 = vlaneseq
      %v7147 = vshrl.u32 %v7146, 7
      %v7148 = vsub.s32 %v7145, %v7147
      %v7149 = vrot.slane %v7141, %v7148
      %v7151 = vunpack.c.l.s4 1983009808
      %v7152 = vunpack.c.0.s8 %v7151
      %v7153 = vlaneseq
      %v7154 = vshrl.u32 %v7153, 7
      %v7155 = vsub.s32 %v7152, %v7154
      %v7156 = vrot.slane %v7142, %v7155
      %v7157 = vcombine.low %v7149, %v7156
      %v7159 = vunpack.c.l.s4 1983009808
      %v7160 = vunpack.c.0.s8 %v7159
      %v7161 = vlaneseq
      %v7162 = vshrl.u32 %v7161, 7
      %v7163 = vsub.s32 %v7160, %v7162
      %v7164 = vrot.slane %v6711, %v7163
      %v7165 = vcombine.low %v6713, %v6721
      %v7166 = vcombine.low %v6729, %v6728
      %v7168 = vunpack.c.l.s4 1983009808
      %v7169 = vunpack.c.0.s8 %v7168
      %v7170 = vlaneseq
      %v7171 = vshrl.u32 %v7170, 7
      %v7172 = vsub.s32 %v7169, %v7171
      %v7173 = vrot.slane %v7165, %v7172
      %v7175 = vunpack.c.l.s4 1983009808
      %v7176 = vunpack.c.0.s8 %v7175
      %v7177 = vlaneseq
      %v7178 = vshrl.u32 %v7177, 7
      %v7179 = vsub.s32 %v7176, %v7178
      %v7180 = vrot.slane %v7166, %v7179
      %v7181 = vcombine.low %v7173, %v7180
      %v7182 = vcombine.low %v6730, %v6738
      %v7183 = vcombine.low %v6746, %v6745
      %v7185 = vunpack.c.l.s4 1983009808
      %v7186 = vunpack.c.0.s8 %v7185
      %v7187 = vlaneseq
      %v7188 = vshrl.u32 %v7187, 7
      %v7189 = vsub.s32 %v7186, %v7188
      %v7190 = vrot.slane %v7182, %v7189
      %v7192 = vunpack.c.l.s4 1983009808
      %v7193 = vunpack.c.0.s8 %v7192
      %v7194 = vlaneseq
      %v7195 = vshrl.u32 %v7194, 7
      %v7196 = vsub.s32 %v7193, %v7195
      %v7197 = vrot.slane %v7183, %v7196
      %v7198 = vcombine.low %v7190, %v7197
      %v7200 = vunpack.c.l.s4 1983009808
      %v7201 = vunpack.c.0.s8 %v7200
      %v7202 = vlaneseq
      %v7203 = vshrl.u32 %v7202, 7
      %v7204 = vsub.s32 %v7201, %v7203
      %v7205 = vrot.slane %v6747, %v7204
      %v7206 = vcombine.low %v6755, %v6763
      %v7207 = vcombine.low %v6762, %v6764
      %v7209 = vunpack.c.l.s4 1983009808
      %v7210 = vunpack.c.0.s8 %v7209
      %v7211 = vlaneseq
      %v7212 = vshrl.u32 %v7211, 7
      %v7213 = vsub.s32 %v7210, %v7212
      %v7214 = vrot.slane %v7206, %v7213
      %v7216 = vunpack.c.l.s4 1983009808
      %v7217 = vunpack.c.0.s8 %v7216
      %v7218 = vlaneseq
      %v7219 = vshrl.u32 %v7218, 7
      %v7220 = vsub.s32 %v7217, %v7219
      %v7221 = vrot.slane %v7207, %v7220
      %v7222 = vcombine.low %v7214, %v7221
      %v7223 = vcombine.low %v6772, %v6780
      %v7224 = vcombine.low %v6779, %v6781
      %v7226 = vunpack.c.l.s4 1983009808
      %v7227 = vunpack.c.0.s8 %v7226
      %v7228 = vlaneseq
      %v7229 = vshrl.u32 %v7228, 7
      %v7230 = vsub.s32 %v7227, %v7229
      %v7231 = vrot.slane %v7223, %v7230
      %v7233 = vunpack.c.l.s4 1983009808
      %v7234 = vunpack.c.0.s8 %v7233
      %v7235 = vlaneseq
      %v7236 = vshrl.u32 %v7235, 7
      %v7237 = vsub.s32 %v7234, %v7236
      %v7238 = vrot.slane %v7224, %v7237
      %v7239 = vcombine.low %v7231, %v7238
      %v7241 = vunpack.c.l.s4 1983009808
      %v7242 = vunpack.c.0.s8 %v7241
      %v7243 = vlaneseq
      %v7244 = vshrl.u32 %v7243, 7
      %v7245 = vsub.s32 %v7242, %v7244
      %v7246 = vrot.slane %v6789, %v7245
      %v7247 = vcombine.low %v6797, %v6796
      %v7248 = vcombine.low %v6798, %v6806
      %v7250 = vunpack.c.l.s4 1983009808
      %v7251 = vunpack.c.0.s8 %v7250
      %v7252 = vlaneseq
      %v7253 = vshrl.u32 %v7252, 7
      %v7254 = vsub.s32 %v7251, %v7253
      %v7255 = vrot.slane %v7247, %v7254
      %v7257 = vunpack.c.l.s4 1983009808
      %v7258 = vunpack.c.0.s8 %v7257
      %v7259 = vlaneseq
      %v7260 = vshrl.u32 %v7259, 7
      %v7261 = vsub.s32 %v7258, %v7260
      %v7262 = vrot.slane %v7248, %v7261
      %v7263 = vcombine.low %v7255, %v7262
      %v7264 = vcombine.low %v6814, %v6813
      %v7265 = vcombine.low %v6815, %v6822
      %v7267 = vunpack.c.l.s4 1983009808
      %v7268 = vunpack.c.0.s8 %v7267
      %v7269 = vlaneseq
      %v7270 = vshrl.u32 %v7269, 7
      %v7271 = vsub.s32 %v7268, %v7270
      %v7272 = vrot.slane %v7264, %v7271
      %v7274 = vunpack.c.l.s4 1983009808
      %v7275 = vunpack.c.0.s8 %v7274
      %v7276 = vlaneseq
      %v7277 = vshrl.u32 %v7276, 7
      %v7278 = vsub.s32 %v7275, %v7277
      %v7279 = vrot.slane %v7265, %v7278
      %v7280 = vcombine.low %v7272, %v7279
      %v7282 = vunpack.c.l.s4 1983009808
      %v7283 = vunpack.c.0.s8 %v7282
      %v7284 = vlaneseq
      %v7285 = vshrl.u32 %v7284, 7
      %v7286 = vsub.s32 %v7283, %v7285
      %v7287 = vrot.slane %v6823, %v7286
      %v7318 = vsel %vm6869, 0.0, %v6894
      %v7319 = vsel %vm6870, 0.0, %v6911
      %v7320 = vsel %vm6871, 0.0, %v6918
      %v7321 = vsel %vm6872, 0.0, %v6935
      %v7322 = vsel %vm6873, 0.0, %v6952
      %v7323 = vsel %vm6874, 0.0, %v6959
      %v7324 = vsel %vm6872, 0.0, %v6976
      %v7325 = vsel %vm6873, 0.0, %v6993
      %v7326 = vsel %vm6874, 0.0, %v7000
      %v7327 = vsel %vm6872, 0.0, %v7017
      %v7328 = vsel %vm6873, 0.0, %v7034
      %v7329 = vsel %vm6874, 0.0, %v7041
      %v7330 = vsel %vm6872, 0.0, %v7058
      %v7331 = vsel %vm6873, 0.0, %v7075
      %v7332 = vsel %vm6874, 0.0, %v7082
      %v7333 = vsel %vm6872, 0.0, %v7099
      %v7334 = vsel %vm6873, 0.0, %v7116
      %v7335 = vsel %vm6874, 0.0, %v7123
      %v7336 = vsel %vm6872, 0.0, %v7140
      %v7337 = vsel %vm6873, 0.0, %v7157
      %v7338 = vsel %vm6874, 0.0, %v7164
      %v7339 = vsel %vm6872, 0.0, %v7181
      %v7340 = vsel %vm6873, 0.0, %v7198
      %v7341 = vsel %vm6874, 0.0, %v7205
      %v7342 = vsel %vm6872, 0.0, %v7222
      %v7343 = vsel %vm6873, 0.0, %v7239
      %v7344 = vsel %vm6874, 0.0, %v7246
      %v7345 = vsel %vm6875, 0.0, %v7263
      %v7346 = vsel %vm6876, 0.0, %v7280
      %v7347 = vsel %vm6877, 0.0, %v7287
      %v7372 = vrot.slane %v7318, 1
      %v7373 = vrot.slane %v7319, 1
      %v7374 = vsel %vm442, %v7372, %v7373
      %v7375 = vrot.slane %v7320, 1
      %v7376 = vsel %vm442, %v7373, %v7375
      %v7377 = vrot.slane %v7321, 1
      %v7378 = vrot.slane %v7322, 1
      %v7379 = vsel %vm442, %v7377, %v7378
      %v7380 = vrot.slane %v7323, 1
      %v7381 = vsel %vm442, %v7378, %v7380
      %v7382 = vrot.slane %v7324, 1
      %v7383 = vrot.slane %v7325, 1
      %v7384 = vsel %vm442, %v7382, %v7383
      %v7385 = vrot.slane %v7326, 1
      %v7386 = vsel %vm442, %v7383, %v7385
      %v7387 = vrot.slane %v7327, 1
      %v7388 = vrot.slane %v7328, 1
      %v7389 = vsel %vm442, %v7387, %v7388
      %v7390 = vrot.slane %v7329, 1
      %v7391 = vsel %vm442, %v7388, %v7390
      %v7392 = vrot.slane %v7330, 1
      %v7393 = vrot.slane %v7331, 1
      %v7394 = vsel %vm442, %v7392, %v7393
      %v7395 = vrot.slane %v7332, 1
      %v7396 = vsel %vm442, %v7393, %v7395
      %v7397 = vrot.slane %v7333, 1
      %v7398 = vrot.slane %v7334, 1
      %v7399 = vsel %vm442, %v7397, %v7398
      %v7400 = vrot.slane %v7335, 1
      %v7401 = vsel %vm442, %v7398, %v7400
      %v7402 = vrot.slane %v7336, 1
      %v7403 = vrot.slane %v7337, 1
      %v7404 = vsel %vm442, %v7402, %v7403
      %v7405 = vrot.slane %v7338, 1
      %v7406 = vsel %vm442, %v7403, %v7405
      %v7407 = vrot.slane %v7339, 1
      %v7408 = vrot.slane %v7340, 1
      %v7409 = vsel %vm442, %v7407, %v7408
      %v7410 = vrot.slane %v7341, 1
      %v7411 = vsel %vm442, %v7408, %v7410
      %7412 = vrot.lane.b32.xlu0 %v7374, 64
      %v7413 = vpop.permute.xlu0 %7412
      %7414 = vrot.lane.b32.xlu0 %v7376, 64
      %v7415 = vpop.permute.xlu0 %7414
      %7416 = vrot.lane.b32.xlu0 %v7379, 64
      %v7417 = vpop.permute.xlu0 %7416
      %7418 = vrot.lane.b32.xlu0 %v7381, 64
      %v7419 = vpop.permute.xlu0 %7418
      %7420 = vrot.lane.b32.xlu0 %v7384, 64
      %v7421 = vpop.permute.xlu0 %7420
      %7422 = vrot.lane.b32.xlu0 %v7386, 64
      %v7423 = vpop.permute.xlu0 %7422
      %7424 = vrot.lane.b32.xlu0 %v7389, 64
      %v7425 = vpop.permute.xlu0 %7424
      %7426 = vrot.lane.b32.xlu0 %v7391, 64
      %v7427 = vpop.permute.xlu0 %7426
      %7428 = vrot.lane.b32.xlu0 %v7394, 64
      %v7429 = vpop.permute.xlu0 %7428
      %7430 = vrot.lane.b32.xlu0 %v7396, 64
      %v7431 = vpop.permute.xlu0 %7430
      %7432 = vrot.lane.b32.xlu0 %v7399, 64
      %v7433 = vpop.permute.xlu0 %7432
      %7434 = vrot.lane.b32.xlu0 %v7401, 64
      %v7435 = vpop.permute.xlu0 %7434
      %7436 = vrot.lane.b32.xlu0 %v7404, 64
      %v7437 = vpop.permute.xlu0 %7436
      %7438 = vrot.lane.b32.xlu0 %v7406, 64
      %v7439 = vpop.permute.xlu0 %7438
      %7440 = vrot.lane.b32.xlu0 %v7409, 64
      %v7441 = vpop.permute.xlu0 %7440
      %7442 = vrot.lane.b32.xlu0 %v7411, 64
      %v7443 = vpop.permute.xlu0 %7442
      %v7460 = vrot.slane %v7318, 2
      %v7461 = vrot.slane %v7319, 2
      %v7462 = vsel %vm583, %v7460, %v7461
      %v7463 = vrot.slane %v7320, 2
      %v7464 = vsel %vm583, %v7461, %v7463
      %v7465 = vrot.slane %v7321, 2
      %v7466 = vrot.slane %v7322, 2
      %v7467 = vsel %vm583, %v7465, %v7466
      %v7468 = vrot.slane %v7323, 2
      %v7469 = vsel %vm583, %v7466, %v7468
      %v7470 = vrot.slane %v7324, 2
      %v7471 = vrot.slane %v7325, 2
      %v7472 = vsel %vm583, %v7470, %v7471
      %v7473 = vrot.slane %v7326, 2
      %v7474 = vsel %vm583, %v7471, %v7473
      %v7475 = vrot.slane %v7327, 2
      %v7476 = vrot.slane %v7328, 2
      %v7477 = vsel %vm583, %v7475, %v7476
      %v7478 = vrot.slane %v7329, 2
      %v7479 = vsel %vm583, %v7476, %v7478
      %v7480 = vrot.slane %v7330, 2
      %v7481 = vrot.slane %v7331, 2
      %v7482 = vsel %vm583, %v7480, %v7481
      %v7483 = vrot.slane %v7332, 2
      %v7484 = vsel %vm583, %v7481, %v7483
      %v7485 = vrot.slane %v7333, 2
      %v7486 = vrot.slane %v7334, 2
      %v7487 = vsel %vm583, %v7485, %v7486
      %v7488 = vrot.slane %v7335, 2
      %v7489 = vsel %vm583, %v7486, %v7488
      %v7490 = vrot.slane %v7336, 2
      %v7491 = vrot.slane %v7337, 2
      %v7492 = vsel %vm583, %v7490, %v7491
      %v7493 = vrot.slane %v7338, 2
      %v7494 = vsel %vm583, %v7491, %v7493
      %v7495 = vrot.slane %v7339, 2
      %v7496 = vrot.slane %v7340, 2
      %v7497 = vsel %vm583, %v7495, %v7496
      %v7498 = vrot.slane %v7341, 2
      %v7499 = vsel %vm583, %v7496, %v7498
      %7518 = vrot.lane.b32.xlu0 %v7321, 64
      %v7519 = vpop.permute.xlu0 %7518
      %7520 = vrot.lane.b32.xlu0 %v7322, 64
      %v7521 = vpop.permute.xlu0 %7520
      %7522 = vrot.lane.b32.xlu0 %v7324, 64
      %v7523 = vpop.permute.xlu0 %7522
      %7524 = vrot.lane.b32.xlu0 %v7325, 64
      %v7525 = vpop.permute.xlu0 %7524
      %7526 = vrot.lane.b32.xlu0 %v7327, 64
      %v7527 = vpop.permute.xlu0 %7526
      %7528 = vrot.lane.b32.xlu0 %v7328, 64
      %v7529 = vpop.permute.xlu0 %7528
      %7530 = vrot.lane.b32.xlu0 %v7330, 64
      %v7531 = vpop.permute.xlu0 %7530
      %7532 = vrot.lane.b32.xlu0 %v7331, 64
      %v7533 = vpop.permute.xlu0 %7532
      %7534 = vrot.lane.b32.xlu0 %v7333, 64
      %v7535 = vpop.permute.xlu0 %7534
      %7536 = vrot.lane.b32.xlu0 %v7334, 64
      %v7537 = vpop.permute.xlu0 %7536
      %7538 = vrot.lane.b32.xlu0 %v7336, 64
      %v7539 = vpop.permute.xlu0 %7538
      %7540 = vrot.lane.b32.xlu0 %v7337, 64
      %v7541 = vpop.permute.xlu0 %7540
      %7542 = vrot.lane.b32.xlu0 %v7339, 64
      %v7543 = vpop.permute.xlu0 %7542
      %7544 = vrot.lane.b32.xlu0 %v7340, 64
      %v7545 = vpop.permute.xlu0 %7544
      %7546 = vrot.lane.b32.xlu0 %v7342, 64
      %v7547 = vpop.permute.xlu0 %7546
      %7548 = vrot.lane.b32.xlu0 %v7343, 64
      %v7549 = vpop.permute.xlu0 %7548
      %v7567 = vrot.slane %v7342, 1
      %v7568 = vrot.slane %v7343, 1
      %v7569 = vsel %vm442, %v7567, %v7568
      %v7570 = vrot.slane %v7344, 1
      %v7571 = vsel %vm442, %v7568, %v7570
      %v7588 = vrot.slane %v7342, 2
      %v7589 = vrot.slane %v7343, 2
      %v7590 = vsel %vm583, %v7588, %v7589
      %v7591 = vrot.slane %v7344, 2
      %v7592 = vsel %vm583, %v7589, %v7591
      %7593 = vrot.lane.b32.xlu0 %v7467, 64
      %v7594 = vpop.permute.xlu0 %7593
      %7595 = vrot.lane.b32.xlu0 %v7469, 64
      %v7596 = vpop.permute.xlu0 %7595
      %7597 = vrot.lane.b32.xlu0 %v7472, 64
      %v7598 = vpop.permute.xlu0 %7597
      %7599 = vrot.lane.b32.xlu0 %v7474, 64
      %v7600 = vpop.permute.xlu0 %7599
      %7601 = vrot.lane.b32.xlu0 %v7477, 64
      %v7602 = vpop.permute.xlu0 %7601
      %7603 = vrot.lane.b32.xlu0 %v7479, 64
      %v7604 = vpop.permute.xlu0 %7603
      %7605 = vrot.lane.b32.xlu0 %v7482, 64
      %v7606 = vpop.permute.xlu0 %7605
      %7607 = vrot.lane.b32.xlu0 %v7484, 64
      %v7608 = vpop.permute.xlu0 %7607
      %7609 = vrot.lane.b32.xlu0 %v7487, 64
      %v7610 = vpop.permute.xlu0 %7609
      %7611 = vrot.lane.b32.xlu0 %v7489, 64
      %v7612 = vpop.permute.xlu0 %7611
      %7613 = vrot.lane.b32.xlu0 %v7492, 64
      %v7614 = vpop.permute.xlu0 %7613
      %7615 = vrot.lane.b32.xlu0 %v7494, 64
      %v7616 = vpop.permute.xlu0 %7615
      %7617 = vrot.lane.b32.xlu0 %v7497, 64
      %v7618 = vpop.permute.xlu0 %7617
      %7619 = vrot.lane.b32.xlu0 %v7499, 64
      %v7620 = vpop.permute.xlu0 %7619
      %7621 = vrot.lane.b32.xlu0 %v7590, 64
      %v7622 = vpop.permute.xlu0 %7621
      %7623 = vrot.lane.b32.xlu0 %v7592, 64
      %v7624 = vpop.permute.xlu0 %7623
      %v7644 = vrot.slane %v7345, 1
      %v7645 = vrot.slane %v7346, 1
      %v7646 = vsel %vm442, %v7644, %v7645
      %v7647 = vrot.slane %v7347, 1
      %v7648 = vsel %vm442, %v7645, %v7647
      %7649 = vrot.lane.b32.xlu0 %v7569, 64
      %v7650 = vpop.permute.xlu0 %7649
      %7651 = vrot.lane.b32.xlu0 %v7571, 64
      %v7652 = vpop.permute.xlu0 %7651
      %7653 = vrot.lane.b32.xlu0 %v7646, 64
      %v7654 = vpop.permute.xlu0 %7653
      %7655 = vrot.lane.b32.xlu0 %v7648, 64
      %v7656 = vpop.permute.xlu0 %7655
      %v7661 = vrot.slane %v7345, 2
      %v7662 = vrot.slane %v7346, 2
      %v7663 = vsel %vm583, %v7661, %v7662
      %v7664 = vrot.slane %v7347, 2
      %v7665 = vsel %vm583, %v7662, %v7664
      %v7670 = vsel %vm3220, %v7318, %v7413
      %v7671 = vsel %vm3220, %v7319, %v7415
      %v7672 = vsel %vm3220, %v7321, %v7417
      %v7673 = vsel %vm3220, %v7322, %v7419
      %v7674 = vsel %vm3220, %v7324, %v7421
      %v7675 = vsel %vm3220, %v7325, %v7423
      %v7676 = vsel %vm3220, %v7327, %v7425
      %v7677 = vsel %vm3220, %v7328, %v7427
      %v7678 = vsel %vm3220, %v7330, %v7429
      %v7679 = vsel %vm3220, %v7331, %v7431
      %v7680 = vsel %vm3220, %v7333, %v7433
      %v7681 = vsel %vm3220, %v7334, %v7435
      %v7682 = vsel %vm3220, %v7336, %v7437
      %v7683 = vsel %vm3220, %v7337, %v7439
      %v7684 = vsel %vm3220, %v7339, %v7441
      %v7685 = vsel %vm3220, %v7340, %v7443
      %v7686 = vsel %vm3220, %v7462, %v7519
      %v7687 = vsel %vm3220, %v7464, %v7521
      %v7688 = vsel %vm3220, %v7467, %v7523
      %v7689 = vsel %vm3220, %v7469, %v7525
      %v7690 = vsel %vm3220, %v7472, %v7527
      %v7691 = vsel %vm3220, %v7474, %v7529
      %v7692 = vsel %vm3220, %v7477, %v7531
      %v7693 = vsel %vm3220, %v7479, %v7533
      %v7694 = vsel %vm3220, %v7482, %v7535
      %v7695 = vsel %vm3220, %v7484, %v7537
      %v7696 = vsel %vm3220, %v7487, %v7539
      %v7697 = vsel %vm3220, %v7489, %v7541
      %v7698 = vsel %vm3220, %v7492, %v7543
      %v7699 = vsel %vm3220, %v7494, %v7545
      %v7700 = vsel %vm3220, %v7497, %v7547
      %v7701 = vsel %vm3220, %v7499, %v7549
      %v7702 = vsel %vm3220, %v7379, %v7594
      %v7703 = vsel %vm3220, %v7381, %v7596
      %v7704 = vsel %vm3220, %v7384, %v7598
      %v7705 = vsel %vm3220, %v7386, %v7600
      %v7706 = vsel %vm3220, %v7389, %v7602
      %v7707 = vsel %vm3220, %v7391, %v7604
      %v7708 = vsel %vm3220, %v7394, %v7606
      %v7709 = vsel %vm3220, %v7396, %v7608
      %v7710 = vsel %vm3220, %v7399, %v7610
      %v7711 = vsel %vm3220, %v7401, %v7612
      %v7712 = vsel %vm3220, %v7404, %v7614
      %v7713 = vsel %vm3220, %v7406, %v7616
      %v7714 = vsel %vm3220, %v7409, %v7618
      %v7715 = vsel %vm3220, %v7411, %v7620
      %v7716 = vsel %vm3220, %v7569, %v7622
      %v7717 = vsel %vm3220, %v7571, %v7624
      %v7718 = vsel %vm3220, %v7342, %v7650
      %v7719 = vsel %vm3220, %v7343, %v7652
      %v7720 = vsel %vm3220, %v7345, %v7654
      %v7721 = vsel %vm3220, %v7346, %v7656
      %v7722 = vpack.c.bf16 %v7671, %v7670
      %v7723 = vpack.c.bf16 %v7687, %v7686
      %v7724 = vpack.c.bf16 %v7703, %v7702
      %v7725 = vpack.c.bf16 %v7675, %v7674
      %v7726 = vpack.c.bf16 %v7474, %v7472
      %v7727 = vpack.c.bf16 %v7673, %v7672
      %v7728 = vpack.c.bf16 %v7689, %v7688
      %v7729 = vpack.c.bf16 %v7705, %v7704
      %v7730 = vpack.c.bf16 %v7677, %v7676
      %v7731 = vpack.c.bf16 %v7479, %v7477
      %v7732 = vpack.c.bf16 %v7691, %v7690
      %v7733 = vpack.c.bf16 %v7707, %v7706
      %v7734 = vpack.c.bf16 %v7679, %v7678
      %v7735 = vpack.c.bf16 %v7484, %v7482
      %v7736 = vpack.c.bf16 %v7693, %v7692
      %v7737 = vpack.c.bf16 %v7709, %v7708
      %v7738 = vpack.c.bf16 %v7681, %v7680
      %v7739 = vpack.c.bf16 %v7489, %v7487
      %v7740 = vpack.c.bf16 %v7695, %v7694
      %v7741 = vpack.c.bf16 %v7711, %v7710
      %v7742 = vpack.c.bf16 %v7683, %v7682
      %v7743 = vpack.c.bf16 %v7494, %v7492
      %v7744 = vpack.c.bf16 %v7697, %v7696
      %v7745 = vpack.c.bf16 %v7713, %v7712
      %v7746 = vpack.c.bf16 %v7685, %v7684
      %v7747 = vpack.c.bf16 %v7499, %v7497
      %v7748 = vpack.c.bf16 %v7699, %v7698
      %v7749 = vpack.c.bf16 %v7715, %v7714
      %v7750 = vpack.c.bf16 %v7719, %v7718
      %v7751 = vpack.c.bf16 %v7592, %v7590
      %v7752 = vpack.c.bf16 %v7701, %v7700
      %v7753 = vpack.c.bf16 %v7717, %v7716
      %v7754 = vpack.c.bf16 %v7721, %v7720
      %v7755 = vpack.c.bf16 %v7665, %v7663
      %v7756 = vld [vmem:[%s7] sm:$0xf]
      %v7757 = vld [vmem:[%s7 + $0x4] sm:$0xf]
      %v7758 = vld [vmem:[%s7 + $0x8] sm:$0xf]
      %v7759 = vld [vmem:[%s7 + $0xc] sm:$0xf]
      %v7760 = vld [vmem:[%s7 + $0x10] sm:$0xf]
      %v7761 = vld [vmem:[%s7 + $0x14] sm:$0xf]
      %v7762 = vld [vmem:[%s7 + $0x18] sm:$0xf]
      %v7763 = vld [vmem:[%s7 + $0x1c] sm:$0xf]
      %v7764 = vld [vmem:[%s7 + $0x20] sm:$0xf]
      %v7765 = vld [vmem:[%s7 + $0x24] sm:$0xf]
      %v7766 = vld [vmem:[%s7 + $0x28] sm:$0xf]
      %v7767 = vld [vmem:[%s7 + $0x2c] sm:$0xf]
      %v7768 = vld [vmem:[%s7 + $0x30] sm:$0xf]
      %v7769 = vld [vmem:[%s7 + $0x34] sm:$0xf]
      %v7770 = vld [vmem:[%s7 + $0x38] sm:$0xf]
      %v7771 = vld [vmem:[%s7 + $0x3c] sm:$0xf]
      %v7772 = vld [vmem:[%s7 + $0x40] sm:$0xf]
      %v7773 = vld [vmem:[%s7 + $0x44] sm:$0xf]
      %v7774 = vld [vmem:[%s7 + $0x48] sm:$0xf]
      %v7775 = vld [vmem:[%s7 + $0x4c] sm:$0xf]
      %v7776 = vld [vmem:[%s7 + $0x50] sm:$0xf]
      %v7777 = vld [vmem:[%s7 + $0x54] sm:$0xf]
      %v7778 = vld [vmem:[%s7 + $0x58] sm:$0xf]
      %v7779 = vld [vmem:[%s7 + $0x5c] sm:$0xf]
      %v7780 = vld [vmem:[%s7 + $0x60] sm:$0xf]
      %v7781 = vld [vmem:[%s7 + $0x64] sm:$0xf]
      %v7782 = vld [vmem:[%s7 + $0x68] sm:$0xf]
      %v7783 = vld [vmem:[%s7 + $0x6c] sm:$0xf]
      %v7784 = vld [vmem:[%s7 + $0x70] sm:$0xf]
      %v7785 = vld [vmem:[%s7 + $0x74] sm:$0xf]
      %v7786 = vld [vmem:[%s7 + $0x78] sm:$0xf]
      %v7787 = vld [vmem:[%s7 + $0x7c] sm:$0xf]
      %v7788 = vld [vmem:[%s7 + $0x80] sm:$0xf]
      %v7789 = vld [vmem:[%s7 + $0x84] sm:$0xf]
      %v7790 = vld [vmem:[%s7 + $0x88] sm:$0xf]
      %v7791 = vld [vmem:[%s7 + $0x8c] sm:$0xf]
      %v7792 = vld [vmem:[%s7 + $0x90] sm:$0xf]
      %v7793 = vld [vmem:[%s7 + $0x94] sm:$0xf]
      %v7794 = vld [vmem:[%s7 + $0x98] sm:$0xf]
      %v7795 = vld [vmem:[%s7 + $0x9c] sm:$0xf]
      %v7796 = vld [vmem:[%s7 + $0xa0] sm:$0xf]
      %v7797 = vld [vmem:[%s7 + $0xa4] sm:$0xf]
      %v7798 = vld [vmem:[%s7 + $0xa8] sm:$0xf]
      %v7799 = vld [vmem:[%s7 + $0xac] sm:$0xf]
      %v7800 = vld [vmem:[%s7 + $0xb0] sm:$0xf]
      %v7801 = vld [vmem:[%s7 + $0xb4] sm:$0xf]
      %v7802 = vld [vmem:[%s7 + $0xb8] sm:$0xf]
      %v7803 = vld [vmem:[%s7 + $0xbc] sm:$0xf]
      %v7804 = vld [vmem:[%s7 + $0xc0] sm:$0xf]
      %v7805 = vld [vmem:[%s7 + $0xc4] sm:$0xf]
      %v7806 = vld [vmem:[%s7 + $0xc8] sm:$0xf]
      %v7807 = vld [vmem:[%s7 + $0xcc] sm:$0xf]
      %v7808 = vld [vmem:[%s7 + $0xd0] sm:$0xf]
      %v7809 = vld [vmem:[%s7 + $0xd4] sm:$0xf]
      %v7810 = vld [vmem:[%s7 + $0xd8] sm:$0xf]
      %v7811 = vld [vmem:[%s7 + $0xdc] sm:$0xf]
      %v7812 = vld [vmem:[%s7 + $0xe0] sm:$0xf]
      %v7813 = vld [vmem:[%s7 + $0xe4] sm:$0xf]
      %v7814 = vld [vmem:[%s7 + $0xe8] sm:$0xf]
      %v7815 = vld [vmem:[%s7 + $0xec] sm:$0xf]
      %v7816 = vld [vmem:[%s7 + $0xf0] sm:$0xf]
      %v7817 = vld [vmem:[%s7 + $0xf4] sm:$0xf]
      %v7818 = vld [vmem:[%s7 + $0xf8] sm:$0xf]
      %v7819 = vld [vmem:[%s7 + $0xfc] sm:$0xf]
      %v7820 = vld [vmem:[%s7 + $0x100] sm:$0xf]
      %v7821 = vld [vmem:[%s7 + $0x104] sm:$0xf]
      %v7822 = vld [vmem:[%s7 + $0x108] sm:$0xf]
      %v7823 = vld [vmem:[%s7 + $0x10c] sm:$0xf]
      %v7824 = vld [vmem:[%s7 + $0x110] sm:$0xf]
      %v7825 = vld [vmem:[%s7 + $0x114] sm:$0xf]
      %v7826 = vld [vmem:[%s7 + $0x118] sm:$0xf]
      %v7827 = vld [vmem:[%s7 + $0x11c] sm:$0xf]
      %v7828 = vld [vmem:[%s8] sm:$0x1]
      %v7830 = vlaneseq
      %v7831 = vshrl.u32 %v7830, 7
      %v7832 = vsub.s32 0, %v7831
      %v7833 = vrot.slane %v7828, %v7832
      %v7907 = vunpack.c.l.b16 %v7756
      %v7908 = vunpack.c.l.b16 %v7757
      %v7909 = vunpack.c.l.b16 %v7758
      %v7910 = vunpack.c.l.b16 %v7759
      %v7911 = vunpack.c.l.b16 %v7760
      %v7912 = vunpack.c.l.b16 %v7761
      %v7913 = vunpack.c.l.b16 %v7762
      %v7914 = vunpack.c.l.b16 %v7763
      %v7915 = vunpack.c.l.b16 %v7764
      %v7916 = vunpack.c.l.b16 %v7765
      %v7917 = vunpack.c.l.b16 %v7766
      %v7918 = vunpack.c.l.b16 %v7767
      %v7919 = vunpack.c.l.b16 %v7768
      %v7920 = vunpack.c.l.b16 %v7769
      %v7921 = vunpack.c.l.b16 %v7770
      %v7922 = vunpack.c.l.b16 %v7771
      %v7923 = vunpack.c.l.b16 %v7772
      %v7924 = vunpack.c.l.b16 %v7773
      %v7925 = vunpack.c.l.b16 %v7774
      %v7926 = vunpack.c.l.b16 %v7775
      %v7927 = vunpack.c.l.b16 %v7776
      %v7928 = vunpack.c.l.b16 %v7777
      %v7929 = vunpack.c.l.b16 %v7778
      %v7930 = vunpack.c.l.b16 %v7779
      %v7931 = vunpack.c.l.b16 %v7780
      %v7932 = vunpack.c.l.b16 %v7781
      %v7933 = vunpack.c.l.b16 %v7782
      %v7934 = vunpack.c.l.b16 %v7783
      %v7935 = vunpack.c.l.b16 %v7784
      %v7936 = vunpack.c.l.b16 %v7785
      %v7937 = vunpack.c.l.b16 %v7786
      %v7938 = vunpack.c.l.b16 %v7787
      %v7939 = vunpack.c.l.b16 %v7788
      %v7940 = vunpack.c.l.b16 %v7789
      %v7941 = vunpack.c.l.b16 %v7790
      %v7942 = vunpack.c.l.b16 %v7791
      %v7943 = vunpack.c.l.b16 %v7792
      %v7944 = vunpack.c.l.b16 %v7793
      %v7945 = vunpack.c.l.b16 %v7794
      %v7946 = vunpack.c.l.b16 %v7795
      %v7947 = vunpack.c.l.b16 %v7796
      %v7948 = vunpack.c.l.b16 %v7797
      %v7949 = vunpack.c.l.b16 %v7798
      %v7950 = vunpack.c.l.b16 %v7799
      %v7951 = vunpack.c.l.b16 %v7800
      %v7952 = vunpack.c.l.b16 %v7801
      %v7953 = vunpack.c.l.b16 %v7802
      %v7954 = vunpack.c.l.b16 %v7803
      %v7955 = vunpack.c.l.b16 %v7804
      %v7956 = vunpack.c.l.b16 %v7805
      %v7957 = vunpack.c.l.b16 %v7806
      %v7958 = vunpack.c.l.b16 %v7807
      %v7959 = vunpack.c.l.b16 %v7808
      %v7960 = vunpack.c.l.b16 %v7809
      %v7961 = vunpack.c.l.b16 %v7810
      %v7962 = vunpack.c.l.b16 %v7811
      %v7963 = vunpack.c.l.b16 %v7812
      %v7964 = vunpack.c.l.b16 %v7813
      %v7965 = vunpack.c.l.b16 %v7814
      %v7966 = vunpack.c.l.b16 %v7815
      %v7967 = vunpack.c.l.b16 %v7816
      %v7968 = vunpack.c.l.b16 %v7817
      %v7969 = vunpack.c.l.b16 %v7818
      %v7970 = vunpack.c.l.b16 %v7819
      %v7971 = vunpack.c.l.b16 %v7820
      %v7972 = vunpack.c.l.b16 %v7821
      %v7973 = vunpack.c.l.b16 %v7822
      %v7974 = vunpack.c.l.b16 %v7823
      %v7975 = vunpack.c.l.b16 %v7824
      %v7976 = vunpack.c.l.b16 %v7825
      %v7977 = vunpack.c.l.b16 %v7826
      %v7978 = vunpack.c.l.b16 %v7827
      %v7979 = vpack.c.b16 %v7908, %v7907
      %v7980 = vpack.c.b16 %v7910, %v7909
      %v7981 = vpack.c.b16 %v7912, %v7911
      %v7982 = vpack.c.b16 %v7914, %v7913
      %v7983 = vpack.c.b16 %v7916, %v7915
      %v7984 = vpack.c.b16 %v7918, %v7917
      %v7985 = vpack.c.b16 %v7920, %v7919
      %v7986 = vpack.c.b16 %v7922, %v7921
      %v7987 = vpack.c.b16 %v7924, %v7923
      %v7988 = vpack.c.b16 %v7926, %v7925
      %v7989 = vpack.c.b16 %v7928, %v7927
      %v7990 = vpack.c.b16 %v7930, %v7929
      %v7991 = vpack.c.b16 %v7932, %v7931
      %v7992 = vpack.c.b16 %v7934, %v7933
      %v7993 = vpack.c.b16 %v7936, %v7935
      %v7994 = vpack.c.b16 %v7938, %v7937
      %v7995 = vpack.c.b16 %v7940, %v7939
      %v7996 = vpack.c.b16 %v7942, %v7941
      %v7997 = vpack.c.b16 %v7944, %v7943
      %v7998 = vpack.c.b16 %v7946, %v7945
      %v7999 = vpack.c.b16 %v7948, %v7947
      %v8000 = vpack.c.b16 %v7950, %v7949
      %v8001 = vpack.c.b16 %v7952, %v7951
      %v8002 = vpack.c.b16 %v7954, %v7953
      %v8003 = vpack.c.b16 %v7956, %v7955
      %v8004 = vpack.c.b16 %v7958, %v7957
      %v8005 = vpack.c.b16 %v7960, %v7959
      %v8006 = vpack.c.b16 %v7962, %v7961
      %v8007 = vpack.c.b16 %v7964, %v7963
      %v8008 = vpack.c.b16 %v7966, %v7965
      %v8009 = vpack.c.b16 %v7968, %v7967
      %v8010 = vpack.c.b16 %v7970, %v7969
      %v8011 = vpack.c.b16 %v7972, %v7971
      %v8012 = vpack.c.b16 %v7974, %v7973
      %v8013 = vpack.c.b16 %v7976, %v7975
      %v8014 = vpack.c.b16 %v7978, %v7977
      %v8052 = vsel %vm3220, %v7726, 0
      %v8055 = vsel %vm3220, %v7731, 0
      %v8058 = vsel %vm3220, %v7735, 0
      %v8061 = vsel %vm3220, %v7739, 0
      %v8064 = vsel %vm3220, %v7743, 0
      %v8067 = vsel %vm3220, %v7747, 0
      %v8070 = vsel %vm3220, %v7751, 0
      %v8073 = vsel %vm3220, %v7755, 0
      %8075 = vmatprep.subr.bf16.mxu0 0
      %8076 = vmatpush1.bf16.msra.mxu0 %v7979
      %8077 = vmatprep.subr.bf16.mxu0 0
      %8078 = vmatpush1.bf16.msra.mxu0 %v7980
      %8079 = vmatprep.subr.bf16.mxu0 0
      %8080 = vmatpush1.bf16.msra.mxu0 %v7981
      %8081 = vmatprep.subr.bf16.mxu0 0
      %8082 = vmatpush1.bf16.msra.mxu0 %v7982
      %8083 = vmatprep.subr.bf16.mxu0 0
      %8084 = vmatpush1.bf16.msra.mxu0 %v7983
      %8085 = vmatprep.subr.bf16.mxu0 0
      %8086 = vmatpush1.bf16.msra.mxu0 %v7984
      %8087 = vmatprep.subr.bf16.mxu0 0
      %8088 = vmatpush1.bf16.msra.mxu0 %v7985
      %8089 = vmatprep.subr.bf16.mxu0 0
      %8090 = vmatpush1.bf16.msra.mxu0 %v7986
      %8091 = vmatprep.subr.bf16.mxu0 0
      %8092 = vmatpush1.bf16.msra.mxu0 %v7987
      %8093 = vmatprep.subr.bf16.mxu0 0
      %8094 = vmatpush1.bf16.msra.mxu0 %v7988
      %8095 = vmatprep.subr.bf16.mxu0 0
      %8096 = vmatpush1.bf16.msra.mxu0 %v7989
      %8097 = vmatprep.subr.bf16.mxu0 0
      %8098 = vmatpush1.bf16.msra.mxu0 %v7990
      %8099 = vmatprep.subr.bf16.mxu0 0
      %8100 = vmatpush1.bf16.msra.mxu0 %v7991
      %8101 = vmatprep.subr.bf16.mxu0 0
      %8102 = vmatpush1.bf16.msra.mxu0 %v7992
      %8103 = vmatprep.subr.bf16.mxu0 0
      %8104 = vmatpush1.bf16.msra.mxu0 %v7993
      %8105 = vmatprep.subr.bf16.mxu0 0
      %8106 = vmatpush1.bf16.msra.mxu0 %v7994
      %8107 = vmatprep.mubr.bf16.mxu0 %v7723
      %8108 = vmatmul.mubr.bf16.gmra.mrb[0].mxu0 %v7722
      %v8109 = vpop.f32.mrb[0].mxu0
      %v8110 = vadd.f32 %v7833, %v8109
      %v8111 = vpop.f32.mrb[0].mxu0
      %v8112 = vpop.f32.mrb[0].mxu0
      %v8113 = vadd.f32 %v7833, %v8112
      %v8114 = vpop.f32.mrb[0].mxu0
      %8115 = vmatprep.mubr.bf16.mxu0 %v7728
      %8116 = vmatmul.mubr.bf16.gmra.mrb[0].mxu0 %v7727
      %v8117 = vpop.f32.mrb[0].mxu0
      %v8118 = vadd.f32 %v7833, %v8117
      %v8119 = vpop.f32.mrb[0].mxu0
      %v8120 = vpop.f32.mrb[0].mxu0
      %v8121 = vadd.f32 %v7833, %v8120
      %v8122 = vpop.f32.mrb[0].mxu0
      %8123 = vmatprep.mubr.bf16.mxu0 %v7732
      %8124 = vmatmul.mubr.bf16.gmra.mrb[0].mxu0 %v7725
      %v8125 = vpop.f32.mrb[0].mxu0
      %v8126 = vadd.f32 %v7833, %v8125
      %v8127 = vpop.f32.mrb[0].mxu0
      %v8128 = vpop.f32.mrb[0].mxu0
      %v8129 = vadd.f32 %v7833, %v8128
      %v8130 = vpop.f32.mrb[0].mxu0
      %8131 = vmatprep.mubr.bf16.mxu0 %v7736
      %8132 = vmatmul.mubr.bf16.gmra.mrb[0].mxu0 %v7730
      %v8133 = vpop.f32.mrb[0].mxu0
      %v8134 = vadd.f32 %v7833, %v8133
      %v8135 = vpop.f32.mrb[0].mxu0
      %v8136 = vpop.f32.mrb[0].mxu0
      %v8137 = vadd.f32 %v7833, %v8136
      %v8138 = vpop.f32.mrb[0].mxu0
      %8139 = vmatprep.mubr.bf16.mxu0 %v7740
      %8140 = vmatmul.mubr.bf16.gmra.mrb[0].mxu0 %v7734
      %v8141 = vpop.f32.mrb[0].mxu0
      %v8142 = vadd.f32 %v7833, %v8141
      %v8143 = vpop.f32.mrb[0].mxu0
      %v8144 = vpop.f32.mrb[0].mxu0
      %v8145 = vadd.f32 %v7833, %v8144
      %v8146 = vpop.f32.mrb[0].mxu0
      %8147 = vmatprep.mubr.bf16.mxu0 %v7744
      %8148 = vmatmul.mubr.bf16.gmra.mrb[0].mxu0 %v7738
      %v8149 = vpop.f32.mrb[0].mxu0
      %v8150 = vadd.f32 %v7833, %v8149
      %v8151 = vpop.f32.mrb[0].mxu0
      %v8152 = vpop.f32.mrb[0].mxu0
      %v8153 = vadd.f32 %v7833, %v8152
      %v8154 = vpop.f32.mrb[0].mxu0
      %8155 = vmatprep.mubr.bf16.mxu0 %v7748
      %8156 = vmatmul.mubr.bf16.gmra.mrb[0].mxu0 %v7742
      %v8157 = vpop.f32.mrb[0].mxu0
      %v8158 = vadd.f32 %v7833, %v8157
      %v8159 = vpop.f32.mrb[0].mxu0
      %v8160 = vpop.f32.mrb[0].mxu0
      %v8161 = vadd.f32 %v7833, %v8160
      %v8162 = vpop.f32.mrb[0].mxu0
      %8163 = vmatprep.mubr.bf16.mxu0 %v7752
      %8164 = vmatmul.mubr.bf16.gmra.mrb[0].mxu0 %v7746
      %v8165 = vpop.f32.mrb[0].mxu0
      %v8166 = vadd.f32 %v7833, %v8165
      %v8167 = vpop.f32.mrb[0].mxu0
      %v8168 = vpop.f32.mrb[0].mxu0
      %v8169 = vadd.f32 %v7833, %v8168
      %v8170 = vpop.f32.mrb[0].mxu0
      %8171 = vdwg.mxu0
      %8172 = vmatprep.subr.bf16.mxu0 0
      %8173 = vmatpush1.bf16.msra.mxu0 %v7995
      %8174 = vmatprep.subr.bf16.mxu0 0
      %8175 = vmatpush1.bf16.msra.mxu0 %v7996
      %8176 = vmatprep.subr.bf16.mxu0 0
      %8177 = vmatpush1.bf16.msra.mxu0 %v7997
      %8178 = vmatprep.subr.bf16.mxu0 0
      %8179 = vmatpush1.bf16.msra.mxu0 %v7998
      %8180 = vmatprep.subr.bf16.mxu0 0
      %8181 = vmatpush1.bf16.msra.mxu0 %v7999
      %8182 = vmatprep.subr.bf16.mxu0 0
      %8183 = vmatpush1.bf16.msra.mxu0 %v8000
      %8184 = vmatprep.subr.bf16.mxu0 0
      %8185 = vmatpush1.bf16.msra.mxu0 %v8001
      %8186 = vmatprep.subr.bf16.mxu0 0
      %8187 = vmatpush1.bf16.msra.mxu0 %v8002
      %8188 = vmatprep.subr.bf16.mxu0 0
      %8189 = vmatpush1.bf16.msra.mxu0 %v8003
      %8190 = vmatprep.subr.bf16.mxu0 0
      %8191 = vmatpush1.bf16.msra.mxu0 %v8004
      %8192 = vmatprep.subr.bf16.mxu0 0
      %8193 = vmatpush1.bf16.msra.mxu0 %v8005
      %8194 = vmatprep.subr.bf16.mxu0 0
      %8195 = vmatpush1.bf16.msra.mxu0 %v8006
      %8196 = vmatprep.subr.bf16.mxu0 0
      %8197 = vmatpush1.bf16.msra.mxu0 %v8007
      %8198 = vmatprep.subr.bf16.mxu0 0
      %8199 = vmatpush1.bf16.msra.mxu0 %v8008
      %8200 = vmatprep.subr.bf16.mxu0 0
      %8201 = vmatpush1.bf16.msra.mxu0 %v8009
      %8202 = vmatprep.subr.bf16.mxu0 0
      %8203 = vmatpush1.bf16.msra.mxu0 %v8010
      %8204 = vmatprep.mubr.bf16.mxu0 %v7725
      %8205 = vmatmul.mubr.bf16.gmra.mrb[0].mxu0 %v7724
      %v8206 = vpop.f32.mrb[0].mxu0
      %v8207 = vadd.f32 %v8110, %v8206
      %v8208 = vpop.f32.mrb[0].mxu0
      %v8209 = vpop.f32.mrb[0].mxu0
      %v8210 = vadd.f32 %v8113, %v8209
      %v8211 = vpop.f32.mrb[0].mxu0
      %8212 = vmatprep.mubr.bf16.mxu0 %v7730
      %8213 = vmatmul.mubr.bf16.gmra.mrb[0].mxu0 %v7729
      %v8214 = vpop.f32.mrb[0].mxu0
      %v8215 = vadd.f32 %v8118, %v8214
      %v8216 = vpop.f32.mrb[0].mxu0
      %v8217 = vpop.f32.mrb[0].mxu0
      %v8218 = vadd.f32 %v8121, %v8217
      %v8219 = vpop.f32.mrb[0].mxu0
      %8220 = vmatprep.mubr.bf16.mxu0 %v7734
      %8221 = vmatmul.mubr.bf16.gmra.mrb[0].mxu0 %v7733
      %v8222 = vpop.f32.mrb[0].mxu0
      %v8223 = vadd.f32 %v8126, %v8222
      %v8224 = vpop.f32.mrb[0].mxu0
      %v8225 = vpop.f32.mrb[0].mxu0
      %v8226 = vadd.f32 %v8129, %v8225
      %v8227 = vpop.f32.mrb[0].mxu0
      %8228 = vmatprep.mubr.bf16.mxu0 %v7738
      %8229 = vmatmul.mubr.bf16.gmra.mrb[0].mxu0 %v7737
      %v8230 = vpop.f32.mrb[0].mxu0
      %v8231 = vadd.f32 %v8134, %v8230
      %v8232 = vpop.f32.mrb[0].mxu0
      %v8233 = vpop.f32.mrb[0].mxu0
      %v8234 = vadd.f32 %v8137, %v8233
      %v8235 = vpop.f32.mrb[0].mxu0
      %8236 = vmatprep.mubr.bf16.mxu0 %v7742
      %8237 = vmatmul.mubr.bf16.gmra.mrb[0].mxu0 %v7741
      %v8238 = vpop.f32.mrb[0].mxu0
      %v8239 = vadd.f32 %v8142, %v8238
      %v8240 = vpop.f32.mrb[0].mxu0
      %v8241 = vpop.f32.mrb[0].mxu0
      %v8242 = vadd.f32 %v8145, %v8241
      %v8243 = vpop.f32.mrb[0].mxu0
      %8244 = vmatprep.mubr.bf16.mxu0 %v7746
      %8245 = vmatmul.mubr.bf16.gmra.mrb[0].mxu0 %v7745
      %v8246 = vpop.f32.mrb[0].mxu0
      %v8247 = vadd.f32 %v8150, %v8246
      %v8248 = vpop.f32.mrb[0].mxu0
      %v8249 = vpop.f32.mrb[0].mxu0
      %v8250 = vadd.f32 %v8153, %v8249
      %v8251 = vpop.f32.mrb[0].mxu0
      %8252 = vmatprep.mubr.bf16.mxu0 %v7750
      %8253 = vmatmul.mubr.bf16.gmra.mrb[0].mxu0 %v7749
      %v8254 = vpop.f32.mrb[0].mxu0
      %v8255 = vadd.f32 %v8158, %v8254
      %v8256 = vpop.f32.mrb[0].mxu0
      %v8257 = vpop.f32.mrb[0].mxu0
      %v8258 = vadd.f32 %v8161, %v8257
      %v8259 = vpop.f32.mrb[0].mxu0
      %8260 = vmatprep.mubr.bf16.mxu0 %v7754
      %8261 = vmatmul.mubr.bf16.gmra.mrb[0].mxu0 %v7753
      %v8262 = vpop.f32.mrb[0].mxu0
      %v8263 = vadd.f32 %v8166, %v8262
      %v8264 = vpop.f32.mrb[0].mxu0
      %v8265 = vpop.f32.mrb[0].mxu0
      %v8266 = vadd.f32 %v8169, %v8265
      %v8267 = vpop.f32.mrb[0].mxu0
      %8268 = vdwg.mxu0
      %8269 = vmatprep.subr.bf16.mxu0 0
      %8270 = vmatpush1.bf16.msra.mxu0 %v8011
      %8271 = vmatprep.subr.bf16.mxu0 0
      %8272 = vmatpush1.bf16.msra.mxu0 %v8012
      %8273 = vmatprep.subr.bf16.mxu0 0
      %8274 = vmatpush1.bf16.msra.mxu0 %v8013
      %8275 = vmatprep.subr.bf16.mxu0 0
      %8276 = vmatpush1.bf16.msra.mxu0 %v8014
      %8277 = vmatprep.subr.bf16.mxu0 0
      %8278 = vmatpush1.bf16.msra.mxu0 0
      %8279 = vmatprep.subr.bf16.mxu0 0
      %8280 = vmatpush1.bf16.msra.mxu0 0
      %8281 = vmatprep.subr.bf16.mxu0 0
      %8282 = vmatpush1.bf16.msra.mxu0 0
      %8283 = vmatprep.subr.bf16.mxu0 0
      %8284 = vmatpush1.bf16.msra.mxu0 0
      %8285 = vmatprep.subr.bf16.mxu0 0
      %8286 = vmatpush1.bf16.msra.mxu0 0
      %8287 = vmatprep.subr.bf16.mxu0 0
      %8288 = vmatpush1.bf16.msra.mxu0 0
      %8289 = vmatprep.subr.bf16.mxu0 0
      %8290 = vmatpush1.bf16.msra.mxu0 0
      %8291 = vmatprep.subr.bf16.mxu0 0
      %8292 = vmatpush1.bf16.msra.mxu0 0
      %8293 = vmatprep.subr.bf16.mxu0 0
      %8294 = vmatpush1.bf16.msra.mxu0 0
      %8295 = vmatprep.subr.bf16.mxu0 0
      %8296 = vmatpush1.bf16.msra.mxu0 0
      %8297 = vmatprep.subr.bf16.mxu0 0
      %8298 = vmatpush1.bf16.msra.mxu0 0
      %8299 = vmatprep.subr.bf16.mxu0 0
      %8300 = vmatpush1.bf16.msra.mxu0 0
      %8301 = vmatprep.mubr.bf16.mxu0 0
      %8302 = vmatmul.mubr.bf16.gmra.mrb[0].mxu0 %v8052
      %v8303 = vpop.f32.mrb[0].mxu0
      %v8304 = vadd.f32 %v8207, %v8303
      %v8305 = vpop.f32.mrb[0].mxu0
      %v8306 = vpop.f32.mrb[0].mxu0
      %v8307 = vadd.f32 %v8210, %v8306
      %v8308 = vpop.f32.mrb[0].mxu0
      %8309 = vmatprep.mubr.bf16.mxu0 0
      %8310 = vmatmul.mubr.bf16.gmra.mrb[0].mxu0 %v8055
      %v8311 = vpop.f32.mrb[0].mxu0
      %v8312 = vadd.f32 %v8215, %v8311
      %v8313 = vpop.f32.mrb[0].mxu0
      %v8314 = vpop.f32.mrb[0].mxu0
      %v8315 = vadd.f32 %v8218, %v8314
      %v8316 = vpop.f32.mrb[0].mxu0
      %8317 = vmatprep.mubr.bf16.mxu0 0
      %8318 = vmatmul.mubr.bf16.gmra.mrb[0].mxu0 %v8058
      %v8319 = vpop.f32.mrb[0].mxu0
      %v8320 = vadd.f32 %v8223, %v8319
      %v8321 = vpop.f32.mrb[0].mxu0
      %v8322 = vpop.f32.mrb[0].mxu0
      %v8323 = vadd.f32 %v8226, %v8322
      %v8324 = vpop.f32.mrb[0].mxu0
      %8325 = vmatprep.mubr.bf16.mxu0 0
      %8326 = vmatmul.mubr.bf16.gmra.mrb[0].mxu0 %v8061
      %v8327 = vpop.f32.mrb[0].mxu0
      %v8328 = vadd.f32 %v8231, %v8327
      %v8329 = vpop.f32.mrb[0].mxu0
      %v8330 = vpop.f32.mrb[0].mxu0
      %v8331 = vadd.f32 %v8234, %v8330
      %v8332 = vpop.f32.mrb[0].mxu0
      %8333 = vmatprep.mubr.bf16.mxu0 0
      %8334 = vmatmul.mubr.bf16.gmra.mrb[0].mxu0 %v8064
      %v8335 = vpop.f32.mrb[0].mxu0
      %v8336 = vadd.f32 %v8239, %v8335
      %v8337 = vpop.f32.mrb[0].mxu0
      %v8338 = vpop.f32.mrb[0].mxu0
      %v8339 = vadd.f32 %v8242, %v8338
      %v8340 = vpop.f32.mrb[0].mxu0
      %8341 = vmatprep.mubr.bf16.mxu0 0
      %8342 = vmatmul.mubr.bf16.gmra.mrb[0].mxu0 %v8067
      %v8343 = vpop.f32.mrb[0].mxu0
      %v8344 = vadd.f32 %v8247, %v8343
      %v8345 = vpop.f32.mrb[0].mxu0
      %v8346 = vpop.f32.mrb[0].mxu0
      %v8347 = vadd.f32 %v8250, %v8346
      %v8348 = vpop.f32.mrb[0].mxu0
      %8349 = vmatprep.mubr.bf16.mxu0 0
      %8350 = vmatmul.mubr.bf16.gmra.mrb[0].mxu0 %v8070
      %v8351 = vpop.f32.mrb[0].mxu0
      %v8352 = vadd.f32 %v8255, %v8351
      %v8353 = vpop.f32.mrb[0].mxu0
      %v8354 = vpop.f32.mrb[0].mxu0
      %v8355 = vadd.f32 %v8258, %v8354
      %v8356 = vpop.f32.mrb[0].mxu0
      %8357 = vmatprep.mubr.bf16.mxu0 0
      %8358 = vmatmul.mubr.bf16.gmra.mrb[0].mxu0 %v8073
      %v8359 = vpop.f32.mrb[0].mxu0
      %v8360 = vadd.f32 %v8263, %v8359
      %v8361 = vpop.f32.mrb[0].mxu0
      %v8362 = vpop.f32.mrb[0].mxu0
      %v8363 = vadd.f32 %v8266, %v8362
      %v8364 = vpop.f32.mrb[0].mxu0
      %8365 = vdwg.mxu0
      %8366 = vst.msk [vmem:[%s368] sm:$0xff] %vm2262, %v8304
      %8367 = vst.msk [vmem:[%s368 + $0x8] sm:$0xff] %vm2262, %v8307
      %8368 = vst.msk [vmem:[%s368 + $0x10] sm:$0xff] %vm2262, %v8312
      %8369 = vst.msk [vmem:[%s368 + $0x18] sm:$0xff] %vm2262, %v8315
      %8370 = vst.msk [vmem:[%s368 + $0x20] sm:$0xff] %vm2262, %v8320
      %8371 = vst.msk [vmem:[%s368 + $0x28] sm:$0xff] %vm2262, %v8323
      %8372 = vst.msk [vmem:[%s368 + $0x30] sm:$0xff] %vm2262, %v8328
      %8373 = vst.msk [vmem:[%s368 + $0x38] sm:$0xff] %vm2262, %v8331
      %8374 = vst.msk [vmem:[%s368 + $0x40] sm:$0xff] %vm2262, %v8336
      %8375 = vst.msk [vmem:[%s368 + $0x48] sm:$0xff] %vm2262, %v8339
      %8376 = vst.msk [vmem:[%s368 + $0x50] sm:$0xff] %vm2262, %v8344
      %8377 = vst.msk [vmem:[%s368 + $0x58] sm:$0xff] %vm2262, %v8347
      %8378 = vst.msk [vmem:[%s368 + $0x60] sm:$0xff] %vm2262, %v8352
      %8379 = vst.msk [vmem:[%s368 + $0x68] sm:$0xff] %vm2262, %v8355
      %8380 = vst.msk [vmem:[%s368 + $0x70] sm:$0xff] %vm2262, %v8360
      %8381 = vst.msk [vmem:[%s368 + $0x78] sm:$0xff] %vm2262, %v8363
      %p8382 = scmp.lt.s32.totalorder %s24, 1
      %s8383 = scalar_select %p8382, %s24, 1
      %p8384 = scmp.lt.s32.totalorder %s25, 1
      %s8385 = scalar_select %p8384, %s25, 1
      %s8386 = smul.addr %s8385, 16
      %s8387 = smul.addr %s8383, 32
      %s8388 = sadd.s32 %s8386, %s8387
      %s8389 = smul.addr %s8388, 8
      %s8390 = scalar_lea.vmem %s9, %s8389
      // Predicated region
      $region57: #{srresnet_forward.3} parent=55 // pred_check
        %p8391 = pneg %p248
      $region58: #{srresnet_forward.3} parent=55 // pred_check_branch
        %8393 = sbr.rel (%p8391) target = $region60
      $region59: #{srresnet_forward.3} parent=55 // pred_region
        _
      $region60: #{srresnet_forward.3} parent=55 // pred_fallthru
        _
    $region56: #{srresnet_forward.3} parent=5 // pred_fallthru
      _
    %p8394 = scmp.le.s32.totalorder 2, %s15
    // Predicated region
    $region61: #{srresnet_forward.3} parent=5 // pred_check
      %p8395 = pneg %p8394
    $region62: #{srresnet_forward.3} parent=5 // pred_check_branch
      %8397 = sbr.rel (%p8395) target = $region64
    $region63: #{srresnet_forward.3} parent=5 // pred_region
      %s8398 = ssub.s32 %s15, 2
      // Predicated region
      $region65: #{srresnet_forward.3} parent=63 // pred_check
        %p8399 = pneg %p254
      $region66: #{srresnet_forward.3} parent=63 // pred_check_branch
        %8401 = sbr.rel (%p8399) target = $region68
      $region67: #{srresnet_forward.3} parent=63 // pred_region
        %p8402 = scmp.lt.s32.totalorder %s26, 1
        %s8403 = scalar_select %p8402, %s26, 1
        %p8404 = scmp.lt.s32.totalorder %s27, 1
        %s8405 = scalar_select %p8404, %s27, 1
        %s8406 = smul.addr %s8405, 16
        %s8407 = smul.addr %s8403, 32
        %s8408 = sadd.s32 %s8406, %s8407
        %s8409 = smul.addr %s8408, 8
        %s8410 = scalar_lea.vmem %s9, %s8409
      $region68: #{srresnet_forward.3} parent=63 // pred_fallthru
        _
    $region64: #{srresnet_forward.3} parent=5 // pred_fallthru
      _
  $region6: #{srresnet_forward.3} parent=0 // loop_footer
    %s19 = sadd.s32 1, %s15
  $region7: #{srresnet_forward.3} parent=0 // loop_footer_branch
    %14 = sbr.rel target = $region3
  $region8: #{srresnet_forward.3} parent=0 // loop_exit
    _

// kernel: srresnet_forward.5
$region0: #{srresnet_forward.5}
  #allocation0 [shape = 'u32[]', space=smem, size = 0x4, offset = 0x4, fixed_abs, tag = 'smem constant byte address 0x4 - core index']
  #allocation1 [shape = 'u32[144,128]{1,0:T(1,128)}', space=vmem, size = 0x12000, scoped, tag = 'internal scratch']
  %s0 = inlined_call_operand.vmem [shape: f32[2,4,10,34,32], index: 0, kind: input, shape index: {}]
  %s1 = inlined_call_operand.vmem [shape: bf16[288,8], index: 1, kind: input, shape index: {}]
  %s2 = inlined_call_operand.vmem [shape: f32[1,8], index: 2, kind: input, shape index: {}]
  %s3 = inlined_call_operand.vmem [shape: f32[2,4,8,32,8], index: 3, kind: output, shape index: {}]
  %s4 = sld [smem:[#allocation0]]
  $region45: #{srresnet_forward.5} parent=0
    _
  %s6 = ssub.s32 1, %s4
  %s7 = scalar_select 0, %s6, %s4
  loop: start=0, step=1, limit=10
  $region2: #{srresnet_forward.5} parent=0 // loop_pre_header
    _
  $region3: #{srresnet_forward.5} parent=0 // loop_header
    %s9 = sphi 0, %s13
    %p10 = scmp.ge.s32.totalorder %s9, 10
    %s16 = sphi 0, %s28
    %s17 = sphi 0, %s24
    %s18 = sphi 0, %s16
    %s19 = sphi 0, %s17
    %s20 = sphi 0, %s18
    %s21 = sphi 0, %s19
    %s33 = sphi 0, %s35
    %s36 = sphi 0, %s33
    %s37 = sphi 0, %s36
    %s53 = sphi 0, %s37
    %s57 = sphi 0, %s57
    %s59 = sphi 0, %s57
    %s60 = sphi 0, %s59
    %s74 = sphi 0, %s60
    %s78 = sphi 0, %s78
    %s80 = sphi 0, %s78
    %s81 = sphi 0, %s80
    %s95 = sphi 0, %s81
    %s103 = sphi 0, %s105
    %s106 = sphi 0, %s103
    %s107 = sphi 0, %s106
    %s123 = sphi 0, %s107
  $region4: #{srresnet_forward.5} parent=0 // loop_header_branch
    %12 = sbr.rel (%p10) target = $region8
  $region5: #{srresnet_forward.5} parent=0 // loop_body
    %s14 = ssub.s32 %s9, 1
    %s15 = ssub.s32 %s9, 2
    %s22 = sadd.s32 1, %s17
    %p23 = scmp.ge.s32.totalorder %s22, 4
    %s24 = scalar_select %p23, 0, %s22
    %s25 = sadd.s32 1, %s16
    %s26 = scalar_select %p23, %s25, %s16
    %p27 = scmp.ge.s32.totalorder %s26, 2
    %s28 = scalar_select %p27, 0, %s26
    %s29 = ssub.s32 %s16, %s28
    %s30 = ssub.s32 %s17, %s24
    %s31 = sor.u32 %s29, %s30
    %p32 = scmp.eq.s32.totalorder %s31, 0
    %s34 = sadd.s32 %s33, 1
    %s35 = scalar_select %p32, %s33, %s34
    %p38 = pneg %p32
    %p39 = scmp.eq.s32.totalorder %s9, 7
    %p40 = por %p38, %p39
    %p41 = scmp.ne.s32.totalorder %s33, %s36
    %p42 = scmp.eq.s32.totalorder %s9, 0
    %p43 = por %p41, %p42
    %p44 = scmp.ne.s32.totalorder %s33, %s36
    %p45 = scmp.eq.s32.totalorder %s14, 7
    %p46 = por %p44, %p45
    %p47 = scmp.ne.s32.totalorder %s36, %s37
    %p48 = scmp.eq.s32.totalorder %s14, 0
    %p49 = por %p47, %p48
    %p50 = scmp.ne.s32.totalorder %s36, %s37
    %p51 = scmp.eq.s32.totalorder %s15, 7
    %p52 = por %p50, %p51
    %p54 = scmp.ne.s32.totalorder %s37, %s53
    %p55 = scmp.eq.s32.totalorder %s15, 0
    %p56 = por %p54, %p55
    %s58 = sadd.s32 %s57, 1
    %p61 = scmp.eq.s32.totalorder %s9, 7
    %p62 = scmp.ne.s32.totalorder %s57, %s59
    %p63 = scmp.eq.s32.totalorder %s9, 0
    %p64 = por %p62, %p63
    %p65 = scmp.ne.s32.totalorder %s57, %s59
    %p66 = scmp.eq.s32.totalorder %s14, 7
    %p67 = por %p65, %p66
    %p68 = scmp.ne.s32.totalorder %s59, %s60
    %p69 = scmp.eq.s32.totalorder %s14, 0
    %p70 = por %p68, %p69
    %p71 = scmp.ne.s32.totalorder %s59, %s60
    %p72 = scmp.eq.s32.totalorder %s15, 7
    %p73 = por %p71, %p72
    %p75 = scmp.ne.s32.totalorder %s60, %s74
    %p76 = scmp.eq.s32.totalorder %s15, 0
    %p77 = por %p75, %p76
    %s79 = sadd.s32 %s78, 1
    %p82 = scmp.eq.s32.totalorder %s9, 7
    %p83 = scmp.ne.s32.totalorder %s78, %s80
    %p84 = scmp.eq.s32.totalorder %s9, 0
    %p85 = por %p83, %p84
    %p86 = scmp.ne.s32.totalorder %s78, %s80
    %p87 = scmp.eq.s32.totalorder %s14, 7
    %p88 = por %p86, %p87
    %p89 = scmp.ne.s32.totalorder %s80, %s81
    %p90 = scmp.eq.s32.totalorder %s14, 0
    %p91 = por %p89, %p90
    %p92 = scmp.ne.s32.totalorder %s80, %s81
    %p93 = scmp.eq.s32.totalorder %s15, 7
    %p94 = por %p92, %p93
    %p96 = scmp.ne.s32.totalorder %s81, %s95
    %p97 = scmp.eq.s32.totalorder %s15, 0
    %p98 = por %p96, %p97
    %s99 = ssub.s32 %s16, %s28
    %s100 = ssub.s32 %s17, %s24
    %s101 = sor.u32 %s99, %s100
    %p102 = scmp.eq.s32.totalorder %s101, 0
    %s104 = sadd.s32 %s103, 1
    %s105 = scalar_select %p102, %s103, %s104
    %p108 = pneg %p102
    %p109 = scmp.eq.s32.totalorder %s9, 7
    %p110 = por %p108, %p109
    %p111 = scmp.ne.s32.totalorder %s103, %s106
    %p112 = scmp.eq.s32.totalorder %s9, 0
    %p113 = por %p111, %p112
    %p114 = scmp.ne.s32.totalorder %s103, %s106
    %p115 = scmp.eq.s32.totalorder %s14, 7
    %p116 = por %p114, %p115
    %p117 = scmp.ne.s32.totalorder %s106, %s107
    %p118 = scmp.eq.s32.totalorder %s14, 0
    %p119 = por %p117, %p118
    %p120 = scmp.ne.s32.totalorder %s106, %s107
    %p121 = scmp.eq.s32.totalorder %s15, 7
    %p122 = por %p120, %p121
    %p124 = scmp.ne.s32.totalorder %s107, %s123
    %p125 = scmp.eq.s32.totalorder %s15, 0
    %p126 = por %p124, %p125
    %p127 = scmp.le.s32.totalorder 1, %s9
    %p128 = scmp.lt.s32.totalorder %s9, 9
    %p129 = pnand %p127, %p128
    %p130 = pneg %p129
    // Predicated region
    $region9: #{srresnet_forward.5} parent=5 // pred_check
      _
    $region10: #{srresnet_forward.5} parent=5 // pred_check_branch
      %132 = sbr.rel (%p129) target = $region12
    $region11: #{srresnet_forward.5} parent=5 // pred_region
      %s133 = ssub.s32 %s9, 1
      // Predicated region
      $region13: #{srresnet_forward.5} parent=11 // pred_check
        %p134 = pneg %p70
      $region14: #{srresnet_forward.5} parent=11 // pred_check_branch
        %136 = sbr.rel (%p134) target = $region16
      $region15: #{srresnet_forward.5} parent=11 // pred_region
        _
      $region16: #{srresnet_forward.5} parent=11 // pred_fallthru
        _
      // Predicated region
      $region17: #{srresnet_forward.5} parent=11 // pred_check
        %p137 = pneg %p91
      $region18: #{srresnet_forward.5} parent=11 // pred_check_branch
        %139 = sbr.rel (%p137) target = $region20
      $region19: #{srresnet_forward.5} parent=11 // pred_region
        _
      $region20: #{srresnet_forward.5} parent=11 // pred_fallthru
        _
    $region12: #{srresnet_forward.5} parent=5 // pred_fallthru
      _
    %p140 = scmp.lt.s32.totalorder %s9, 8
    // Predicated region
    $region21: #{srresnet_forward.5} parent=5 // pred_check
      %p141 = pneg %p140
    $region22: #{srresnet_forward.5} parent=5 // pred_check_branch
      %143 = sbr.rel (%p141) target = $region24
    $region23: #{srresnet_forward.5} parent=5 // pred_region
      // Predicated region
      $region25: #{srresnet_forward.5} parent=23 // pred_check
        %p144 = pneg %p43
      $region26: #{srresnet_forward.5} parent=23 // pred_check_branch
        %146 = sbr.rel (%p144) target = $region28
      $region27: #{srresnet_forward.5} parent=23 // pred_region
        %p147 = scmp.lt.s32.totalorder %s16, 1
        %s148 = scalar_select %p147, %s16, 1
        %p149 = scmp.lt.s32.totalorder %s17, 3
        %s150 = scalar_select %p149, %s17, 3
        %s151 = smul.addr %s150, 50
        %s152 = smul.addr %s148, 200
        %s153 = sadd.s32 %s151, %s152
        %s154 = smul.addr %s153, 8
        %s155 = scalar_lea.vmem %s0, %s154
      $region28: #{srresnet_forward.5} parent=23 // pred_fallthru
        _
    $region24: #{srresnet_forward.5} parent=5 // pred_fallthru
      _
    %p156 = scmp.le.s32.totalorder 1, %s9
    %p157 = scmp.lt.s32.totalorder %s9, 9
    %p158 = pnand %p156, %p157
    %p159 = pneg %p158
    // Predicated region
    $region29: #{srresnet_forward.5} parent=5 // pred_check
      _
    $region30: #{srresnet_forward.5} parent=5 // pred_check_branch
      %161 = sbr.rel (%p158) target = $region32
    $region31: #{srresnet_forward.5} parent=5 // pred_region
      %s162 = ssub.s32 %s9, 1
      %p163 = scmp.lt.s32.totalorder %s18, 1
      %s164 = scalar_select %p163, %s18, 1
      %p165 = scmp.lt.s32.totalorder %s19, 3
      %s166 = scalar_select %p165, %s19, 3
      %s167 = smul.addr %s166, 50
      %s168 = smul.addr %s164, 200
      %s169 = sadd.s32 %s167, %s168
      %s170 = smul.addr %s169, 8
      %s171 = scalar_lea.vmem %s0, %s170
      %p172 = pneg %p49
      %p173 = pneg %p46
      %p174 = pneg %p70
      %p175 = pneg %p67
      %p176 = pneg %p91
      %p177 = pneg %p88
      %p178 = pneg %p119
      %p179 = pneg %p116
      %p180 = scmp.lt.s32.totalorder %s18, 1
      %s181 = scalar_select %p180, %s18, 1
      %p182 = scmp.lt.s32.totalorder %s19, 3
      %s183 = scalar_select %p182, %s19, 3
      %s184 = smul.addr %s183, 32
      %s185 = smul.addr %s181, 128
      %s186 = sadd.s32 %s184, %s185
      %s187 = smul.addr %s186, 8
      %s188 = scalar_lea.vmem %s3, %s187
      %p189 = scmp.lt.s32.totalorder %s18, 1
      %s190 = scalar_select %p189, %s18, 1
      %p191 = scmp.lt.s32.totalorder %s19, 3
      %s192 = scalar_select %p191, %s19, 3
      %s193 = smul.addr %s192, 50
      %s194 = smul.addr %s190, 200
      %s195 = sadd.s32 %s193, %s194
      %s196 = smul.addr %s195, 8
      %s197 = scalar_lea.vmem %s0, %s196
      %p198 = scmp.lt.s32.totalorder %s18, 1
      %s199 = scalar_select %p198, %s18, 1
      %p200 = scmp.lt.s32.totalorder %s19, 3
      %s201 = scalar_select %p200, %s19, 3
      %s202 = smul.addr %s201, 32
      %s203 = smul.addr %s199, 128
      %s204 = sadd.s32 %s202, %s203
      %s205 = smul.addr %s204, 8
      %s206 = scalar_lea.vmem %s3, %s205
      %v208 = vld [vmem:[%s197] sm:$0xff]
      %v209 = vld [vmem:[%s197 + $0x8] sm:$0xff]
      %v210 = vld [vmem:[%s197 + $0x10] sm:$0xff]
      %v211 = vld [vmem:[%s197 + $0x18] sm:$0xff]
      %v212 = vld [vmem:[%s197 + $0x20] sm:$0x3]
      %v213 = vld [vmem:[%s197 + $0x28] sm:$0xff]
      %v214 = vld [vmem:[%s197 + $0x30] sm:$0xff]
      %v215 = vld [vmem:[%s197 + $0x38] sm:$0xff]
      %v216 = vld [vmem:[%s197 + $0x40] sm:$0xff]
      %v217 = vld [vmem:[%s197 + $0x48] sm:$0x3]
      %v218 = vld [vmem:[%s197 + $0x50] sm:$0xff]
      %v219 = vld [vmem:[%s197 + $0x58] sm:$0xff]
      %v220 = vld [vmem:[%s197 + $0x60] sm:$0xff]
      %v221 = vld [vmem:[%s197 + $0x68] sm:$0xff]
      %v222 = vld [vmem:[%s197 + $0x70] sm:$0x3]
      %v223 = vld [vmem:[%s197 + $0x78] sm:$0xff]
      %v224 = vld [vmem:[%s197 + $0x80] sm:$0xff]
      %v225 = vld [vmem:[%s197 + $0x88] sm:$0xff]
      %v226 = vld [vmem:[%s197 + $0x90] sm:$0xff]
      %v227 = vld [vmem:[%s197 + $0x98] sm:$0x3]
      %v228 = vld [vmem:[%s197 + $0xa0] sm:$0xff]
      %v229 = vld [vmem:[%s197 + $0xa8] sm:$0xff]
      %v230 = vld [vmem:[%s197 + $0xb0] sm:$0xff]
      %v231 = vld [vmem:[%s197 + $0xb8] sm:$0xff]
      %v232 = vld [vmem:[%s197 + $0xc0] sm:$0x3]
      %v233 = vld [vmem:[%s197 + $0xc8] sm:$0xff]
      %v234 = vld [vmem:[%s197 + $0xd0] sm:$0xff]
      %v235 = vld [vmem:[%s197 + $0xd8] sm:$0xff]
      %v236 = vld [vmem:[%s197 + $0xe0] sm:$0xff]
      %v237 = vld [vmem:[%s197 + $0xe8] sm:$0x3]
      %v238 = vld [vmem:[%s197 + $0xf0] sm:$0xff]
      %v239 = vld [vmem:[%s197 + $0xf8] sm:$0xff]
      %v240 = vld [vmem:[%s197 + $0x100] sm:$0xff]
      %v241 = vld [vmem:[%s197 + $0x108] sm:$0xff]
      %v242 = vld [vmem:[%s197 + $0x110] sm:$0x3]
      %v243 = vld [vmem:[%s197 + $0x118] sm:$0xff]
      %v244 = vld [vmem:[%s197 + $0x120] sm:$0xff]
      %v245 = vld [vmem:[%s197 + $0x128] sm:$0xff]
      %v246 = vld [vmem:[%s197 + $0x130] sm:$0xff]
      %v247 = vld [vmem:[%s197 + $0x138] sm:$0x3]
      %v248 = vld [vmem:[%s197 + $0x140] sm:$0xff]
      %v249 = vld [vmem:[%s197 + $0x148] sm:$0xff]
      %v250 = vld [vmem:[%s197 + $0x150] sm:$0xff]
      %v251 = vld [vmem:[%s197 + $0x158] sm:$0xff]
      %v252 = vld [vmem:[%s197 + $0x160] sm:$0x3]
      %v253 = vld [vmem:[%s197 + $0x168] sm:$0xff]
      %v254 = vld [vmem:[%s197 + $0x170] sm:$0xff]
      %v255 = vld [vmem:[%s197 + $0x178] sm:$0xff]
      %v256 = vld [vmem:[%s197 + $0x180] sm:$0xff]
      %v257 = vld [vmem:[%s197 + $0x188] sm:$0x3]
      %vm298 = vcmask 1046528
      %v299 = vrot.slane %v208, 1
      %v300 = vrot.slane %v209, 1
      %v301 = vsel %vm298, %v299, %v300
      %v302 = vrot.slane %v210, 1
      %v303 = vsel %vm298, %v300, %v302
      %v304 = vrot.slane %v211, 1
      %v305 = vsel %vm298, %v302, %v304
      %v306 = vrot.slane %v212, 1
      %v307 = vsel %vm298, %v304, %v306
      %v308 = vrot.slane %v213, 1
      %v309 = vrot.slane %v214, 1
      %v310 = vsel %vm298, %v308, %v309
      %v311 = vrot.slane %v215, 1
      %v312 = vsel %vm298, %v309, %v311
      %v313 = vrot.slane %v216, 1
      %v314 = vsel %vm298, %v311, %v313
      %v315 = vrot.slane %v217, 1
      %v316 = vsel %vm298, %v313, %v315
      %v317 = vrot.slane %v218, 1
      %v318 = vrot.slane %v219, 1
      %v319 = vsel %vm298, %v317, %v318
      %v320 = vrot.slane %v220, 1
      %v321 = vsel %vm298, %v318, %v320
      %v322 = vrot.slane %v221, 1
      %v323 = vsel %vm298, %v320, %v322
      %v324 = vrot.slane %v222, 1
      %v325 = vsel %vm298, %v322, %v324
      %v326 = vrot.slane %v223, 1
      %v327 = vrot.slane %v224, 1
      %v328 = vsel %vm298, %v326, %v327
      %v329 = vrot.slane %v225, 1
      %v330 = vsel %vm298, %v327, %v329
      %v331 = vrot.slane %v226, 1
      %v332 = vsel %vm298, %v329, %v331
      %v333 = vrot.slane %v227, 1
      %v334 = vsel %vm298, %v331, %v333
      %v335 = vrot.slane %v228, 1
      %v336 = vrot.slane %v229, 1
      %v337 = vsel %vm298, %v335, %v336
      %v338 = vrot.slane %v230, 1
      %v339 = vsel %vm298, %v336, %v338
      %v340 = vrot.slane %v231, 1
      %v341 = vsel %vm298, %v338, %v340
      %v342 = vrot.slane %v232, 1
      %v343 = vsel %vm298, %v340, %v342
      %v344 = vrot.slane %v233, 1
      %v345 = vrot.slane %v234, 1
      %v346 = vsel %vm298, %v344, %v345
      %v347 = vrot.slane %v235, 1
      %v348 = vsel %vm298, %v345, %v347
      %v349 = vrot.slane %v236, 1
      %v350 = vsel %vm298, %v347, %v349
      %v351 = vrot.slane %v237, 1
      %v352 = vsel %vm298, %v349, %v351
      %v353 = vrot.slane %v238, 1
      %v354 = vrot.slane %v239, 1
      %v355 = vsel %vm298, %v353, %v354
      %v356 = vrot.slane %v240, 1
      %v357 = vsel %vm298, %v354, %v356
      %v358 = vrot.slane %v241, 1
      %v359 = vsel %vm298, %v356, %v358
      %v360 = vrot.slane %v242, 1
      %v361 = vsel %vm298, %v358, %v360
      %v362 = vrot.slane %v243, 1
      %v363 = vrot.slane %v244, 1
      %v364 = vsel %vm298, %v362, %v363
      %v365 = vrot.slane %v245, 1
      %v366 = vsel %vm298, %v363, %v365
      %v367 = vrot.slane %v246, 1
      %v368 = vsel %vm298, %v365, %v367
      %v369 = vrot.slane %v247, 1
      %v370 = vsel %vm298, %v367, %v369
      %371 = vrot.lane.b32.xlu0 %v301, 32
      %v372 = vpop.permute.xlu0 %371
      %373 = vrot.lane.b32.xlu0 %v303, 32
      %v374 = vpop.permute.xlu0 %373
      %375 = vrot.lane.b32.xlu0 %v305, 32
      %v376 = vpop.permute.xlu0 %375
      %377 = vrot.lane.b32.xlu0 %v307, 32
      %v378 = vpop.permute.xlu0 %377
      %379 = vrot.lane.b32.xlu0 %v310, 32
      %v380 = vpop.permute.xlu0 %379
      %381 = vrot.lane.b32.xlu0 %v312, 32
      %v382 = vpop.permute.xlu0 %381
      %383 = vrot.lane.b32.xlu0 %v314, 32
      %v384 = vpop.permute.xlu0 %383
      %385 = vrot.lane.b32.xlu0 %v316, 32
      %v386 = vpop.permute.xlu0 %385
      %387 = vrot.lane.b32.xlu0 %v319, 32
      %v388 = vpop.permute.xlu0 %387
      %389 = vrot.lane.b32.xlu0 %v321, 32
      %v390 = vpop.permute.xlu0 %389
      %391 = vrot.lane.b32.xlu0 %v323, 32
      %v392 = vpop.permute.xlu0 %391
      %393 = vrot.lane.b32.xlu0 %v325, 32
      %v394 = vpop.permute.xlu0 %393
      %395 = vrot.lane.b32.xlu0 %v328, 32
      %v396 = vpop.permute.xlu0 %395
      %397 = vrot.lane.b32.xlu0 %v330, 32
      %v398 = vpop.permute.xlu0 %397
      %399 = vrot.lane.b32.xlu0 %v332, 32
      %v400 = vpop.permute.xlu0 %399
      %401 = vrot.lane.b32.xlu0 %v334, 32
      %v402 = vpop.permute.xlu0 %401
      %403 = vrot.lane.b32.xlu0 %v337, 32
      %v404 = vpop.permute.xlu0 %403
      %405 = vrot.lane.b32.xlu0 %v339, 32
      %v406 = vpop.permute.xlu0 %405
      %407 = vrot.lane.b32.xlu0 %v341, 32
      %v408 = vpop.permute.xlu0 %407
      %409 = vrot.lane.b32.xlu0 %v343, 32
      %v410 = vpop.permute.xlu0 %409
      %411 = vrot.lane.b32.xlu0 %v346, 32
      %v412 = vpop.permute.xlu0 %411
      %413 = vrot.lane.b32.xlu0 %v348, 32
      %v414 = vpop.permute.xlu0 %413
      %415 = vrot.lane.b32.xlu0 %v350, 32
      %v416 = vpop.permute.xlu0 %415
      %417 = vrot.lane.b32.xlu0 %v352, 32
      %v418 = vpop.permute.xlu0 %417
      %419 = vrot.lane.b32.xlu0 %v355, 32
      %v420 = vpop.permute.xlu0 %419
      %421 = vrot.lane.b32.xlu0 %v357, 32
      %v422 = vpop.permute.xlu0 %421
      %423 = vrot.lane.b32.xlu0 %v359, 32
      %v424 = vpop.permute.xlu0 %423
      %425 = vrot.lane.b32.xlu0 %v361, 32
      %v426 = vpop.permute.xlu0 %425
      %427 = vrot.lane.b32.xlu0 %v364, 32
      %v428 = vpop.permute.xlu0 %427
      %429 = vrot.lane.b32.xlu0 %v366, 32
      %v430 = vpop.permute.xlu0 %429
      %431 = vrot.lane.b32.xlu0 %v368, 32
      %v432 = vpop.permute.xlu0 %431
      %433 = vrot.lane.b32.xlu0 %v370, 32
      %v434 = vpop.permute.xlu0 %433
      %vm467 = vcmask 1045504
      %v468 = vrot.slane %v208, 2
      %v469 = vrot.slane %v209, 2
      %v470 = vsel %vm467, %v468, %v469
      %v471 = vrot.slane %v210, 2
      %v472 = vsel %vm467, %v469, %v471
      %v473 = vrot.slane %v211, 2
      %v474 = vsel %vm467, %v471, %v473
      %v475 = vrot.slane %v212, 2
      %v476 = vsel %vm467, %v473, %v475
      %v477 = vrot.slane %v213, 2
      %v478 = vrot.slane %v214, 2
      %v479 = vsel %vm467, %v477, %v478
      %v480 = vrot.slane %v215, 2
      %v481 = vsel %vm467, %v478, %v480
      %v482 = vrot.slane %v216, 2
      %v483 = vsel %vm467, %v480, %v482
      %v484 = vrot.slane %v217, 2
      %v485 = vsel %vm467, %v482, %v484
      %v486 = vrot.slane %v218, 2
      %v487 = vrot.slane %v219, 2
      %v488 = vsel %vm467, %v486, %v487
      %v489 = vrot.slane %v220, 2
      %v490 = vsel %vm467, %v487, %v489
      %v491 = vrot.slane %v221, 2
      %v492 = vsel %vm467, %v489, %v491
      %v493 = vrot.slane %v222, 2
      %v494 = vsel %vm467, %v491, %v493
      %v495 = vrot.slane %v223, 2
      %v496 = vrot.slane %v224, 2
      %v497 = vsel %vm467, %v495, %v496
      %v498 = vrot.slane %v225, 2
      %v499 = vsel %vm467, %v496, %v498
      %v500 = vrot.slane %v226, 2
      %v501 = vsel %vm467, %v498, %v500
      %v502 = vrot.slane %v227, 2
      %v503 = vsel %vm467, %v500, %v502
      %v504 = vrot.slane %v228, 2
      %v505 = vrot.slane %v229, 2
      %v506 = vsel %vm467, %v504, %v505
      %v507 = vrot.slane %v230, 2
      %v508 = vsel %vm467, %v505, %v507
      %v509 = vrot.slane %v231, 2
      %v510 = vsel %vm467, %v507, %v509
      %v511 = vrot.slane %v232, 2
      %v512 = vsel %vm467, %v509, %v511
      %v513 = vrot.slane %v233, 2
      %v514 = vrot.slane %v234, 2
      %v515 = vsel %vm467, %v513, %v514
      %v516 = vrot.slane %v235, 2
      %v517 = vsel %vm467, %v514, %v516
      %v518 = vrot.slane %v236, 2
      %v519 = vsel %vm467, %v516, %v518
      %v520 = vrot.slane %v237, 2
      %v521 = vsel %vm467, %v518, %v520
      %v522 = vrot.slane %v238, 2
      %v523 = vrot.slane %v239, 2
      %v524 = vsel %vm467, %v522, %v523
      %v525 = vrot.slane %v240, 2
      %v526 = vsel %vm467, %v523, %v525
      %v527 = vrot.slane %v241, 2
      %v528 = vsel %vm467, %v525, %v527
      %v529 = vrot.slane %v242, 2
      %v530 = vsel %vm467, %v527, %v529
      %v531 = vrot.slane %v243, 2
      %v532 = vrot.slane %v244, 2
      %v533 = vsel %vm467, %v531, %v532
      %v534 = vrot.slane %v245, 2
      %v535 = vsel %vm467, %v532, %v534
      %v536 = vrot.slane %v246, 2
      %v537 = vsel %vm467, %v534, %v536
      %v538 = vrot.slane %v247, 2
      %v539 = vsel %vm467, %v536, %v538
      %540 = vrot.lane.b32.xlu0 %v470, 64
      %v541 = vpop.permute.xlu0 %540
      %542 = vrot.lane.b32.xlu0 %v472, 64
      %v543 = vpop.permute.xlu0 %542
      %544 = vrot.lane.b32.xlu0 %v474, 64
      %v545 = vpop.permute.xlu0 %544
      %546 = vrot.lane.b32.xlu0 %v476, 64
      %v547 = vpop.permute.xlu0 %546
      %548 = vrot.lane.b32.xlu0 %v479, 64
      %v549 = vpop.permute.xlu0 %548
      %550 = vrot.lane.b32.xlu0 %v481, 64
      %v551 = vpop.permute.xlu0 %550
      %552 = vrot.lane.b32.xlu0 %v483, 64
      %v553 = vpop.permute.xlu0 %552
      %554 = vrot.lane.b32.xlu0 %v485, 64
      %v555 = vpop.permute.xlu0 %554
      %556 = vrot.lane.b32.xlu0 %v488, 64
      %v557 = vpop.permute.xlu0 %556
      %558 = vrot.lane.b32.xlu0 %v490, 64
      %v559 = vpop.permute.xlu0 %558
      %560 = vrot.lane.b32.xlu0 %v492, 64
      %v561 = vpop.permute.xlu0 %560
      %562 = vrot.lane.b32.xlu0 %v494, 64
      %v563 = vpop.permute.xlu0 %562
      %564 = vrot.lane.b32.xlu0 %v497, 64
      %v565 = vpop.permute.xlu0 %564
      %566 = vrot.lane.b32.xlu0 %v499, 64
      %v567 = vpop.permute.xlu0 %566
      %568 = vrot.lane.b32.xlu0 %v501, 64
      %v569 = vpop.permute.xlu0 %568
      %570 = vrot.lane.b32.xlu0 %v503, 64
      %v571 = vpop.permute.xlu0 %570
      %572 = vrot.lane.b32.xlu0 %v506, 64
      %v573 = vpop.permute.xlu0 %572
      %574 = vrot.lane.b32.xlu0 %v508, 64
      %v575 = vpop.permute.xlu0 %574
      %576 = vrot.lane.b32.xlu0 %v510, 64
      %v577 = vpop.permute.xlu0 %576
      %578 = vrot.lane.b32.xlu0 %v512, 64
      %v579 = vpop.permute.xlu0 %578
      %580 = vrot.lane.b32.xlu0 %v515, 64
      %v581 = vpop.permute.xlu0 %580
      %582 = vrot.lane.b32.xlu0 %v517, 64
      %v583 = vpop.permute.xlu0 %582
      %584 = vrot.lane.b32.xlu0 %v519, 64
      %v585 = vpop.permute.xlu0 %584
      %586 = vrot.lane.b32.xlu0 %v521, 64
      %v587 = vpop.permute.xlu0 %586
      %588 = vrot.lane.b32.xlu0 %v524, 64
      %v589 = vpop.permute.xlu0 %588
      %590 = vrot.lane.b32.xlu0 %v526, 64
      %v591 = vpop.permute.xlu0 %590
      %592 = vrot.lane.b32.xlu0 %v528, 64
      %v593 = vpop.permute.xlu0 %592
      %594 = vrot.lane.b32.xlu0 %v530, 64
      %v595 = vpop.permute.xlu0 %594
      %596 = vrot.lane.b32.xlu0 %v533, 64
      %v597 = vpop.permute.xlu0 %596
      %598 = vrot.lane.b32.xlu0 %v535, 64
      %v599 = vpop.permute.xlu0 %598
      %600 = vrot.lane.b32.xlu0 %v537, 64
      %v601 = vpop.permute.xlu0 %600
      %602 = vrot.lane.b32.xlu0 %v539, 64
      %v603 = vpop.permute.xlu0 %602
      %640 = vrot.lane.b32.xlu0 %v213, 96
      %v641 = vpop.permute.xlu0 %640
      %642 = vrot.lane.b32.xlu0 %v214, 96
      %v643 = vpop.permute.xlu0 %642
      %644 = vrot.lane.b32.xlu0 %v215, 96
      %v645 = vpop.permute.xlu0 %644
      %646 = vrot.lane.b32.xlu0 %v216, 96
      %v647 = vpop.permute.xlu0 %646
      %648 = vrot.lane.b32.xlu0 %v218, 96
      %v649 = vpop.permute.xlu0 %648
      %650 = vrot.lane.b32.xlu0 %v219, 96
      %v651 = vpop.permute.xlu0 %650
      %652 = vrot.lane.b32.xlu0 %v220, 96
      %v653 = vpop.permute.xlu0 %652
      %654 = vrot.lane.b32.xlu0 %v221, 96
      %v655 = vpop.permute.xlu0 %654
      %656 = vrot.lane.b32.xlu0 %v223, 96
      %v657 = vpop.permute.xlu0 %656
      %658 = vrot.lane.b32.xlu0 %v224, 96
      %v659 = vpop.permute.xlu0 %658
      %660 = vrot.lane.b32.xlu0 %v225, 96
      %v661 = vpop.permute.xlu0 %660
      %662 = vrot.lane.b32.xlu0 %v226, 96
      %v663 = vpop.permute.xlu0 %662
      %664 = vrot.lane.b32.xlu0 %v228, 96
      %v665 = vpop.permute.xlu0 %664
      %666 = vrot.lane.b32.xlu0 %v229, 96
      %v667 = vpop.permute.xlu0 %666
      %668 = vrot.lane.b32.xlu0 %v230, 96
      %v669 = vpop.permute.xlu0 %668
      %670 = vrot.lane.b32.xlu0 %v231, 96
      %v671 = vpop.permute.xlu0 %670
      %672 = vrot.lane.b32.xlu0 %v233, 96
      %v673 = vpop.permute.xlu0 %672
      %674 = vrot.lane.b32.xlu0 %v234, 96
      %v675 = vpop.permute.xlu0 %674
      %676 = vrot.lane.b32.xlu0 %v235, 96
      %v677 = vpop.permute.xlu0 %676
      %678 = vrot.lane.b32.xlu0 %v236, 96
      %v679 = vpop.permute.xlu0 %678
      %680 = vrot.lane.b32.xlu0 %v238, 96
      %v681 = vpop.permute.xlu0 %680
      %682 = vrot.lane.b32.xlu0 %v239, 96
      %v683 = vpop.permute.xlu0 %682
      %684 = vrot.lane.b32.xlu0 %v240, 96
      %v685 = vpop.permute.xlu0 %684
      %686 = vrot.lane.b32.xlu0 %v241, 96
      %v687 = vpop.permute.xlu0 %686
      %688 = vrot.lane.b32.xlu0 %v243, 96
      %v689 = vpop.permute.xlu0 %688
      %690 = vrot.lane.b32.xlu0 %v244, 96
      %v691 = vpop.permute.xlu0 %690
      %692 = vrot.lane.b32.xlu0 %v245, 96
      %v693 = vpop.permute.xlu0 %692
      %694 = vrot.lane.b32.xlu0 %v246, 96
      %v695 = vpop.permute.xlu0 %694
      %696 = vrot.lane.b32.xlu0 %v248, 96
      %v697 = vpop.permute.xlu0 %696
      %698 = vrot.lane.b32.xlu0 %v249, 96
      %v699 = vpop.permute.xlu0 %698
      %700 = vrot.lane.b32.xlu0 %v250, 96
      %v701 = vpop.permute.xlu0 %700
      %702 = vrot.lane.b32.xlu0 %v251, 96
      %v703 = vpop.permute.xlu0 %702
      %v737 = vrot.slane %v248, 1
      %v738 = vrot.slane %v249, 1
      %v739 = vsel %vm298, %v737, %v738
      %v740 = vrot.slane %v250, 1
      %v741 = vsel %vm298, %v738, %v740
      %v742 = vrot.slane %v251, 1
      %v743 = vsel %vm298, %v740, %v742
      %v744 = vrot.slane %v252, 1
      %v745 = vsel %vm298, %v742, %v744
      %v778 = vrot.slane %v248, 2
      %v779 = vrot.slane %v249, 2
      %v780 = vsel %vm467, %v778, %v779
      %v781 = vrot.slane %v250, 2
      %v782 = vsel %vm467, %v779, %v781
      %v783 = vrot.slane %v251, 2
      %v784 = vsel %vm467, %v781, %v783
      %v785 = vrot.slane %v252, 2
      %v786 = vsel %vm467, %v783, %v785
      %787 = vrot.lane.b32.xlu0 %v479, 32
      %v788 = vpop.permute.xlu0 %787
      %789 = vrot.lane.b32.xlu0 %v481, 32
      %v790 = vpop.permute.xlu0 %789
      %791 = vrot.lane.b32.xlu0 %v483, 32
      %v792 = vpop.permute.xlu0 %791
      %793 = vrot.lane.b32.xlu0 %v485, 32
      %v794 = vpop.permute.xlu0 %793
      %795 = vrot.lane.b32.xlu0 %v488, 32
      %v796 = vpop.permute.xlu0 %795
      %797 = vrot.lane.b32.xlu0 %v490, 32
      %v798 = vpop.permute.xlu0 %797
      %799 = vrot.lane.b32.xlu0 %v492, 32
      %v800 = vpop.permute.xlu0 %799
      %801 = vrot.lane.b32.xlu0 %v494, 32
      %v802 = vpop.permute.xlu0 %801
      %803 = vrot.lane.b32.xlu0 %v497, 32
      %v804 = vpop.permute.xlu0 %803
      %805 = vrot.lane.b32.xlu0 %v499, 32
      %v806 = vpop.permute.xlu0 %805
      %807 = vrot.lane.b32.xlu0 %v501, 32
      %v808 = vpop.permute.xlu0 %807
      %809 = vrot.lane.b32.xlu0 %v503, 32
      %v810 = vpop.permute.xlu0 %809
      %811 = vrot.lane.b32.xlu0 %v506, 32
      %v812 = vpop.permute.xlu0 %811
      %813 = vrot.lane.b32.xlu0 %v508, 32
      %v814 = vpop.permute.xlu0 %813
      %815 = vrot.lane.b32.xlu0 %v510, 32
      %v816 = vpop.permute.xlu0 %815
      %817 = vrot.lane.b32.xlu0 %v512, 32
      %v818 = vpop.permute.xlu0 %817
      %819 = vrot.lane.b32.xlu0 %v515, 32
      %v820 = vpop.permute.xlu0 %819
      %821 = vrot.lane.b32.xlu0 %v517, 32
      %v822 = vpop.permute.xlu0 %821
      %823 = vrot.lane.b32.xlu0 %v519, 32
      %v824 = vpop.permute.xlu0 %823
      %825 = vrot.lane.b32.xlu0 %v521, 32
      %v826 = vpop.permute.xlu0 %825
      %827 = vrot.lane.b32.xlu0 %v524, 32
      %v828 = vpop.permute.xlu0 %827
      %829 = vrot.lane.b32.xlu0 %v526, 32
      %v830 = vpop.permute.xlu0 %829
      %831 = vrot.lane.b32.xlu0 %v528, 32
      %v832 = vpop.permute.xlu0 %831
      %833 = vrot.lane.b32.xlu0 %v530, 32
      %v834 = vpop.permute.xlu0 %833
      %835 = vrot.lane.b32.xlu0 %v533, 32
      %v836 = vpop.permute.xlu0 %835
      %837 = vrot.lane.b32.xlu0 %v535, 32
      %v838 = vpop.permute.xlu0 %837
      %839 = vrot.lane.b32.xlu0 %v537, 32
      %v840 = vpop.permute.xlu0 %839
      %841 = vrot.lane.b32.xlu0 %v539, 32
      %v842 = vpop.permute.xlu0 %841
      %843 = vrot.lane.b32.xlu0 %v780, 32
      %v844 = vpop.permute.xlu0 %843
      %845 = vrot.lane.b32.xlu0 %v782, 32
      %v846 = vpop.permute.xlu0 %845
      %847 = vrot.lane.b32.xlu0 %v784, 32
      %v848 = vpop.permute.xlu0 %847
      %849 = vrot.lane.b32.xlu0 %v786, 32
      %v850 = vpop.permute.xlu0 %849
      %887 = vrot.lane.b32.xlu0 %v218, 64
      %v888 = vpop.permute.xlu0 %887
      %889 = vrot.lane.b32.xlu0 %v219, 64
      %v890 = vpop.permute.xlu0 %889
      %891 = vrot.lane.b32.xlu0 %v220, 64
      %v892 = vpop.permute.xlu0 %891
      %893 = vrot.lane.b32.xlu0 %v221, 64
      %v894 = vpop.permute.xlu0 %893
      %895 = vrot.lane.b32.xlu0 %v223, 64
      %v896 = vpop.permute.xlu0 %895
      %897 = vrot.lane.b32.xlu0 %v224, 64
      %v898 = vpop.permute.xlu0 %897
      %899 = vrot.lane.b32.xlu0 %v225, 64
      %v900 = vpop.permute.xlu0 %899
      %901 = vrot.lane.b32.xlu0 %v226, 64
      %v902 = vpop.permute.xlu0 %901
      %903 = vrot.lane.b32.xlu0 %v228, 64
      %v904 = vpop.permute.xlu0 %903
      %905 = vrot.lane.b32.xlu0 %v229, 64
      %v906 = vpop.permute.xlu0 %905
      %907 = vrot.lane.b32.xlu0 %v230, 64
      %v908 = vpop.permute.xlu0 %907
      %909 = vrot.lane.b32.xlu0 %v231, 64
      %v910 = vpop.permute.xlu0 %909
      %911 = vrot.lane.b32.xlu0 %v233, 64
      %v912 = vpop.permute.xlu0 %911
      %913 = vrot.lane.b32.xlu0 %v234, 64
      %v914 = vpop.permute.xlu0 %913
      %915 = vrot.lane.b32.xlu0 %v235, 64
      %v916 = vpop.permute.xlu0 %915
      %917 = vrot.lane.b32.xlu0 %v236, 64
      %v918 = vpop.permute.xlu0 %917
      %919 = vrot.lane.b32.xlu0 %v238, 64
      %v920 = vpop.permute.xlu0 %919
      %921 = vrot.lane.b32.xlu0 %v239, 64
      %v922 = vpop.permute.xlu0 %921
      %923 = vrot.lane.b32.xlu0 %v240, 64
      %v924 = vpop.permute.xlu0 %923
      %925 = vrot.lane.b32.xlu0 %v241, 64
      %v926 = vpop.permute.xlu0 %925
      %927 = vrot.lane.b32.xlu0 %v243, 64
      %v928 = vpop.permute.xlu0 %927
      %929 = vrot.lane.b32.xlu0 %v244, 64
      %v930 = vpop.permute.xlu0 %929
      %931 = vrot.lane.b32.xlu0 %v245, 64
      %v932 = vpop.permute.xlu0 %931
      %933 = vrot.lane.b32.xlu0 %v246, 64
      %v934 = vpop.permute.xlu0 %933
      %935 = vrot.lane.b32.xlu0 %v248, 64
      %v936 = vpop.permute.xlu0 %935
      %937 = vrot.lane.b32.xlu0 %v249, 64
      %v938 = vpop.permute.xlu0 %937
      %939 = vrot.lane.b32.xlu0 %v250, 64
      %v940 = vpop.permute.xlu0 %939
      %941 = vrot.lane.b32.xlu0 %v251, 64
      %v942 = vpop.permute.xlu0 %941
      %943 = vrot.lane.b32.xlu0 %v253, 64
      %v944 = vpop.permute.xlu0 %943
      %945 = vrot.lane.b32.xlu0 %v254, 64
      %v946 = vpop.permute.xlu0 %945
      %947 = vrot.lane.b32.xlu0 %v255, 64
      %v948 = vpop.permute.xlu0 %947
      %949 = vrot.lane.b32.xlu0 %v256, 64
      %v950 = vpop.permute.xlu0 %949
      %v984 = vrot.slane %v253, 1
      %v985 = vrot.slane %v254, 1
      %v986 = vsel %vm298, %v984, %v985
      %v987 = vrot.slane %v255, 1
      %v988 = vsel %vm298, %v985, %v987
      %v989 = vrot.slane %v256, 1
      %v990 = vsel %vm298, %v987, %v989
      %v991 = vrot.slane %v257, 1
      %v992 = vsel %vm298, %v989, %v991
      %993 = vrot.lane.b32.xlu0 %v319, 96
      %v994 = vpop.permute.xlu0 %993
      %995 = vrot.lane.b32.xlu0 %v321, 96
      %v996 = vpop.permute.xlu0 %995
      %997 = vrot.lane.b32.xlu0 %v323, 96
      %v998 = vpop.permute.xlu0 %997
      %999 = vrot.lane.b32.xlu0 %v325, 96
      %v1000 = vpop.permute.xlu0 %999
      %1001 = vrot.lane.b32.xlu0 %v328, 96
      %v1002 = vpop.permute.xlu0 %1001
      %1003 = vrot.lane.b32.xlu0 %v330, 96
      %v1004 = vpop.permute.xlu0 %1003
      %1005 = vrot.lane.b32.xlu0 %v332, 96
      %v1006 = vpop.permute.xlu0 %1005
      %1007 = vrot.lane.b32.xlu0 %v334, 96
      %v1008 = vpop.permute.xlu0 %1007
      %1009 = vrot.lane.b32.xlu0 %v337, 96
      %v1010 = vpop.permute.xlu0 %1009
      %1011 = vrot.lane.b32.xlu0 %v339, 96
      %v1012 = vpop.permute.xlu0 %1011
      %1013 = vrot.lane.b32.xlu0 %v341, 96
      %v1014 = vpop.permute.xlu0 %1013
      %1015 = vrot.lane.b32.xlu0 %v343, 96
      %v1016 = vpop.permute.xlu0 %1015
      %1017 = vrot.lane.b32.xlu0 %v346, 96
      %v1018 = vpop.permute.xlu0 %1017
      %1019 = vrot.lane.b32.xlu0 %v348, 96
      %v1020 = vpop.permute.xlu0 %1019
      %1021 = vrot.lane.b32.xlu0 %v350, 96
      %v1022 = vpop.permute.xlu0 %1021
      %1023 = vrot.lane.b32.xlu0 %v352, 96
      %v1024 = vpop.permute.xlu0 %1023
      %1025 = vrot.lane.b32.xlu0 %v355, 96
      %v1026 = vpop.permute.xlu0 %1025
      %1027 = vrot.lane.b32.xlu0 %v357, 96
      %v1028 = vpop.permute.xlu0 %1027
      %1029 = vrot.lane.b32.xlu0 %v359, 96
      %v1030 = vpop.permute.xlu0 %1029
      %1031 = vrot.lane.b32.xlu0 %v361, 96
      %v1032 = vpop.permute.xlu0 %1031
      %1033 = vrot.lane.b32.xlu0 %v364, 96
      %v1034 = vpop.permute.xlu0 %1033
      %1035 = vrot.lane.b32.xlu0 %v366, 96
      %v1036 = vpop.permute.xlu0 %1035
      %1037 = vrot.lane.b32.xlu0 %v368, 96
      %v1038 = vpop.permute.xlu0 %1037
      %1039 = vrot.lane.b32.xlu0 %v370, 96
      %v1040 = vpop.permute.xlu0 %1039
      %1041 = vrot.lane.b32.xlu0 %v739, 96
      %v1042 = vpop.permute.xlu0 %1041
      %1043 = vrot.lane.b32.xlu0 %v741, 96
      %v1044 = vpop.permute.xlu0 %1043
      %1045 = vrot.lane.b32.xlu0 %v743, 96
      %v1046 = vpop.permute.xlu0 %1045
      %1047 = vrot.lane.b32.xlu0 %v745, 96
      %v1048 = vpop.permute.xlu0 %1047
      %1049 = vrot.lane.b32.xlu0 %v986, 96
      %v1050 = vpop.permute.xlu0 %1049
      %1051 = vrot.lane.b32.xlu0 %v988, 96
      %v1052 = vpop.permute.xlu0 %1051
      %1053 = vrot.lane.b32.xlu0 %v990, 96
      %v1054 = vpop.permute.xlu0 %1053
      %1055 = vrot.lane.b32.xlu0 %v992, 96
      %v1056 = vpop.permute.xlu0 %1055
      %v1089 = vrot.slane %v253, 2
      %v1090 = vrot.slane %v254, 2
      %v1091 = vsel %vm467, %v1089, %v1090
      %v1092 = vrot.slane %v255, 2
      %v1093 = vsel %vm467, %v1090, %v1092
      %v1094 = vrot.slane %v256, 2
      %v1095 = vsel %vm467, %v1092, %v1094
      %v1096 = vrot.slane %v257, 2
      %v1097 = vsel %vm467, %v1094, %v1096
      %vm1130 = vcmask 261120
      %v1131 = vsel %vm1130, %v208, %v372
      %v1132 = vsel %vm1130, %v209, %v374
      %v1133 = vsel %vm1130, %v210, %v376
      %v1134 = vsel %vm1130, %v211, %v378
      %v1135 = vsel %vm1130, %v213, %v380
      %v1136 = vsel %vm1130, %v214, %v382
      %v1137 = vsel %vm1130, %v215, %v384
      %v1138 = vsel %vm1130, %v216, %v386
      %v1139 = vsel %vm1130, %v218, %v388
      %v1140 = vsel %vm1130, %v219, %v390
      %v1141 = vsel %vm1130, %v220, %v392
      %v1142 = vsel %vm1130, %v221, %v394
      %v1143 = vsel %vm1130, %v223, %v396
      %v1144 = vsel %vm1130, %v224, %v398
      %v1145 = vsel %vm1130, %v225, %v400
      %v1146 = vsel %vm1130, %v226, %v402
      %v1147 = vsel %vm1130, %v228, %v404
      %v1148 = vsel %vm1130, %v229, %v406
      %v1149 = vsel %vm1130, %v230, %v408
      %v1150 = vsel %vm1130, %v231, %v410
      %v1151 = vsel %vm1130, %v233, %v412
      %v1152 = vsel %vm1130, %v234, %v414
      %v1153 = vsel %vm1130, %v235, %v416
      %v1154 = vsel %vm1130, %v236, %v418
      %v1155 = vsel %vm1130, %v238, %v420
      %v1156 = vsel %vm1130, %v239, %v422
      %v1157 = vsel %vm1130, %v240, %v424
      %v1158 = vsel %vm1130, %v241, %v426
      %v1159 = vsel %vm1130, %v243, %v428
      %v1160 = vsel %vm1130, %v244, %v430
      %v1161 = vsel %vm1130, %v245, %v432
      %v1162 = vsel %vm1130, %v246, %v434
      %vm1163 = vcmask 523264
      %v1164 = vsel %vm1163, %v1131, %v541
      %v1165 = vsel %vm1163, %v1132, %v543
      %v1166 = vsel %vm1163, %v1133, %v545
      %v1167 = vsel %vm1163, %v1134, %v547
      %v1168 = vsel %vm1163, %v1135, %v549
      %v1169 = vsel %vm1163, %v1136, %v551
      %v1170 = vsel %vm1163, %v1137, %v553
      %v1171 = vsel %vm1163, %v1138, %v555
      %v1172 = vsel %vm1163, %v1139, %v557
      %v1173 = vsel %vm1163, %v1140, %v559
      %v1174 = vsel %vm1163, %v1141, %v561
      %v1175 = vsel %vm1163, %v1142, %v563
      %v1176 = vsel %vm1163, %v1143, %v565
      %v1177 = vsel %vm1163, %v1144, %v567
      %v1178 = vsel %vm1163, %v1145, %v569
      %v1179 = vsel %vm1163, %v1146, %v571
      %v1180 = vsel %vm1163, %v1147, %v573
      %v1181 = vsel %vm1163, %v1148, %v575
      %v1182 = vsel %vm1163, %v1149, %v577
      %v1183 = vsel %vm1163, %v1150, %v579
      %v1184 = vsel %vm1163, %v1151, %v581
      %v1185 = vsel %vm1163, %v1152, %v583
      %v1186 = vsel %vm1163, %v1153, %v585
      %v1187 = vsel %vm1163, %v1154, %v587
      %v1188 = vsel %vm1163, %v1155, %v589
      %v1189 = vsel %vm1163, %v1156, %v591
      %v1190 = vsel %vm1163, %v1157, %v593
      %v1191 = vsel %vm1163, %v1158, %v595
      %v1192 = vsel %vm1163, %v1159, %v597
      %v1193 = vsel %vm1163, %v1160, %v599
      %v1194 = vsel %vm1163, %v1161, %v601
      %v1195 = vsel %vm1163, %v1162, %v603
      %vm1196 = vcmask 785408
      %v1197 = vsel %vm1196, %v1164, %v641
      %v1198 = vsel %vm1196, %v1165, %v643
      %v1199 = vsel %vm1196, %v1166, %v645
      %v1200 = vsel %vm1196, %v1167, %v647
      %v1201 = vsel %vm1196, %v1168, %v649
      %v1202 = vsel %vm1196, %v1169, %v651
      %v1203 = vsel %vm1196, %v1170, %v653
      %v1204 = vsel %vm1196, %v1171, %v655
      %v1205 = vsel %vm1196, %v1172, %v657
      %v1206 = vsel %vm1196, %v1173, %v659
      %v1207 = vsel %vm1196, %v1174, %v661
      %v1208 = vsel %vm1196, %v1175, %v663
      %v1209 = vsel %vm1196, %v1176, %v665
      %v1210 = vsel %vm1196, %v1177, %v667
      %v1211 = vsel %vm1196, %v1178, %v669
      %v1212 = vsel %vm1196, %v1179, %v671
      %v1213 = vsel %vm1196, %v1180, %v673
      %v1214 = vsel %vm1196, %v1181, %v675
      %v1215 = vsel %vm1196, %v1182, %v677
      %v1216 = vsel %vm1196, %v1183, %v679
      %v1217 = vsel %vm1196, %v1184, %v681
      %v1218 = vsel %vm1196, %v1185, %v683
      %v1219 = vsel %vm1196, %v1186, %v685
      %v1220 = vsel %vm1196, %v1187, %v687
      %v1221 = vsel %vm1196, %v1188, %v689
      %v1222 = vsel %vm1196, %v1189, %v691
      %v1223 = vsel %vm1196, %v1190, %v693
      %v1224 = vsel %vm1196, %v1191, %v695
      %v1225 = vsel %vm1196, %v1192, %v697
      %v1226 = vsel %vm1196, %v1193, %v699
      %v1227 = vsel %vm1196, %v1194, %v701
      %v1228 = vsel %vm1196, %v1195, %v703
      %v1229 = vsel %vm1130, %v310, %v788
      %v1230 = vsel %vm1130, %v312, %v790
      %v1231 = vsel %vm1130, %v314, %v792
      %v1232 = vsel %vm1130, %v316, %v794
      %v1233 = vsel %vm1130, %v319, %v796
      %v1234 = vsel %vm1130, %v321, %v798
      %v1235 = vsel %vm1130, %v323, %v800
      %v1236 = vsel %vm1130, %v325, %v802
      %v1237 = vsel %vm1130, %v328, %v804
      %v1238 = vsel %vm1130, %v330, %v806
      %v1239 = vsel %vm1130, %v332, %v808
      %v1240 = vsel %vm1130, %v334, %v810
      %v1241 = vsel %vm1130, %v337, %v812
      %v1242 = vsel %vm1130, %v339, %v814
      %v1243 = vsel %vm1130, %v341, %v816
      %v1244 = vsel %vm1130, %v343, %v818
      %v1245 = vsel %vm1130, %v346, %v820
      %v1246 = vsel %vm1130, %v348, %v822
      %v1247 = vsel %vm1130, %v350, %v824
      %v1248 = vsel %vm1130, %v352, %v826
      %v1249 = vsel %vm1130, %v355, %v828
      %v1250 = vsel %vm1130, %v357, %v830
      %v1251 = vsel %vm1130, %v359, %v832
      %v1252 = vsel %vm1130, %v361, %v834
      %v1253 = vsel %vm1130, %v364, %v836
      %v1254 = vsel %vm1130, %v366, %v838
      %v1255 = vsel %vm1130, %v368, %v840
      %v1256 = vsel %vm1130, %v370, %v842
      %v1257 = vsel %vm1130, %v739, %v844
      %v1258 = vsel %vm1130, %v741, %v846
      %v1259 = vsel %vm1130, %v743, %v848
      %v1260 = vsel %vm1130, %v745, %v850
      %v1261 = vsel %vm1163, %v1229, %v888
      %v1262 = vsel %vm1163, %v1230, %v890
      %v1263 = vsel %vm1163, %v1231, %v892
      %v1264 = vsel %vm1163, %v1232, %v894
      %v1265 = vsel %vm1163, %v1233, %v896
      %v1266 = vsel %vm1163, %v1234, %v898
      %v1267 = vsel %vm1163, %v1235, %v900
      %v1268 = vsel %vm1163, %v1236, %v902
      %v1269 = vsel %vm1163, %v1237, %v904
      %v1270 = vsel %vm1163, %v1238, %v906
      %v1271 = vsel %vm1163, %v1239, %v908
      %v1272 = vsel %vm1163, %v1240, %v910
      %v1273 = vsel %vm1163, %v1241, %v912
      %v1274 = vsel %vm1163, %v1242, %v914
      %v1275 = vsel %vm1163, %v1243, %v916
      %v1276 = vsel %vm1163, %v1244, %v918
      %v1277 = vsel %vm1163, %v1245, %v920
      %v1278 = vsel %vm1163, %v1246, %v922
      %v1279 = vsel %vm1163, %v1247, %v924
      %v1280 = vsel %vm1163, %v1248, %v926
      %v1281 = vsel %vm1163, %v1249, %v928
      %v1282 = vsel %vm1163, %v1250, %v930
      %v1283 = vsel %vm1163, %v1251, %v932
      %v1284 = vsel %vm1163, %v1252, %v934
      %v1285 = vsel %vm1163, %v1253, %v936
      %v1286 = vsel %vm1163, %v1254, %v938
      %v1287 = vsel %vm1163, %v1255, %v940
      %v1288 = vsel %vm1163, %v1256, %v942
      %v1289 = vsel %vm1163, %v1257, %v944
      %v1290 = vsel %vm1163, %v1258, %v946
      %v1291 = vsel %vm1163, %v1259, %v948
      %v1292 = vsel %vm1163, %v1260, %v950
      %v1293 = vsel %vm1196, %v1261, %v994
      %v1294 = vsel %vm1196, %v1262, %v996
      %v1295 = vsel %vm1196, %v1263, %v998
      %v1296 = vsel %vm1196, %v1264, %v1000
      %v1297 = vsel %vm1196, %v1265, %v1002
      %v1298 = vsel %vm1196, %v1266, %v1004
      %v1299 = vsel %vm1196, %v1267, %v1006
      %v1300 = vsel %vm1196, %v1268, %v1008
      %v1301 = vsel %vm1196, %v1269, %v1010
      %v1302 = vsel %vm1196, %v1270, %v1012
      %v1303 = vsel %vm1196, %v1271, %v1014
      %v1304 = vsel %vm1196, %v1272, %v1016
      %v1305 = vsel %vm1196, %v1273, %v1018
      %v1306 = vsel %vm1196, %v1274, %v1020
      %v1307 = vsel %vm1196, %v1275, %v1022
      %v1308 = vsel %vm1196, %v1276, %v1024
      %v1309 = vsel %vm1196, %v1277, %v1026
      %v1310 = vsel %vm1196, %v1278, %v1028
      %v1311 = vsel %vm1196, %v1279, %v1030
      %v1312 = vsel %vm1196, %v1280, %v1032
      %v1313 = vsel %vm1196, %v1281, %v1034
      %v1314 = vsel %vm1196, %v1282, %v1036
      %v1315 = vsel %vm1196, %v1283, %v1038
      %v1316 = vsel %vm1196, %v1284, %v1040
      %v1317 = vsel %vm1196, %v1285, %v1042
      %v1318 = vsel %vm1196, %v1286, %v1044
      %v1319 = vsel %vm1196, %v1287, %v1046
      %v1320 = vsel %vm1196, %v1288, %v1048
      %v1321 = vsel %vm1196, %v1289, %v1050
      %v1322 = vsel %vm1196, %v1290, %v1052
      %v1323 = vsel %vm1196, %v1291, %v1054
      %v1324 = vsel %vm1196, %v1292, %v1056
      %v1325 = vpack.c.bf16 %v1198, %v1197
      %v1326 = vpack.c.bf16 %v1294, %v1293
      %v1327 = vpack.c.bf16 %v490, %v488
      %v1328 = vpack.c.bf16 %v1200, %v1199
      %v1329 = vpack.c.bf16 %v1296, %v1295
      %v1330 = vpack.c.bf16 %v494, %v492
      %v1331 = vpack.c.bf16 %v1202, %v1201
      %v1332 = vpack.c.bf16 %v1298, %v1297
      %v1333 = vpack.c.bf16 %v499, %v497
      %v1334 = vpack.c.bf16 %v1204, %v1203
      %v1335 = vpack.c.bf16 %v1300, %v1299
      %v1336 = vpack.c.bf16 %v503, %v501
      %v1337 = vpack.c.bf16 %v1206, %v1205
      %v1338 = vpack.c.bf16 %v1302, %v1301
      %v1339 = vpack.c.bf16 %v508, %v506
      %v1340 = vpack.c.bf16 %v1208, %v1207
      %v1341 = vpack.c.bf16 %v1304, %v1303
      %v1342 = vpack.c.bf16 %v512, %v510
      %v1343 = vpack.c.bf16 %v1210, %v1209
      %v1344 = vpack.c.bf16 %v1306, %v1305
      %v1345 = vpack.c.bf16 %v517, %v515
      %v1346 = vpack.c.bf16 %v1212, %v1211
      %v1347 = vpack.c.bf16 %v1308, %v1307
      %v1348 = vpack.c.bf16 %v521, %v519
      %v1349 = vpack.c.bf16 %v1214, %v1213
      %v1350 = vpack.c.bf16 %v1310, %v1309
      %v1351 = vpack.c.bf16 %v526, %v524
      %v1352 = vpack.c.bf16 %v1216, %v1215
      %v1353 = vpack.c.bf16 %v1312, %v1311
      %v1354 = vpack.c.bf16 %v530, %v528
      %v1355 = vpack.c.bf16 %v1218, %v1217
      %v1356 = vpack.c.bf16 %v1314, %v1313
      %v1357 = vpack.c.bf16 %v535, %v533
      %v1358 = vpack.c.bf16 %v1220, %v1219
      %v1359 = vpack.c.bf16 %v1316, %v1315
      %v1360 = vpack.c.bf16 %v539, %v537
      %v1361 = vpack.c.bf16 %v1222, %v1221
      %v1362 = vpack.c.bf16 %v1318, %v1317
      %v1363 = vpack.c.bf16 %v782, %v780
      %v1364 = vpack.c.bf16 %v1224, %v1223
      %v1365 = vpack.c.bf16 %v1320, %v1319
      %v1366 = vpack.c.bf16 %v786, %v784
      %v1367 = vpack.c.bf16 %v1226, %v1225
      %v1368 = vpack.c.bf16 %v1322, %v1321
      %v1369 = vpack.c.bf16 %v1093, %v1091
      %v1370 = vpack.c.bf16 %v1228, %v1227
      %v1371 = vpack.c.bf16 %v1324, %v1323
      %v1372 = vpack.c.bf16 %v1097, %v1095
      %v1373 = vld [vmem:[%s1] sm:$0xf]
      %v1374 = vld [vmem:[%s1 + $0x4] sm:$0xf]
      %v1375 = vld [vmem:[%s1 + $0x8] sm:$0xf]
      %v1376 = vld [vmem:[%s1 + $0xc] sm:$0xf]
      %v1377 = vld [vmem:[%s1 + $0x10] sm:$0xf]
      %v1378 = vld [vmem:[%s1 + $0x14] sm:$0xf]
      %v1379 = vld [vmem:[%s1 + $0x18] sm:$0xf]
      %v1380 = vld [vmem:[%s1 + $0x1c] sm:$0xf]
      %v1381 = vld [vmem:[%s1 + $0x20] sm:$0xf]
      %v1382 = vld [vmem:[%s1 + $0x24] sm:$0xf]
      %v1383 = vld [vmem:[%s1 + $0x28] sm:$0xf]
      %v1384 = vld [vmem:[%s1 + $0x2c] sm:$0xf]
      %v1385 = vld [vmem:[%s1 + $0x30] sm:$0xf]
      %v1386 = vld [vmem:[%s1 + $0x34] sm:$0xf]
      %v1387 = vld [vmem:[%s1 + $0x38] sm:$0xf]
      %v1388 = vld [vmem:[%s1 + $0x3c] sm:$0xf]
      %v1389 = vld [vmem:[%s1 + $0x40] sm:$0xf]
      %v1390 = vld [vmem:[%s1 + $0x44] sm:$0xf]
      %v1391 = vld [vmem:[%s1 + $0x48] sm:$0xf]
      %v1392 = vld [vmem:[%s1 + $0x4c] sm:$0xf]
      %v1393 = vld [vmem:[%s1 + $0x50] sm:$0xf]
      %v1394 = vld [vmem:[%s1 + $0x54] sm:$0xf]
      %v1395 = vld [vmem:[%s1 + $0x58] sm:$0xf]
      %v1396 = vld [vmem:[%s1 + $0x5c] sm:$0xf]
      %v1397 = vld [vmem:[%s1 + $0x60] sm:$0xf]
      %v1398 = vld [vmem:[%s1 + $0x64] sm:$0xf]
      %v1399 = vld [vmem:[%s1 + $0x68] sm:$0xf]
      %v1400 = vld [vmem:[%s1 + $0x6c] sm:$0xf]
      %v1401 = vld [vmem:[%s1 + $0x70] sm:$0xf]
      %v1402 = vld [vmem:[%s1 + $0x74] sm:$0xf]
      %v1403 = vld [vmem:[%s1 + $0x78] sm:$0xf]
      %v1404 = vld [vmem:[%s1 + $0x7c] sm:$0xf]
      %v1405 = vld [vmem:[%s1 + $0x80] sm:$0xf]
      %v1406 = vld [vmem:[%s1 + $0x84] sm:$0xf]
      %v1407 = vld [vmem:[%s1 + $0x88] sm:$0xf]
      %v1408 = vld [vmem:[%s1 + $0x8c] sm:$0xf]
      %v1409 = vld [vmem:[%s2] sm:$0x1]
      %v1411 = vlaneseq
      %v1412 = vshrl.u32 %v1411, 7
      %v1413 = vsub.s32 0, %v1412
      %v1414 = vrot.slane %v1409, %v1413
      %v1452 = vunpack.c.l.b16 %v1373
      %v1453 = vunpack.c.l.b16 %v1374
      %v1454 = vunpack.c.l.b16 %v1375
      %v1455 = vunpack.c.l.b16 %v1376
      %v1456 = vunpack.c.l.b16 %v1377
      %v1457 = vunpack.c.l.b16 %v1378
      %v1458 = vunpack.c.l.b16 %v1379
      %v1459 = vunpack.c.l.b16 %v1380
      %v1460 = vunpack.c.l.b16 %v1381
      %v1461 = vunpack.c.l.b16 %v1382
      %v1462 = vunpack.c.l.b16 %v1383
      %v1463 = vunpack.c.l.b16 %v1384
      %v1464 = vunpack.c.l.b16 %v1385
      %v1465 = vunpack.c.l.b16 %v1386
      %v1466 = vunpack.c.l.b16 %v1387
      %v1467 = vunpack.c.l.b16 %v1388
      %v1468 = vunpack.c.l.b16 %v1389
      %v1469 = vunpack.c.l.b16 %v1390
      %v1470 = vunpack.c.l.b16 %v1391
      %v1471 = vunpack.c.l.b16 %v1392
      %v1472 = vunpack.c.l.b16 %v1393
      %v1473 = vunpack.c.l.b16 %v1394
      %v1474 = vunpack.c.l.b16 %v1395
      %v1475 = vunpack.c.l.b16 %v1396
      %v1476 = vunpack.c.l.b16 %v1397
      %v1477 = vunpack.c.l.b16 %v1398
      %v1478 = vunpack.c.l.b16 %v1399
      %v1479 = vunpack.c.l.b16 %v1400
      %v1480 = vunpack.c.l.b16 %v1401
      %v1481 = vunpack.c.l.b16 %v1402
      %v1482 = vunpack.c.l.b16 %v1403
      %v1483 = vunpack.c.l.b16 %v1404
      %v1484 = vunpack.c.l.b16 %v1405
      %v1485 = vunpack.c.l.b16 %v1406
      %v1486 = vunpack.c.l.b16 %v1407
      %v1487 = vunpack.c.l.b16 %v1408
      %v1488 = vpack.c.b16 %v1453, %v1452
      %v1489 = vpack.c.b16 %v1455, %v1454
      %v1490 = vpack.c.b16 %v1457, %v1456
      %v1491 = vpack.c.b16 %v1459, %v1458
      %v1492 = vpack.c.b16 %v1461, %v1460
      %v1493 = vpack.c.b16 %v1463, %v1462
      %v1494 = vpack.c.b16 %v1465, %v1464
      %v1495 = vpack.c.b16 %v1467, %v1466
      %v1496 = vpack.c.b16 %v1469, %v1468
      %v1497 = vpack.c.b16 %v1471, %v1470
      %v1498 = vpack.c.b16 %v1473, %v1472
      %v1499 = vpack.c.b16 %v1475, %v1474
      %v1500 = vpack.c.b16 %v1477, %v1476
      %v1501 = vpack.c.b16 %v1479, %v1478
      %v1502 = vpack.c.b16 %v1481, %v1480
      %v1503 = vpack.c.b16 %v1483, %v1482
      %v1504 = vpack.c.b16 %v1485, %v1484
      %v1505 = vpack.c.b16 %v1487, %v1486
      %v1525 = vsel %vm1130, %v1327, 0
      %v1528 = vsel %vm1130, %v1330, 0
      %v1531 = vsel %vm1130, %v1333, 0
      %v1534 = vsel %vm1130, %v1336, 0
      %v1537 = vsel %vm1130, %v1339, 0
      %v1540 = vsel %vm1130, %v1342, 0
      %v1543 = vsel %vm1130, %v1345, 0
      %v1546 = vsel %vm1130, %v1348, 0
      %v1549 = vsel %vm1130, %v1351, 0
      %v1552 = vsel %vm1130, %v1354, 0
      %v1555 = vsel %vm1130, %v1357, 0
      %v1558 = vsel %vm1130, %v1360, 0
      %v1561 = vsel %vm1130, %v1363, 0
      %v1564 = vsel %vm1130, %v1366, 0
      %v1567 = vsel %vm1130, %v1369, 0
      %v1570 = vsel %vm1130, %v1372, 0
      %1572 = vmatprep.subr.bf16.mxu0 0
      %1573 = vmatpush1.bf16.msra.mxu0 %v1488
      %1574 = vmatprep.subr.bf16.mxu0 0
      %1575 = vmatpush1.bf16.msra.mxu0 %v1489
      %1576 = vmatprep.subr.bf16.mxu0 0
      %1577 = vmatpush1.bf16.msra.mxu0 %v1490
      %1578 = vmatprep.subr.bf16.mxu0 0
      %1579 = vmatpush1.bf16.msra.mxu0 %v1491
      %1580 = vmatprep.subr.bf16.mxu0 0
      %1581 = vmatpush1.bf16.msra.mxu0 %v1492
      %1582 = vmatprep.subr.bf16.mxu0 0
      %1583 = vmatpush1.bf16.msra.mxu0 %v1493
      %1584 = vmatprep.subr.bf16.mxu0 0
      %1585 = vmatpush1.bf16.msra.mxu0 %v1494
      %1586 = vmatprep.subr.bf16.mxu0 0
      %1587 = vmatpush1.bf16.msra.mxu0 %v1495
      %1588 = vmatprep.subr.bf16.mxu0 0
      %1589 = vmatpush1.bf16.msra.mxu0 %v1496
      %1590 = vmatprep.subr.bf16.mxu0 0
      %1591 = vmatpush1.bf16.msra.mxu0 %v1497
      %1592 = vmatprep.subr.bf16.mxu0 0
      %1593 = vmatpush1.bf16.msra.mxu0 %v1498
      %1594 = vmatprep.subr.bf16.mxu0 0
      %1595 = vmatpush1.bf16.msra.mxu0 %v1499
      %1596 = vmatprep.subr.bf16.mxu0 0
      %1597 = vmatpush1.bf16.msra.mxu0 %v1500
      %1598 = vmatprep.subr.bf16.mxu0 0
      %1599 = vmatpush1.bf16.msra.mxu0 %v1501
      %1600 = vmatprep.subr.bf16.mxu0 0
      %1601 = vmatpush1.bf16.msra.mxu0 %v1502
      %1602 = vmatprep.subr.bf16.mxu0 0
      %1603 = vmatpush1.bf16.msra.mxu0 %v1503
      %1604 = vmatprep.mubr.bf16.mxu0 %v1326
      %1605 = vmatmul.mubr.bf16.gmra.mrb[0].mxu0 %v1325
      %v1606 = vpop.f32.mrb[0].mxu0
      %v1607 = vadd.f32 %v1414, %v1606
      %v1608 = vpop.f32.mrb[0].mxu0
      %v1609 = vpop.f32.mrb[0].mxu0
      %v1610 = vadd.f32 %v1414, %v1609
      %v1611 = vpop.f32.mrb[0].mxu0
      %1612 = vmatprep.mubr.bf16.mxu0 %v1329
      %1613 = vmatmul.mubr.bf16.gmra.mrb[0].mxu0 %v1328
      %v1614 = vpop.f32.mrb[0].mxu0
      %v1615 = vadd.f32 %v1414, %v1614
      %v1616 = vpop.f32.mrb[0].mxu0
      %v1617 = vpop.f32.mrb[0].mxu0
      %v1618 = vadd.f32 %v1414, %v1617
      %v1619 = vpop.f32.mrb[0].mxu0
      %1620 = vmatprep.mubr.bf16.mxu0 %v1332
      %1621 = vmatmul.mubr.bf16.gmra.mrb[0].mxu0 %v1331
      %v1622 = vpop.f32.mrb[0].mxu0
      %v1623 = vadd.f32 %v1414, %v1622
      %v1624 = vpop.f32.mrb[0].mxu0
      %v1625 = vpop.f32.mrb[0].mxu0
      %v1626 = vadd.f32 %v1414, %v1625
      %v1627 = vpop.f32.mrb[0].mxu0
      %1628 = vmatprep.mubr.bf16.mxu0 %v1335
      %1629 = vmatmul.mubr.bf16.gmra.mrb[0].mxu0 %v1334
      %v1630 = vpop.f32.mrb[0].mxu0
      %v1631 = vadd.f32 %v1414, %v1630
      %v1632 = vpop.f32.mrb[0].mxu0
      %v1633 = vpop.f32.mrb[0].mxu0
      %v1634 = vadd.f32 %v1414, %v1633
      %v1635 = vpop.f32.mrb[0].mxu0
      %1636 = vmatprep.mubr.bf16.mxu0 %v1338
      %1637 = vmatmul.mubr.bf16.gmra.mrb[0].mxu0 %v1337
      %v1638 = vpop.f32.mrb[0].mxu0
      %v1639 = vadd.f32 %v1414, %v1638
      %v1640 = vpop.f32.mrb[0].mxu0
      %v1641 = vpop.f32.mrb[0].mxu0
      %v1642 = vadd.f32 %v1414, %v1641
      %v1643 = vpop.f32.mrb[0].mxu0
      %1644 = vmatprep.mubr.bf16.mxu0 %v1341
      %1645 = vmatmul.mubr.bf16.gmra.mrb[0].mxu0 %v1340
      %v1646 = vpop.f32.mrb[0].mxu0
      %v1647 = vadd.f32 %v1414, %v1646
      %v1648 = vpop.f32.mrb[0].mxu0
      %v1649 = vpop.f32.mrb[0].mxu0
      %v1650 = vadd.f32 %v1414, %v1649
      %v1651 = vpop.f32.mrb[0].mxu0
      %1652 = vmatprep.mubr.bf16.mxu0 %v1344
      %1653 = vmatmul.mubr.bf16.gmra.mrb[0].mxu0 %v1343
      %v1654 = vpop.f32.mrb[0].mxu0
      %v1655 = vadd.f32 %v1414, %v1654
      %v1656 = vpop.f32.mrb[0].mxu0
      %v1657 = vpop.f32.mrb[0].mxu0
      %v1658 = vadd.f32 %v1414, %v1657
      %v1659 = vpop.f32.mrb[0].mxu0
      %1660 = vmatprep.mubr.bf16.mxu0 %v1347
      %1661 = vmatmul.mubr.bf16.gmra.mrb[0].mxu0 %v1346
      %v1662 = vpop.f32.mrb[0].mxu0
      %v1663 = vadd.f32 %v1414, %v1662
      %v1664 = vpop.f32.mrb[0].mxu0
      %v1665 = vpop.f32.mrb[0].mxu0
      %v1666 = vadd.f32 %v1414, %v1665
      %v1667 = vpop.f32.mrb[0].mxu0
      %1668 = vmatprep.mubr.bf16.mxu0 %v1350
      %1669 = vmatmul.mubr.bf16.gmra.mrb[0].mxu0 %v1349
      %v1670 = vpop.f32.mrb[0].mxu0
      %v1671 = vadd.f32 %v1414, %v1670
      %v1672 = vpop.f32.mrb[0].mxu0
      %v1673 = vpop.f32.mrb[0].mxu0
      %v1674 = vadd.f32 %v1414, %v1673
      %v1675 = vpop.f32.mrb[0].mxu0
      %1676 = vmatprep.mubr.bf16.mxu0 %v1353
      %1677 = vmatmul.mubr.bf16.gmra.mrb[0].mxu0 %v1352
      %v1678 = vpop.f32.mrb[0].mxu0
      %v1679 = vadd.f32 %v1414, %v1678
      %v1680 = vpop.f32.mrb[0].mxu0
      %v1681 = vpop.f32.mrb[0].mxu0
      %v1682 = vadd.f32 %v1414, %v1681
      %v1683 = vpop.f32.mrb[0].mxu0
      %1684 = vmatprep.mubr.bf16.mxu0 %v1356
      %1685 = vmatmul.mubr.bf16.gmra.mrb[0].mxu0 %v1355
      %v1686 = vpop.f32.mrb[0].mxu0
      %v1687 = vadd.f32 %v1414, %v1686
      %v1688 = vpop.f32.mrb[0].mxu0
      %v1689 = vpop.f32.mrb[0].mxu0
      %v1690 = vadd.f32 %v1414, %v1689
      %v1691 = vpop.f32.mrb[0].mxu0
      %1692 = vmatprep.mubr.bf16.mxu0 %v1359
      %1693 = vmatmul.mubr.bf16.gmra.mrb[0].mxu0 %v1358
      %v1694 = vpop.f32.mrb[0].mxu0
      %v1695 = vadd.f32 %v1414, %v1694
      %v1696 = vpop.f32.mrb[0].mxu0
      %v1697 = vpop.f32.mrb[0].mxu0
      %v1698 = vadd.f32 %v1414, %v1697
      %v1699 = vpop.f32.mrb[0].mxu0
      %1700 = vmatprep.mubr.bf16.mxu0 %v1362
      %1701 = vmatmul.mubr.bf16.gmra.mrb[0].mxu0 %v1361
      %v1702 = vpop.f32.mrb[0].mxu0
      %v1703 = vadd.f32 %v1414, %v1702
      %v1704 = vpop.f32.mrb[0].mxu0
      %v1705 = vpop.f32.mrb[0].mxu0
      %v1706 = vadd.f32 %v1414, %v1705
      %v1707 = vpop.f32.mrb[0].mxu0
      %1708 = vmatprep.mubr.bf16.mxu0 %v1365
      %1709 = vmatmul.mubr.bf16.gmra.mrb[0].mxu0 %v1364
      %v1710 = vpop.f32.mrb[0].mxu0
      %v1711 = vadd.f32 %v1414, %v1710
      %v1712 = vpop.f32.mrb[0].mxu0
      %v1713 = vpop.f32.mrb[0].mxu0
      %v1714 = vadd.f32 %v1414, %v1713
      %v1715 = vpop.f32.mrb[0].mxu0
      %1716 = vmatprep.mubr.bf16.mxu0 %v1368
      %1717 = vmatmul.mubr.bf16.gmra.mrb[0].mxu0 %v1367
      %v1718 = vpop.f32.mrb[0].mxu0
      %v1719 = vadd.f32 %v1414, %v1718
      %v1720 = vpop.f32.mrb[0].mxu0
      %v1721 = vpop.f32.mrb[0].mxu0
      %v1722 = vadd.f32 %v1414, %v1721
      %v1723 = vpop.f32.mrb[0].mxu0
      %1724 = vmatprep.mubr.bf16.mxu0 %v1371
      %1725 = vmatmul.mubr.bf16.gmra.mrb[0].mxu0 %v1370
      %v1726 = vpop.f32.mrb[0].mxu0
      %v1727 = vadd.f32 %v1414, %v1726
      %v1728 = vpop.f32.mrb[0].mxu0
      %v1729 = vpop.f32.mrb[0].mxu0
      %v1730 = vadd.f32 %v1414, %v1729
      %v1731 = vpop.f32.mrb[0].mxu0
      %1732 = vdwg.mxu0
      %1733 = vmatprep.subr.bf16.mxu0 0
      %1734 = vmatpush1.bf16.msra.mxu0 %v1504
      %1735 = vmatprep.subr.bf16.mxu0 0
      %1736 = vmatpush1.bf16.msra.mxu0 %v1505
      %1737 = vmatprep.subr.bf16.mxu0 0
      %1738 = vmatpush1.bf16.msra.mxu0 0
      %1739 = vmatprep.subr.bf16.mxu0 0
      %1740 = vmatpush1.bf16.msra.mxu0 0
      %1741 = vmatprep.subr.bf16.mxu0 0
      %1742 = vmatpush1.bf16.msra.mxu0 0
      %1743 = vmatprep.subr.bf16.mxu0 0
      %1744 = vmatpush1.bf16.msra.mxu0 0
      %1745 = vmatprep.subr.bf16.mxu0 0
      %1746 = vmatpush1.bf16.msra.mxu0 0
      %1747 = vmatprep.subr.bf16.mxu0 0
      %1748 = vmatpush1.bf16.msra.mxu0 0
      %1749 = vmatprep.subr.bf16.mxu0 0
      %1750 = vmatpush1.bf16.msra.mxu0 0
      %1751 = vmatprep.subr.bf16.mxu0 0
      %1752 = vmatpush1.bf16.msra.mxu0 0
      %1753 = vmatprep.subr.bf16.mxu0 0
      %1754 = vmatpush1.bf16.msra.mxu0 0
      %1755 = vmatprep.subr.bf16.mxu0 0
      %1756 = vmatpush1.bf16.msra.mxu0 0
      %1757 = vmatprep.subr.bf16.mxu0 0
      %1758 = vmatpush1.bf16.msra.mxu0 0
      %1759 = vmatprep.subr.bf16.mxu0 0
      %1760 = vmatpush1.bf16.msra.mxu0 0
      %1761 = vmatprep.subr.bf16.mxu0 0
      %1762 = vmatpush1.bf16.msra.mxu0 0
      %1763 = vmatprep.subr.bf16.mxu0 0
      %1764 = vmatpush1.bf16.msra.mxu0 0
      %1765 = vmatprep.mubr.bf16.mxu0 0
      %1766 = vmatmul.mubr.bf16.gmra.mrb[0].mxu0 %v1525
      %v1767 = vpop.f32.mrb[0].mxu0
      %v1768 = vadd.f32 %v1607, %v1767
      %v1769 = vpop.f32.mrb[0].mxu0
      %v1770 = vpop.f32.mrb[0].mxu0
      %v1771 = vadd.f32 %v1610, %v1770
      %v1772 = vpop.f32.mrb[0].mxu0
      %1773 = vmatprep.mubr.bf16.mxu0 0
      %1774 = vmatmul.mubr.bf16.gmra.mrb[0].mxu0 %v1528
      %v1775 = vpop.f32.mrb[0].mxu0
      %v1776 = vadd.f32 %v1615, %v1775
      %v1777 = vpop.f32.mrb[0].mxu0
      %v1778 = vpop.f32.mrb[0].mxu0
      %v1779 = vadd.f32 %v1618, %v1778
      %v1780 = vpop.f32.mrb[0].mxu0
      %1781 = vmatprep.mubr.bf16.mxu0 0
      %1782 = vmatmul.mubr.bf16.gmra.mrb[0].mxu0 %v1531
      %v1783 = vpop.f32.mrb[0].mxu0
      %v1784 = vadd.f32 %v1623, %v1783
      %v1785 = vpop.f32.mrb[0].mxu0
      %v1786 = vpop.f32.mrb[0].mxu0
      %v1787 = vadd.f32 %v1626, %v1786
      %v1788 = vpop.f32.mrb[0].mxu0
      %1789 = vmatprep.mubr.bf16.mxu0 0
      %1790 = vmatmul.mubr.bf16.gmra.mrb[0].mxu0 %v1534
      %v1791 = vpop.f32.mrb[0].mxu0
      %v1792 = vadd.f32 %v1631, %v1791
      %v1793 = vpop.f32.mrb[0].mxu0
      %v1794 = vpop.f32.mrb[0].mxu0
      %v1795 = vadd.f32 %v1634, %v1794
      %v1796 = vpop.f32.mrb[0].mxu0
      %1797 = vmatprep.mubr.bf16.mxu0 0
      %1798 = vmatmul.mubr.bf16.gmra.mrb[0].mxu0 %v1537
      %v1799 = vpop.f32.mrb[0].mxu0
      %v1800 = vadd.f32 %v1639, %v1799
      %v1801 = vpop.f32.mrb[0].mxu0
      %v1802 = vpop.f32.mrb[0].mxu0
      %v1803 = vadd.f32 %v1642, %v1802
      %v1804 = vpop.f32.mrb[0].mxu0
      %1805 = vmatprep.mubr.bf16.mxu0 0
      %1806 = vmatmul.mubr.bf16.gmra.mrb[0].mxu0 %v1540
      %v1807 = vpop.f32.mrb[0].mxu0
      %v1808 = vadd.f32 %v1647, %v1807
      %v1809 = vpop.f32.mrb[0].mxu0
      %v1810 = vpop.f32.mrb[0].mxu0
      %v1811 = vadd.f32 %v1650, %v1810
      %v1812 = vpop.f32.mrb[0].mxu0
      %1813 = vmatprep.mubr.bf16.mxu0 0
      %1814 = vmatmul.mubr.bf16.gmra.mrb[0].mxu0 %v1543
      %v1815 = vpop.f32.mrb[0].mxu0
      %v1816 = vadd.f32 %v1655, %v1815
      %v1817 = vpop.f32.mrb[0].mxu0
      %v1818 = vpop.f32.mrb[0].mxu0
      %v1819 = vadd.f32 %v1658, %v1818
      %v1820 = vpop.f32.mrb[0].mxu0
      %1821 = vmatprep.mubr.bf16.mxu0 0
      %1822 = vmatmul.mubr.bf16.gmra.mrb[0].mxu0 %v1546
      %v1823 = vpop.f32.mrb[0].mxu0
      %v1824 = vadd.f32 %v1663, %v1823
      %v1825 = vpop.f32.mrb[0].mxu0
      %v1826 = vpop.f32.mrb[0].mxu0
      %v1827 = vadd.f32 %v1666, %v1826
      %v1828 = vpop.f32.mrb[0].mxu0
      %1829 = vmatprep.mubr.bf16.mxu0 0
      %1830 = vmatmul.mubr.bf16.gmra.mrb[0].mxu0 %v1549
      %v1831 = vpop.f32.mrb[0].mxu0
      %v1832 = vadd.f32 %v1671, %v1831
      %v1833 = vpop.f32.mrb[0].mxu0
      %v1834 = vpop.f32.mrb[0].mxu0
      %v1835 = vadd.f32 %v1674, %v1834
      %v1836 = vpop.f32.mrb[0].mxu0
      %1837 = vmatprep.mubr.bf16.mxu0 0
      %1838 = vmatmul.mubr.bf16.gmra.mrb[0].mxu0 %v1552
      %v1839 = vpop.f32.mrb[0].mxu0
      %v1840 = vadd.f32 %v1679, %v1839
      %v1841 = vpop.f32.mrb[0].mxu0
      %v1842 = vpop.f32.mrb[0].mxu0
      %v1843 = vadd.f32 %v1682, %v1842
      %v1844 = vpop.f32.mrb[0].mxu0
      %1845 = vmatprep.mubr.bf16.mxu0 0
      %1846 = vmatmul.mubr.bf16.gmra.mrb[0].mxu0 %v1555
      %v1847 = vpop.f32.mrb[0].mxu0
      %v1848 = vadd.f32 %v1687, %v1847
      %v1849 = vpop.f32.mrb[0].mxu0
      %v1850 = vpop.f32.mrb[0].mxu0
      %v1851 = vadd.f32 %v1690, %v1850
      %v1852 = vpop.f32.mrb[0].mxu0
      %1853 = vmatprep.mubr.bf16.mxu0 0
      %1854 = vmatmul.mubr.bf16.gmra.mrb[0].mxu0 %v1558
      %v1855 = vpop.f32.mrb[0].mxu0
      %v1856 = vadd.f32 %v1695, %v1855
      %v1857 = vpop.f32.mrb[0].mxu0
      %v1858 = vpop.f32.mrb[0].mxu0
      %v1859 = vadd.f32 %v1698, %v1858
      %v1860 = vpop.f32.mrb[0].mxu0
      %1861 = vmatprep.mubr.bf16.mxu0 0
      %1862 = vmatmul.mubr.bf16.gmra.mrb[0].mxu0 %v1561
      %v1863 = vpop.f32.mrb[0].mxu0
      %v1864 = vadd.f32 %v1703, %v1863
      %v1865 = vpop.f32.mrb[0].mxu0
      %v1866 = vpop.f32.mrb[0].mxu0
      %v1867 = vadd.f32 %v1706, %v1866
      %v1868 = vpop.f32.mrb[0].mxu0
      %1869 = vmatprep.mubr.bf16.mxu0 0
      %1870 = vmatmul.mubr.bf16.gmra.mrb[0].mxu0 %v1564
      %v1871 = vpop.f32.mrb[0].mxu0
      %v1872 = vadd.f32 %v1711, %v1871
      %v1873 = vpop.f32.mrb[0].mxu0
      %v1874 = vpop.f32.mrb[0].mxu0
      %v1875 = vadd.f32 %v1714, %v1874
      %v1876 = vpop.f32.mrb[0].mxu0
      %1877 = vmatprep.mubr.bf16.mxu0 0
      %1878 = vmatmul.mubr.bf16.gmra.mrb[0].mxu0 %v1567
      %v1879 = vpop.f32.mrb[0].mxu0
      %v1880 = vadd.f32 %v1719, %v1879
      %v1881 = vpop.f32.mrb[0].mxu0
      %v1882 = vpop.f32.mrb[0].mxu0
      %v1883 = vadd.f32 %v1722, %v1882
      %v1884 = vpop.f32.mrb[0].mxu0
      %1885 = vmatprep.mubr.bf16.mxu0 0
      %1886 = vmatmul.mubr.bf16.gmra.mrb[0].mxu0 %v1570
      %v1887 = vpop.f32.mrb[0].mxu0
      %v1888 = vadd.f32 %v1727, %v1887
      %v1889 = vpop.f32.mrb[0].mxu0
      %v1890 = vpop.f32.mrb[0].mxu0
      %v1891 = vadd.f32 %v1730, %v1890
      %v1892 = vpop.f32.mrb[0].mxu0
      %1893 = vdwg.mxu0
      %v1894 = vxor.u32 %v1768, 2147483648
      %v1895 = vxor.u32 %v1771, 2147483648
      %v1896 = vxor.u32 %v1776, 2147483648
      %v1897 = vxor.u32 %v1779, 2147483648
      %v1898 = vxor.u32 %v1784, 2147483648
      %v1899 = vxor.u32 %v1787, 2147483648
      %v1900 = vxor.u32 %v1792, 2147483648
      %v1901 = vxor.u32 %v1795, 2147483648
      %v1902 = vxor.u32 %v1800, 2147483648
      %v1903 = vxor.u32 %v1803, 2147483648
      %v1904 = vxor.u32 %v1808, 2147483648
      %v1905 = vxor.u32 %v1811, 2147483648
      %v1906 = vxor.u32 %v1816, 2147483648
      %v1907 = vxor.u32 %v1819, 2147483648
      %v1908 = vxor.u32 %v1824, 2147483648
      %v1909 = vxor.u32 %v1827, 2147483648
      %v1910 = vxor.u32 %v1832, 2147483648
      %v1911 = vxor.u32 %v1835, 2147483648
      %v1912 = vxor.u32 %v1840, 2147483648
      %v1913 = vxor.u32 %v1843, 2147483648
      %v1914 = vxor.u32 %v1848, 2147483648
      %v1915 = vxor.u32 %v1851, 2147483648
      %v1916 = vxor.u32 %v1856, 2147483648
      %v1917 = vxor.u32 %v1859, 2147483648
      %v1918 = vxor.u32 %v1864, 2147483648
      %v1919 = vxor.u32 %v1867, 2147483648
      %v1920 = vxor.u32 %v1872, 2147483648
      %v1921 = vxor.u32 %v1875, 2147483648
      %v1922 = vxor.u32 %v1880, 2147483648
      %v1923 = vxor.u32 %v1883, 2147483648
      %v1924 = vxor.u32 %v1888, 2147483648
      %v1925 = vxor.u32 %v1891, 2147483648
      %v1926 = vmul.f32 %v1894, 1.442695
      %v1927 = vpow.pop %v1926
      %v1928 = vmul.f32 %v1895, 1.442695
      %v1929 = vpow.pop %v1928
      %v1930 = vmul.f32 %v1896, 1.442695
      %v1931 = vpow.pop %v1930
      %v1932 = vmul.f32 %v1897, 1.442695
      %v1933 = vpow.pop %v1932
      %v1934 = vmul.f32 %v1898, 1.442695
      %v1935 = vpow.pop %v1934
      %v1936 = vmul.f32 %v1899, 1.442695
      %v1937 = vpow.pop %v1936
      %v1938 = vmul.f32 %v1900, 1.442695
      %v1939 = vpow.pop %v1938
      %v1940 = vmul.f32 %v1901, 1.442695
      %v1941 = vpow.pop %v1940
      %v1942 = vmul.f32 %v1902, 1.442695
      %v1943 = vpow.pop %v1942
      %v1944 = vmul.f32 %v1903, 1.442695
      %v1945 = vpow.pop %v1944
      %v1946 = vmul.f32 %v1904, 1.442695
      %v1947 = vpow.pop %v1946
      %v1948 = vmul.f32 %v1905, 1.442695
      %v1949 = vpow.pop %v1948
      %v1950 = vmul.f32 %v1906, 1.442695
      %v1951 = vpow.pop %v1950
      %v1952 = vmul.f32 %v1907, 1.442695
      %v1953 = vpow.pop %v1952
      %v1954 = vmul.f32 %v1908, 1.442695
      %v1955 = vpow.pop %v1954
      %v1956 = vmul.f32 %v1909, 1.442695
      %v1957 = vpow.pop %v1956
      %v1958 = vmul.f32 %v1910, 1.442695
      %v1959 = vpow.pop %v1958
      %v1960 = vmul.f32 %v1911, 1.442695
      %v1961 = vpow.pop %v1960
      %v1962 = vmul.f32 %v1912, 1.442695
      %v1963 = vpow.pop %v1962
      %v1964 = vmul.f32 %v1913, 1.442695
      %v1965 = vpow.pop %v1964
      %v1966 = vmul.f32 %v1914, 1.442695
      %v1967 = vpow.pop %v1966
      %v1968 = vmul.f32 %v1915, 1.442695
      %v1969 = vpow.pop %v1968
      %v1970 = vmul.f32 %v1916, 1.442695
      %v1971 = vpow.pop %v1970
      %v1972 = vmul.f32 %v1917, 1.442695
      %v1973 = vpow.pop %v1972
      %v1974 = vmul.f32 %v1918, 1.442695
      %v1975 = vpow.pop %v1974
      %v1976 = vmul.f32 %v1919, 1.442695
      %v1977 = vpow.pop %v1976
      %v1978 = vmul.f32 %v1920, 1.442695
      %v1979 = vpow.pop %v1978
      %v1980 = vmul.f32 %v1921, 1.442695
      %v1981 = vpow.pop %v1980
      %v1982 = vmul.f32 %v1922, 1.442695
      %v1983 = vpow.pop %v1982
      %v1984 = vmul.f32 %v1923, 1.442695
      %v1985 = vpow.pop %v1984
      %v1986 = vmul.f32 %v1924, 1.442695
      %v1987 = vpow.pop %v1986
      %v1988 = vmul.f32 %v1925, 1.442695
      %v1989 = vpow.pop %v1988
      %v1990 = vadd.f32 %v1927, 1.0
      %v1991 = vadd.f32 %v1929, 1.0
      %v1992 = vadd.f32 %v1931, 1.0
      %v1993 = vadd.f32 %v1933, 1.0
      %v1994 = vadd.f32 %v1935, 1.0
      %v1995 = vadd.f32 %v1937, 1.0
      %v1996 = vadd.f32 %v1939, 1.0
      %v1997 = vadd.f32 %v1941, 1.0
      %v1998 = vadd.f32 %v1943, 1.0
      %v1999 = vadd.f32 %v1945, 1.0
      %v2000 = vadd.f32 %v1947, 1.0
      %v2001 = vadd.f32 %v1949, 1.0
      %v2002 = vadd.f32 %v1951, 1.0
      %v2003 = vadd.f32 %v1953, 1.0
      %v2004 = vadd.f32 %v1955, 1.0
      %v2005 = vadd.f32 %v1957, 1.0
      %v2006 = vadd.f32 %v1959, 1.0
      %v2007 = vadd.f32 %v1961, 1.0
      %v2008 = vadd.f32 %v1963, 1.0
      %v2009 = vadd.f32 %v1965, 1.0
      %v2010 = vadd.f32 %v1967, 1.0
      %v2011 = vadd.f32 %v1969, 1.0
      %v2012 = vadd.f32 %v1971, 1.0
      %v2013 = vadd.f32 %v1973, 1.0
      %v2014 = vadd.f32 %v1975, 1.0
      %v2015 = vadd.f32 %v1977, 1.0
      %v2016 = vadd.f32 %v1979, 1.0
      %v2017 = vadd.f32 %v1981, 1.0
      %v2018 = vadd.f32 %v1983, 1.0
      %v2019 = vadd.f32 %v1985, 1.0
      %v2020 = vadd.f32 %v1987, 1.0
      %v2021 = vadd.f32 %v1989, 1.0
      %v2022 = vrcp.pop %v1990
      %v2023 = vmul.f32 1.0, %v2022
      %v2024 = vrcp.pop %v1991
      %v2025 = vmul.f32 1.0, %v2024
      %v2026 = vrcp.pop %v1992
      %v2027 = vmul.f32 1.0, %v2026
      %v2028 = vrcp.pop %v1993
      %v2029 = vmul.f32 1.0, %v2028
      %v2030 = vrcp.pop %v1994
      %v2031 = vmul.f32 1.0, %v2030
      %v2032 = vrcp.pop %v1995
      %v2033 = vmul.f32 1.0, %v2032
      %v2034 = vrcp.pop %v1996
      %v2035 = vmul.f32 1.0, %v2034
      %v2036 = vrcp.pop %v1997
      %v2037 = vmul.f32 1.0, %v2036
      %v2038 = vrcp.pop %v1998
      %v2039 = vmul.f32 1.0, %v2038
      %v2040 = vrcp.pop %v1999
      %v2041 = vmul.f32 1.0, %v2040
      %v2042 = vrcp.pop %v2000
      %v2043 = vmul.f32 1.0, %v2042
      %v2044 = vrcp.pop %v2001
      %v2045 = vmul.f32 1.0, %v2044
      %v2046 = vrcp.pop %v2002
      %v2047 = vmul.f32 1.0, %v2046
      %v2048 = vrcp.pop %v2003
      %v2049 = vmul.f32 1.0, %v2048
      %v2050 = vrcp.pop %v2004
      %v2051 = vmul.f32 1.0, %v2050
      %v2052 = vrcp.pop %v2005
      %v2053 = vmul.f32 1.0, %v2052
      %v2054 = vrcp.pop %v2006
      %v2055 = vmul.f32 1.0, %v2054
      %v2056 = vrcp.pop %v2007
      %v2057 = vmul.f32 1.0, %v2056
      %v2058 = vrcp.pop %v2008
      %v2059 = vmul.f32 1.0, %v2058
      %v2060 = vrcp.pop %v2009
      %v2061 = vmul.f32 1.0, %v2060
      %v2062 = vrcp.pop %v2010
      %v2063 = vmul.f32 1.0, %v2062
      %v2064 = vrcp.pop %v2011
      %v2065 = vmul.f32 1.0, %v2064
      %v2066 = vrcp.pop %v2012
      %v2067 = vmul.f32 1.0, %v2066
      %v2068 = vrcp.pop %v2013
      %v2069 = vmul.f32 1.0, %v2068
      %v2070 = vrcp.pop %v2014
      %v2071 = vmul.f32 1.0, %v2070
      %v2072 = vrcp.pop %v2015
      %v2073 = vmul.f32 1.0, %v2072
      %v2074 = vrcp.pop %v2016
      %v2075 = vmul.f32 1.0, %v2074
      %v2076 = vrcp.pop %v2017
      %v2077 = vmul.f32 1.0, %v2076
      %v2078 = vrcp.pop %v2018
      %v2079 = vmul.f32 1.0, %v2078
      %v2080 = vrcp.pop %v2019
      %v2081 = vmul.f32 1.0, %v2080
      %v2082 = vrcp.pop %v2020
      %v2083 = vmul.f32 1.0, %v2082
      %v2084 = vrcp.pop %v2021
      %v2085 = vmul.f32 1.0, %v2084
      %vm2086 = vcmask 64512
      %2087 = vst.msk [vmem:[%s206] sm:$0xff] %vm2086, %v2023
      %2088 = vst.msk [vmem:[%s206 + $0x8] sm:$0xff] %vm2086, %v2025
      %2089 = vst.msk [vmem:[%s206 + $0x10] sm:$0xff] %vm2086, %v2027
      %2090 = vst.msk [vmem:[%s206 + $0x18] sm:$0xff] %vm2086, %v2029
      %2091 = vst.msk [vmem:[%s206 + $0x20] sm:$0xff] %vm2086, %v2031
      %2092 = vst.msk [vmem:[%s206 + $0x28] sm:$0xff] %vm2086, %v2033
      %2093 = vst.msk [vmem:[%s206 + $0x30] sm:$0xff] %vm2086, %v2035
      %2094 = vst.msk [vmem:[%s206 + $0x38] sm:$0xff] %vm2086, %v2037
      %2095 = vst.msk [vmem:[%s206 + $0x40] sm:$0xff] %vm2086, %v2039
      %2096 = vst.msk [vmem:[%s206 + $0x48] sm:$0xff] %vm2086, %v2041
      %2097 = vst.msk [vmem:[%s206 + $0x50] sm:$0xff] %vm2086, %v2043
      %2098 = vst.msk [vmem:[%s206 + $0x58] sm:$0xff] %vm2086, %v2045
      %2099 = vst.msk [vmem:[%s206 + $0x60] sm:$0xff] %vm2086, %v2047
      %2100 = vst.msk [vmem:[%s206 + $0x68] sm:$0xff] %vm2086, %v2049
      %2101 = vst.msk [vmem:[%s206 + $0x70] sm:$0xff] %vm2086, %v2051
      %2102 = vst.msk [vmem:[%s206 + $0x78] sm:$0xff] %vm2086, %v2053
      %2103 = vst.msk [vmem:[%s206 + $0x80] sm:$0xff] %vm2086, %v2055
      %2104 = vst.msk [vmem:[%s206 + $0x88] sm:$0xff] %vm2086, %v2057
      %2105 = vst.msk [vmem:[%s206 + $0x90] sm:$0xff] %vm2086, %v2059
      %2106 = vst.msk [vmem:[%s206 + $0x98] sm:$0xff] %vm2086, %v2061
      %2107 = vst.msk [vmem:[%s206 + $0xa0] sm:$0xff] %vm2086, %v2063
      %2108 = vst.msk [vmem:[%s206 + $0xa8] sm:$0xff] %vm2086, %v2065
      %2109 = vst.msk [vmem:[%s206 + $0xb0] sm:$0xff] %vm2086, %v2067
      %2110 = vst.msk [vmem:[%s206 + $0xb8] sm:$0xff] %vm2086, %v2069
      %2111 = vst.msk [vmem:[%s206 + $0xc0] sm:$0xff] %vm2086, %v2071
      %2112 = vst.msk [vmem:[%s206 + $0xc8] sm:$0xff] %vm2086, %v2073
      %2113 = vst.msk [vmem:[%s206 + $0xd0] sm:$0xff] %vm2086, %v2075
      %2114 = vst.msk [vmem:[%s206 + $0xd8] sm:$0xff] %vm2086, %v2077
      %2115 = vst.msk [vmem:[%s206 + $0xe0] sm:$0xff] %vm2086, %v2079
      %2116 = vst.msk [vmem:[%s206 + $0xe8] sm:$0xff] %vm2086, %v2081
      %2117 = vst.msk [vmem:[%s206 + $0xf0] sm:$0xff] %vm2086, %v2083
      %2118 = vst.msk [vmem:[%s206 + $0xf8] sm:$0xff] %vm2086, %v2085
      %p2119 = scmp.lt.s32.totalorder %s18, 1
      %s2120 = scalar_select %p2119, %s18, 1
      %p2121 = scmp.lt.s32.totalorder %s19, 3
      %s2122 = scalar_select %p2121, %s19, 3
      %s2123 = smul.addr %s2122, 32
      %s2124 = smul.addr %s2120, 128
      %s2125 = sadd.s32 %s2123, %s2124
      %s2126 = smul.addr %s2125, 8
      %s2127 = scalar_lea.vmem %s3, %s2126
      // Predicated region
      $region33: #{srresnet_forward.5} parent=31 // pred_check
        %p2128 = pneg %p116
      $region34: #{srresnet_forward.5} parent=31 // pred_check_branch
        %2130 = sbr.rel (%p2128) target = $region36
      $region35: #{srresnet_forward.5} parent=31 // pred_region
        _
      $region36: #{srresnet_forward.5} parent=31 // pred_fallthru
        _
    $region32: #{srresnet_forward.5} parent=5 // pred_fallthru
      _
    %p2131 = scmp.le.s32.totalorder 2, %s9
    // Predicated region
    $region37: #{srresnet_forward.5} parent=5 // pred_check
      %p2132 = pneg %p2131
    $region38: #{srresnet_forward.5} parent=5 // pred_check_branch
      %2134 = sbr.rel (%p2132) target = $region40
    $region39: #{srresnet_forward.5} parent=5 // pred_region
      %s2135 = ssub.s32 %s9, 2
      // Predicated region
      $region41: #{srresnet_forward.5} parent=39 // pred_check
        %p2136 = pneg %p122
      $region42: #{srresnet_forward.5} parent=39 // pred_check_branch
        %2138 = sbr.rel (%p2136) target = $region44
      $region43: #{srresnet_forward.5} parent=39 // pred_region
        %p2139 = scmp.lt.s32.totalorder %s20, 1
        %s2140 = scalar_select %p2139, %s20, 1
        %p2141 = scmp.lt.s32.totalorder %s21, 3
        %s2142 = scalar_select %p2141, %s21, 3
        %s2143 = smul.addr %s2142, 32
        %s2144 = smul.addr %s2140, 128
        %s2145 = sadd.s32 %s2143, %s2144
        %s2146 = smul.addr %s2145, 8
        %s2147 = scalar_lea.vmem %s3, %s2146
      $region44: #{srresnet_forward.5} parent=39 // pred_fallthru
        _
    $region40: #{srresnet_forward.5} parent=5 // pred_fallthru
      _
  $region6: #{srresnet_forward.5} parent=0 // loop_footer
    %s13 = sadd.s32 1, %s9
  $region7: #{srresnet_forward.5} parent=0 // loop_footer_branch
    %8 = sbr.rel target = $region3
  $region8: #{srresnet_forward.5} parent=0 // loop_exit
    _

</llo_original>
